<compile_context>
chip_gen: v7x
topology: tpu7x:2x2x1
jax: 0.10.0
libtpu: 0.0.40
codegen_flags: <defaults>
</compile_context>

<pallas_src>
import functools
import math

import jax
import jax.numpy as jnp
from jax.experimental import pallas as pl
from jax.experimental.pallas import tpu as pltpu

_LANE = 128
_BN_EPS = 1e-5


def _round_up(x, m):
    return ((x + m - 1) // m) * m


def _cdiv(a, b):
    return -(-a // b)


def _vmem_caps():
    """Generation-aware VMEM budget / scoped limit (v5e/v6e: 128 MiB, v7x: 64 MiB)."""
    cap = 64 * 1024 * 1024                      # conservative fallback (v7x-sized)
    try:
        cap = int(pltpu.get_tpu_info().vmem_capacity_bytes)
    except Exception:
        pass
    budget = min(int(cap * 0.45), 64 * 1024 * 1024)
    limit = min(int(cap * 0.75), 100 * 1024 * 1024)
    return budget, limit


_VMEM_BUDGET, _VMEM_LIMIT = _vmem_caps()


# ---------------------------------------------------------------------------
# Pallas kernel 1: plain matmul + shift (ConvTranspose2d k=2 s=2)
# ---------------------------------------------------------------------------
def _matmul_bias_kernel(x_ref, w_ref, shift_ref, o_ref):
    acc = jnp.dot(x_ref[...], w_ref[...], preferred_element_type=jnp.float32)
    o_ref[...] = (acc + shift_ref[...]).astype(o_ref.dtype)


def _pick_bm_matmul(M, K, Ncol, out_bytes):
    fixed = 2 * (K * Ncol * 2 + Ncol * 4)       # weight + shift, assume double-buffered
    def fits(b):
        return (fixed + 2 * b * K * 2 + 2 * b * Ncol * out_bytes
                + b * Ncol * 4) <= _VMEM_BUDGET
    bm = 64
    cap = max(64, _round_up(M, 64))
    while 2 * bm <= cap and fits(2 * bm):
        bm *= 2
    while _cdiv(M, bm) < 4 and bm > 64:         # >=4 grid steps keeps both v7x TCs pipelined
        bm //= 2
    return bm


def matmul_bias(x, w, shift, *, out_dtype):
    """x: (M, K) bf16, w: (K, N) bf16, shift: (1, N) f32  ->  (M, N) out_dtype."""
    M, K = x.shape
    _, Ncol = w.shape
    bm = _pick_bm_matmul(M, K, Ncol, jnp.dtype(out_dtype).itemsize)
    nb = _cdiv(M, bm)
    rows = nb * bm
    if rows != M:
        x = jnp.pad(x, ((0, rows - M), (0, 0)))
    out = pl.pallas_call(
        _matmul_bias_kernel,
        out_shape=jax.ShapeDtypeStruct((rows, Ncol), out_dtype),
        grid=(nb,),
        in_specs=[
            pl.BlockSpec((bm, K), lambda i: (i, 0)),
            pl.BlockSpec((K, Ncol), lambda i: (0, 0)),      # resident weight
            pl.BlockSpec((1, Ncol), lambda i: (0, 0)),
        ],
        out_specs=pl.BlockSpec((bm, Ncol), lambda i: (i, 0)),
        compiler_params=pltpu.CompilerParams(
            dimension_semantics=("parallel",),
            vmem_limit_bytes=_VMEM_LIMIT),
    )(x, w, shift)
    return out[:M]


# ---------------------------------------------------------------------------
# Pallas kernel 2: fused 3x3 conv (9 taps over a staged window) + folded BN + ReLU
# ---------------------------------------------------------------------------
def _conv3x3_kernel(*args, n_inputs, ks, offsets, bm, hp):
    in_refs = args[:2 * n_inputs]
    w_ref, shift_ref, mask_ref, o_ref, win_ref = args[2 * n_inputs:]
    ktot = sum(ks)

    # Stage bm + hp window rows once in VMEM; multiple inputs are placed side by side
    # channel-wise, which fuses the channel concat for free.
    col = 0
    for j in range(n_inputs):
        kj = ks[j]
        win_ref[0:bm, col:col + kj] = in_refs[2 * j][...]
        win_ref[bm:bm + hp, col:col + kj] = in_refs[2 * j + 1][...]
        col += kj

    acc = jnp.dot(win_ref[offsets[0]:offsets[0] + bm, :], w_ref[0:ktot, :],
                  preferred_element_type=jnp.float32)
    for t in range(1, 9):
        off = offsets[t]
        acc = acc + jnp.dot(win_ref[off:off + bm, :],
                            w_ref[t * ktot:(t + 1) * ktot, :],
                            preferred_element_type=jnp.float32)

    y = jnp.maximum(acc + shift_ref[...], 0.0) * mask_ref[...]
    o_ref[...] = y.astype(o_ref.dtype)


def _plan_conv(M, Ws, ktot, cout, out_bytes):
    """Pick (bm, hp, nb) for the 3x3 conv: hp = halo rows (multiple of 8, divides bm)."""
    halo = 2 * Ws + 2
    hp = _round_up(halo, 8)
    fixed = 2 * (9 * ktot * cout * 2 + cout * 4)        # weight + shift, assume double-buffered
    def fits(b):
        per_step = (2 * (b + hp) * ktot * 2             # main + halo input blocks (x2 buffers)
                    + (b + hp) * ktot * 2               # window scratch
                    + 2 * b * cout * out_bytes          # output blocks
                    + b * cout * 4                      # f32 accumulator
                    + 2 * b * 4)                        # mask blocks
        return fixed + per_step <= _VMEM_BUDGET
    bm = hp
    cap = max(hp, _round_up(M, hp))
    while 2 * bm <= cap and fits(2 * bm):
        bm *= 2
    while _cdiv(M, bm) < 4 and bm >= 2 * hp:            # >=4 grid steps for megacore pipelining
        bm //= 2
    return bm, hp, _cdiv(M, bm)


def conv3x3_bn_relu(inputs, w9, shift, mask, *, bm, hp, nb, Ws, out_dtype):
    """Fused 3x3 conv + folded BN + ReLU over flat (rows, K) slabs.

    inputs: list of (nb*bm, Kj) bf16 slabs sharing one (N, Hs, Ws) row geometry; their
            channels are concatenated inside the kernel window scratch.
    w9:     (9*sum(Kj), Cout) bf16 tap-major weight (BN scale folded in).
    shift:  (1, Cout) f32.   mask: (nb*bm, 1) f32 row mask multiplied into the output.
    """
    rows = nb * bm
    ks = tuple(int(a.shape[1]) for a in inputs)
    ktot = sum(ks)
    cout = int(w9.shape[1])
    offsets = tuple(dy * Ws + dx for dy in range(3) for dx in range(3))
    blk = bm // hp

    in_specs = []
    operands = []
    for a, kj in zip(inputs, ks):
        in_specs.append(pl.BlockSpec((bm, kj), lambda i: (i, 0)))
        # Halo: only hp rows of the next block; the last block wraps to block 0 (its
        # halo-dependent output rows are junk / masked, so the contents do not matter).
        in_specs.append(pl.BlockSpec(
            (hp, kj), lambda i, blk=blk, nb=nb: (((i + 1) % nb) * blk, 0)))
        operands += [a, a]
    in_specs += [
        pl.BlockSpec((9 * ktot, cout), lambda i: (0, 0)),   # resident weight
        pl.BlockSpec((1, cout), lambda i: (0, 0)),
        pl.BlockSpec((bm, 1), lambda i: (i, 0)),
    ]
    operands += [w9, shift, mask]

    kernel = functools.partial(_conv3x3_kernel, n_inputs=len(inputs), ks=ks,
                               offsets=offsets, bm=bm, hp=hp)
    return pl.pallas_call(
        kernel,
        out_shape=jax.ShapeDtypeStruct((rows, cout), out_dtype),
        grid=(nb,),
        in_specs=in_specs,
        out_specs=pl.BlockSpec((bm, cout), lambda i: (i, 0)),
        scratch_shapes=[pltpu.VMEM((bm + hp, ktot), jnp.bfloat16)],
        compiler_params=pltpu.CompilerParams(
            dimension_semantics=("parallel",),
            vmem_limit_bytes=_VMEM_LIMIT),
    )(*operands)


# ---------------------------------------------------------------------------
# Parameter folding (conv bias + BatchNorm(eval) -> weight scale + shift)
# ---------------------------------------------------------------------------
def _fold_conv_bn(w_torch, b, gamma, beta, *, in_segments, kin, cout_pad):
    """Build (9*kin, cout_pad) bf16 tap-major weights with BN scale folded in, plus a
    (1, cout_pad) f32 shift.  `in_segments` = ((src, len, dst), ...) maps torch input
    channel ranges into the channel-padded window layout."""
    Co = w_torch.shape[0]
    scale = gamma / jnp.sqrt(1.0 + _BN_EPS)             # eval-mode BN, running stats 0/1
    w = jnp.transpose(w_torch, (2, 3, 1, 0)) * scale[None, None, None, :]   # (3,3,Cin,Co)
    wp = jnp.zeros((3, 3, kin, cout_pad), jnp.float32)
    for src, length, dst in in_segments:
        wp = wp.at[:, :, dst:dst + length, :Co].set(w[:, :, src:src + length, :])
    shift = jnp.zeros((1, cout_pad), jnp.float32).at[0, :Co].set(b * scale + beta)
    return wp.reshape(9 * kin, cout_pad).astype(jnp.bfloat16), shift


# ---------------------------------------------------------------------------
# Up.forward
# ---------------------------------------------------------------------------
def up_forward(x1_nchw, x2_nchw, p):
    """Mirrors Up.forward(x1, x2). Inputs/outputs are NCHW like PyTorch."""
    x1 = jnp.transpose(x1_nchw, (0, 2, 3, 1)).astype(jnp.bfloat16)   # NHWC
    x2 = jnp.transpose(x2_nchw, (0, 2, 3, 1)).astype(jnp.bfloat16)
    N, H, W, C1 = x1.shape
    _, H2, W2, Ch = x2.shape
    Co = p["w1"].shape[0]
    C1p = _round_up(C1, _LANE)
    Chp = _round_up(Ch, _LANE)
    Cop = _round_up(Co, _LANE)

    # --- ConvTranspose2d(kernel=2, stride=2): one lane-dense matmul per input pixel ---
    wt = jnp.transpose(p["w_up"], (0, 2, 3, 1))                           # (C1, 2, 2, Ch)
    wt_p = jnp.zeros((C1p, 2, 2, Chp), jnp.float32).at[:C1, :, :, :Ch].set(wt)
    wt_p = wt_p.reshape(C1p, 4 * Chp).astype(jnp.bfloat16)
    shift_up = jnp.zeros((2, 2, Chp), jnp.float32).at[:, :, :Ch].set(p["b_up"])
    shift_up = shift_up.reshape(1, 4 * Chp)

    x1_slab = jnp.pad(x1, ((0, 0), (0, 0), (0, 0), (0, C1p - C1))).reshape(N * H * W, C1p)
    y = matmul_bias(x1_slab, wt_p, shift_up, out_dtype=jnp.bfloat16)      # (N*H*W, 4*Chp)
    # TODO(synk): the (kh,kw) interleave below is one strided XLA pass; it could be folded
    # into conv1's input assembly instead of materializing the upsampled tensor.
    y = (y.reshape(N, H, W, 2, 2, Chp)
          .transpose(0, 1, 3, 2, 4, 5)
          .reshape(N, 2 * H, 2 * W, Chp))

    # --- geometry: conv1's input is 2-padded so conv1's raw output slab is directly
    #     conv2's 1-padded input (no slice + re-pad round trip between the convs) ---
    diffY = H2 - 2 * H
    diffX = W2 - 2 * W
    Hs = H2 + 4
    Ws = _round_up(W2 + 4, 8)            # row stride multiple of 8 -> dy taps sublane-aligned
    M1 = N * Hs * Ws

    top, left = 2 + diffY // 2, 2 + diffX // 2
    y_slab = jnp.pad(y, ((0, 0), (top, Hs - top - 2 * H),
                         (left, Ws - left - 2 * W), (0, 0)))
    x2_slab = jnp.pad(x2, ((0, 0), (2, Hs - 2 - H2), (2, Ws - 2 - W2), (0, Chp - Ch)))

    # --- shared row-block plan for both convs (same slab geometry) ---
    bm1, hp, _ = _plan_conv(M1, Ws, 2 * Chp, Cop, 2)
    bm2, _, _ = _plan_conv(M1, Ws, Cop, Cop, 4)
    bm = min(bm1, bm2)
    nb = _cdiv(M1, bm)
    rows = nb * bm

    def to_rows(slab):
        flat = slab.reshape(M1, slab.shape[-1])
        return jnp.pad(flat, ((0, rows - M1), (0, 0))) if rows != M1 else flat

    # Interior mask: keep conv1 outputs only where real; the ring conv2 treats as zero
    # padding (plus junk rows/columns of the slab) is forced to 0 in the epilogue.
    yy = jnp.arange(Hs)
    xx = jnp.arange(Ws)
    inner = (((yy >= 1) & (yy <= H2))[:, None] & ((xx >= 1) & (xx <= W2))[None, :])
    mask1 = to_rows(jnp.broadcast_to(inner[None], (N, Hs, Ws)).reshape(M1, 1)
                    .astype(jnp.float32))
    mask_all = jnp.ones((rows, 1), jnp.float32)

    # --- DoubleConv: conv1 fuses the channel concat in its window staging; conv2 reads
    #     conv1's output slab directly (same geometry, same tap offsets) ---
    w1_9, shift1 = _fold_conv_bn(p["w1"], p["b1"], p["g1"], p["be1"],
                                 in_segments=((0, Ch, 0), (Ch, Ch, Chp)),
                                 kin=2 * Chp, cout_pad=Cop)
    h = conv3x3_bn_relu([to_rows(y_slab), to_rows(x2_slab)], w1_9, shift1, mask1,
                        bm=bm, hp=hp, nb=nb, Ws=Ws, out_dtype=jnp.bfloat16)

    w2_9, shift2 = _fold_conv_bn(p["w2"], p["b2"], p["g2"], p["be2"],
                                 in_segments=((0, Co, 0),),
                                 kin=Cop, cout_pad=Cop)
    o = conv3x3_bn_relu([h], w2_9, shift2, mask_all,
                        bm=bm, hp=hp, nb=nb, Ws=Ws, out_dtype=jnp.float32)

    out = o[:M1].reshape(N, Hs, Ws, Cop)[:, :H2, :W2, :Co]
    return jnp.transpose(out, (0, 3, 1, 2))                              # back to NCHW


# ---------------------------------------------------------------------------
# Deterministic parameter init (kaiming-normal fan_in, like weights_init_kaiming)
# ---------------------------------------------------------------------------
def make_params(key, in_channels, out_channels):
    ks = jax.random.split(key, 12)
    chalf = in_channels // 2
    nrm = jax.random.normal

    # ConvTranspose2d weight (Cin, Chalf, 2, 2); torch fan_in = Chalf * 2 * 2
    w_up = math.sqrt(2.0 / (chalf * 4)) * nrm(ks[0], (in_channels, chalf, 2, 2), jnp.float32)
    b_up = 0.01 * nrm(ks[1], (chalf,), jnp.float32)

    # DoubleConv conv1: (Cout, Cin, 3, 3), fan_in = Cin * 9
    w1 = math.sqrt(2.0 / (in_channels * 9)) * nrm(ks[2], (out_channels, in_channels, 3, 3), jnp.float32)
    b1 = 0.01 * nrm(ks[3], (out_channels,), jnp.float32)
    g1 = 1.0 + 0.02 * nrm(ks[4], (out_channels,), jnp.float32)   # BN weight ~ N(1, 0.02)
    be1 = jnp.zeros((out_channels,), jnp.float32)                # BN bias = 0

    # DoubleConv conv2: (Cout, Cout, 3, 3), fan_in = Cout * 9
    w2 = math.sqrt(2.0 / (out_channels * 9)) * nrm(ks[5], (out_channels, out_channels, 3, 3), jnp.float32)
    b2 = 0.01 * nrm(ks[6], (out_channels,), jnp.float32)
    g2 = 1.0 + 0.02 * nrm(ks[7], (out_channels,), jnp.float32)
    be2 = jnp.zeros((out_channels,), jnp.float32)

    return dict(w_up=w_up, b_up=b_up,
                w1=w1, b1=b1, g1=g1, be1=be1,
                w2=w2, b2=b2, g2=g2, be2=be2)


if __name__ == "__main__":
    key = jax.random.PRNGKey(0)
    k_param, k_x1, k_x2 = jax.random.split(key, 3)

    in_channels, out_channels = 8, 4
    N, H, W = 2, 8, 8

    params = make_params(k_param, in_channels, out_channels)
    # x1: low-res feature map (NCHW); x2: skip connection at 2x resolution.
    x1 = jax.random.normal(k_x1, (N, in_channels, H, W), jnp.float32)
    x2 = jax.random.normal(k_x2, (N, in_channels // 2, 2 * H, 2 * W), jnp.float32)

    out = jax.jit(up_forward)(x1, x2, params)
    out = jax.block_until_ready(out)
    assert out.shape == (N, out_channels, 2 * H, 2 * W), out.shape
    assert jnp.all(jnp.isfinite(out))
    print("KERNEL_OK")
</pallas_src>

<mosaic_0001>
module attributes {stable_mosaic.version = 11 : i64} {
  func.func @_matmul_bias_kernel(%arg0: i32, %arg1: memref<64x128xbf16, #tpu.memory_space<vmem>>, %arg2: memref<128x512xbf16, #tpu.memory_space<vmem>>, %arg3: memref<1x512xf32, #tpu.memory_space<vmem>>, %arg4: memref<64x512xbf16, #tpu.memory_space<vmem>>) attributes {dimension_semantics = [#tpu.dimension_semantics<parallel>], iteration_bounds = array<i64: 2>, scalar_prefetch = 0 : i64, scratch_operands = 0 : i64, tpu.core_type = #tpu.core_type<tc>, window_params = [{transform_indices = @transform_0, window_bounds = array<i64: 64, 128>}, {pipeline_mode = #tpu.pipeline_mode<synchronous>, transform_indices = @transform_1, window_bounds = array<i64: 128, 512>}, {pipeline_mode = #tpu.pipeline_mode<synchronous>, transform_indices = @transform_2, window_bounds = array<i64: 1, 512>}, {transform_indices = @transform_3, window_bounds = array<i64: 64, 512>}]} {
    %c0 = arith.constant 0 : index
    %c0_0 = arith.constant 0 : index
    %0 = vector.load %arg1[%c0, %c0_0] : memref<64x128xbf16, #tpu.memory_space<vmem>>, vector<64x128xbf16>
    %c0_1 = arith.constant 0 : index
    %c0_2 = arith.constant 0 : index
    %1 = vector.load %arg2[%c0_1, %c0_2] : memref<128x512xbf16, #tpu.memory_space<vmem>>, vector<128x512xbf16>
    %cst = arith.constant dense<0.000000e+00> : vector<64x512xf32>
    %2 = tpu.matmul %0, %1, %cst {dimension_numbers = #tpu.dot_dimension_numbers<[1], [0], [0], [1], [0, 0, 1, 1], [], []>} : vector<64x128xbf16>, vector<128x512xbf16>, vector<64x512xf32> -> vector<64x512xf32>
    %c0_3 = arith.constant 0 : index
    %c0_4 = arith.constant 0 : index
    %3 = vector.load %arg3[%c0_3, %c0_4] : memref<1x512xf32, #tpu.memory_space<vmem>>, vector<1x512xf32>
    %4 = vector.broadcast %3 : vector<1x512xf32> to vector<64x512xf32>
    %5 = arith.addf %2, %4 : vector<64x512xf32>
    %6 = arith.truncf %5 : vector<64x512xf32> to vector<64x512xbf16>
    %c0_5 = arith.constant 0 : index
    %c0_6 = arith.constant 0 : index
    %7 = vector.load %arg4[%c0_5, %c0_6] : memref<64x512xbf16, #tpu.memory_space<vmem>>, vector<64x512xbf16>
    tpu.vector_store %arg4[%c0_5, %c0_6], %6 {strides = array<i32>} : memref<64x512xbf16, #tpu.memory_space<vmem>>, vector<64x512xbf16>,
    return
  }
  func.func @transform_0(%arg0: i32) -> (i32, i32) {
    %c0_i32 = arith.constant 0 : i32
    %c0_i32_0 = arith.constant 0 : i32
    return %arg0, %c0_i32 : i32, i32
  }
  func.func @transform_1(%arg0: i32) -> (i32, i32) {
    %c0_i32 = arith.constant 0 : i32
    %c0_i32_0 = arith.constant 0 : i32
    %c0_i32_1 = arith.constant 0 : i32
    return %c0_i32, %c0_i32_0 : i32, i32
  }
  func.func @transform_2(%arg0: i32) -> (i32, i32) {
    %c0_i32 = arith.constant 0 : i32
    %c0_i32_0 = arith.constant 0 : i32
    %c0_i32_1 = arith.constant 0 : i32
    return %c0_i32, %c0_i32_0 : i32, i32
  }
  func.func @transform_3(%arg0: i32) -> (i32, i32) {
    %c0_i32 = arith.constant 0 : i32
    %c0_i32_0 = arith.constant 0 : i32
    return %arg0, %c0_i32 : i32, i32
  }
}

module attributes {stable_mosaic.version = 11 : i64} {
  func.func @_conv3x3_kernel(%arg0: i32, %arg1: memref<224x128xbf16, #tpu.memory_space<vmem>>, %arg2: memref<56x128xbf16, #tpu.memory_space<vmem>>, %arg3: memref<224x128xbf16, #tpu.memory_space<vmem>>, %arg4: memref<56x128xbf16, #tpu.memory_space<vmem>>, %arg5: memref<2304x128xbf16, #tpu.memory_space<vmem>>, %arg6: memref<1x128xf32, #tpu.memory_space<vmem>>, %arg7: memref<224x1xf32, #tpu.memory_space<vmem>>, %arg8: memref<224x128xbf16, #tpu.memory_space<vmem>>, %arg9: memref<280x256xbf16, #tpu.memory_space<vmem>>) attributes {dimension_semantics = [#tpu.dimension_semantics<parallel>], iteration_bounds = array<i64: 5>, scalar_prefetch = 0 : i64, scratch_operands = 1 : i64, tpu.core_type = #tpu.core_type<tc>, window_params = [{transform_indices = @transform_0, window_bounds = array<i64: 224, 128>}, {transform_indices = @transform_1, window_bounds = array<i64: 56, 128>}, {transform_indices = @transform_2, window_bounds = array<i64: 224, 128>}, {transform_indices = @transform_3, window_bounds = array<i64: 56, 128>}, {pipeline_mode = #tpu.pipeline_mode<synchronous>, transform_indices = @transform_4, window_bounds = array<i64: 2304, 128>}, {pipeline_mode = #tpu.pipeline_mode<synchronous>, transform_indices = @transform_5, window_bounds = array<i64: 1, 128>}, {transform_indices = @transform_6, window_bounds = array<i64: 224, 1>}, {transform_indices = @transform_7, window_bounds = array<i64: 224, 128>}]} {
    %c0 = arith.constant 0 : index
    %c0_0 = arith.constant 0 : index
    %0 = vector.load %arg1[%c0, %c0_0] : memref<224x128xbf16, #tpu.memory_space<vmem>>, vector<224x128xbf16>
    %c0_1 = arith.constant 0 : index
    %c0_2 = arith.constant 0 : index
    %1 = vector.load %arg9[%c0_1, %c0_2] : memref<280x256xbf16, #tpu.memory_space<vmem>>, vector<224x128xbf16>
    tpu.vector_store %arg9[%c0_1, %c0_2], %0 {strides = array<i32>} : memref<280x256xbf16, #tpu.memory_space<vmem>>, vector<224x128xbf16>,
    %c0_3 = arith.constant 0 : index
    %c0_4 = arith.constant 0 : index
    %2 = vector.load %arg2[%c0_3, %c0_4] : memref<56x128xbf16, #tpu.memory_space<vmem>>, vector<56x128xbf16>
    %c224 = arith.constant 224 : index
    %c0_5 = arith.constant 0 : index
    %3 = vector.load %arg9[%c224, %c0_5] : memref<280x256xbf16, #tpu.memory_space<vmem>>, vector<56x128xbf16>
    tpu.vector_store %arg9[%c224, %c0_5], %2 {strides = array<i32>} : memref<280x256xbf16, #tpu.memory_space<vmem>>, vector<56x128xbf16>,
    %c0_6 = arith.constant 0 : index
    %c0_7 = arith.constant 0 : index
    %4 = vector.load %arg3[%c0_6, %c0_7] : memref<224x128xbf16, #tpu.memory_space<vmem>>, vector<224x128xbf16>
    %c0_8 = arith.constant 0 : index
    %c128 = arith.constant 128 : index
    %5 = vector.load %arg9[%c0_8, %c128] : memref<280x256xbf16, #tpu.memory_space<vmem>>, vector<224x128xbf16>
    tpu.vector_store %arg9[%c0_8, %c128], %4 {strides = array<i32>} : memref<280x256xbf16, #tpu.memory_space<vmem>>, vector<224x128xbf16>,
    %c0_9 = arith.constant 0 : index
    %c0_10 = arith.constant 0 : index
    %6 = vector.load %arg4[%c0_9, %c0_10] : memref<56x128xbf16, #tpu.memory_space<vmem>>, vector<56x128xbf16>
    %c224_11 = arith.constant 224 : index
    %c128_12 = arith.constant 128 : index
    %7 = vector.load %arg9[%c224_11, %c128_12] : memref<280x256xbf16, #tpu.memory_space<vmem>>, vector<56x128xbf16>
    tpu.vector_store %arg9[%c224_11, %c128_12], %6 {strides = array<i32>} : memref<280x256xbf16, #tpu.memory_space<vmem>>, vector<56x128xbf16>,
    %c0_13 = arith.constant 0 : index
    %c0_14 = arith.constant 0 : index
    %8 = vector.load %arg9[%c0_13, %c0_14] : memref<280x256xbf16, #tpu.memory_space<vmem>>, vector<224x256xbf16>
    %c0_15 = arith.constant 0 : index
    %c0_16 = arith.constant 0 : index
    %9 = vector.load %arg5[%c0_15, %c0_16] : memref<2304x128xbf16, #tpu.memory_space<vmem>>, vector<256x128xbf16>
    %cst = arith.constant dense<0.000000e+00> : vector<224x128xf32>
    %10 = tpu.matmul %8, %9, %cst {dimension_numbers = #tpu.dot_dimension_numbers<[1], [0], [0], [1], [0, 0, 1, 1], [], []>} : vector<224x256xbf16>, vector<256x128xbf16>, vector<224x128xf32> -> vector<224x128xf32>
    %c1 = arith.constant 1 : index
    %c0_17 = arith.constant 0 : index
    %11 = vector.load %arg9[%c1, %c0_17] : memref<280x256xbf16, #tpu.memory_space<vmem>>, vector<224x256xbf16>
    %c256 = arith.constant 256 : index
    %c0_18 = arith.constant 0 : index
    %12 = vector.load %arg5[%c256, %c0_18] : memref<2304x128xbf16, #tpu.memory_space<vmem>>, vector<256x128xbf16>
    %cst_19 = arith.constant dense<0.000000e+00> : vector<224x128xf32>
    %13 = tpu.matmul %11, %12, %cst_19 {dimension_numbers = #tpu.dot_dimension_numbers<[1], [0], [0], [1], [0, 0, 1, 1], [], []>} : vector<224x256xbf16>, vector<256x128xbf16>, vector<224x128xf32> -> vector<224x128xf32>
    %14 = arith.addf %10, %13 : vector<224x128xf32>
    %c2 = arith.constant 2 : index
    %c0_20 = arith.constant 0 : index
    %15 = vector.load %arg9[%c2, %c0_20] : memref<280x256xbf16, #tpu.memory_space<vmem>>, vector<224x256xbf16>
    %c512 = arith.constant 512 : index
    %c0_21 = arith.constant 0 : index
    %16 = vector.load %arg5[%c512, %c0_21] : memref<2304x128xbf16, #tpu.memory_space<vmem>>, vector<256x128xbf16>
    %cst_22 = arith.constant dense<0.000000e+00> : vector<224x128xf32>
    %17 = tpu.matmul %15, %16, %cst_22 {dimension_numbers = #tpu.dot_dimension_numbers<[1], [0], [0], [1], [0, 0, 1, 1], [], []>} : vector<224x256xbf16>, vector<256x128xbf16>, vector<224x128xf32> -> vector<224x128xf32>
    %18 = arith.addf %14, %17 : vector<224x128xf32>
    %c24 = arith.constant 24 : index
    %c0_23 = arith.constant 0 : index
    %19 = vector.load %arg9[%c24, %c0_23] : memref<280x256xbf16, #tpu.memory_space<vmem>>, vector<224x256xbf16>
    %c768 = arith.constant 768 : index
    %c0_24 = arith.constant 0 : index
    %20 = vector.load %arg5[%c768, %c0_24] : memref<2304x128xbf16, #tpu.memory_space<vmem>>, vector<256x128xbf16>
    %cst_25 = arith.constant dense<0.000000e+00> : vector<224x128xf32>
    %21 = tpu.matmul %19, %20, %cst_25 {dimension_numbers = #tpu.dot_dimension_numbers<[1], [0], [0], [1], [0, 0, 1, 1], [], []>} : vector<224x256xbf16>, vector<256x128xbf16>, vector<224x128xf32> -> vector<224x128xf32>
    %22 = arith.addf %18, %21 : vector<224x128xf32>
    %c25 = arith.constant 25 : index
    %c0_26 = arith.constant 0 : index
    %23 = vector.load %arg9[%c25, %c0_26] : memref<280x256xbf16, #tpu.memory_space<vmem>>, vector<224x256xbf16>
    %c1024 = arith.constant 1024 : index
    %c0_27 = arith.constant 0 : index
    %24 = vector.load %arg5[%c1024, %c0_27] : memref<2304x128xbf16, #tpu.memory_space<vmem>>, vector<256x128xbf16>
    %cst_28 = arith.constant dense<0.000000e+00> : vector<224x128xf32>
    %25 = tpu.matmul %23, %24, %cst_28 {dimension_numbers = #tpu.dot_dimension_numbers<[1], [0], [0], [1], [0, 0, 1, 1], [], []>} : vector<224x256xbf16>, vector<256x128xbf16>, vector<224x128xf32> -> vector<224x128xf32>
    %26 = arith.addf %22, %25 : vector<224x128xf32>
    %c26 = arith.constant 26 : index
    %c0_29 = arith.constant 0 : index
    %27 = vector.load %arg9[%c26, %c0_29] : memref<280x256xbf16, #tpu.memory_space<vmem>>, vector<224x256xbf16>
    %c1280 = arith.constant 1280 : index
    %c0_30 = arith.constant 0 : index
    %28 = vector.load %arg5[%c1280, %c0_30] : memref<2304x128xbf16, #tpu.memory_space<vmem>>, vector<256x128xbf16>
    %cst_31 = arith.constant dense<0.000000e+00> : vector<224x128xf32>
    %29 = tpu.matmul %27, %28, %cst_31 {dimension_numbers = #tpu.dot_dimension_numbers<[1], [0], [0], [1], [0, 0, 1, 1], [], []>} : vector<224x256xbf16>, vector<256x128xbf16>, vector<224x128xf32> -> vector<224x128xf32>
    %30 = arith.addf %26, %29 : vector<224x128xf32>
    %c48 = arith.constant 48 : index
    %c0_32 = arith.constant 0 : index
    %31 = vector.load %arg9[%c48, %c0_32] : memref<280x256xbf16, #tpu.memory_space<vmem>>, vector<224x256xbf16>
    %c1536 = arith.constant 1536 : index
    %c0_33 = arith.constant 0 : index
    %32 = vector.load %arg5[%c1536, %c0_33] : memref<2304x128xbf16, #tpu.memory_space<vmem>>, vector<256x128xbf16>
    %cst_34 = arith.constant dense<0.000000e+00> : vector<224x128xf32>
    %33 = tpu.matmul %31, %32, %cst_34 {dimension_numbers = #tpu.dot_dimension_numbers<[1], [0], [0], [1], [0, 0, 1, 1], [], []>} : vector<224x256xbf16>, vector<256x128xbf16>, vector<224x128xf32> -> vector<224x128xf32>
    %34 = arith.addf %30, %33 : vector<224x128xf32>
    %c49 = arith.constant 49 : index
    %c0_35 = arith.constant 0 : index
    %35 = vector.load %arg9[%c49, %c0_35] : memref<280x256xbf16, #tpu.memory_space<vmem>>, vector<224x256xbf16>
    %c1792 = arith.constant 1792 : index
    %c0_36 = arith.constant 0 : index
    %36 = vector.load %arg5[%c1792, %c0_36] : memref<2304x128xbf16, #tpu.memory_space<vmem>>, vector<256x128xbf16>
    %cst_37 = arith.constant dense<0.000000e+00> : vector<224x128xf32>
    %37 = tpu.matmul %35, %36, %cst_37 {dimension_numbers = #tpu.dot_dimension_numbers<[1], [0], [0], [1], [0, 0, 1, 1], [], []>} : vector<224x256xbf16>, vector<256x128xbf16>, vector<224x128xf32> -> vector<224x128xf32>
    %38 = arith.addf %34, %37 : vector<224x128xf32>
    %c50 = arith.constant 50 : index
    %c0_38 = arith.constant 0 : index
    %39 = vector.load %arg9[%c50, %c0_38] : memref<280x256xbf16, #tpu.memory_space<vmem>>, vector<224x256xbf16>
    %c2048 = arith.constant 2048 : index
    %c0_39 = arith.constant 0 : index
    %40 = vector.load %arg5[%c2048, %c0_39] : memref<2304x128xbf16, #tpu.memory_space<vmem>>, vector<256x128xbf16>
    %cst_40 = arith.constant dense<0.000000e+00> : vector<224x128xf32>
    %41 = tpu.matmul %39, %40, %cst_40 {dimension_numbers = #tpu.dot_dimension_numbers<[1], [0], [0], [1], [0, 0, 1, 1], [], []>} : vector<224x256xbf16>, vector<256x128xbf16>, vector<224x128xf32> -> vector<224x128xf32>
    %42 = arith.addf %38, %41 : vector<224x128xf32>
    %c0_41 = arith.constant 0 : index
    %c0_42 = arith.constant 0 : index
    %43 = vector.load %arg6[%c0_41, %c0_42] : memref<1x128xf32, #tpu.memory_space<vmem>>, vector<1x128xf32>
    %44 = vector.broadcast %43 : vector<1x128xf32> to vector<224x128xf32>
    %45 = arith.addf %42, %44 : vector<224x128xf32>
    %cst_43 = arith.constant 0.000000e+00 : f32
    %46 = vector.broadcast %cst_43 : f32 to vector<224x128xf32>
    %47 = arith.maximumf %45, %46 : vector<224x128xf32>
    %c0_44 = arith.constant 0 : index
    %c0_45 = arith.constant 0 : index
    %48 = vector.load %arg7[%c0_44, %c0_45] : memref<224x1xf32, #tpu.memory_space<vmem>>, vector<224x1xf32>
    %49 = vector.broadcast %48 : vector<224x1xf32> to vector<224x128xf32>
    %50 = arith.mulf %47, %49 : vector<224x128xf32>
    %51 = arith.truncf %50 : vector<224x128xf32> to vector<224x128xbf16>
    %c0_46 = arith.constant 0 : index
    %c0_47 = arith.constant 0 : index
    %52 = vector.load %arg8[%c0_46, %c0_47] : memref<224x128xbf16, #tpu.memory_space<vmem>>, vector<224x128xbf16>
    tpu.vector_store %arg8[%c0_46, %c0_47], %51 {strides = array<i32>} : memref<224x128xbf16, #tpu.memory_space<vmem>>, vector<224x128xbf16>,
    return
  }
  func.func @transform_0(%arg0: i32) -> (i32, i32) {
    %c0_i32 = arith.constant 0 : i32
    %c0_i32_0 = arith.constant 0 : i32
    return %arg0, %c0_i32 : i32, i32
  }
  func.func @transform_1(%arg0: i32) -> (i32, i32) {
    %c1_i32 = arith.constant 1 : i32
    %0 = arith.addi %arg0, %c1_i32 : i32
    %c5_i32 = arith.constant 5 : i32
    %c0_i32 = arith.constant 0 : i32
    %1 = arith.cmpi eq, %c5_i32, %c0_i32 : i32
    %c1_i32_0 = arith.constant 1 : i32
    %2 = arith.select %1, %c1_i32_0, %c5_i32 : i32
    %3 = arith.remsi %0, %2 : i32
    %c0_i32_1 = arith.constant 0 : i32
    %4 = arith.cmpi ne, %3, %c0_i32_1 : i32
    %c0_i32_2 = arith.constant 0 : i32
    %5 = arith.cmpi slt, %3, %c0_i32_2 : i32
    %c0_i32_3 = arith.constant 0 : i32
    %6 = arith.cmpi slt, %2, %c0_i32_3 : i32
    %7 = arith.xori %5, %6 : i1
    %8 = arith.andi %7, %4 : i1
    %9 = arith.addi %3, %2 : i32
    %10 = arith.select %8, %9, %3 : i32
    %c4_i32 = arith.constant 4 : i32
    %11 = arith.muli %10, %c4_i32 : i32
    %c0_i32_4 = arith.constant 0 : i32
    %c0_i32_5 = arith.constant 0 : i32
    return %11, %c0_i32_4 : i32, i32
  }
  func.func @transform_2(%arg0: i32) -> (i32, i32) {
    %c0_i32 = arith.constant 0 : i32
    %c0_i32_0 = arith.constant 0 : i32
    return %arg0, %c0_i32 : i32, i32
  }
  func.func @transform_3(%arg0: i32) -> (i32, i32) {
    %c1_i32 = arith.constant 1 : i32
    %0 = arith.addi %arg0, %c1_i32 : i32
    %c5_i32 = arith.constant 5 : i32
    %c0_i32 = arith.constant 0 : i32
    %1 = arith.cmpi eq, %c5_i32, %c0_i32 : i32
    %c1_i32_0 = arith.constant 1 : i32
    %2 = arith.select %1, %c1_i32_0, %c5_i32 : i32
    %3 = arith.remsi %0, %2 : i32
    %c0_i32_1 = arith.constant 0 : i32
    %4 = arith.cmpi ne, %3, %c0_i32_1 : i32
    %c0_i32_2 = arith.constant 0 : i32
    %5 = arith.cmpi slt, %3, %c0_i32_2 : i32
    %c0_i32_3 = arith.constant 0 : i32
    %6 = arith.cmpi slt, %2, %c0_i32_3 : i32
    %7 = arith.xori %5, %6 : i1
    %8 = arith.andi %7, %4 : i1
    %9 = arith.addi %3, %2 : i32
    %10 = arith.select %8, %9, %3 : i32
    %c4_i32 = arith.constant 4 : i32
    %11 = arith.muli %10, %c4_i32 : i32
    %c0_i32_4 = arith.constant 0 : i32
    %c0_i32_5 = arith.constant 0 : i32
    return %11, %c0_i32_4 : i32, i32
  }
  func.func @transform_4(%arg0: i32) -> (i32, i32) {
    %c0_i32 = arith.constant 0 : i32
    %c0_i32_0 = arith.constant 0 : i32
    %c0_i32_1 = arith.constant 0 : i32
    return %c0_i32, %c0_i32_0 : i32, i32
  }
  func.func @transform_5(%arg0: i32) -> (i32, i32) {
    %c0_i32 = arith.constant 0 : i32
    %c0_i32_0 = arith.constant 0 : i32
    %c0_i32_1 = arith.constant 0 : i32
    return %c0_i32, %c0_i32_0 : i32, i32
  }
  func.func @transform_6(%arg0: i32) -> (i32, i32) {
    %c0_i32 = arith.constant 0 : i32
    %c0_i32_0 = arith.constant 0 : i32
    return %arg0, %c0_i32 : i32, i32
  }
  func.func @transform_7(%arg0: i32) -> (i32, i32) {
    %c0_i32 = arith.constant 0 : i32
    %c0_i32_0 = arith.constant 0 : i32
    return %arg0, %c0_i32 : i32, i32
  }
}

module attributes {stable_mosaic.version = 11 : i64} {
  func.func @_conv3x3_kernel(%arg0: i32, %arg1: memref<224x128xbf16, #tpu.memory_space<vmem>>, %arg2: memref<56x128xbf16, #tpu.memory_space<vmem>>, %arg3: memref<1152x128xbf16, #tpu.memory_space<vmem>>, %arg4: memref<1x128xf32, #tpu.memory_space<vmem>>, %arg5: memref<224x1xf32, #tpu.memory_space<vmem>>, %arg6: memref<224x128xf32, #tpu.memory_space<vmem>>, %arg7: memref<280x128xbf16, #tpu.memory_space<vmem>>) attributes {dimension_semantics = [#tpu.dimension_semantics<parallel>], iteration_bounds = array<i64: 5>, scalar_prefetch = 0 : i64, scratch_operands = 1 : i64, tpu.core_type = #tpu.core_type<tc>, window_params = [{transform_indices = @transform_0, window_bounds = array<i64: 224, 128>}, {transform_indices = @transform_1, window_bounds = array<i64: 56, 128>}, {pipeline_mode = #tpu.pipeline_mode<synchronous>, transform_indices = @transform_2, window_bounds = array<i64: 1152, 128>}, {pipeline_mode = #tpu.pipeline_mode<synchronous>, transform_indices = @transform_3, window_bounds = array<i64: 1, 128>}, {transform_indices = @transform_4, window_bounds = array<i64: 224, 1>}, {transform_indices = @transform_5, window_bounds = array<i64: 224, 128>}]} {
    %c0 = arith.constant 0 : index
    %c0_0 = arith.constant 0 : index
    %0 = vector.load %arg1[%c0, %c0_0] : memref<224x128xbf16, #tpu.memory_space<vmem>>, vector<224x128xbf16>
    %c0_1 = arith.constant 0 : index
    %c0_2 = arith.constant 0 : index
    %1 = vector.load %arg7[%c0_1, %c0_2] : memref<280x128xbf16, #tpu.memory_space<vmem>>, vector<224x128xbf16>
    tpu.vector_store %arg7[%c0_1, %c0_2], %0 {strides = array<i32>} : memref<280x128xbf16, #tpu.memory_space<vmem>>, vector<224x128xbf16>,
    %c0_3 = arith.constant 0 : index
    %c0_4 = arith.constant 0 : index
    %2 = vector.load %arg2[%c0_3, %c0_4] : memref<56x128xbf16, #tpu.memory_space<vmem>>, vector<56x128xbf16>
    %c224 = arith.constant 224 : index
    %c0_5 = arith.constant 0 : index
    %3 = vector.load %arg7[%c224, %c0_5] : memref<280x128xbf16, #tpu.memory_space<vmem>>, vector<56x128xbf16>
    tpu.vector_store %arg7[%c224, %c0_5], %2 {strides = array<i32>} : memref<280x128xbf16, #tpu.memory_space<vmem>>, vector<56x128xbf16>,
    %c0_6 = arith.constant 0 : index
    %c0_7 = arith.constant 0 : index
    %4 = vector.load %arg7[%c0_6, %c0_7] : memref<280x128xbf16, #tpu.memory_space<vmem>>, vector<224x128xbf16>
    %c0_8 = arith.constant 0 : index
    %c0_9 = arith.constant 0 : index
    %5 = vector.load %arg3[%c0_8, %c0_9] : memref<1152x128xbf16, #tpu.memory_space<vmem>>, vector<128x128xbf16>
    %cst = arith.constant dense<0.000000e+00> : vector<224x128xf32>
    %6 = tpu.matmul %4, %5, %cst {dimension_numbers = #tpu.dot_dimension_numbers<[1], [0], [0], [1], [0, 0, 1, 1], [], []>} : vector<224x128xbf16>, vector<128x128xbf16>, vector<224x128xf32> -> vector<224x128xf32>
    %c1 = arith.constant 1 : index
    %c0_10 = arith.constant 0 : index
    %7 = vector.load %arg7[%c1, %c0_10] : memref<280x128xbf16, #tpu.memory_space<vmem>>, vector<224x128xbf16>
    %c128 = arith.constant 128 : index
    %c0_11 = arith.constant 0 : index
    %8 = vector.load %arg3[%c128, %c0_11] : memref<1152x128xbf16, #tpu.memory_space<vmem>>, vector<128x128xbf16>
    %cst_12 = arith.constant dense<0.000000e+00> : vector<224x128xf32>
    %9 = tpu.matmul %7, %8, %cst_12 {dimension_numbers = #tpu.dot_dimension_numbers<[1], [0], [0], [1], [0, 0, 1, 1], [], []>} : vector<224x128xbf16>, vector<128x128xbf16>, vector<224x128xf32> -> vector<224x128xf32>
    %10 = arith.addf %6, %9 : vector<224x128xf32>
    %c2 = arith.constant 2 : index
    %c0_13 = arith.constant 0 : index
    %11 = vector.load %arg7[%c2, %c0_13] : memref<280x128xbf16, #tpu.memory_space<vmem>>, vector<224x128xbf16>
    %c256 = arith.constant 256 : index
    %c0_14 = arith.constant 0 : index
    %12 = vector.load %arg3[%c256, %c0_14] : memref<1152x128xbf16, #tpu.memory_space<vmem>>, vector<128x128xbf16>
    %cst_15 = arith.constant dense<0.000000e+00> : vector<224x128xf32>
    %13 = tpu.matmul %11, %12, %cst_15 {dimension_numbers = #tpu.dot_dimension_numbers<[1], [0], [0], [1], [0, 0, 1, 1], [], []>} : vector<224x128xbf16>, vector<128x128xbf16>, vector<224x128xf32> -> vector<224x128xf32>
    %14 = arith.addf %10, %13 : vector<224x128xf32>
    %c24 = arith.constant 24 : index
    %c0_16 = arith.constant 0 : index
    %15 = vector.load %arg7[%c24, %c0_16] : memref<280x128xbf16, #tpu.memory_space<vmem>>, vector<224x128xbf16>
    %c384 = arith.constant 384 : index
    %c0_17 = arith.constant 0 : index
    %16 = vector.load %arg3[%c384, %c0_17] : memref<1152x128xbf16, #tpu.memory_space<vmem>>, vector<128x128xbf16>
    %cst_18 = arith.constant dense<0.000000e+00> : vector<224x128xf32>
    %17 = tpu.matmul %15, %16, %cst_18 {dimension_numbers = #tpu.dot_dimension_numbers<[1], [0], [0], [1], [0, 0, 1, 1], [], []>} : vector<224x128xbf16>, vector<128x128xbf16>, vector<224x128xf32> -> vector<224x128xf32>
    %18 = arith.addf %14, %17 : vector<224x128xf32>
    %c25 = arith.constant 25 : index
    %c0_19 = arith.constant 0 : index
    %19 = vector.load %arg7[%c25, %c0_19] : memref<280x128xbf16, #tpu.memory_space<vmem>>, vector<224x128xbf16>
    %c512 = arith.constant 512 : index
    %c0_20 = arith.constant 0 : index
    %20 = vector.load %arg3[%c512, %c0_20] : memref<1152x128xbf16, #tpu.memory_space<vmem>>, vector<128x128xbf16>
    %cst_21 = arith.constant dense<0.000000e+00> : vector<224x128xf32>
    %21 = tpu.matmul %19, %20, %cst_21 {dimension_numbers = #tpu.dot_dimension_numbers<[1], [0], [0], [1], [0, 0, 1, 1], [], []>} : vector<224x128xbf16>, vector<128x128xbf16>, vector<224x128xf32> -> vector<224x128xf32>
    %22 = arith.addf %18, %21 : vector<224x128xf32>
    %c26 = arith.constant 26 : index
    %c0_22 = arith.constant 0 : index
    %23 = vector.load %arg7[%c26, %c0_22] : memref<280x128xbf16, #tpu.memory_space<vmem>>, vector<224x128xbf16>
    %c640 = arith.constant 640 : index
    %c0_23 = arith.constant 0 : index
    %24 = vector.load %arg3[%c640, %c0_23] : memref<1152x128xbf16, #tpu.memory_space<vmem>>, vector<128x128xbf16>
    %cst_24 = arith.constant dense<0.000000e+00> : vector<224x128xf32>
    %25 = tpu.matmul %23, %24, %cst_24 {dimension_numbers = #tpu.dot_dimension_numbers<[1], [0], [0], [1], [0, 0, 1, 1], [], []>} : vector<224x128xbf16>, vector<128x128xbf16>, vector<224x128xf32> -> vector<224x128xf32>
    %26 = arith.addf %22, %25 : vector<224x128xf32>
    %c48 = arith.constant 48 : index
    %c0_25 = arith.constant 0 : index
    %27 = vector.load %arg7[%c48, %c0_25] : memref<280x128xbf16, #tpu.memory_space<vmem>>, vector<224x128xbf16>
    %c768 = arith.constant 768 : index
    %c0_26 = arith.constant 0 : index
    %28 = vector.load %arg3[%c768, %c0_26] : memref<1152x128xbf16, #tpu.memory_space<vmem>>, vector<128x128xbf16>
    %cst_27 = arith.constant dense<0.000000e+00> : vector<224x128xf32>
    %29 = tpu.matmul %27, %28, %cst_27 {dimension_numbers = #tpu.dot_dimension_numbers<[1], [0], [0], [1], [0, 0, 1, 1], [], []>} : vector<224x128xbf16>, vector<128x128xbf16>, vector<224x128xf32> -> vector<224x128xf32>
    %30 = arith.addf %26, %29 : vector<224x128xf32>
    %c49 = arith.constant 49 : index
    %c0_28 = arith.constant 0 : index
    %31 = vector.load %arg7[%c49, %c0_28] : memref<280x128xbf16, #tpu.memory_space<vmem>>, vector<224x128xbf16>
    %c896 = arith.constant 896 : index
    %c0_29 = arith.constant 0 : index
    %32 = vector.load %arg3[%c896, %c0_29] : memref<1152x128xbf16, #tpu.memory_space<vmem>>, vector<128x128xbf16>
    %cst_30 = arith.constant dense<0.000000e+00> : vector<224x128xf32>
    %33 = tpu.matmul %31, %32, %cst_30 {dimension_numbers = #tpu.dot_dimension_numbers<[1], [0], [0], [1], [0, 0, 1, 1], [], []>} : vector<224x128xbf16>, vector<128x128xbf16>, vector<224x128xf32> -> vector<224x128xf32>
    %34 = arith.addf %30, %33 : vector<224x128xf32>
    %c50 = arith.constant 50 : index
    %c0_31 = arith.constant 0 : index
    %35 = vector.load %arg7[%c50, %c0_31] : memref<280x128xbf16, #tpu.memory_space<vmem>>, vector<224x128xbf16>
    %c1024 = arith.constant 1024 : index
    %c0_32 = arith.constant 0 : index
    %36 = vector.load %arg3[%c1024, %c0_32] : memref<1152x128xbf16, #tpu.memory_space<vmem>>, vector<128x128xbf16>
    %cst_33 = arith.constant dense<0.000000e+00> : vector<224x128xf32>
    %37 = tpu.matmul %35, %36, %cst_33 {dimension_numbers = #tpu.dot_dimension_numbers<[1], [0], [0], [1], [0, 0, 1, 1], [], []>} : vector<224x128xbf16>, vector<128x128xbf16>, vector<224x128xf32> -> vector<224x128xf32>
    %38 = arith.addf %34, %37 : vector<224x128xf32>
    %c0_34 = arith.constant 0 : index
    %c0_35 = arith.constant 0 : index
    %39 = vector.load %arg4[%c0_34, %c0_35] : memref<1x128xf32, #tpu.memory_space<vmem>>, vector<1x128xf32>
    %40 = vector.broadcast %39 : vector<1x128xf32> to vector<224x128xf32>
    %41 = arith.addf %38, %40 : vector<224x128xf32>
    %cst_36 = arith.constant 0.000000e+00 : f32
    %42 = vector.broadcast %cst_36 : f32 to vector<224x128xf32>
    %43 = arith.maximumf %41, %42 : vector<224x128xf32>
    %c0_37 = arith.constant 0 : index
    %c0_38 = arith.constant 0 : index
    %44 = vector.load %arg5[%c0_37, %c0_38] : memref<224x1xf32, #tpu.memory_space<vmem>>, vector<224x1xf32>
    %45 = vector.broadcast %44 : vector<224x1xf32> to vector<224x128xf32>
    %46 = arith.mulf %43, %45 : vector<224x128xf32>
    %c0_39 = arith.constant 0 : index
    %c0_40 = arith.constant 0 : index
    %47 = vector.load %arg6[%c0_39, %c0_40] : memref<224x128xf32, #tpu.memory_space<vmem>>, vector<224x128xf32>
    tpu.vector_store %arg6[%c0_39, %c0_40], %46 {strides = array<i32>} : memref<224x128xf32, #tpu.memory_space<vmem>>, vector<224x128xf32>,
    return
  }
  func.func @transform_0(%arg0: i32) -> (i32, i32) {
    %c0_i32 = arith.constant 0 : i32
    %c0_i32_0 = arith.constant 0 : i32
    return %arg0, %c0_i32 : i32, i32
  }
  func.func @transform_1(%arg0: i32) -> (i32, i32) {
    %c1_i32 = arith.constant 1 : i32
    %0 = arith.addi %arg0, %c1_i32 : i32
    %c5_i32 = arith.constant 5 : i32
    %c0_i32 = arith.constant 0 : i32
    %1 = arith.cmpi eq, %c5_i32, %c0_i32 : i32
    %c1_i32_0 = arith.constant 1 : i32
    %2 = arith.select %1, %c1_i32_0, %c5_i32 : i32
    %3 = arith.remsi %0, %2 : i32
    %c0_i32_1 = arith.constant 0 : i32
    %4 = arith.cmpi ne, %3, %c0_i32_1 : i32
    %c0_i32_2 = arith.constant 0 : i32
    %5 = arith.cmpi slt, %3, %c0_i32_2 : i32
    %c0_i32_3 = arith.constant 0 : i32
    %6 = arith.cmpi slt, %2, %c0_i32_3 : i32
    %7 = arith.xori %5, %6 : i1
    %8 = arith.andi %7, %4 : i1
    %9 = arith.addi %3, %2 : i32
    %10 = arith.select %8, %9, %3 : i32
    %c4_i32 = arith.constant 4 : i32
    %11 = arith.muli %10, %c4_i32 : i32
    %c0_i32_4 = arith.constant 0 : i32
    %c0_i32_5 = arith.constant 0 : i32
    return %11, %c0_i32_4 : i32, i32
  }
  func.func @transform_2(%arg0: i32) -> (i32, i32) {
    %c0_i32 = arith.constant 0 : i32
    %c0_i32_0 = arith.constant 0 : i32
    %c0_i32_1 = arith.constant 0 : i32
    return %c0_i32, %c0_i32_0 : i32, i32
  }
  func.func @transform_3(%arg0: i32) -> (i32, i32) {
    %c0_i32 = arith.constant 0 : i32
    %c0_i32_0 = arith.constant 0 : i32
    %c0_i32_1 = arith.constant 0 : i32
    return %c0_i32, %c0_i32_0 : i32, i32
  }
  func.func @transform_4(%arg0: i32) -> (i32, i32) {
    %c0_i32 = arith.constant 0 : i32
    %c0_i32_0 = arith.constant 0 : i32
    return %arg0, %c0_i32 : i32, i32
  }
  func.func @transform_5(%arg0: i32) -> (i32, i32) {
    %c0_i32 = arith.constant 0 : i32
    %c0_i32_0 = arith.constant 0 : i32
    return %arg0, %c0_i32 : i32, i32
  }
}

</mosaic_0001>

<llo_original>
// kernel: up_forward.3
$region0: #{up_forward.3}
  #allocation0 [shape = 'u32[]', space=smem, size = 0x4, offset = 0x4, fixed_abs, tag = 'smem constant byte address 0x4 - core index']
  #allocation1 [shape = 'u32[144,128]{1,0:T(1,128)}', space=vmem, size = 0x12000, scoped, tag = 'internal scratch']
  %s0 = inlined_call_operand.vmem [shape: bf16[128,128], index: 0, kind: input, shape index: {}]
  %s1 = inlined_call_operand.vmem [shape: bf16[128,512], index: 1, kind: input, shape index: {}]
  %s2 = inlined_call_operand.vmem [shape: f32[1,512], index: 2, kind: input, shape index: {}]
  %s3 = inlined_call_operand.vmem [shape: bf16[128,512], index: 3, kind: output, shape index: {}]
  %s4 = sld [smem:[#allocation0]]
  $region45: #{up_forward.3} parent=0
    _
  %s6 = ssub.s32 1, %s4
  %s7 = scalar_select 0, %s6, %s4
  loop: start=0, step=1, limit=4
  $region2: #{up_forward.3} parent=0 // loop_pre_header
    _
  $region3: #{up_forward.3} parent=0 // loop_header
    %s9 = sphi 0, %s13
    %p10 = scmp.ge.s32.totalorder %s9, 4
    %s19 = sphi 0, %s21
    %s22 = sphi 0, %s19
    %s23 = sphi 0, %s22
    %s39 = sphi 0, %s23
    %s43 = sphi 0, %s43
    %s45 = sphi 0, %s43
    %s46 = sphi 0, %s45
    %s60 = sphi 0, %s46
    %s64 = sphi 0, %s64
    %s66 = sphi 0, %s64
    %s67 = sphi 0, %s66
    %s81 = sphi 0, %s67
    %s87 = sphi 0, %s89
    %s90 = sphi 0, %s87
    %s91 = sphi 0, %s90
    %s107 = sphi 0, %s91
  $region4: #{up_forward.3} parent=0 // loop_header_branch
    %12 = sbr.rel (%p10) target = $region8
  $region5: #{up_forward.3} parent=0 // loop_body
    %s14 = ssub.s32 %s9, 1
    %s15 = ssub.s32 %s9, 2
    %s16 = sadd.s32 %s9, 1
    %s17 = ssub.s32 %s9, %s16
    %p18 = scmp.eq.s32.totalorder %s17, 0
    %s20 = sadd.s32 %s19, 1
    %s21 = scalar_select %p18, %s19, %s20
    %p24 = pneg %p18
    %p25 = scmp.eq.s32.totalorder %s9, 1
    %p26 = por %p24, %p25
    %p27 = scmp.ne.s32.totalorder %s19, %s22
    %p28 = scmp.eq.s32.totalorder %s9, 0
    %p29 = por %p27, %p28
    %p30 = scmp.ne.s32.totalorder %s19, %s22
    %p31 = scmp.eq.s32.totalorder %s14, 1
    %p32 = por %p30, %p31
    %p33 = scmp.ne.s32.totalorder %s22, %s23
    %p34 = scmp.eq.s32.totalorder %s14, 0
    %p35 = por %p33, %p34
    %p36 = scmp.ne.s32.totalorder %s22, %s23
    %p37 = scmp.eq.s32.totalorder %s15, 1
    %p38 = por %p36, %p37
    %p40 = scmp.ne.s32.totalorder %s23, %s39
    %p41 = scmp.eq.s32.totalorder %s15, 0
    %p42 = por %p40, %p41
    %s44 = sadd.s32 %s43, 1
    %p47 = scmp.eq.s32.totalorder %s9, 1
    %p48 = scmp.ne.s32.totalorder %s43, %s45
    %p49 = scmp.eq.s32.totalorder %s9, 0
    %p50 = por %p48, %p49
    %p51 = scmp.ne.s32.totalorder %s43, %s45
    %p52 = scmp.eq.s32.totalorder %s14, 1
    %p53 = por %p51, %p52
    %p54 = scmp.ne.s32.totalorder %s45, %s46
    %p55 = scmp.eq.s32.totalorder %s14, 0
    %p56 = por %p54, %p55
    %p57 = scmp.ne.s32.totalorder %s45, %s46
    %p58 = scmp.eq.s32.totalorder %s15, 1
    %p59 = por %p57, %p58
    %p61 = scmp.ne.s32.totalorder %s46, %s60
    %p62 = scmp.eq.s32.totalorder %s15, 0
    %p63 = por %p61, %p62
    %s65 = sadd.s32 %s64, 1
    %p68 = scmp.eq.s32.totalorder %s9, 1
    %p69 = scmp.ne.s32.totalorder %s64, %s66
    %p70 = scmp.eq.s32.totalorder %s9, 0
    %p71 = por %p69, %p70
    %p72 = scmp.ne.s32.totalorder %s64, %s66
    %p73 = scmp.eq.s32.totalorder %s14, 1
    %p74 = por %p72, %p73
    %p75 = scmp.ne.s32.totalorder %s66, %s67
    %p76 = scmp.eq.s32.totalorder %s14, 0
    %p77 = por %p75, %p76
    %p78 = scmp.ne.s32.totalorder %s66, %s67
    %p79 = scmp.eq.s32.totalorder %s15, 1
    %p80 = por %p78, %p79
    %p82 = scmp.ne.s32.totalorder %s67, %s81
    %p83 = scmp.eq.s32.totalorder %s15, 0
    %p84 = por %p82, %p83
    %s85 = ssub.s32 %s9, %s16
    %p86 = scmp.eq.s32.totalorder %s85, 0
    %s88 = sadd.s32 %s87, 1
    %s89 = scalar_select %p86, %s87, %s88
    %p92 = pneg %p86
    %p93 = scmp.eq.s32.totalorder %s9, 1
    %p94 = por %p92, %p93
    %p95 = scmp.ne.s32.totalorder %s87, %s90
    %p96 = scmp.eq.s32.totalorder %s9, 0
    %p97 = por %p95, %p96
    %p98 = scmp.ne.s32.totalorder %s87, %s90
    %p99 = scmp.eq.s32.totalorder %s14, 1
    %p100 = por %p98, %p99
    %p101 = scmp.ne.s32.totalorder %s90, %s91
    %p102 = scmp.eq.s32.totalorder %s14, 0
    %p103 = por %p101, %p102
    %p104 = scmp.ne.s32.totalorder %s90, %s91
    %p105 = scmp.eq.s32.totalorder %s15, 1
    %p106 = por %p104, %p105
    %p108 = scmp.ne.s32.totalorder %s91, %s107
    %p109 = scmp.eq.s32.totalorder %s15, 0
    %p110 = por %p108, %p109
    %p111 = scmp.le.s32.totalorder 1, %s9
    %p112 = scmp.lt.s32.totalorder %s9, 3
    %p113 = pnand %p111, %p112
    %p114 = pneg %p113
    // Predicated region
    $region9: #{up_forward.3} parent=5 // pred_check
      _
    $region10: #{up_forward.3} parent=5 // pred_check_branch
      %116 = sbr.rel (%p113) target = $region12
    $region11: #{up_forward.3} parent=5 // pred_region
      %s117 = ssub.s32 %s9, 1
      // Predicated region
      $region13: #{up_forward.3} parent=11 // pred_check
        %p118 = pneg %p56
      $region14: #{up_forward.3} parent=11 // pred_check_branch
        %120 = sbr.rel (%p118) target = $region16
      $region15: #{up_forward.3} parent=11 // pred_region
        _
      $region16: #{up_forward.3} parent=11 // pred_fallthru
        _
      // Predicated region
      $region17: #{up_forward.3} parent=11 // pred_check
        %p121 = pneg %p77
      $region18: #{up_forward.3} parent=11 // pred_check_branch
        %123 = sbr.rel (%p121) target = $region20
      $region19: #{up_forward.3} parent=11 // pred_region
        _
      $region20: #{up_forward.3} parent=11 // pred_fallthru
        _
    $region12: #{up_forward.3} parent=5 // pred_fallthru
      _
    %p124 = scmp.lt.s32.totalorder %s9, 2
    // Predicated region
    $region21: #{up_forward.3} parent=5 // pred_check
      %p125 = pneg %p124
    $region22: #{up_forward.3} parent=5 // pred_check_branch
      %127 = sbr.rel (%p125) target = $region24
    $region23: #{up_forward.3} parent=5 // pred_region
      // Predicated region
      $region25: #{up_forward.3} parent=23 // pred_check
        %p128 = pneg %p29
      $region26: #{up_forward.3} parent=23 // pred_check_branch
        %130 = sbr.rel (%p128) target = $region28
      $region27: #{up_forward.3} parent=23 // pred_region
        %s131 = smul.u32 8, %s9
        %p132 = scmp.lt.s32.totalorder %s131, 15
        %s133 = scalar_select %p132, %s131, 15
        %s134 = smul.addr %s133, 4
        %s135 = scalar_lea.vmem %s0, %s134
        %s136 = smul.u32 8, %s9
      $region28: #{up_forward.3} parent=23 // pred_fallthru
        _
    $region24: #{up_forward.3} parent=5 // pred_fallthru
      _
    %p137 = scmp.le.s32.totalorder 1, %s9
    %p138 = scmp.lt.s32.totalorder %s9, 3
    %p139 = pnand %p137, %p138
    %p140 = pneg %p139
    // Predicated region
    $region29: #{up_forward.3} parent=5 // pred_check
      _
    $region30: #{up_forward.3} parent=5 // pred_check_branch
      %142 = sbr.rel (%p139) target = $region32
    $region31: #{up_forward.3} parent=5 // pred_region
      %s143 = ssub.s32 %s9, 1
      %s144 = smul.u32 8, %s14
      %p145 = scmp.lt.s32.totalorder %s144, 15
      %s146 = scalar_select %p145, %s144, 15
      %s147 = smul.addr %s146, 4
      %s148 = scalar_lea.vmem %s0, %s147
      %p149 = pneg %p35
      %p150 = pneg %p32
      %p151 = pneg %p56
      %p152 = pneg %p53
      %p153 = pneg %p77
      %p154 = pneg %p74
      %p155 = pneg %p103
      %p156 = pneg %p100
      %s157 = smul.u32 8, %s14
      %p158 = scmp.lt.s32.totalorder %s157, 15
      %s159 = scalar_select %p158, %s157, 15
      %s160 = smul.addr %s159, 4
      %s161 = smul.addr %s160, 4
      %s162 = scalar_lea.vmem %s3, %s161
      %s163 = smul.u32 8, %s14
      %p164 = scmp.lt.s32.totalorder %s163, 15
      %s165 = scalar_select %p164, %s163, 15
      %s166 = smul.addr %s165, 4
      %s167 = scalar_lea.vmem %s0, %s166
      %s168 = smul.u32 8, %s14
      %s169 = smul.u32 8, %s14
      %p170 = scmp.lt.s32.totalorder %s169, 15
      %s171 = scalar_select %p170, %s169, 15
      %s172 = smul.addr %s171, 4
      %s173 = smul.addr %s172, 4
      %s174 = scalar_lea.vmem %s3, %s173
      %s175 = smul.u32 8, %s14
      %v177 = vld [vmem:[%s167] sm:$0xf]
      %v178 = vld [vmem:[%s167 + $0x4] sm:$0xf]
      %v179 = vld [vmem:[%s167 + $0x8] sm:$0xf]
      %v180 = vld [vmem:[%s167 + $0xc] sm:$0xf]
      %v181 = vld [vmem:[%s167 + $0x10] sm:$0xf]
      %v182 = vld [vmem:[%s167 + $0x14] sm:$0xf]
      %v183 = vld [vmem:[%s167 + $0x18] sm:$0xf]
      %v184 = vld [vmem:[%s167 + $0x1c] sm:$0xf]
      %v185 = vld [vmem:[%s1] sm:$0xff]
      %v186 = vld [vmem:[%s1 + $0x8] sm:$0xff]
      %v187 = vld [vmem:[%s1 + $0x10] sm:$0xff]
      %v188 = vld [vmem:[%s1 + $0x18] sm:$0xff]
      %v189 = vld [vmem:[%s1 + $0x20] sm:$0xff]
      %v190 = vld [vmem:[%s1 + $0x28] sm:$0xff]
      %v191 = vld [vmem:[%s1 + $0x30] sm:$0xff]
      %v192 = vld [vmem:[%s1 + $0x38] sm:$0xff]
      %v193 = vld [vmem:[%s1 + $0x40] sm:$0xff]
      %v194 = vld [vmem:[%s1 + $0x48] sm:$0xff]
      %v195 = vld [vmem:[%s1 + $0x50] sm:$0xff]
      %v196 = vld [vmem:[%s1 + $0x58] sm:$0xff]
      %v197 = vld [vmem:[%s1 + $0x60] sm:$0xff]
      %v198 = vld [vmem:[%s1 + $0x68] sm:$0xff]
      %v199 = vld [vmem:[%s1 + $0x70] sm:$0xff]
      %v200 = vld [vmem:[%s1 + $0x78] sm:$0xff]
      %v201 = vld [vmem:[%s1 + $0x80] sm:$0xff]
      %v202 = vld [vmem:[%s1 + $0x88] sm:$0xff]
      %v203 = vld [vmem:[%s1 + $0x90] sm:$0xff]
      %v204 = vld [vmem:[%s1 + $0x98] sm:$0xff]
      %v205 = vld [vmem:[%s1 + $0xa0] sm:$0xff]
      %v206 = vld [vmem:[%s1 + $0xa8] sm:$0xff]
      %v207 = vld [vmem:[%s1 + $0xb0] sm:$0xff]
      %v208 = vld [vmem:[%s1 + $0xb8] sm:$0xff]
      %v209 = vld [vmem:[%s1 + $0xc0] sm:$0xff]
      %v210 = vld [vmem:[%s1 + $0xc8] sm:$0xff]
      %v211 = vld [vmem:[%s1 + $0xd0] sm:$0xff]
      %v212 = vld [vmem:[%s1 + $0xd8] sm:$0xff]
      %v213 = vld [vmem:[%s1 + $0xe0] sm:$0xff]
      %v214 = vld [vmem:[%s1 + $0xe8] sm:$0xff]
      %v215 = vld [vmem:[%s1 + $0xf0] sm:$0xff]
      %v216 = vld [vmem:[%s1 + $0xf8] sm:$0xff]
      %v217 = vld [vmem:[%s2] sm:$0xf]
      %v219 = vlaneseq
      %v220 = vshrl.u32 %v219, 7
      %v221 = vsub.s32 0, %v220
      %v222 = vrot.slane %v217, %v221
      %v223 = vlaneseq
      %v224 = vshrl.u32 %v223, 7
      %v225 = vsub.s32 1, %v224
      %v226 = vrot.slane %v217, %v225
      %v227 = vlaneseq
      %v228 = vshrl.u32 %v227, 7
      %v229 = vsub.s32 2, %v228
      %v230 = vrot.slane %v217, %v229
      %v231 = vlaneseq
      %v232 = vshrl.u32 %v231, 7
      %v233 = vsub.s32 3, %v232
      %v234 = vrot.slane %v217, %v233
      %v247 = vunpack.c.l.b16 %v177
      %v248 = vunpack.c.l.b16 %v178
      %v249 = vunpack.c.l.b16 %v179
      %v250 = vunpack.c.l.b16 %v180
      %v251 = vunpack.c.l.b16 %v181
      %v252 = vunpack.c.l.b16 %v182
      %v253 = vunpack.c.l.b16 %v183
      %v254 = vunpack.c.l.b16 %v184
      %v255 = vpack.c.b16 %v248, %v247
      %v256 = vpack.c.b16 %v250, %v249
      %v257 = vpack.c.b16 %v252, %v251
      %v258 = vpack.c.b16 %v254, %v253
      %v295 = vunpack.c.l.b16 %v185
      %v296 = vunpack.c.h.b16 %v185
      %v297 = vunpack.c.l.b16 %v186
      %v298 = vunpack.c.h.b16 %v186
      %v299 = vunpack.c.l.b16 %v187
      %v300 = vunpack.c.h.b16 %v187
      %v301 = vunpack.c.l.b16 %v188
      %v302 = vunpack.c.h.b16 %v188
      %v303 = vunpack.c.l.b16 %v189
      %v304 = vunpack.c.h.b16 %v189
      %v305 = vunpack.c.l.b16 %v190
      %v306 = vunpack.c.h.b16 %v190
      %v307 = vunpack.c.l.b16 %v191
      %v308 = vunpack.c.h.b16 %v191
      %v309 = vunpack.c.l.b16 %v192
      %v310 = vunpack.c.h.b16 %v192
      %v311 = vunpack.c.l.b16 %v193
      %v312 = vunpack.c.h.b16 %v193
      %v313 = vunpack.c.l.b16 %v194
      %v314 = vunpack.c.h.b16 %v194
      %v315 = vunpack.c.l.b16 %v195
      %v316 = vunpack.c.h.b16 %v195
      %v317 = vunpack.c.l.b16 %v196
      %v318 = vunpack.c.h.b16 %v196
      %v319 = vunpack.c.l.b16 %v197
      %v320 = vunpack.c.h.b16 %v197
      %v321 = vunpack.c.l.b16 %v198
      %v322 = vunpack.c.h.b16 %v198
      %v323 = vunpack.c.l.b16 %v199
      %v324 = vunpack.c.h.b16 %v199
      %v325 = vunpack.c.l.b16 %v200
      %v326 = vunpack.c.h.b16 %v200
      %v327 = vunpack.c.l.b16 %v201
      %v328 = vunpack.c.h.b16 %v201
      %v329 = vunpack.c.l.b16 %v202
      %v330 = vunpack.c.h.b16 %v202
      %v331 = vunpack.c.l.b16 %v203
      %v332 = vunpack.c.h.b16 %v203
      %v333 = vunpack.c.l.b16 %v204
      %v334 = vunpack.c.h.b16 %v204
      %v335 = vunpack.c.l.b16 %v205
      %v336 = vunpack.c.h.b16 %v205
      %v337 = vunpack.c.l.b16 %v206
      %v338 = vunpack.c.h.b16 %v206
      %v339 = vunpack.c.l.b16 %v207
      %v340 = vunpack.c.h.b16 %v207
      %v341 = vunpack.c.l.b16 %v208
      %v342 = vunpack.c.h.b16 %v208
      %v343 = vunpack.c.l.b16 %v209
      %v344 = vunpack.c.h.b16 %v209
      %v345 = vunpack.c.l.b16 %v210
      %v346 = vunpack.c.h.b16 %v210
      %v347 = vunpack.c.l.b16 %v211
      %v348 = vunpack.c.h.b16 %v211
      %v349 = vunpack.c.l.b16 %v212
      %v350 = vunpack.c.h.b16 %v212
      %v351 = vunpack.c.l.b16 %v213
      %v352 = vunpack.c.h.b16 %v213
      %v353 = vunpack.c.l.b16 %v214
      %v354 = vunpack.c.h.b16 %v214
      %v355 = vunpack.c.l.b16 %v215
      %v356 = vunpack.c.h.b16 %v215
      %v357 = vunpack.c.l.b16 %v216
      %v358 = vunpack.c.h.b16 %v216
      %v359 = vpack.c.b16 %v299, %v295
      %v360 = vpack.c.b16 %v300, %v296
      %v361 = vpack.c.b16 %v301, %v297
      %v362 = vpack.c.b16 %v302, %v298
      %v363 = vpack.c.b16 %v307, %v303
      %v364 = vpack.c.b16 %v308, %v304
      %v365 = vpack.c.b16 %v309, %v305
      %v366 = vpack.c.b16 %v310, %v306
      %v367 = vpack.c.b16 %v315, %v311
      %v368 = vpack.c.b16 %v316, %v312
      %v369 = vpack.c.b16 %v317, %v313
      %v370 = vpack.c.b16 %v318, %v314
      %v371 = vpack.c.b16 %v323, %v319
      %v372 = vpack.c.b16 %v324, %v320
      %v373 = vpack.c.b16 %v325, %v321
      %v374 = vpack.c.b16 %v326, %v322
      %v375 = vpack.c.b16 %v331, %v327
      %v376 = vpack.c.b16 %v332, %v328
      %v377 = vpack.c.b16 %v333, %v329
      %v378 = vpack.c.b16 %v334, %v330
      %v379 = vpack.c.b16 %v339, %v335
      %v380 = vpack.c.b16 %v340, %v336
      %v381 = vpack.c.b16 %v341, %v337
      %v382 = vpack.c.b16 %v342, %v338
      %v383 = vpack.c.b16 %v347, %v343
      %v384 = vpack.c.b16 %v348, %v344
      %v385 = vpack.c.b16 %v349, %v345
      %v386 = vpack.c.b16 %v350, %v346
      %v387 = vpack.c.b16 %v355, %v351
      %v388 = vpack.c.b16 %v356, %v352
      %v389 = vpack.c.b16 %v357, %v353
      %v390 = vpack.c.b16 %v358, %v354
      %423 = vmatprep.subr.bf16.mxu0 %v360
      %424 = vmatpush1.bf16.msra.mxu0 %v359
      %425 = vmatprep.subr.bf16.mxu0 %v364
      %426 = vmatpush1.bf16.msra.mxu0 %v363
      %427 = vmatprep.subr.bf16.mxu0 %v368
      %428 = vmatpush1.bf16.msra.mxu0 %v367
      %429 = vmatprep.subr.bf16.mxu0 %v372
      %430 = vmatpush1.bf16.msra.mxu0 %v371
      %431 = vmatprep.subr.bf16.mxu0 %v376
      %432 = vmatpush1.bf16.msra.mxu0 %v375
      %433 = vmatprep.subr.bf16.mxu0 %v380
      %434 = vmatpush1.bf16.msra.mxu0 %v379
      %435 = vmatprep.subr.bf16.mxu0 %v384
      %436 = vmatpush1.bf16.msra.mxu0 %v383
      %437 = vmatprep.subr.bf16.mxu0 %v388
      %438 = vmatpush1.bf16.msra.mxu0 %v387
      %439 = vmatprep.subr.bf16.mxu0 0
      %440 = vmatpush1.bf16.msra.mxu0 0
      %441 = vmatprep.subr.bf16.mxu0 0
      %442 = vmatpush1.bf16.msra.mxu0 0
      %443 = vmatprep.subr.bf16.mxu0 0
      %444 = vmatpush1.bf16.msra.mxu0 0
      %445 = vmatprep.subr.bf16.mxu0 0
      %446 = vmatpush1.bf16.msra.mxu0 0
      %447 = vmatprep.subr.bf16.mxu0 0
      %448 = vmatpush1.bf16.msra.mxu0 0
      %449 = vmatprep.subr.bf16.mxu0 0
      %450 = vmatpush1.bf16.msra.mxu0 0
      %451 = vmatprep.subr.bf16.mxu0 0
      %452 = vmatpush1.bf16.msra.mxu0 0
      %453 = vmatprep.subr.bf16.mxu0 0
      %454 = vmatpush1.bf16.msra.mxu0 0
      %455 = vmatprep.mubr.bf16.mxu0 0
      %456 = vmatmul.mubr.bf16.gmra.mrb[0].mxu0 %v255
      %v457 = vpop.f32.mrb[0].mxu0
      %v458 = vadd.f32 %v222, %v457
      %v459 = vpop.f32.mrb[0].mxu0
      %v460 = vadd.f32 %v226, %v459
      %v461 = vpop.f32.mrb[0].mxu0
      %v462 = vadd.f32 %v222, %v461
      %v463 = vpop.f32.mrb[0].mxu0
      %v464 = vadd.f32 %v226, %v463
      %465 = vmatprep.mubr.bf16.mxu0 0
      %466 = vmatmul.mubr.bf16.gmra.mrb[0].mxu0 %v256
      %v467 = vpop.f32.mrb[0].mxu0
      %v468 = vadd.f32 %v222, %v467
      %v469 = vpop.f32.mrb[0].mxu0
      %v470 = vadd.f32 %v226, %v469
      %v471 = vpop.f32.mrb[0].mxu0
      %v472 = vadd.f32 %v222, %v471
      %v473 = vpop.f32.mrb[0].mxu0
      %v474 = vadd.f32 %v226, %v473
      %475 = vmatprep.mubr.bf16.mxu0 0
      %476 = vmatmul.mubr.bf16.gmra.mrb[0].mxu0 %v257
      %v477 = vpop.f32.mrb[0].mxu0
      %v478 = vadd.f32 %v222, %v477
      %v479 = vpop.f32.mrb[0].mxu0
      %v480 = vadd.f32 %v226, %v479
      %v481 = vpop.f32.mrb[0].mxu0
      %v482 = vadd.f32 %v222, %v481
      %v483 = vpop.f32.mrb[0].mxu0
      %v484 = vadd.f32 %v226, %v483
      %485 = vmatprep.mubr.bf16.mxu0 0
      %486 = vmatmul.mubr.bf16.gmra.mrb[0].mxu0 %v258
      %v487 = vpop.f32.mrb[0].mxu0
      %v488 = vadd.f32 %v222, %v487
      %v489 = vpop.f32.mrb[0].mxu0
      %v490 = vadd.f32 %v226, %v489
      %v491 = vpop.f32.mrb[0].mxu0
      %v492 = vadd.f32 %v222, %v491
      %v493 = vpop.f32.mrb[0].mxu0
      %v494 = vadd.f32 %v226, %v493
      %495 = vdwg.mxu0
      %496 = vmatprep.subr.bf16.mxu0 %v362
      %497 = vmatpush1.bf16.msra.mxu0 %v361
      %498 = vmatprep.subr.bf16.mxu0 %v366
      %499 = vmatpush1.bf16.msra.mxu0 %v365
      %500 = vmatprep.subr.bf16.mxu0 %v370
      %501 = vmatpush1.bf16.msra.mxu0 %v369
      %502 = vmatprep.subr.bf16.mxu0 %v374
      %503 = vmatpush1.bf16.msra.mxu0 %v373
      %504 = vmatprep.subr.bf16.mxu0 %v378
      %505 = vmatpush1.bf16.msra.mxu0 %v377
      %506 = vmatprep.subr.bf16.mxu0 %v382
      %507 = vmatpush1.bf16.msra.mxu0 %v381
      %508 = vmatprep.subr.bf16.mxu0 %v386
      %509 = vmatpush1.bf16.msra.mxu0 %v385
      %510 = vmatprep.subr.bf16.mxu0 %v390
      %511 = vmatpush1.bf16.msra.mxu0 %v389
      %512 = vmatprep.subr.bf16.mxu0 0
      %513 = vmatpush1.bf16.msra.mxu0 0
      %514 = vmatprep.subr.bf16.mxu0 0
      %515 = vmatpush1.bf16.msra.mxu0 0
      %516 = vmatprep.subr.bf16.mxu0 0
      %517 = vmatpush1.bf16.msra.mxu0 0
      %518 = vmatprep.subr.bf16.mxu0 0
      %519 = vmatpush1.bf16.msra.mxu0 0
      %520 = vmatprep.subr.bf16.mxu0 0
      %521 = vmatpush1.bf16.msra.mxu0 0
      %522 = vmatprep.subr.bf16.mxu0 0
      %523 = vmatpush1.bf16.msra.mxu0 0
      %524 = vmatprep.subr.bf16.mxu0 0
      %525 = vmatpush1.bf16.msra.mxu0 0
      %526 = vmatprep.subr.bf16.mxu0 0
      %527 = vmatpush1.bf16.msra.mxu0 0
      %528 = vmatprep.mubr.bf16.mxu0 0
      %529 = vmatmul.mubr.bf16.gmra.mrb[0].mxu0 %v255
      %v530 = vpop.f32.mrb[0].mxu0
      %v531 = vadd.f32 %v230, %v530
      %v532 = vpop.f32.mrb[0].mxu0
      %v533 = vadd.f32 %v234, %v532
      %v534 = vpop.f32.mrb[0].mxu0
      %v535 = vadd.f32 %v230, %v534
      %v536 = vpop.f32.mrb[0].mxu0
      %v537 = vadd.f32 %v234, %v536
      %538 = vmatprep.mubr.bf16.mxu0 0
      %539 = vmatmul.mubr.bf16.gmra.mrb[0].mxu0 %v256
      %v540 = vpop.f32.mrb[0].mxu0
      %v541 = vadd.f32 %v230, %v540
      %v542 = vpop.f32.mrb[0].mxu0
      %v543 = vadd.f32 %v234, %v542
      %v544 = vpop.f32.mrb[0].mxu0
      %v545 = vadd.f32 %v230, %v544
      %v546 = vpop.f32.mrb[0].mxu0
      %v547 = vadd.f32 %v234, %v546
      %548 = vmatprep.mubr.bf16.mxu0 0
      %549 = vmatmul.mubr.bf16.gmra.mrb[0].mxu0 %v257
      %v550 = vpop.f32.mrb[0].mxu0
      %v551 = vadd.f32 %v230, %v550
      %v552 = vpop.f32.mrb[0].mxu0
      %v553 = vadd.f32 %v234, %v552
      %v554 = vpop.f32.mrb[0].mxu0
      %v555 = vadd.f32 %v230, %v554
      %v556 = vpop.f32.mrb[0].mxu0
      %v557 = vadd.f32 %v234, %v556
      %558 = vmatprep.mubr.bf16.mxu0 0
      %559 = vmatmul.mubr.bf16.gmra.mrb[0].mxu0 %v258
      %v560 = vpop.f32.mrb[0].mxu0
      %v561 = vadd.f32 %v230, %v560
      %v562 = vpop.f32.mrb[0].mxu0
      %v563 = vadd.f32 %v234, %v562
      %v564 = vpop.f32.mrb[0].mxu0
      %v565 = vadd.f32 %v230, %v564
      %v566 = vpop.f32.mrb[0].mxu0
      %v567 = vadd.f32 %v234, %v566
      %568 = vdwg.mxu0
      %v569 = vpack.c.bf16 %v462, %v458
      %v570 = vpack.c.bf16 %v464, %v460
      %v571 = vpack.c.bf16 %v535, %v531
      %v572 = vpack.c.bf16 %v537, %v533
      %v573 = vpack.c.bf16 %v472, %v468
      %v574 = vpack.c.bf16 %v474, %v470
      %v575 = vpack.c.bf16 %v545, %v541
      %v576 = vpack.c.bf16 %v547, %v543
      %v577 = vpack.c.bf16 %v482, %v478
      %v578 = vpack.c.bf16 %v484, %v480
      %v579 = vpack.c.bf16 %v555, %v551
      %v580 = vpack.c.bf16 %v557, %v553
      %v581 = vpack.c.bf16 %v492, %v488
      %v582 = vpack.c.bf16 %v494, %v490
      %v583 = vpack.c.bf16 %v565, %v561
      %v584 = vpack.c.bf16 %v567, %v563
      %v601 = vunpack.c.l.b16 %v569
      %v602 = vunpack.c.l.b16 %v570
      %v603 = vunpack.c.l.b16 %v571
      %v604 = vunpack.c.l.b16 %v572
      %v605 = vunpack.c.h.b16 %v569
      %v606 = vunpack.c.h.b16 %v570
      %v607 = vunpack.c.h.b16 %v571
      %v608 = vunpack.c.h.b16 %v572
      %v609 = vunpack.c.l.b16 %v573
      %v610 = vunpack.c.l.b16 %v574
      %v611 = vunpack.c.l.b16 %v575
      %v612 = vunpack.c.l.b16 %v576
      %v613 = vunpack.c.h.b16 %v573
      %v614 = vunpack.c.h.b16 %v574
      %v615 = vunpack.c.h.b16 %v575
      %v616 = vunpack.c.h.b16 %v576
      %v617 = vunpack.c.l.b16 %v577
      %v618 = vunpack.c.l.b16 %v578
      %v619 = vunpack.c.l.b16 %v579
      %v620 = vunpack.c.l.b16 %v580
      %v621 = vunpack.c.h.b16 %v577
      %v622 = vunpack.c.h.b16 %v578
      %v623 = vunpack.c.h.b16 %v579
      %v624 = vunpack.c.h.b16 %v580
      %v625 = vunpack.c.l.b16 %v581
      %v626 = vunpack.c.l.b16 %v582
      %v627 = vunpack.c.l.b16 %v583
      %v628 = vunpack.c.l.b16 %v584
      %v629 = vunpack.c.h.b16 %v581
      %v630 = vunpack.c.h.b16 %v582
      %v631 = vunpack.c.h.b16 %v583
      %v632 = vunpack.c.h.b16 %v584
      %v633 = vpack.c.b16 %v602, %v601
      %v634 = vpack.c.b16 %v604, %v603
      %v635 = vpack.c.b16 %v606, %v605
      %v636 = vpack.c.b16 %v608, %v607
      %v637 = vpack.c.b16 %v610, %v609
      %v638 = vpack.c.b16 %v612, %v611
      %v639 = vpack.c.b16 %v614, %v613
      %v640 = vpack.c.b16 %v616, %v615
      %v641 = vpack.c.b16 %v618, %v617
      %v642 = vpack.c.b16 %v620, %v619
      %v643 = vpack.c.b16 %v622, %v621
      %v644 = vpack.c.b16 %v624, %v623
      %v645 = vpack.c.b16 %v626, %v625
      %v646 = vpack.c.b16 %v628, %v627
      %v647 = vpack.c.b16 %v630, %v629
      %v648 = vpack.c.b16 %v632, %v631
      %665 = vst [vmem:[%s174] sm:$0xff] %v633
      %666 = vst [vmem:[%s174 + $0x8] sm:$0xff] %v634
      %667 = vst [vmem:[%s174 + $0x10] sm:$0xff] %v635
      %668 = vst [vmem:[%s174 + $0x18] sm:$0xff] %v636
      %669 = vst [vmem:[%s174 + $0x20] sm:$0xff] %v637
      %670 = vst [vmem:[%s174 + $0x28] sm:$0xff] %v638
      %671 = vst [vmem:[%s174 + $0x30] sm:$0xff] %v639
      %672 = vst [vmem:[%s174 + $0x38] sm:$0xff] %v640
      %673 = vst [vmem:[%s174 + $0x40] sm:$0xff] %v641
      %674 = vst [vmem:[%s174 + $0x48] sm:$0xff] %v642
      %675 = vst [vmem:[%s174 + $0x50] sm:$0xff] %v643
      %676 = vst [vmem:[%s174 + $0x58] sm:$0xff] %v644
      %677 = vst [vmem:[%s174 + $0x60] sm:$0xff] %v645
      %678 = vst [vmem:[%s174 + $0x68] sm:$0xff] %v646
      %679 = vst [vmem:[%s174 + $0x70] sm:$0xff] %v647
      %680 = vst [vmem:[%s174 + $0x78] sm:$0xff] %v648
      %s681 = smul.u32 8, %s14
      %p682 = scmp.lt.s32.totalorder %s681, 15
      %s683 = scalar_select %p682, %s681, 15
      %s684 = smul.addr %s683, 4
      %s685 = smul.addr %s684, 4
      %s686 = scalar_lea.vmem %s3, %s685
      // Predicated region
      $region33: #{up_forward.3} parent=31 // pred_check
        %p687 = pneg %p100
      $region34: #{up_forward.3} parent=31 // pred_check_branch
        %689 = sbr.rel (%p687) target = $region36
      $region35: #{up_forward.3} parent=31 // pred_region
        %s690 = smul.u32 8, %s14
      $region36: #{up_forward.3} parent=31 // pred_fallthru
        _
    $region32: #{up_forward.3} parent=5 // pred_fallthru
      _
    %p691 = scmp.le.s32.totalorder 2, %s9
    // Predicated region
    $region37: #{up_forward.3} parent=5 // pred_check
      %p692 = pneg %p691
    $region38: #{up_forward.3} parent=5 // pred_check_branch
      %694 = sbr.rel (%p692) target = $region40
    $region39: #{up_forward.3} parent=5 // pred_region
      %s695 = ssub.s32 %s9, 2
      // Predicated region
      $region41: #{up_forward.3} parent=39 // pred_check
        %p696 = pneg %p106
      $region42: #{up_forward.3} parent=39 // pred_check_branch
        %698 = sbr.rel (%p696) target = $region44
      $region43: #{up_forward.3} parent=39 // pred_region
        %s699 = smul.u32 8, %s15
        %p700 = scmp.lt.s32.totalorder %s699, 15
        %s701 = scalar_select %p700, %s699, 15
        %s702 = smul.addr %s701, 4
        %s703 = smul.addr %s702, 4
        %s704 = scalar_lea.vmem %s3, %s703
      $region44: #{up_forward.3} parent=39 // pred_fallthru
        _
    $region40: #{up_forward.3} parent=5 // pred_fallthru
      _
  $region6: #{up_forward.3} parent=0 // loop_footer
    %s13 = sadd.s32 1, %s9
  $region7: #{up_forward.3} parent=0 // loop_footer_branch
    %8 = sbr.rel target = $region3
  $region8: #{up_forward.3} parent=0 // loop_exit
    _

// kernel: up_forward.5
$region0: #{up_forward.5}
  #allocation0 [shape = 'u32[]', space=smem, size = 0x4, offset = 0x4, fixed_abs, tag = 'smem constant byte address 0x4 - core index']
  #allocation1 [shape = 'u32[144,128]{1,0:T(1,128)}', space=vmem, size = 0x12000, scoped, tag = 'internal scratch']
  #allocation2 [shape = 'bf16[280,128]{1,0:T(8,128)(2,1)}', space=vmem, size = 0x11800, scoped, tag = 'scratch operand']
  %s0 = inlined_call_operand.vmem [shape: bf16[1120,128], index: 0, kind: input, shape index: {}, may-alias: {0,1}]
  %s1 = inlined_call_operand.vmem [shape: bf16[1120,128], index: 1, kind: input, shape index: {}, may-alias: {0,1}]
  %s2 = inlined_call_operand.vmem [shape: bf16[1152,128], index: 2, kind: input, shape index: {}]
  %s3 = inlined_call_operand.vmem [shape: f32[1,128], index: 3, kind: input, shape index: {}]
  %s4 = inlined_call_operand.vmem [shape: f32[1120,1], index: 4, kind: input, shape index: {}]
  %s5 = inlined_call_operand.vmem [shape: f32[1120,128], index: 5, kind: output, shape index: {}]
  %s6 = sld [smem:[#allocation0]]
  $region53: #{up_forward.5} parent=0
    _
  %s8 = ssub.s32 1, %s6
  %s9 = scalar_select 0, %s8, %s6
  loop: start=0, step=1, limit=7
  $region2: #{up_forward.5} parent=0 // loop_pre_header
    _
  $region3: #{up_forward.5} parent=0 // loop_header
    %s11 = sphi 0, %s15
    %p12 = scmp.ge.s32.totalorder %s11, 7
    %s21 = sphi 0, %s23
    %s24 = sphi 0, %s21
    %s25 = sphi 0, %s24
    %s41 = sphi 0, %s25
    %s77 = sphi 0, %s79
    %s80 = sphi 0, %s77
    %s81 = sphi 0, %s80
    %s97 = sphi 0, %s81
    %s101 = sphi 0, %s101
    %s103 = sphi 0, %s101
    %s104 = sphi 0, %s103
    %s118 = sphi 0, %s104
    %s122 = sphi 0, %s122
    %s124 = sphi 0, %s122
    %s125 = sphi 0, %s124
    %s139 = sphi 0, %s125
    %s145 = sphi 0, %s147
    %s148 = sphi 0, %s145
    %s149 = sphi 0, %s148
    %s165 = sphi 0, %s149
    %s171 = sphi 0, %s173
    %s174 = sphi 0, %s171
    %s175 = sphi 0, %s174
    %s191 = sphi 0, %s175
  $region4: #{up_forward.5} parent=0 // loop_header_branch
    %14 = sbr.rel (%p12) target = $region8
  $region5: #{up_forward.5} parent=0 // loop_body
    %s16 = ssub.s32 %s11, 1
    %s17 = ssub.s32 %s11, 2
    %s18 = sadd.s32 %s11, 1
    %s19 = ssub.s32 %s11, %s18
    %p20 = scmp.eq.s32.totalorder %s19, 0
    %s22 = sadd.s32 %s21, 1
    %s23 = scalar_select %p20, %s21, %s22
    %p26 = pneg %p20
    %p27 = scmp.eq.s32.totalorder %s11, 4
    %p28 = por %p26, %p27
    %p29 = scmp.ne.s32.totalorder %s21, %s24
    %p30 = scmp.eq.s32.totalorder %s11, 0
    %p31 = por %p29, %p30
    %p32 = scmp.ne.s32.totalorder %s21, %s24
    %p33 = scmp.eq.s32.totalorder %s16, 4
    %p34 = por %p32, %p33
    %p35 = scmp.ne.s32.totalorder %s24, %s25
    %p36 = scmp.eq.s32.totalorder %s16, 0
    %p37 = por %p35, %p36
    %p38 = scmp.ne.s32.totalorder %s24, %s25
    %p39 = scmp.eq.s32.totalorder %s17, 4
    %p40 = por %p38, %p39
    %p42 = scmp.ne.s32.totalorder %s25, %s41
    %p43 = scmp.eq.s32.totalorder %s17, 0
    %p44 = por %p42, %p43
    %s45 = sadd.s32 %s11, 1
    %p46 = scmp.lt.s32.totalorder %s45, 0
    %s47 = ssub.s32 0, %s45
    %s48 = scalar_select %p46, %s47, %s45
    %s49 = sdiv.u32.pop %s48, 5
    %s50 = srem.u32.pop %s48, 5
    %s51 = ssub.s32 0, %s50
    %s52 = scalar_select %p46, %s51, %s50
    %p53 = scmp.ne.s32.totalorder %s52, 0
    %p54 = scmp.lt.s32.totalorder %s52, 0
    %p55 = pnand %p54, %p53
    %p56 = pneg %p55
    %s57 = sadd.s32 %s52, 5
    %s58 = scalar_select %p56, %s57, %s52
    %s59 = smul.u32 %s58, 4
    %s60 = sadd.s32 %s18, 1
    %p61 = scmp.lt.s32.totalorder %s60, 0
    %s62 = ssub.s32 0, %s60
    %s63 = scalar_select %p61, %s62, %s60
    %s64 = sdiv.u32.pop %s63, 5
    %s65 = srem.u32.pop %s63, 5
    %s66 = ssub.s32 0, %s65
    %s67 = scalar_select %p61, %s66, %s65
    %p68 = scmp.ne.s32.totalorder %s67, 0
    %p69 = scmp.lt.s32.totalorder %s67, 0
    %p70 = pnand %p69, %p68
    %p71 = pneg %p70
    %s72 = sadd.s32 %s67, 5
    %s73 = scalar_select %p71, %s72, %s67
    %s74 = smul.u32 %s73, 4
    %s75 = ssub.s32 %s59, %s74
    %p76 = scmp.eq.s32.totalorder %s75, 0
    %s78 = sadd.s32 %s77, 1
    %s79 = scalar_select %p76, %s77, %s78
    %p82 = pneg %p76
    %p83 = scmp.eq.s32.totalorder %s11, 4
    %p84 = por %p82, %p83
    %p85 = scmp.ne.s32.totalorder %s77, %s80
    %p86 = scmp.eq.s32.totalorder %s11, 0
    %p87 = por %p85, %p86
    %p88 = scmp.ne.s32.totalorder %s77, %s80
    %p89 = scmp.eq.s32.totalorder %s16, 4
    %p90 = por %p88, %p89
    %p91 = scmp.ne.s32.totalorder %s80, %s81
    %p92 = scmp.eq.s32.totalorder %s16, 0
    %p93 = por %p91, %p92
    %p94 = scmp.ne.s32.totalorder %s80, %s81
    %p95 = scmp.eq.s32.totalorder %s17, 4
    %p96 = por %p94, %p95
    %p98 = scmp.ne.s32.totalorder %s81, %s97
    %p99 = scmp.eq.s32.totalorder %s17, 0
    %p100 = por %p98, %p99
    %s102 = sadd.s32 %s101, 1
    %p105 = scmp.eq.s32.totalorder %s11, 4
    %p106 = scmp.ne.s32.totalorder %s101, %s103
    %p107 = scmp.eq.s32.totalorder %s11, 0
    %p108 = por %p106, %p107
    %p109 = scmp.ne.s32.totalorder %s101, %s103
    %p110 = scmp.eq.s32.totalorder %s16, 4
    %p111 = por %p109, %p110
    %p112 = scmp.ne.s32.totalorder %s103, %s104
    %p113 = scmp.eq.s32.totalorder %s16, 0
    %p114 = por %p112, %p113
    %p115 = scmp.ne.s32.totalorder %s103, %s104
    %p116 = scmp.eq.s32.totalorder %s17, 4
    %p117 = por %p115, %p116
    %p119 = scmp.ne.s32.totalorder %s104, %s118
    %p120 = scmp.eq.s32.totalorder %s17, 0
    %p121 = por %p119, %p120
    %s123 = sadd.s32 %s122, 1
    %p126 = scmp.eq.s32.totalorder %s11, 4
    %p127 = scmp.ne.s32.totalorder %s122, %s124
    %p128 = scmp.eq.s32.totalorder %s11, 0
    %p129 = por %p127, %p128
    %p130 = scmp.ne.s32.totalorder %s122, %s124
    %p131 = scmp.eq.s32.totalorder %s16, 4
    %p132 = por %p130, %p131
    %p133 = scmp.ne.s32.totalorder %s124, %s125
    %p134 = scmp.eq.s32.totalorder %s16, 0
    %p135 = por %p133, %p134
    %p136 = scmp.ne.s32.totalorder %s124, %s125
    %p137 = scmp.eq.s32.totalorder %s17, 4
    %p138 = por %p136, %p137
    %p140 = scmp.ne.s32.totalorder %s125, %s139
    %p141 = scmp.eq.s32.totalorder %s17, 0
    %p142 = por %p140, %p141
    %s143 = ssub.s32 %s11, %s18
    %p144 = scmp.eq.s32.totalorder %s143, 0
    %s146 = sadd.s32 %s145, 1
    %s147 = scalar_select %p144, %s145, %s146
    %p150 = pneg %p144
    %p151 = scmp.eq.s32.totalorder %s11, 4
    %p152 = por %p150, %p151
    %p153 = scmp.ne.s32.totalorder %s145, %s148
    %p154 = scmp.eq.s32.totalorder %s11, 0
    %p155 = por %p153, %p154
    %p156 = scmp.ne.s32.totalorder %s145, %s148
    %p157 = scmp.eq.s32.totalorder %s16, 4
    %p158 = por %p156, %p157
    %p159 = scmp.ne.s32.totalorder %s148, %s149
    %p160 = scmp.eq.s32.totalorder %s16, 0
    %p161 = por %p159, %p160
    %p162 = scmp.ne.s32.totalorder %s148, %s149
    %p163 = scmp.eq.s32.totalorder %s17, 4
    %p164 = por %p162, %p163
    %p166 = scmp.ne.s32.totalorder %s149, %s165
    %p167 = scmp.eq.s32.totalorder %s17, 0
    %p168 = por %p166, %p167
    %s169 = ssub.s32 %s11, %s18
    %p170 = scmp.eq.s32.totalorder %s169, 0
    %s172 = sadd.s32 %s171, 1
    %s173 = scalar_select %p170, %s171, %s172
    %p176 = pneg %p170
    %p177 = scmp.eq.s32.totalorder %s11, 4
    %p178 = por %p176, %p177
    %p179 = scmp.ne.s32.totalorder %s171, %s174
    %p180 = scmp.eq.s32.totalorder %s11, 0
    %p181 = por %p179, %p180
    %p182 = scmp.ne.s32.totalorder %s171, %s174
    %p183 = scmp.eq.s32.totalorder %s16, 4
    %p184 = por %p182, %p183
    %p185 = scmp.ne.s32.totalorder %s174, %s175
    %p186 = scmp.eq.s32.totalorder %s16, 0
    %p187 = por %p185, %p186
    %p188 = scmp.ne.s32.totalorder %s174, %s175
    %p189 = scmp.eq.s32.totalorder %s17, 4
    %p190 = por %p188, %p189
    %p192 = scmp.ne.s32.totalorder %s175, %s191
    %p193 = scmp.eq.s32.totalorder %s17, 0
    %p194 = por %p192, %p193
    %p195 = scmp.le.s32.totalorder 1, %s11
    %p196 = scmp.lt.s32.totalorder %s11, 6
    %p197 = pnand %p195, %p196
    %p198 = pneg %p197
    // Predicated region
    $region9: #{up_forward.5} parent=5 // pred_check
      _
    $region10: #{up_forward.5} parent=5 // pred_check_branch
      %200 = sbr.rel (%p197) target = $region12
    $region11: #{up_forward.5} parent=5 // pred_region
      %s201 = ssub.s32 %s11, 1
      // Predicated region
      $region13: #{up_forward.5} parent=11 // pred_check
        %p202 = pneg %p114
      $region14: #{up_forward.5} parent=11 // pred_check_branch
        %204 = sbr.rel (%p202) target = $region16
      $region15: #{up_forward.5} parent=11 // pred_region
        _
      $region16: #{up_forward.5} parent=11 // pred_fallthru
        _
      // Predicated region
      $region17: #{up_forward.5} parent=11 // pred_check
        %p205 = pneg %p135
      $region18: #{up_forward.5} parent=11 // pred_check_branch
        %207 = sbr.rel (%p205) target = $region20
      $region19: #{up_forward.5} parent=11 // pred_region
        _
      $region20: #{up_forward.5} parent=11 // pred_fallthru
        _
    $region12: #{up_forward.5} parent=5 // pred_fallthru
      _
    %p208 = scmp.lt.s32.totalorder %s11, 5
    // Predicated region
    $region21: #{up_forward.5} parent=5 // pred_check
      %p209 = pneg %p208
    $region22: #{up_forward.5} parent=5 // pred_check_branch
      %211 = sbr.rel (%p209) target = $region24
    $region23: #{up_forward.5} parent=5 // pred_region
      // Predicated region
      $region25: #{up_forward.5} parent=23 // pred_check
        %p212 = pneg %p31
      $region26: #{up_forward.5} parent=23 // pred_check_branch
        %214 = sbr.rel (%p212) target = $region28
      $region27: #{up_forward.5} parent=23 // pred_region
        %s215 = smul.u32 28, %s11
        %p216 = scmp.lt.s32.totalorder %s215, 139
        %s217 = scalar_select %p216, %s215, 139
        %s218 = smul.addr %s217, 4
        %s219 = scalar_lea.vmem %s0, %s218
        %s220 = smul.u32 28, %s11
      $region28: #{up_forward.5} parent=23 // pred_fallthru
        _
      // Predicated region
      $region29: #{up_forward.5} parent=23 // pred_check
        %p221 = pneg %p87
      $region30: #{up_forward.5} parent=23 // pred_check_branch
        %223 = sbr.rel (%p221) target = $region32
      $region31: #{up_forward.5} parent=23 // pred_region
        %s224 = sadd.s32 %s11, 1
        %p225 = scmp.lt.s32.totalorder %s224, 0
        %s226 = ssub.s32 0, %s224
        %s227 = scalar_select %p225, %s226, %s224
        %s228 = sdiv.u32.pop %s227, 5
        %s229 = srem.u32.pop %s227, 5
        %s230 = ssub.s32 0, %s229
        %s231 = scalar_select %p225, %s230, %s229
        %p232 = scmp.ne.s32.totalorder %s231, 0
        %p233 = scmp.lt.s32.totalorder %s231, 0
        %p234 = pnand %p233, %p232
        %p235 = pneg %p234
        %s236 = sadd.s32 %s231, 5
        %s237 = scalar_select %p235, %s236, %s231
        %s238 = smul.u32 %s237, 4
        %s239 = smul.u32 7, %s238
        %p240 = scmp.lt.s32.totalorder %s239, 139
        %s241 = scalar_select %p240, %s239, 139
        %s242 = smul.addr %s241, 4
        %s243 = scalar_lea.vmem %s1, %s242
        %s244 = sadd.s32 %s11, 1
        %p245 = scmp.lt.s32.totalorder %s244, 0
        %s246 = ssub.s32 0, %s244
        %s247 = scalar_select %p245, %s246, %s244
        %s248 = sdiv.u32.pop %s247, 5
        %s249 = srem.u32.pop %s247, 5
        %s250 = ssub.s32 0, %s249
        %s251 = scalar_select %p245, %s250, %s249
        %p252 = scmp.ne.s32.totalorder %s251, 0
        %p253 = scmp.lt.s32.totalorder %s251, 0
        %p254 = pnand %p253, %p252
        %p255 = pneg %p254
        %s256 = sadd.s32 %s251, 5
        %s257 = scalar_select %p255, %s256, %s251
        %s258 = smul.u32 %s257, 4
        %s259 = smul.u32 7, %s258
      $region32: #{up_forward.5} parent=23 // pred_fallthru
        _
      // Predicated region
      $region33: #{up_forward.5} parent=23 // pred_check
        %p260 = pneg %p155
      $region34: #{up_forward.5} parent=23 // pred_check_branch
        %262 = sbr.rel (%p260) target = $region36
      $region35: #{up_forward.5} parent=23 // pred_region
        %s263 = smul.u32 28, %s11
        %p264 = scmp.lt.s32.totalorder %s263, 139
        %s265 = scalar_select %p264, %s263, 139
        %s266 = smul.addr %s265, 8
        %s267 = scalar_lea.vmem %s4, %s266
        %s268 = smul.u32 28, %s11
      $region36: #{up_forward.5} parent=23 // pred_fallthru
        _
    $region24: #{up_forward.5} parent=5 // pred_fallthru
      _
    %p269 = scmp.le.s32.totalorder 1, %s11
    %p270 = scmp.lt.s32.totalorder %s11, 6
    %p271 = pnand %p269, %p270
    %p272 = pneg %p271
    // Predicated region
    $region37: #{up_forward.5} parent=5 // pred_check
      _
    $region38: #{up_forward.5} parent=5 // pred_check_branch
      %274 = sbr.rel (%p271) target = $region40
    $region39: #{up_forward.5} parent=5 // pred_region
      %s275 = ssub.s32 %s11, 1
      %s276 = smul.u32 28, %s16
      %p277 = scmp.lt.s32.totalorder %s276, 139
      %s278 = scalar_select %p277, %s276, 139
      %s279 = smul.addr %s278, 4
      %s280 = scalar_lea.vmem %s0, %s279
      %p281 = pneg %p37
      %p282 = pneg %p34
      %s283 = sadd.s32 %s16, 1
      %p284 = scmp.lt.s32.totalorder %s283, 0
      %s285 = ssub.s32 0, %s283
      %s286 = scalar_select %p284, %s285, %s283
      %s287 = sdiv.u32.pop %s286, 5
      %s288 = srem.u32.pop %s286, 5
      %s289 = ssub.s32 0, %s288
      %s290 = scalar_select %p284, %s289, %s288
      %p291 = scmp.ne.s32.totalorder %s290, 0
      %p292 = scmp.lt.s32.totalorder %s290, 0
      %p293 = pnand %p292, %p291
      %p294 = pneg %p293
      %s295 = sadd.s32 %s290, 5
      %s296 = scalar_select %p294, %s295, %s290
      %s297 = smul.u32 %s296, 4
      %s298 = smul.u32 7, %s297
      %p299 = scmp.lt.s32.totalorder %s298, 139
      %s300 = scalar_select %p299, %s298, 139
      %s301 = smul.addr %s300, 4
      %s302 = scalar_lea.vmem %s1, %s301
      %p303 = pneg %p93
      %p304 = pneg %p90
      %p305 = pneg %p114
      %p306 = pneg %p111
      %p307 = pneg %p135
      %p308 = pneg %p132
      %s309 = smul.u32 28, %s16
      %p310 = scmp.lt.s32.totalorder %s309, 139
      %s311 = scalar_select %p310, %s309, 139
      %s312 = smul.addr %s311, 8
      %s313 = scalar_lea.vmem %s4, %s312
      %p314 = pneg %p161
      %p315 = pneg %p158
      %p316 = pneg %p187
      %p317 = pneg %p184
      %s318 = smul.u32 28, %s16
      %p319 = scmp.lt.s32.totalorder %s318, 139
      %s320 = scalar_select %p319, %s318, 139
      %s321 = smul.addr %s320, 8
      %s322 = scalar_lea.vmem %s5, %s321
      %s323 = smul.u32 28, %s16
      %p324 = scmp.lt.s32.totalorder %s323, 139
      %s325 = scalar_select %p324, %s323, 139
      %s326 = smul.addr %s325, 4
      %s327 = scalar_lea.vmem %s0, %s326
      %s328 = smul.u32 28, %s16
      %s329 = sadd.s32 %s16, 1
      %p330 = scmp.lt.s32.totalorder %s329, 0
      %s331 = ssub.s32 0, %s329
      %s332 = scalar_select %p330, %s331, %s329
      %s333 = sdiv.u32.pop %s332, 5
      %s334 = srem.u32.pop %s332, 5
      %s335 = ssub.s32 0, %s334
      %s336 = scalar_select %p330, %s335, %s334
      %p337 = scmp.ne.s32.totalorder %s336, 0
      %p338 = scmp.lt.s32.totalorder %s336, 0
      %p339 = pnand %p338, %p337
      %p340 = pneg %p339
      %s341 = sadd.s32 %s336, 5
      %s342 = scalar_select %p340, %s341, %s336
      %s343 = smul.u32 %s342, 4
      %s344 = smul.u32 7, %s343
      %p345 = scmp.lt.s32.totalorder %s344, 139
      %s346 = scalar_select %p345, %s344, 139
      %s347 = smul.addr %s346, 4
      %s348 = scalar_lea.vmem %s1, %s347
      %s349 = sadd.s32 %s16, 1
      %p350 = scmp.lt.s32.totalorder %s349, 0
      %s351 = ssub.s32 0, %s349
      %s352 = scalar_select %p350, %s351, %s349
      %s353 = sdiv.u32.pop %s352, 5
      %s354 = srem.u32.pop %s352, 5
      %s355 = ssub.s32 0, %s354
      %s356 = scalar_select %p350, %s355, %s354
      %p357 = scmp.ne.s32.totalorder %s356, 0
      %p358 = scmp.lt.s32.totalorder %s356, 0
      %p359 = pnand %p358, %p357
      %p360 = pneg %p359
      %s361 = sadd.s32 %s356, 5
      %s362 = scalar_select %p360, %s361, %s356
      %s363 = smul.u32 %s362, 4
      %s364 = smul.u32 7, %s363
      %s365 = smul.u32 28, %s16
      %p366 = scmp.lt.s32.totalorder %s365, 139
      %s367 = scalar_select %p366, %s365, 139
      %s368 = smul.addr %s367, 8
      %s369 = scalar_lea.vmem %s4, %s368
      %s370 = smul.u32 28, %s16
      %s371 = smul.u32 28, %s16
      %p372 = scmp.lt.s32.totalorder %s371, 139
      %s373 = scalar_select %p372, %s371, 139
      %s374 = smul.addr %s373, 8
      %s375 = scalar_lea.vmem %s5, %s374
      %s376 = smul.u32 28, %s16
      %v378 = vld [vmem:[%s327] sm:$0xf]
      %v379 = vld [vmem:[%s327 + $0x4] sm:$0xf]
      %v380 = vld [vmem:[%s327 + $0x8] sm:$0xf]
      %v381 = vld [vmem:[%s327 + $0xc] sm:$0xf]
      %v382 = vld [vmem:[%s327 + $0x10] sm:$0xf]
      %v383 = vld [vmem:[%s327 + $0x14] sm:$0xf]
      %v384 = vld [vmem:[%s327 + $0x18] sm:$0xf]
      %v385 = vld [vmem:[%s327 + $0x1c] sm:$0xf]
      %v386 = vld [vmem:[%s327 + $0x20] sm:$0xf]
      %v387 = vld [vmem:[%s327 + $0x24] sm:$0xf]
      %v388 = vld [vmem:[%s327 + $0x28] sm:$0xf]
      %v389 = vld [vmem:[%s327 + $0x2c] sm:$0xf]
      %v390 = vld [vmem:[%s327 + $0x30] sm:$0xf]
      %v391 = vld [vmem:[%s327 + $0x34] sm:$0xf]
      %v392 = vld [vmem:[%s327 + $0x38] sm:$0xf]
      %v393 = vld [vmem:[%s327 + $0x3c] sm:$0xf]
      %v394 = vld [vmem:[%s327 + $0x40] sm:$0xf]
      %v395 = vld [vmem:[%s327 + $0x44] sm:$0xf]
      %v396 = vld [vmem:[%s327 + $0x48] sm:$0xf]
      %v397 = vld [vmem:[%s327 + $0x4c] sm:$0xf]
      %v398 = vld [vmem:[%s327 + $0x50] sm:$0xf]
      %v399 = vld [vmem:[%s327 + $0x54] sm:$0xf]
      %v400 = vld [vmem:[%s327 + $0x58] sm:$0xf]
      %v401 = vld [vmem:[%s327 + $0x5c] sm:$0xf]
      %v402 = vld [vmem:[%s327 + $0x60] sm:$0xf]
      %v403 = vld [vmem:[%s327 + $0x64] sm:$0xf]
      %v404 = vld [vmem:[%s327 + $0x68] sm:$0xf]
      %v405 = vld [vmem:[%s327 + $0x6c] sm:$0xf]
      %406 = vst [vmem:[#allocation2] sm:$0xf] %v378
      %407 = vst [vmem:[#allocation2 + $0x4] sm:$0xf] %v379
      %408 = vst [vmem:[#allocation2 + $0x8] sm:$0xf] %v380
      %409 = vst [vmem:[#allocation2 + $0xc] sm:$0xf] %v381
      %410 = vst [vmem:[#allocation2 + $0x10] sm:$0xf] %v382
      %411 = vst [vmem:[#allocation2 + $0x14] sm:$0xf] %v383
      %412 = vst [vmem:[#allocation2 + $0x18] sm:$0xf] %v384
      %413 = vst [vmem:[#allocation2 + $0x1c] sm:$0xf] %v385
      %414 = vst [vmem:[#allocation2 + $0x20] sm:$0xf] %v386
      %415 = vst [vmem:[#allocation2 + $0x24] sm:$0xf] %v387
      %416 = vst [vmem:[#allocation2 + $0x28] sm:$0xf] %v388
      %417 = vst [vmem:[#allocation2 + $0x2c] sm:$0xf] %v389
      %418 = vst [vmem:[#allocation2 + $0x30] sm:$0xf] %v390
      %419 = vst [vmem:[#allocation2 + $0x34] sm:$0xf] %v391
      %420 = vst [vmem:[#allocation2 + $0x38] sm:$0xf] %v392
      %421 = vst [vmem:[#allocation2 + $0x3c] sm:$0xf] %v393
      %422 = vst [vmem:[#allocation2 + $0x40] sm:$0xf] %v394
      %423 = vst [vmem:[#allocation2 + $0x44] sm:$0xf] %v395
      %424 = vst [vmem:[#allocation2 + $0x48] sm:$0xf] %v396
      %425 = vst [vmem:[#allocation2 + $0x4c] sm:$0xf] %v397
      %426 = vst [vmem:[#allocation2 + $0x50] sm:$0xf] %v398
      %427 = vst [vmem:[#allocation2 + $0x54] sm:$0xf] %v399
      %428 = vst [vmem:[#allocation2 + $0x58] sm:$0xf] %v400
      %429 = vst [vmem:[#allocation2 + $0x5c] sm:$0xf] %v401
      %430 = vst [vmem:[#allocation2 + $0x60] sm:$0xf] %v402
      %431 = vst [vmem:[#allocation2 + $0x64] sm:$0xf] %v403
      %432 = vst [vmem:[#allocation2 + $0x68] sm:$0xf] %v404
      %433 = vst [vmem:[#allocation2 + $0x6c] sm:$0xf] %v405
      %v434 = vld [vmem:[%s348] sm:$0xf]
      %v435 = vld [vmem:[%s348 + $0x4] sm:$0xf]
      %v436 = vld [vmem:[%s348 + $0x8] sm:$0xf]
      %v437 = vld [vmem:[%s348 + $0xc] sm:$0xf]
      %v438 = vld [vmem:[%s348 + $0x10] sm:$0xf]
      %v439 = vld [vmem:[%s348 + $0x14] sm:$0xf]
      %v440 = vld [vmem:[%s348 + $0x18] sm:$0xf]
      %441 = vst [vmem:[#allocation2 + $0x70] sm:$0xf] %v434
      %442 = vst [vmem:[#allocation2 + $0x74] sm:$0xf] %v435
      %443 = vst [vmem:[#allocation2 + $0x78] sm:$0xf] %v436
      %444 = vst [vmem:[#allocation2 + $0x7c] sm:$0xf] %v437
      %445 = vst [vmem:[#allocation2 + $0x80] sm:$0xf] %v438
      %446 = vst [vmem:[#allocation2 + $0x84] sm:$0xf] %v439
      %447 = vst [vmem:[#allocation2 + $0x88] sm:$0xf] %v440
      %v448 = vld [vmem:[#allocation2] sm:$0xf]
      %v449 = vld [vmem:[#allocation2 + $0x4] sm:$0xf]
      %v450 = vld [vmem:[#allocation2 + $0x8] sm:$0xf]
      %v451 = vld [vmem:[#allocation2 + $0xc] sm:$0xf]
      %v452 = vld [vmem:[#allocation2 + $0x10] sm:$0xf]
      %v453 = vld [vmem:[#allocation2 + $0x14] sm:$0xf]
      %v454 = vld [vmem:[#allocation2 + $0x18] sm:$0xf]
      %v455 = vld [vmem:[#allocation2 + $0x1c] sm:$0xf]
      %v456 = vld [vmem:[#allocation2 + $0x20] sm:$0xf]
      %v457 = vld [vmem:[#allocation2 + $0x24] sm:$0xf]
      %v458 = vld [vmem:[#allocation2 + $0x28] sm:$0xf]
      %v459 = vld [vmem:[#allocation2 + $0x2c] sm:$0xf]
      %v460 = vld [vmem:[#allocation2 + $0x30] sm:$0xf]
      %v461 = vld [vmem:[#allocation2 + $0x34] sm:$0xf]
      %v462 = vld [vmem:[#allocation2 + $0x38] sm:$0xf]
      %v463 = vld [vmem:[#allocation2 + $0x3c] sm:$0xf]
      %v464 = vld [vmem:[#allocation2 + $0x40] sm:$0xf]
      %v465 = vld [vmem:[#allocation2 + $0x44] sm:$0xf]
      %v466 = vld [vmem:[#allocation2 + $0x48] sm:$0xf]
      %v467 = vld [vmem:[#allocation2 + $0x4c] sm:$0xf]
      %v468 = vld [vmem:[#allocation2 + $0x50] sm:$0xf]
      %v469 = vld [vmem:[#allocation2 + $0x54] sm:$0xf]
      %v470 = vld [vmem:[#allocation2 + $0x58] sm:$0xf]
      %v471 = vld [vmem:[#allocation2 + $0x5c] sm:$0xf]
      %v472 = vld [vmem:[#allocation2 + $0x60] sm:$0xf]
      %v473 = vld [vmem:[#allocation2 + $0x64] sm:$0xf]
      %v474 = vld [vmem:[#allocation2 + $0x68] sm:$0xf]
      %v475 = vld [vmem:[#allocation2 + $0x6c] sm:$0xf]
      %v476 = vld [vmem:[%s2] sm:$0xf]
      %v477 = vld [vmem:[%s2 + $0x4] sm:$0xf]
      %v478 = vld [vmem:[%s2 + $0x8] sm:$0xf]
      %v479 = vld [vmem:[%s2 + $0xc] sm:$0xf]
      %v480 = vld [vmem:[%s2 + $0x10] sm:$0xf]
      %v481 = vld [vmem:[%s2 + $0x14] sm:$0xf]
      %v482 = vld [vmem:[%s2 + $0x18] sm:$0xf]
      %v483 = vld [vmem:[%s2 + $0x1c] sm:$0xf]
      %v484 = vld [vmem:[%s2 + $0x20] sm:$0xf]
      %v485 = vld [vmem:[%s2 + $0x24] sm:$0xf]
      %v486 = vld [vmem:[%s2 + $0x28] sm:$0xf]
      %v487 = vld [vmem:[%s2 + $0x2c] sm:$0xf]
      %v488 = vld [vmem:[%s2 + $0x30] sm:$0xf]
      %v489 = vld [vmem:[%s2 + $0x34] sm:$0xf]
      %v490 = vld [vmem:[%s2 + $0x38] sm:$0xf]
      %v491 = vld [vmem:[%s2 + $0x3c] sm:$0xf]
      %v492 = vld [vmem:[#allocation2 + $0x70] sm:$0x1]
      %v493 = vld [vmem:[%s2 + $0x40] sm:$0xf]
      %v494 = vld [vmem:[%s2 + $0x44] sm:$0xf]
      %v495 = vld [vmem:[%s2 + $0x48] sm:$0xf]
      %v496 = vld [vmem:[%s2 + $0x4c] sm:$0xf]
      %v497 = vld [vmem:[%s2 + $0x50] sm:$0xf]
      %v498 = vld [vmem:[%s2 + $0x54] sm:$0xf]
      %v499 = vld [vmem:[%s2 + $0x58] sm:$0xf]
      %v500 = vld [vmem:[%s2 + $0x5c] sm:$0xf]
      %v501 = vld [vmem:[%s2 + $0x60] sm:$0xf]
      %v502 = vld [vmem:[%s2 + $0x64] sm:$0xf]
      %v503 = vld [vmem:[%s2 + $0x68] sm:$0xf]
      %v504 = vld [vmem:[%s2 + $0x6c] sm:$0xf]
      %v505 = vld [vmem:[%s2 + $0x70] sm:$0xf]
      %v506 = vld [vmem:[%s2 + $0x74] sm:$0xf]
      %v507 = vld [vmem:[%s2 + $0x78] sm:$0xf]
      %v508 = vld [vmem:[%s2 + $0x7c] sm:$0xf]
      %v538 = vunpack.c.l.b16 %v448
      %v539 = vunpack.c.l.b16 %v449
      %v540 = vunpack.c.l.b16 %v450
      %v541 = vunpack.c.l.b16 %v451
      %v542 = vunpack.c.l.b16 %v452
      %v543 = vunpack.c.l.b16 %v453
      %v544 = vunpack.c.l.b16 %v454
      %v545 = vunpack.c.l.b16 %v455
      %v546 = vunpack.c.l.b16 %v456
      %v547 = vunpack.c.l.b16 %v457
      %v548 = vunpack.c.l.b16 %v458
      %v549 = vunpack.c.l.b16 %v459
      %v550 = vunpack.c.l.b16 %v460
      %v551 = vunpack.c.l.b16 %v461
      %v552 = vunpack.c.l.b16 %v462
      %v553 = vunpack.c.l.b16 %v463
      %v554 = vunpack.c.l.b16 %v464
      %v555 = vunpack.c.l.b16 %v465
      %v556 = vunpack.c.l.b16 %v466
      %v557 = vunpack.c.l.b16 %v467
      %v558 = vunpack.c.l.b16 %v468
      %v559 = vunpack.c.l.b16 %v469
      %v560 = vunpack.c.l.b16 %v470
      %v561 = vunpack.c.l.b16 %v471
      %v562 = vunpack.c.l.b16 %v472
      %v563 = vunpack.c.l.b16 %v473
      %v564 = vunpack.c.l.b16 %v474
      %v565 = vunpack.c.l.b16 %v475
      %v566 = vunpack.c.l.b16 %v492
      %v567 = vpack.c.b16 %v539, %v538
      %v568 = vpack.c.b16 %v541, %v540
      %v569 = vpack.c.b16 %v543, %v542
      %v570 = vpack.c.b16 %v545, %v544
      %v571 = vpack.c.b16 %v547, %v546
      %v572 = vpack.c.b16 %v549, %v548
      %v573 = vpack.c.b16 %v551, %v550
      %v574 = vpack.c.b16 %v553, %v552
      %v575 = vpack.c.b16 %v555, %v554
      %v576 = vpack.c.b16 %v557, %v556
      %v577 = vpack.c.b16 %v559, %v558
      %v578 = vpack.c.b16 %v561, %v560
      %v579 = vpack.c.b16 %v563, %v562
      %v580 = vpack.c.b16 %v565, %v564
      %v581 = vpack.c.b16 %v566, %v566
      %vm582 = vsmask.f32 7424
      %v584 = vshrl.u32 %v567, 16
      %v586 = vshll.u32 %v567, 16
      %v588 = vrot.slane %v586, 1
      %v589 = vor.u32 %v584, %v588
      %v591 = vshll.u32 %v568, 16
      %v593 = vrot.slane %v591, 1
      %v594 = vsel %vm582, %v589, %v593
      %v595 = vshrl.u32 %v568, 16
      %v597 = vor.u32 %v595, %v593
      %v599 = vshll.u32 %v569, 16
      %v601 = vrot.slane %v599, 1
      %v602 = vsel %vm582, %v597, %v601
      %v603 = vshrl.u32 %v569, 16
      %v605 = vor.u32 %v603, %v601
      %v607 = vshll.u32 %v570, 16
      %v609 = vrot.slane %v607, 1
      %v610 = vsel %vm582, %v605, %v609
      %v611 = vshrl.u32 %v570, 16
      %v613 = vor.u32 %v611, %v609
      %v615 = vshll.u32 %v571, 16
      %v617 = vrot.slane %v615, 1
      %v618 = vsel %vm582, %v613, %v617
      %v619 = vshrl.u32 %v571, 16
      %v621 = vor.u32 %v619, %v617
      %v623 = vshll.u32 %v572, 16
      %v625 = vrot.slane %v623, 1
      %v626 = vsel %vm582, %v621, %v625
      %v627 = vshrl.u32 %v572, 16
      %v629 = vor.u32 %v627, %v625
      %v631 = vshll.u32 %v573, 16
      %v633 = vrot.slane %v631, 1
      %v634 = vsel %vm582, %v629, %v633
      %v635 = vshrl.u32 %v573, 16
      %v637 = vor.u32 %v635, %v633
      %v639 = vshll.u32 %v574, 16
      %v641 = vrot.slane %v639, 1
      %v642 = vsel %vm582, %v637, %v641
      %v643 = vshrl.u32 %v574, 16
      %v645 = vor.u32 %v643, %v641
      %v647 = vshll.u32 %v575, 16
      %v649 = vrot.slane %v647, 1
      %v650 = vsel %vm582, %v645, %v649
      %v651 = vshrl.u32 %v575, 16
      %v653 = vor.u32 %v651, %v649
      %v655 = vshll.u32 %v576, 16
      %v657 = vrot.slane %v655, 1
      %v658 = vsel %vm582, %v653, %v657
      %v659 = vshrl.u32 %v576, 16
      %v661 = vor.u32 %v659, %v657
      %v663 = vshll.u32 %v577, 16
      %v665 = vrot.slane %v663, 1
      %v666 = vsel %vm582, %v661, %v665
      %v667 = vshrl.u32 %v577, 16
      %v669 = vor.u32 %v667, %v665
      %v671 = vshll.u32 %v578, 16
      %v673 = vrot.slane %v671, 1
      %v674 = vsel %vm582, %v669, %v673
      %v675 = vshrl.u32 %v578, 16
      %v677 = vor.u32 %v675, %v673
      %v679 = vshll.u32 %v579, 16
      %v681 = vrot.slane %v679, 1
      %v682 = vsel %vm582, %v677, %v681
      %v683 = vshrl.u32 %v579, 16
      %v685 = vor.u32 %v683, %v681
      %v687 = vshll.u32 %v580, 16
      %v689 = vrot.slane %v687, 1
      %v690 = vsel %vm582, %v685, %v689
      %v691 = vshrl.u32 %v580, 16
      %v693 = vor.u32 %v691, %v689
      %v695 = vshll.u32 %v581, 16
      %v697 = vrot.slane %v695, 1
      %v698 = vsel %vm582, %v693, %v697
      %v729 = vunpack.c.l.b16 %v493
      %v730 = vunpack.c.l.b16 %v494
      %v731 = vunpack.c.l.b16 %v495
      %v732 = vunpack.c.l.b16 %v496
      %v733 = vunpack.c.l.b16 %v497
      %v734 = vunpack.c.l.b16 %v498
      %v735 = vunpack.c.l.b16 %v499
      %v736 = vunpack.c.l.b16 %v500
      %v737 = vunpack.c.l.b16 %v501
      %v738 = vunpack.c.l.b16 %v502
      %v739 = vunpack.c.l.b16 %v503
      %v740 = vunpack.c.l.b16 %v504
      %v741 = vunpack.c.l.b16 %v505
      %v742 = vunpack.c.l.b16 %v506
      %v743 = vunpack.c.l.b16 %v507
      %v744 = vunpack.c.l.b16 %v508
      %v745 = vpack.c.b16 %v730, %v729
      %v746 = vpack.c.b16 %v732, %v731
      %v747 = vpack.c.b16 %v734, %v733
      %v748 = vpack.c.b16 %v736, %v735
      %v749 = vpack.c.b16 %v738, %v737
      %v750 = vpack.c.b16 %v740, %v739
      %v751 = vpack.c.b16 %v742, %v741
      %v752 = vpack.c.b16 %v744, %v743
      %761 = vmatprep.subr.bf16.mxu0 0
      %762 = vmatpush1.bf16.msra.mxu0 %v745
      %763 = vmatprep.subr.bf16.mxu0 0
      %764 = vmatpush1.bf16.msra.mxu0 %v746
      %765 = vmatprep.subr.bf16.mxu0 0
      %766 = vmatpush1.bf16.msra.mxu0 %v747
      %767 = vmatprep.subr.bf16.mxu0 0
      %768 = vmatpush1.bf16.msra.mxu0 %v748
      %769 = vmatprep.subr.bf16.mxu0 0
      %770 = vmatpush1.bf16.msra.mxu0 %v749
      %771 = vmatprep.subr.bf16.mxu0 0
      %772 = vmatpush1.bf16.msra.mxu0 %v750
      %773 = vmatprep.subr.bf16.mxu0 0
      %774 = vmatpush1.bf16.msra.mxu0 %v751
      %775 = vmatprep.subr.bf16.mxu0 0
      %776 = vmatpush1.bf16.msra.mxu0 %v752
      %777 = vmatprep.subr.bf16.mxu0 0
      %778 = vmatpush1.bf16.msra.mxu0 0
      %779 = vmatprep.subr.bf16.mxu0 0
      %780 = vmatpush1.bf16.msra.mxu0 0
      %781 = vmatprep.subr.bf16.mxu0 0
      %782 = vmatpush1.bf16.msra.mxu0 0
      %783 = vmatprep.subr.bf16.mxu0 0
      %784 = vmatpush1.bf16.msra.mxu0 0
      %785 = vmatprep.subr.bf16.mxu0 0
      %786 = vmatpush1.bf16.msra.mxu0 0
      %787 = vmatprep.subr.bf16.mxu0 0
      %788 = vmatpush1.bf16.msra.mxu0 0
      %789 = vmatprep.subr.bf16.mxu0 0
      %790 = vmatpush1.bf16.msra.mxu0 0
      %791 = vmatprep.subr.bf16.mxu0 0
      %792 = vmatpush1.bf16.msra.mxu0 0
      %793 = vmatprep.mubr.bf16.mxu0 0
      %794 = vmatmul.mubr.bf16.gmra.mrb[0].mxu0 %v594
      %v795 = vpop.f32.mrb[0].mxu0
      %v796 = vadd.f32 0.0, %v795
      %v797 = vpop.f32.mrb[0].mxu0
      %v798 = vpop.f32.mrb[0].mxu0
      %v799 = vadd.f32 0.0, %v798
      %v800 = vpop.f32.mrb[0].mxu0
      %801 = vmatprep.mubr.bf16.mxu0 0
      %802 = vmatmul.mubr.bf16.gmra.mrb[0].mxu0 %v602
      %v803 = vpop.f32.mrb[0].mxu0
      %v804 = vadd.f32 0.0, %v803
      %v805 = vpop.f32.mrb[0].mxu0
      %v806 = vpop.f32.mrb[0].mxu0
      %v807 = vadd.f32 0.0, %v806
      %v808 = vpop.f32.mrb[0].mxu0
      %809 = vmatprep.mubr.bf16.mxu0 0
      %810 = vmatmul.mubr.bf16.gmra.mrb[0].mxu0 %v610
      %v811 = vpop.f32.mrb[0].mxu0
      %v812 = vadd.f32 0.0, %v811
      %v813 = vpop.f32.mrb[0].mxu0
      %v814 = vpop.f32.mrb[0].mxu0
      %v815 = vadd.f32 0.0, %v814
      %v816 = vpop.f32.mrb[0].mxu0
      %817 = vmatprep.mubr.bf16.mxu0 0
      %818 = vmatmul.mubr.bf16.gmra.mrb[0].mxu0 %v618
      %v819 = vpop.f32.mrb[0].mxu0
      %v820 = vadd.f32 0.0, %v819
      %v821 = vpop.f32.mrb[0].mxu0
      %v822 = vpop.f32.mrb[0].mxu0
      %v823 = vadd.f32 0.0, %v822
      %v824 = vpop.f32.mrb[0].mxu0
      %825 = vmatprep.mubr.bf16.mxu0 0
      %826 = vmatmul.mubr.bf16.gmra.mrb[0].mxu0 %v626
      %v827 = vpop.f32.mrb[0].mxu0
      %v828 = vadd.f32 0.0, %v827
      %v829 = vpop.f32.mrb[0].mxu0
      %v830 = vpop.f32.mrb[0].mxu0
      %v831 = vadd.f32 0.0, %v830
      %v832 = vpop.f32.mrb[0].mxu0
      %833 = vmatprep.mubr.bf16.mxu0 0
      %834 = vmatmul.mubr.bf16.gmra.mrb[0].mxu0 %v634
      %v835 = vpop.f32.mrb[0].mxu0
      %v836 = vadd.f32 0.0, %v835
      %v837 = vpop.f32.mrb[0].mxu0
      %v838 = vpop.f32.mrb[0].mxu0
      %v839 = vadd.f32 0.0, %v838
      %v840 = vpop.f32.mrb[0].mxu0
      %841 = vmatprep.mubr.bf16.mxu0 0
      %842 = vmatmul.mubr.bf16.gmra.mrb[0].mxu0 %v642
      %v843 = vpop.f32.mrb[0].mxu0
      %v844 = vadd.f32 0.0, %v843
      %v845 = vpop.f32.mrb[0].mxu0
      %v846 = vpop.f32.mrb[0].mxu0
      %v847 = vadd.f32 0.0, %v846
      %v848 = vpop.f32.mrb[0].mxu0
      %849 = vmatprep.mubr.bf16.mxu0 0
      %850 = vmatmul.mubr.bf16.gmra.mrb[0].mxu0 %v650
      %v851 = vpop.f32.mrb[0].mxu0
      %v852 = vadd.f32 0.0, %v851
      %v853 = vpop.f32.mrb[0].mxu0
      %v854 = vpop.f32.mrb[0].mxu0
      %v855 = vadd.f32 0.0, %v854
      %v856 = vpop.f32.mrb[0].mxu0
      %857 = vmatprep.mubr.bf16.mxu0 0
      %858 = vmatmul.mubr.bf16.gmra.mrb[0].mxu0 %v658
      %v859 = vpop.f32.mrb[0].mxu0
      %v860 = vadd.f32 0.0, %v859
      %v861 = vpop.f32.mrb[0].mxu0
      %v862 = vpop.f32.mrb[0].mxu0
      %v863 = vadd.f32 0.0, %v862
      %v864 = vpop.f32.mrb[0].mxu0
      %865 = vmatprep.mubr.bf16.mxu0 0
      %866 = vmatmul.mubr.bf16.gmra.mrb[0].mxu0 %v666
      %v867 = vpop.f32.mrb[0].mxu0
      %v868 = vadd.f32 0.0, %v867
      %v869 = vpop.f32.mrb[0].mxu0
      %v870 = vpop.f32.mrb[0].mxu0
      %v871 = vadd.f32 0.0, %v870
      %v872 = vpop.f32.mrb[0].mxu0
      %873 = vmatprep.mubr.bf16.mxu0 0
      %874 = vmatmul.mubr.bf16.gmra.mrb[0].mxu0 %v674
      %v875 = vpop.f32.mrb[0].mxu0
      %v876 = vadd.f32 0.0, %v875
      %v877 = vpop.f32.mrb[0].mxu0
      %v878 = vpop.f32.mrb[0].mxu0
      %v879 = vadd.f32 0.0, %v878
      %v880 = vpop.f32.mrb[0].mxu0
      %881 = vmatprep.mubr.bf16.mxu0 0
      %882 = vmatmul.mubr.bf16.gmra.mrb[0].mxu0 %v682
      %v883 = vpop.f32.mrb[0].mxu0
      %v884 = vadd.f32 0.0, %v883
      %v885 = vpop.f32.mrb[0].mxu0
      %v886 = vpop.f32.mrb[0].mxu0
      %v887 = vadd.f32 0.0, %v886
      %v888 = vpop.f32.mrb[0].mxu0
      %889 = vmatprep.mubr.bf16.mxu0 0
      %890 = vmatmul.mubr.bf16.gmra.mrb[0].mxu0 %v690
      %v891 = vpop.f32.mrb[0].mxu0
      %v892 = vadd.f32 0.0, %v891
      %v893 = vpop.f32.mrb[0].mxu0
      %v894 = vpop.f32.mrb[0].mxu0
      %v895 = vadd.f32 0.0, %v894
      %v896 = vpop.f32.mrb[0].mxu0
      %897 = vmatprep.mubr.bf16.mxu0 0
      %898 = vmatmul.mubr.bf16.gmra.mrb[0].mxu0 %v698
      %v899 = vpop.f32.mrb[0].mxu0
      %v900 = vadd.f32 0.0, %v899
      %v901 = vpop.f32.mrb[0].mxu0
      %v902 = vpop.f32.mrb[0].mxu0
      %v903 = vadd.f32 0.0, %v902
      %v904 = vpop.f32.mrb[0].mxu0
      %905 = vdwg.mxu0
      %v936 = vunpack.c.l.b16 %v476
      %v937 = vunpack.c.l.b16 %v477
      %v938 = vunpack.c.l.b16 %v478
      %v939 = vunpack.c.l.b16 %v479
      %v940 = vunpack.c.l.b16 %v480
      %v941 = vunpack.c.l.b16 %v481
      %v942 = vunpack.c.l.b16 %v482
      %v943 = vunpack.c.l.b16 %v483
      %v944 = vunpack.c.l.b16 %v484
      %v945 = vunpack.c.l.b16 %v485
      %v946 = vunpack.c.l.b16 %v486
      %v947 = vunpack.c.l.b16 %v487
      %v948 = vunpack.c.l.b16 %v488
      %v949 = vunpack.c.l.b16 %v489
      %v950 = vunpack.c.l.b16 %v490
      %v951 = vunpack.c.l.b16 %v491
      %v952 = vpack.c.b16 %v937, %v936
      %v953 = vpack.c.b16 %v939, %v938
      %v954 = vpack.c.b16 %v941, %v940
      %v955 = vpack.c.b16 %v943, %v942
      %v956 = vpack.c.b16 %v945, %v944
      %v957 = vpack.c.b16 %v947, %v946
      %v958 = vpack.c.b16 %v949, %v948
      %v959 = vpack.c.b16 %v951, %v950
      %968 = vmatprep.subr.bf16.mxu0 0
      %969 = vmatpush1.bf16.msra.mxu0 %v952
      %970 = vmatprep.subr.bf16.mxu0 0
      %971 = vmatpush1.bf16.msra.mxu0 %v953
      %972 = vmatprep.subr.bf16.mxu0 0
      %973 = vmatpush1.bf16.msra.mxu0 %v954
      %974 = vmatprep.subr.bf16.mxu0 0
      %975 = vmatpush1.bf16.msra.mxu0 %v955
      %976 = vmatprep.subr.bf16.mxu0 0
      %977 = vmatpush1.bf16.msra.mxu0 %v956
      %978 = vmatprep.subr.bf16.mxu0 0
      %979 = vmatpush1.bf16.msra.mxu0 %v957
      %980 = vmatprep.subr.bf16.mxu0 0
      %981 = vmatpush1.bf16.msra.mxu0 %v958
      %982 = vmatprep.subr.bf16.mxu0 0
      %983 = vmatpush1.bf16.msra.mxu0 %v959
      %984 = vmatprep.subr.bf16.mxu0 0
      %985 = vmatpush1.bf16.msra.mxu0 0
      %986 = vmatprep.subr.bf16.mxu0 0
      %987 = vmatpush1.bf16.msra.mxu0 0
      %988 = vmatprep.subr.bf16.mxu0 0
      %989 = vmatpush1.bf16.msra.mxu0 0
      %990 = vmatprep.subr.bf16.mxu0 0
      %991 = vmatpush1.bf16.msra.mxu0 0
      %992 = vmatprep.subr.bf16.mxu0 0
      %993 = vmatpush1.bf16.msra.mxu0 0
      %994 = vmatprep.subr.bf16.mxu0 0
      %995 = vmatpush1.bf16.msra.mxu0 0
      %996 = vmatprep.subr.bf16.mxu0 0
      %997 = vmatpush1.bf16.msra.mxu0 0
      %998 = vmatprep.subr.bf16.mxu0 0
      %999 = vmatpush1.bf16.msra.mxu0 0
      %1000 = vmatprep.mubr.bf16.mxu0 0
      %1001 = vmatmul.mubr.bf16.gmra.mrb[0].mxu0 %v567
      %v1002 = vpop.f32.mrb[0].mxu0
      %v1003 = vadd.f32 %v796, %v1002
      %v1004 = vpop.f32.mrb[0].mxu0
      %v1005 = vpop.f32.mrb[0].mxu0
      %v1006 = vadd.f32 %v799, %v1005
      %v1007 = vpop.f32.mrb[0].mxu0
      %1008 = vmatprep.mubr.bf16.mxu0 0
      %1009 = vmatmul.mubr.bf16.gmra.mrb[0].mxu0 %v568
      %v1010 = vpop.f32.mrb[0].mxu0
      %v1011 = vadd.f32 %v804, %v1010
      %v1012 = vpop.f32.mrb[0].mxu0
      %v1013 = vpop.f32.mrb[0].mxu0
      %v1014 = vadd.f32 %v807, %v1013
      %v1015 = vpop.f32.mrb[0].mxu0
      %1016 = vmatprep.mubr.bf16.mxu0 0
      %1017 = vmatmul.mubr.bf16.gmra.mrb[0].mxu0 %v569
      %v1018 = vpop.f32.mrb[0].mxu0
      %v1019 = vadd.f32 %v812, %v1018
      %v1020 = vpop.f32.mrb[0].mxu0
      %v1021 = vpop.f32.mrb[0].mxu0
      %v1022 = vadd.f32 %v815, %v1021
      %v1023 = vpop.f32.mrb[0].mxu0
      %1024 = vmatprep.mubr.bf16.mxu0 0
      %1025 = vmatmul.mubr.bf16.gmra.mrb[0].mxu0 %v570
      %v1026 = vpop.f32.mrb[0].mxu0
      %v1027 = vadd.f32 %v820, %v1026
      %v1028 = vpop.f32.mrb[0].mxu0
      %v1029 = vpop.f32.mrb[0].mxu0
      %v1030 = vadd.f32 %v823, %v1029
      %v1031 = vpop.f32.mrb[0].mxu0
      %1032 = vmatprep.mubr.bf16.mxu0 0
      %1033 = vmatmul.mubr.bf16.gmra.mrb[0].mxu0 %v571
      %v1034 = vpop.f32.mrb[0].mxu0
      %v1035 = vadd.f32 %v828, %v1034
      %v1036 = vpop.f32.mrb[0].mxu0
      %v1037 = vpop.f32.mrb[0].mxu0
      %v1038 = vadd.f32 %v831, %v1037
      %v1039 = vpop.f32.mrb[0].mxu0
      %1040 = vmatprep.mubr.bf16.mxu0 0
      %1041 = vmatmul.mubr.bf16.gmra.mrb[0].mxu0 %v572
      %v1042 = vpop.f32.mrb[0].mxu0
      %v1043 = vadd.f32 %v836, %v1042
      %v1044 = vpop.f32.mrb[0].mxu0
      %v1045 = vpop.f32.mrb[0].mxu0
      %v1046 = vadd.f32 %v839, %v1045
      %v1047 = vpop.f32.mrb[0].mxu0
      %1048 = vmatprep.mubr.bf16.mxu0 0
      %1049 = vmatmul.mubr.bf16.gmra.mrb[0].mxu0 %v573
      %v1050 = vpop.f32.mrb[0].mxu0
      %v1051 = vadd.f32 %v844, %v1050
      %v1052 = vpop.f32.mrb[0].mxu0
      %v1053 = vpop.f32.mrb[0].mxu0
      %v1054 = vadd.f32 %v847, %v1053
      %v1055 = vpop.f32.mrb[0].mxu0
      %1056 = vmatprep.mubr.bf16.mxu0 0
      %1057 = vmatmul.mubr.bf16.gmra.mrb[0].mxu0 %v574
      %v1058 = vpop.f32.mrb[0].mxu0
      %v1059 = vadd.f32 %v852, %v1058
      %v1060 = vpop.f32.mrb[0].mxu0
      %v1061 = vpop.f32.mrb[0].mxu0
      %v1062 = vadd.f32 %v855, %v1061
      %v1063 = vpop.f32.mrb[0].mxu0
      %1064 = vmatprep.mubr.bf16.mxu0 0
      %1065 = vmatmul.mubr.bf16.gmra.mrb[0].mxu0 %v575
      %v1066 = vpop.f32.mrb[0].mxu0
      %v1067 = vadd.f32 %v860, %v1066
      %v1068 = vpop.f32.mrb[0].mxu0
      %v1069 = vpop.f32.mrb[0].mxu0
      %v1070 = vadd.f32 %v863, %v1069
      %v1071 = vpop.f32.mrb[0].mxu0
      %1072 = vmatprep.mubr.bf16.mxu0 0
      %1073 = vmatmul.mubr.bf16.gmra.mrb[0].mxu0 %v576
      %v1074 = vpop.f32.mrb[0].mxu0
      %v1075 = vadd.f32 %v868, %v1074
      %v1076 = vpop.f32.mrb[0].mxu0
      %v1077 = vpop.f32.mrb[0].mxu0
      %v1078 = vadd.f32 %v871, %v1077
      %v1079 = vpop.f32.mrb[0].mxu0
      %1080 = vmatprep.mubr.bf16.mxu0 0
      %1081 = vmatmul.mubr.bf16.gmra.mrb[0].mxu0 %v577
      %v1082 = vpop.f32.mrb[0].mxu0
      %v1083 = vadd.f32 %v876, %v1082
      %v1084 = vpop.f32.mrb[0].mxu0
      %v1085 = vpop.f32.mrb[0].mxu0
      %v1086 = vadd.f32 %v879, %v1085
      %v1087 = vpop.f32.mrb[0].mxu0
      %1088 = vmatprep.mubr.bf16.mxu0 0
      %1089 = vmatmul.mubr.bf16.gmra.mrb[0].mxu0 %v578
      %v1090 = vpop.f32.mrb[0].mxu0
      %v1091 = vadd.f32 %v884, %v1090
      %v1092 = vpop.f32.mrb[0].mxu0
      %v1093 = vpop.f32.mrb[0].mxu0
      %v1094 = vadd.f32 %v887, %v1093
      %v1095 = vpop.f32.mrb[0].mxu0
      %1096 = vmatprep.mubr.bf16.mxu0 0
      %1097 = vmatmul.mubr.bf16.gmra.mrb[0].mxu0 %v579
      %v1098 = vpop.f32.mrb[0].mxu0
      %v1099 = vadd.f32 %v892, %v1098
      %v1100 = vpop.f32.mrb[0].mxu0
      %v1101 = vpop.f32.mrb[0].mxu0
      %v1102 = vadd.f32 %v895, %v1101
      %v1103 = vpop.f32.mrb[0].mxu0
      %1104 = vmatprep.mubr.bf16.mxu0 0
      %1105 = vmatmul.mubr.bf16.gmra.mrb[0].mxu0 %v580
      %v1106 = vpop.f32.mrb[0].mxu0
      %v1107 = vadd.f32 %v900, %v1106
      %v1108 = vpop.f32.mrb[0].mxu0
      %v1109 = vpop.f32.mrb[0].mxu0
      %v1110 = vadd.f32 %v903, %v1109
      %v1111 = vpop.f32.mrb[0].mxu0
      %1112 = vdwg.mxu0
      %v1113 = vld [vmem:[#allocation2] sm:$0xe]
      %v1114 = vld [vmem:[%s2 + $0x80] sm:$0xf]
      %v1115 = vld [vmem:[%s2 + $0x84] sm:$0xf]
      %v1116 = vld [vmem:[%s2 + $0x88] sm:$0xf]
      %v1117 = vld [vmem:[%s2 + $0x8c] sm:$0xf]
      %v1118 = vld [vmem:[%s2 + $0x90] sm:$0xf]
      %v1119 = vld [vmem:[%s2 + $0x94] sm:$0xf]
      %v1120 = vld [vmem:[%s2 + $0x98] sm:$0xf]
      %v1121 = vld [vmem:[%s2 + $0x9c] sm:$0xf]
      %v1122 = vld [vmem:[%s2 + $0xa0] sm:$0xf]
      %v1123 = vld [vmem:[%s2 + $0xa4] sm:$0xf]
      %v1124 = vld [vmem:[%s2 + $0xa8] sm:$0xf]
      %v1125 = vld [vmem:[%s2 + $0xac] sm:$0xf]
      %v1126 = vld [vmem:[%s2 + $0xb0] sm:$0xf]
      %v1127 = vld [vmem:[%s2 + $0xb4] sm:$0xf]
      %v1128 = vld [vmem:[%s2 + $0xb8] sm:$0xf]
      %v1129 = vld [vmem:[%s2 + $0xbc] sm:$0xf]
      %v1131 = vunpack.c.l.b16 %v1113
      %v1132 = vpack.c.b16 %v539, %v1131
      %vm1133 = vcmask 1046528
      %v1134 = vrot.slane %v1132, 1
      %v1135 = vrot.slane %v568, 1
      %v1136 = vsel %vm1133, %v1134, %v1135
      %v1137 = vrot.slane %v569, 1
      %v1138 = vsel %vm1133, %v1135, %v1137
      %v1139 = vrot.slane %v570, 1
      %v1140 = vsel %vm1133, %v1137, %v1139
      %v1141 = vrot.slane %v571, 1
      %v1142 = vsel %vm1133, %v1139, %v1141
      %v1143 = vrot.slane %v572, 1
      %v1144 = vsel %vm1133, %v1141, %v1143
      %v1145 = vrot.slane %v573, 1
      %v1146 = vsel %vm1133, %v1143, %v1145
      %v1147 = vrot.slane %v574, 1
      %v1148 = vsel %vm1133, %v1145, %v1147
      %v1149 = vrot.slane %v575, 1
      %v1150 = vsel %vm1133, %v1147, %v1149
      %v1151 = vrot.slane %v576, 1
      %v1152 = vsel %vm1133, %v1149, %v1151
      %v1153 = vrot.slane %v577, 1
      %v1154 = vsel %vm1133, %v1151, %v1153
      %v1155 = vrot.slane %v578, 1
      %v1156 = vsel %vm1133, %v1153, %v1155
      %v1157 = vrot.slane %v579, 1
      %v1158 = vsel %vm1133, %v1155, %v1157
      %v1159 = vrot.slane %v580, 1
      %v1160 = vsel %vm1133, %v1157, %v1159
      %v1161 = vrot.slane %v581, 1
      %v1162 = vsel %vm1133, %v1159, %v1161
      %v1193 = vunpack.c.l.b16 %v1114
      %v1194 = vunpack.c.l.b16 %v1115
      %v1195 = vunpack.c.l.b16 %v1116
      %v1196 = vunpack.c.l.b16 %v1117
      %v1197 = vunpack.c.l.b16 %v1118
      %v1198 = vunpack.c.l.b16 %v1119
      %v1199 = vunpack.c.l.b16 %v1120
      %v1200 = vunpack.c.l.b16 %v1121
      %v1201 = vunpack.c.l.b16 %v1122
      %v1202 = vunpack.c.l.b16 %v1123
      %v1203 = vunpack.c.l.b16 %v1124
      %v1204 = vunpack.c.l.b16 %v1125
      %v1205 = vunpack.c.l.b16 %v1126
      %v1206 = vunpack.c.l.b16 %v1127
      %v1207 = vunpack.c.l.b16 %v1128
      %v1208 = vunpack.c.l.b16 %v1129
      %v1209 = vpack.c.b16 %v1194, %v1193
      %v1210 = vpack.c.b16 %v1196, %v1195
      %v1211 = vpack.c.b16 %v1198, %v1197
      %v1212 = vpack.c.b16 %v1200, %v1199
      %v1213 = vpack.c.b16 %v1202, %v1201
      %v1214 = vpack.c.b16 %v1204, %v1203
      %v1215 = vpack.c.b16 %v1206, %v1205
      %v1216 = vpack.c.b16 %v1208, %v1207
      %1225 = vmatprep.subr.bf16.mxu0 0
      %1226 = vmatpush1.bf16.msra.mxu0 %v1209
      %1227 = vmatprep.subr.bf16.mxu0 0
      %1228 = vmatpush1.bf16.msra.mxu0 %v1210
      %1229 = vmatprep.subr.bf16.mxu0 0
      %1230 = vmatpush1.bf16.msra.mxu0 %v1211
      %1231 = vmatprep.subr.bf16.mxu0 0
      %1232 = vmatpush1.bf16.msra.mxu0 %v1212
      %1233 = vmatprep.subr.bf16.mxu0 0
      %1234 = vmatpush1.bf16.msra.mxu0 %v1213
      %1235 = vmatprep.subr.bf16.mxu0 0
      %1236 = vmatpush1.bf16.msra.mxu0 %v1214
      %1237 = vmatprep.subr.bf16.mxu0 0
      %1238 = vmatpush1.bf16.msra.mxu0 %v1215
      %1239 = vmatprep.subr.bf16.mxu0 0
      %1240 = vmatpush1.bf16.msra.mxu0 %v1216
      %1241 = vmatprep.subr.bf16.mxu0 0
      %1242 = vmatpush1.bf16.msra.mxu0 0
      %1243 = vmatprep.subr.bf16.mxu0 0
      %1244 = vmatpush1.bf16.msra.mxu0 0
      %1245 = vmatprep.subr.bf16.mxu0 0
      %1246 = vmatpush1.bf16.msra.mxu0 0
      %1247 = vmatprep.subr.bf16.mxu0 0
      %1248 = vmatpush1.bf16.msra.mxu0 0
      %1249 = vmatprep.subr.bf16.mxu0 0
      %1250 = vmatpush1.bf16.msra.mxu0 0
      %1251 = vmatprep.subr.bf16.mxu0 0
      %1252 = vmatpush1.bf16.msra.mxu0 0
      %1253 = vmatprep.subr.bf16.mxu0 0
      %1254 = vmatpush1.bf16.msra.mxu0 0
      %1255 = vmatprep.subr.bf16.mxu0 0
      %1256 = vmatpush1.bf16.msra.mxu0 0
      %1257 = vmatprep.mubr.bf16.mxu0 0
      %1258 = vmatmul.mubr.bf16.gmra.mrb[0].mxu0 %v1136
      %v1259 = vpop.f32.mrb[0].mxu0
      %v1260 = vadd.f32 0.0, %v1259
      %v1261 = vpop.f32.mrb[0].mxu0
      %v1262 = vpop.f32.mrb[0].mxu0
      %v1263 = vadd.f32 0.0, %v1262
      %v1264 = vpop.f32.mrb[0].mxu0
      %1265 = vmatprep.mubr.bf16.mxu0 0
      %1266 = vmatmul.mubr.bf16.gmra.mrb[0].mxu0 %v1138
      %v1267 = vpop.f32.mrb[0].mxu0
      %v1268 = vadd.f32 0.0, %v1267
      %v1269 = vpop.f32.mrb[0].mxu0
      %v1270 = vpop.f32.mrb[0].mxu0
      %v1271 = vadd.f32 0.0, %v1270
      %v1272 = vpop.f32.mrb[0].mxu0
      %1273 = vmatprep.mubr.bf16.mxu0 0
      %1274 = vmatmul.mubr.bf16.gmra.mrb[0].mxu0 %v1140
      %v1275 = vpop.f32.mrb[0].mxu0
      %v1276 = vadd.f32 0.0, %v1275
      %v1277 = vpop.f32.mrb[0].mxu0
      %v1278 = vpop.f32.mrb[0].mxu0
      %v1279 = vadd.f32 0.0, %v1278
      %v1280 = vpop.f32.mrb[0].mxu0
      %1281 = vmatprep.mubr.bf16.mxu0 0
      %1282 = vmatmul.mubr.bf16.gmra.mrb[0].mxu0 %v1142
      %v1283 = vpop.f32.mrb[0].mxu0
      %v1284 = vadd.f32 0.0, %v1283
      %v1285 = vpop.f32.mrb[0].mxu0
      %v1286 = vpop.f32.mrb[0].mxu0
      %v1287 = vadd.f32 0.0, %v1286
      %v1288 = vpop.f32.mrb[0].mxu0
      %1289 = vmatprep.mubr.bf16.mxu0 0
      %1290 = vmatmul.mubr.bf16.gmra.mrb[0].mxu0 %v1144
      %v1291 = vpop.f32.mrb[0].mxu0
      %v1292 = vadd.f32 0.0, %v1291
      %v1293 = vpop.f32.mrb[0].mxu0
      %v1294 = vpop.f32.mrb[0].mxu0
      %v1295 = vadd.f32 0.0, %v1294
      %v1296 = vpop.f32.mrb[0].mxu0
      %1297 = vmatprep.mubr.bf16.mxu0 0
      %1298 = vmatmul.mubr.bf16.gmra.mrb[0].mxu0 %v1146
      %v1299 = vpop.f32.mrb[0].mxu0
      %v1300 = vadd.f32 0.0, %v1299
      %v1301 = vpop.f32.mrb[0].mxu0
      %v1302 = vpop.f32.mrb[0].mxu0
      %v1303 = vadd.f32 0.0, %v1302
      %v1304 = vpop.f32.mrb[0].mxu0
      %1305 = vmatprep.mubr.bf16.mxu0 0
      %1306 = vmatmul.mubr.bf16.gmra.mrb[0].mxu0 %v1148
      %v1307 = vpop.f32.mrb[0].mxu0
      %v1308 = vadd.f32 0.0, %v1307
      %v1309 = vpop.f32.mrb[0].mxu0
      %v1310 = vpop.f32.mrb[0].mxu0
      %v1311 = vadd.f32 0.0, %v1310
      %v1312 = vpop.f32.mrb[0].mxu0
      %1313 = vmatprep.mubr.bf16.mxu0 0
      %1314 = vmatmul.mubr.bf16.gmra.mrb[0].mxu0 %v1150
      %v1315 = vpop.f32.mrb[0].mxu0
      %v1316 = vadd.f32 0.0, %v1315
      %v1317 = vpop.f32.mrb[0].mxu0
      %v1318 = vpop.f32.mrb[0].mxu0
      %v1319 = vadd.f32 0.0, %v1318
      %v1320 = vpop.f32.mrb[0].mxu0
      %1321 = vmatprep.mubr.bf16.mxu0 0
      %1322 = vmatmul.mubr.bf16.gmra.mrb[0].mxu0 %v1152
      %v1323 = vpop.f32.mrb[0].mxu0
      %v1324 = vadd.f32 0.0, %v1323
      %v1325 = vpop.f32.mrb[0].mxu0
      %v1326 = vpop.f32.mrb[0].mxu0
      %v1327 = vadd.f32 0.0, %v1326
      %v1328 = vpop.f32.mrb[0].mxu0
      %1329 = vmatprep.mubr.bf16.mxu0 0
      %1330 = vmatmul.mubr.bf16.gmra.mrb[0].mxu0 %v1154
      %v1331 = vpop.f32.mrb[0].mxu0
      %v1332 = vadd.f32 0.0, %v1331
      %v1333 = vpop.f32.mrb[0].mxu0
      %v1334 = vpop.f32.mrb[0].mxu0
      %v1335 = vadd.f32 0.0, %v1334
      %v1336 = vpop.f32.mrb[0].mxu0
      %1337 = vmatprep.mubr.bf16.mxu0 0
      %1338 = vmatmul.mubr.bf16.gmra.mrb[0].mxu0 %v1156
      %v1339 = vpop.f32.mrb[0].mxu0
      %v1340 = vadd.f32 0.0, %v1339
      %v1341 = vpop.f32.mrb[0].mxu0
      %v1342 = vpop.f32.mrb[0].mxu0
      %v1343 = vadd.f32 0.0, %v1342
      %v1344 = vpop.f32.mrb[0].mxu0
      %1345 = vmatprep.mubr.bf16.mxu0 0
      %1346 = vmatmul.mubr.bf16.gmra.mrb[0].mxu0 %v1158
      %v1347 = vpop.f32.mrb[0].mxu0
      %v1348 = vadd.f32 0.0, %v1347
      %v1349 = vpop.f32.mrb[0].mxu0
      %v1350 = vpop.f32.mrb[0].mxu0
      %v1351 = vadd.f32 0.0, %v1350
      %v1352 = vpop.f32.mrb[0].mxu0
      %1353 = vmatprep.mubr.bf16.mxu0 0
      %1354 = vmatmul.mubr.bf16.gmra.mrb[0].mxu0 %v1160
      %v1355 = vpop.f32.mrb[0].mxu0
      %v1356 = vadd.f32 0.0, %v1355
      %v1357 = vpop.f32.mrb[0].mxu0
      %v1358 = vpop.f32.mrb[0].mxu0
      %v1359 = vadd.f32 0.0, %v1358
      %v1360 = vpop.f32.mrb[0].mxu0
      %1361 = vmatprep.mubr.bf16.mxu0 0
      %1362 = vmatmul.mubr.bf16.gmra.mrb[0].mxu0 %v1162
      %v1363 = vpop.f32.mrb[0].mxu0
      %v1364 = vadd.f32 0.0, %v1363
      %v1365 = vpop.f32.mrb[0].mxu0
      %v1366 = vpop.f32.mrb[0].mxu0
      %v1367 = vadd.f32 0.0, %v1366
      %v1368 = vpop.f32.mrb[0].mxu0
      %1369 = vdwg.mxu0
      %v1370 = vadd.f32 %v1003, %v1260
      %v1371 = vadd.f32 %v1006, %v1263
      %v1372 = vadd.f32 %v1011, %v1268
      %v1373 = vadd.f32 %v1014, %v1271
      %v1374 = vadd.f32 %v1019, %v1276
      %v1375 = vadd.f32 %v1022, %v1279
      %v1376 = vadd.f32 %v1027, %v1284
      %v1377 = vadd.f32 %v1030, %v1287
      %v1378 = vadd.f32 %v1035, %v1292
      %v1379 = vadd.f32 %v1038, %v1295
      %v1380 = vadd.f32 %v1043, %v1300
      %v1381 = vadd.f32 %v1046, %v1303
      %v1382 = vadd.f32 %v1051, %v1308
      %v1383 = vadd.f32 %v1054, %v1311
      %v1384 = vadd.f32 %v1059, %v1316
      %v1385 = vadd.f32 %v1062, %v1319
      %v1386 = vadd.f32 %v1067, %v1324
      %v1387 = vadd.f32 %v1070, %v1327
      %v1388 = vadd.f32 %v1075, %v1332
      %v1389 = vadd.f32 %v1078, %v1335
      %v1390 = vadd.f32 %v1083, %v1340
      %v1391 = vadd.f32 %v1086, %v1343
      %v1392 = vadd.f32 %v1091, %v1348
      %v1393 = vadd.f32 %v1094, %v1351
      %v1394 = vadd.f32 %v1099, %v1356
      %v1395 = vadd.f32 %v1102, %v1359
      %v1396 = vadd.f32 %v1107, %v1364
      %v1397 = vadd.f32 %v1110, %v1367
      %v1398 = vld [vmem:[#allocation2 + $0xc] sm:$0xf]
      %v1399 = vld [vmem:[#allocation2 + $0x10] sm:$0xf]
      %v1400 = vld [vmem:[#allocation2 + $0x14] sm:$0xf]
      %v1401 = vld [vmem:[#allocation2 + $0x18] sm:$0xf]
      %v1402 = vld [vmem:[#allocation2 + $0x1c] sm:$0xf]
      %v1403 = vld [vmem:[#allocation2 + $0x20] sm:$0xf]
      %v1404 = vld [vmem:[#allocation2 + $0x24] sm:$0xf]
      %v1405 = vld [vmem:[#allocation2 + $0x28] sm:$0xf]
      %v1406 = vld [vmem:[#allocation2 + $0x2c] sm:$0xf]
      %v1407 = vld [vmem:[#allocation2 + $0x30] sm:$0xf]
      %v1408 = vld [vmem:[#allocation2 + $0x34] sm:$0xf]
      %v1409 = vld [vmem:[#allocation2 + $0x38] sm:$0xf]
      %v1410 = vld [vmem:[#allocation2 + $0x3c] sm:$0xf]
      %v1411 = vld [vmem:[#allocation2 + $0x40] sm:$0xf]
      %v1412 = vld [vmem:[#allocation2 + $0x44] sm:$0xf]
      %v1413 = vld [vmem:[#allocation2 + $0x48] sm:$0xf]
      %v1414 = vld [vmem:[#allocation2 + $0x4c] sm:$0xf]
      %v1415 = vld [vmem:[#allocation2 + $0x50] sm:$0xf]
      %v1416 = vld [vmem:[#allocation2 + $0x54] sm:$0xf]
      %v1417 = vld [vmem:[#allocation2 + $0x58] sm:$0xf]
      %v1418 = vld [vmem:[#allocation2 + $0x5c] sm:$0xf]
      %v1419 = vld [vmem:[#allocation2 + $0x60] sm:$0xf]
      %v1420 = vld [vmem:[#allocation2 + $0x64] sm:$0xf]
      %v1421 = vld [vmem:[#allocation2 + $0x68] sm:$0xf]
      %v1422 = vld [vmem:[#allocation2 + $0x6c] sm:$0xf]
      %v1423 = vld [vmem:[#allocation2 + $0x70] sm:$0xf]
      %v1424 = vld [vmem:[#allocation2 + $0x74] sm:$0xf]
      %v1425 = vld [vmem:[#allocation2 + $0x78] sm:$0xf]
      %v1426 = vld [vmem:[%s2 + $0xc0] sm:$0xf]
      %v1427 = vld [vmem:[%s2 + $0xc4] sm:$0xf]
      %v1428 = vld [vmem:[%s2 + $0xc8] sm:$0xf]
      %v1429 = vld [vmem:[%s2 + $0xcc] sm:$0xf]
      %v1430 = vld [vmem:[%s2 + $0xd0] sm:$0xf]
      %v1431 = vld [vmem:[%s2 + $0xd4] sm:$0xf]
      %v1432 = vld [vmem:[%s2 + $0xd8] sm:$0xf]
      %v1433 = vld [vmem:[%s2 + $0xdc] sm:$0xf]
      %v1434 = vld [vmem:[%s2 + $0xe0] sm:$0xf]
      %v1435 = vld [vmem:[%s2 + $0xe4] sm:$0xf]
      %v1436 = vld [vmem:[%s2 + $0xe8] sm:$0xf]
      %v1437 = vld [vmem:[%s2 + $0xec] sm:$0xf]
      %v1438 = vld [vmem:[%s2 + $0xf0] sm:$0xf]
      %v1439 = vld [vmem:[%s2 + $0xf4] sm:$0xf]
      %v1440 = vld [vmem:[%s2 + $0xf8] sm:$0xf]
      %v1441 = vld [vmem:[%s2 + $0xfc] sm:$0xf]
      %v1470 = vunpack.c.l.b16 %v1398
      %v1471 = vunpack.c.l.b16 %v1399
      %v1472 = vunpack.c.l.b16 %v1400
      %v1473 = vunpack.c.l.b16 %v1401
      %v1474 = vunpack.c.l.b16 %v1402
      %v1475 = vunpack.c.l.b16 %v1403
      %v1476 = vunpack.c.l.b16 %v1404
      %v1477 = vunpack.c.l.b16 %v1405
      %v1478 = vunpack.c.l.b16 %v1406
      %v1479 = vunpack.c.l.b16 %v1407
      %v1480 = vunpack.c.l.b16 %v1408
      %v1481 = vunpack.c.l.b16 %v1409
      %v1482 = vunpack.c.l.b16 %v1410
      %v1483 = vunpack.c.l.b16 %v1411
      %v1484 = vunpack.c.l.b16 %v1412
      %v1485 = vunpack.c.l.b16 %v1413
      %v1486 = vunpack.c.l.b16 %v1414
      %v1487 = vunpack.c.l.b16 %v1415
      %v1488 = vunpack.c.l.b16 %v1416
      %v1489 = vunpack.c.l.b16 %v1417
      %v1490 = vunpack.c.l.b16 %v1418
      %v1491 = vunpack.c.l.b16 %v1419
      %v1492 = vunpack.c.l.b16 %v1420
      %v1493 = vunpack.c.l.b16 %v1421
      %v1494 = vunpack.c.l.b16 %v1422
      %v1495 = vunpack.c.l.b16 %v1423
      %v1496 = vunpack.c.l.b16 %v1424
      %v1497 = vunpack.c.l.b16 %v1425
      %v1498 = vpack.c.b16 %v1471, %v1470
      %v1499 = vpack.c.b16 %v1473, %v1472
      %v1500 = vpack.c.b16 %v1475, %v1474
      %v1501 = vpack.c.b16 %v1477, %v1476
      %v1502 = vpack.c.b16 %v1479, %v1478
      %v1503 = vpack.c.b16 %v1481, %v1480
      %v1504 = vpack.c.b16 %v1483, %v1482
      %v1505 = vpack.c.b16 %v1485, %v1484
      %v1506 = vpack.c.b16 %v1487, %v1486
      %v1507 = vpack.c.b16 %v1489, %v1488
      %v1508 = vpack.c.b16 %v1491, %v1490
      %v1509 = vpack.c.b16 %v1493, %v1492
      %v1510 = vpack.c.b16 %v1495, %v1494
      %v1511 = vpack.c.b16 %v1497, %v1496
      %v1542 = vunpack.c.l.b16 %v1426
      %v1543 = vunpack.c.l.b16 %v1427
      %v1544 = vunpack.c.l.b16 %v1428
      %v1545 = vunpack.c.l.b16 %v1429
      %v1546 = vunpack.c.l.b16 %v1430
      %v1547 = vunpack.c.l.b16 %v1431
      %v1548 = vunpack.c.l.b16 %v1432
      %v1549 = vunpack.c.l.b16 %v1433
      %v1550 = vunpack.c.l.b16 %v1434
      %v1551 = vunpack.c.l.b16 %v1435
      %v1552 = vunpack.c.l.b16 %v1436
      %v1553 = vunpack.c.l.b16 %v1437
      %v1554 = vunpack.c.l.b16 %v1438
      %v1555 = vunpack.c.l.b16 %v1439
      %v1556 = vunpack.c.l.b16 %v1440
      %v1557 = vunpack.c.l.b16 %v1441
      %v1558 = vpack.c.b16 %v1543, %v1542
      %v1559 = vpack.c.b16 %v1545, %v1544
      %v1560 = vpack.c.b16 %v1547, %v1546
      %v1561 = vpack.c.b16 %v1549, %v1548
      %v1562 = vpack.c.b16 %v1551, %v1550
      %v1563 = vpack.c.b16 %v1553, %v1552
      %v1564 = vpack.c.b16 %v1555, %v1554
      %v1565 = vpack.c.b16 %v1557, %v1556
      %1574 = vmatprep.subr.bf16.mxu0 0
      %1575 = vmatpush1.bf16.msra.mxu0 %v1558
      %1576 = vmatprep.subr.bf16.mxu0 0
      %1577 = vmatpush1.bf16.msra.mxu0 %v1559
      %1578 = vmatprep.subr.bf16.mxu0 0
      %1579 = vmatpush1.bf16.msra.mxu0 %v1560
      %1580 = vmatprep.subr.bf16.mxu0 0
      %1581 = vmatpush1.bf16.msra.mxu0 %v1561
      %1582 = vmatprep.subr.bf16.mxu0 0
      %1583 = vmatpush1.bf16.msra.mxu0 %v1562
      %1584 = vmatprep.subr.bf16.mxu0 0
      %1585 = vmatpush1.bf16.msra.mxu0 %v1563
      %1586 = vmatprep.subr.bf16.mxu0 0
      %1587 = vmatpush1.bf16.msra.mxu0 %v1564
      %1588 = vmatprep.subr.bf16.mxu0 0
      %1589 = vmatpush1.bf16.msra.mxu0 %v1565
      %1590 = vmatprep.subr.bf16.mxu0 0
      %1591 = vmatpush1.bf16.msra.mxu0 0
      %1592 = vmatprep.subr.bf16.mxu0 0
      %1593 = vmatpush1.bf16.msra.mxu0 0
      %1594 = vmatprep.subr.bf16.mxu0 0
      %1595 = vmatpush1.bf16.msra.mxu0 0
      %1596 = vmatprep.subr.bf16.mxu0 0
      %1597 = vmatpush1.bf16.msra.mxu0 0
      %1598 = vmatprep.subr.bf16.mxu0 0
      %1599 = vmatpush1.bf16.msra.mxu0 0
      %1600 = vmatprep.subr.bf16.mxu0 0
      %1601 = vmatpush1.bf16.msra.mxu0 0
      %1602 = vmatprep.subr.bf16.mxu0 0
      %1603 = vmatpush1.bf16.msra.mxu0 0
      %1604 = vmatprep.subr.bf16.mxu0 0
      %1605 = vmatpush1.bf16.msra.mxu0 0
      %1606 = vmatprep.mubr.bf16.mxu0 0
      %1607 = vmatmul.mubr.bf16.gmra.mrb[0].mxu0 %v1498
      %v1608 = vpop.f32.mrb[0].mxu0
      %v1609 = vadd.f32 0.0, %v1608
      %v1610 = vpop.f32.mrb[0].mxu0
      %v1611 = vpop.f32.mrb[0].mxu0
      %v1612 = vadd.f32 0.0, %v1611
      %v1613 = vpop.f32.mrb[0].mxu0
      %1614 = vmatprep.mubr.bf16.mxu0 0
      %1615 = vmatmul.mubr.bf16.gmra.mrb[0].mxu0 %v1499
      %v1616 = vpop.f32.mrb[0].mxu0
      %v1617 = vadd.f32 0.0, %v1616
      %v1618 = vpop.f32.mrb[0].mxu0
      %v1619 = vpop.f32.mrb[0].mxu0
      %v1620 = vadd.f32 0.0, %v1619
      %v1621 = vpop.f32.mrb[0].mxu0
      %1622 = vmatprep.mubr.bf16.mxu0 0
      %1623 = vmatmul.mubr.bf16.gmra.mrb[0].mxu0 %v1500
      %v1624 = vpop.f32.mrb[0].mxu0
      %v1625 = vadd.f32 0.0, %v1624
      %v1626 = vpop.f32.mrb[0].mxu0
      %v1627 = vpop.f32.mrb[0].mxu0
      %v1628 = vadd.f32 0.0, %v1627
      %v1629 = vpop.f32.mrb[0].mxu0
      %1630 = vmatprep.mubr.bf16.mxu0 0
      %1631 = vmatmul.mubr.bf16.gmra.mrb[0].mxu0 %v1501
      %v1632 = vpop.f32.mrb[0].mxu0
      %v1633 = vadd.f32 0.0, %v1632
      %v1634 = vpop.f32.mrb[0].mxu0
      %v1635 = vpop.f32.mrb[0].mxu0
      %v1636 = vadd.f32 0.0, %v1635
      %v1637 = vpop.f32.mrb[0].mxu0
      %1638 = vmatprep.mubr.bf16.mxu0 0
      %1639 = vmatmul.mubr.bf16.gmra.mrb[0].mxu0 %v1502
      %v1640 = vpop.f32.mrb[0].mxu0
      %v1641 = vadd.f32 0.0, %v1640
      %v1642 = vpop.f32.mrb[0].mxu0
      %v1643 = vpop.f32.mrb[0].mxu0
      %v1644 = vadd.f32 0.0, %v1643
      %v1645 = vpop.f32.mrb[0].mxu0
      %1646 = vmatprep.mubr.bf16.mxu0 0
      %1647 = vmatmul.mubr.bf16.gmra.mrb[0].mxu0 %v1503
      %v1648 = vpop.f32.mrb[0].mxu0
      %v1649 = vadd.f32 0.0, %v1648
      %v1650 = vpop.f32.mrb[0].mxu0
      %v1651 = vpop.f32.mrb[0].mxu0
      %v1652 = vadd.f32 0.0, %v1651
      %v1653 = vpop.f32.mrb[0].mxu0
      %1654 = vmatprep.mubr.bf16.mxu0 0
      %1655 = vmatmul.mubr.bf16.gmra.mrb[0].mxu0 %v1504
      %v1656 = vpop.f32.mrb[0].mxu0
      %v1657 = vadd.f32 0.0, %v1656
      %v1658 = vpop.f32.mrb[0].mxu0
      %v1659 = vpop.f32.mrb[0].mxu0
      %v1660 = vadd.f32 0.0, %v1659
      %v1661 = vpop.f32.mrb[0].mxu0
      %1662 = vmatprep.mubr.bf16.mxu0 0
      %1663 = vmatmul.mubr.bf16.gmra.mrb[0].mxu0 %v1505
      %v1664 = vpop.f32.mrb[0].mxu0
      %v1665 = vadd.f32 0.0, %v1664
      %v1666 = vpop.f32.mrb[0].mxu0
      %v1667 = vpop.f32.mrb[0].mxu0
      %v1668 = vadd.f32 0.0, %v1667
      %v1669 = vpop.f32.mrb[0].mxu0
      %1670 = vmatprep.mubr.bf16.mxu0 0
      %1671 = vmatmul.mubr.bf16.gmra.mrb[0].mxu0 %v1506
      %v1672 = vpop.f32.mrb[0].mxu0
      %v1673 = vadd.f32 0.0, %v1672
      %v1674 = vpop.f32.mrb[0].mxu0
      %v1675 = vpop.f32.mrb[0].mxu0
      %v1676 = vadd.f32 0.0, %v1675
      %v1677 = vpop.f32.mrb[0].mxu0
      %1678 = vmatprep.mubr.bf16.mxu0 0
      %1679 = vmatmul.mubr.bf16.gmra.mrb[0].mxu0 %v1507
      %v1680 = vpop.f32.mrb[0].mxu0
      %v1681 = vadd.f32 0.0, %v1680
      %v1682 = vpop.f32.mrb[0].mxu0
      %v1683 = vpop.f32.mrb[0].mxu0
      %v1684 = vadd.f32 0.0, %v1683
      %v1685 = vpop.f32.mrb[0].mxu0
      %1686 = vmatprep.mubr.bf16.mxu0 0
      %1687 = vmatmul.mubr.bf16.gmra.mrb[0].mxu0 %v1508
      %v1688 = vpop.f32.mrb[0].mxu0
      %v1689 = vadd.f32 0.0, %v1688
      %v1690 = vpop.f32.mrb[0].mxu0
      %v1691 = vpop.f32.mrb[0].mxu0
      %v1692 = vadd.f32 0.0, %v1691
      %v1693 = vpop.f32.mrb[0].mxu0
      %1694 = vmatprep.mubr.bf16.mxu0 0
      %1695 = vmatmul.mubr.bf16.gmra.mrb[0].mxu0 %v1509
      %v1696 = vpop.f32.mrb[0].mxu0
      %v1697 = vadd.f32 0.0, %v1696
      %v1698 = vpop.f32.mrb[0].mxu0
      %v1699 = vpop.f32.mrb[0].mxu0
      %v1700 = vadd.f32 0.0, %v1699
      %v1701 = vpop.f32.mrb[0].mxu0
      %1702 = vmatprep.mubr.bf16.mxu0 0
      %1703 = vmatmul.mubr.bf16.gmra.mrb[0].mxu0 %v1510
      %v1704 = vpop.f32.mrb[0].mxu0
      %v1705 = vadd.f32 0.0, %v1704
      %v1706 = vpop.f32.mrb[0].mxu0
      %v1707 = vpop.f32.mrb[0].mxu0
      %v1708 = vadd.f32 0.0, %v1707
      %v1709 = vpop.f32.mrb[0].mxu0
      %1710 = vmatprep.mubr.bf16.mxu0 0
      %1711 = vmatmul.mubr.bf16.gmra.mrb[0].mxu0 %v1511
      %v1712 = vpop.f32.mrb[0].mxu0
      %v1713 = vadd.f32 0.0, %v1712
      %v1714 = vpop.f32.mrb[0].mxu0
      %v1715 = vpop.f32.mrb[0].mxu0
      %v1716 = vadd.f32 0.0, %v1715
      %v1717 = vpop.f32.mrb[0].mxu0
      %1718 = vdwg.mxu0
      %v1719 = vadd.f32 %v1370, %v1609
      %v1720 = vadd.f32 %v1371, %v1612
      %v1721 = vadd.f32 %v1372, %v1617
      %v1722 = vadd.f32 %v1373, %v1620
      %v1723 = vadd.f32 %v1374, %v1625
      %v1724 = vadd.f32 %v1375, %v1628
      %v1725 = vadd.f32 %v1376, %v1633
      %v1726 = vadd.f32 %v1377, %v1636
      %v1727 = vadd.f32 %v1378, %v1641
      %v1728 = vadd.f32 %v1379, %v1644
      %v1729 = vadd.f32 %v1380, %v1649
      %v1730 = vadd.f32 %v1381, %v1652
      %v1731 = vadd.f32 %v1382, %v1657
      %v1732 = vadd.f32 %v1383, %v1660
      %v1733 = vadd.f32 %v1384, %v1665
      %v1734 = vadd.f32 %v1385, %v1668
      %v1735 = vadd.f32 %v1386, %v1673
      %v1736 = vadd.f32 %v1387, %v1676
      %v1737 = vadd.f32 %v1388, %v1681
      %v1738 = vadd.f32 %v1389, %v1684
      %v1739 = vadd.f32 %v1390, %v1689
      %v1740 = vadd.f32 %v1391, %v1692
      %v1741 = vadd.f32 %v1392, %v1697
      %v1742 = vadd.f32 %v1393, %v1700
      %v1743 = vadd.f32 %v1394, %v1705
      %v1744 = vadd.f32 %v1395, %v1708
      %v1745 = vadd.f32 %v1396, %v1713
      %v1746 = vadd.f32 %v1397, %v1716
      %v1747 = vld [vmem:[#allocation2 + $0xc] sm:$0xf]
      %v1748 = vld [vmem:[#allocation2 + $0x10] sm:$0xf]
      %v1749 = vld [vmem:[#allocation2 + $0x14] sm:$0xf]
      %v1750 = vld [vmem:[#allocation2 + $0x18] sm:$0xf]
      %v1751 = vld [vmem:[#allocation2 + $0x1c] sm:$0xf]
      %v1752 = vld [vmem:[#allocation2 + $0x20] sm:$0xf]
      %v1753 = vld [vmem:[#allocation2 + $0x24] sm:$0xf]
      %v1754 = vld [vmem:[#allocation2 + $0x28] sm:$0xf]
      %v1755 = vld [vmem:[#allocation2 + $0x2c] sm:$0xf]
      %v1756 = vld [vmem:[#allocation2 + $0x30] sm:$0xf]
      %v1757 = vld [vmem:[#allocation2 + $0x34] sm:$0xf]
      %v1758 = vld [vmem:[#allocation2 + $0x38] sm:$0xf]
      %v1759 = vld [vmem:[#allocation2 + $0x3c] sm:$0xf]
      %v1760 = vld [vmem:[#allocation2 + $0x40] sm:$0xf]
      %v1761 = vld [vmem:[#allocation2 + $0x44] sm:$0xf]
      %v1762 = vld [vmem:[#allocation2 + $0x48] sm:$0xf]
      %v1763 = vld [vmem:[#allocation2 + $0x4c] sm:$0xf]
      %v1764 = vld [vmem:[#allocation2 + $0x50] sm:$0xf]
      %v1765 = vld [vmem:[#allocation2 + $0x54] sm:$0xf]
      %v1766 = vld [vmem:[#allocation2 + $0x58] sm:$0xf]
      %v1767 = vld [vmem:[#allocation2 + $0x5c] sm:$0xf]
      %v1768 = vld [vmem:[#allocation2 + $0x60] sm:$0xf]
      %v1769 = vld [vmem:[#allocation2 + $0x64] sm:$0xf]
      %v1770 = vld [vmem:[#allocation2 + $0x68] sm:$0xf]
      %v1771 = vld [vmem:[#allocation2 + $0x6c] sm:$0xf]
      %v1772 = vld [vmem:[#allocation2 + $0x70] sm:$0xf]
      %v1773 = vld [vmem:[#allocation2 + $0x74] sm:$0xf]
      %v1774 = vld [vmem:[#allocation2 + $0x78] sm:$0xf]
      %v1775 = vld [vmem:[#allocation2 + $0x7c] sm:$0x1]
      %v1776 = vld [vmem:[%s2 + $0x100] sm:$0xf]
      %v1777 = vld [vmem:[%s2 + $0x104] sm:$0xf]
      %v1778 = vld [vmem:[%s2 + $0x108] sm:$0xf]
      %v1779 = vld [vmem:[%s2 + $0x10c] sm:$0xf]
      %v1780 = vld [vmem:[%s2 + $0x110] sm:$0xf]
      %v1781 = vld [vmem:[%s2 + $0x114] sm:$0xf]
      %v1782 = vld [vmem:[%s2 + $0x118] sm:$0xf]
      %v1783 = vld [vmem:[%s2 + $0x11c] sm:$0xf]
      %v1784 = vld [vmem:[%s2 + $0x120] sm:$0xf]
      %v1785 = vld [vmem:[%s2 + $0x124] sm:$0xf]
      %v1786 = vld [vmem:[%s2 + $0x128] sm:$0xf]
      %v1787 = vld [vmem:[%s2 + $0x12c] sm:$0xf]
      %v1788 = vld [vmem:[%s2 + $0x130] sm:$0xf]
      %v1789 = vld [vmem:[%s2 + $0x134] sm:$0xf]
      %v1790 = vld [vmem:[%s2 + $0x138] sm:$0xf]
      %v1791 = vld [vmem:[%s2 + $0x13c] sm:$0xf]
      %v1821 = vunpack.c.l.b16 %v1747
      %v1822 = vunpack.c.l.b16 %v1748
      %v1823 = vunpack.c.l.b16 %v1749
      %v1824 = vunpack.c.l.b16 %v1750
      %v1825 = vunpack.c.l.b16 %v1751
      %v1826 = vunpack.c.l.b16 %v1752
      %v1827 = vunpack.c.l.b16 %v1753
      %v1828 = vunpack.c.l.b16 %v1754
      %v1829 = vunpack.c.l.b16 %v1755
      %v1830 = vunpack.c.l.b16 %v1756
      %v1831 = vunpack.c.l.b16 %v1757
      %v1832 = vunpack.c.l.b16 %v1758
      %v1833 = vunpack.c.l.b16 %v1759
      %v1834 = vunpack.c.l.b16 %v1760
      %v1835 = vunpack.c.l.b16 %v1761
      %v1836 = vunpack.c.l.b16 %v1762
      %v1837 = vunpack.c.l.b16 %v1763
      %v1838 = vunpack.c.l.b16 %v1764
      %v1839 = vunpack.c.l.b16 %v1765
      %v1840 = vunpack.c.l.b16 %v1766
      %v1841 = vunpack.c.l.b16 %v1767
      %v1842 = vunpack.c.l.b16 %v1768
      %v1843 = vunpack.c.l.b16 %v1769
      %v1844 = vunpack.c.l.b16 %v1770
      %v1845 = vunpack.c.l.b16 %v1771
      %v1846 = vunpack.c.l.b16 %v1772
      %v1847 = vunpack.c.l.b16 %v1773
      %v1848 = vunpack.c.l.b16 %v1774
      %v1849 = vunpack.c.l.b16 %v1775
      %v1850 = vpack.c.b16 %v1822, %v1821
      %v1851 = vpack.c.b16 %v1824, %v1823
      %v1852 = vpack.c.b16 %v1826, %v1825
      %v1853 = vpack.c.b16 %v1828, %v1827
      %v1854 = vpack.c.b16 %v1830, %v1829
      %v1855 = vpack.c.b16 %v1832, %v1831
      %v1856 = vpack.c.b16 %v1834, %v1833
      %v1857 = vpack.c.b16 %v1836, %v1835
      %v1858 = vpack.c.b16 %v1838, %v1837
      %v1859 = vpack.c.b16 %v1840, %v1839
      %v1860 = vpack.c.b16 %v1842, %v1841
      %v1861 = vpack.c.b16 %v1844, %v1843
      %v1862 = vpack.c.b16 %v1846, %v1845
      %v1863 = vpack.c.b16 %v1848, %v1847
      %v1864 = vpack.c.b16 %v1849, %v1849
      %v1866 = vshrl.u32 %v1850, 16
      %v1868 = vshll.u32 %v1850, 16
      %v1870 = vrot.slane %v1868, 1
      %v1871 = vor.u32 %v1866, %v1870
      %v1873 = vshll.u32 %v1851, 16
      %v1875 = vrot.slane %v1873, 1
      %v1876 = vsel %vm582, %v1871, %v1875
      %v1877 = vshrl.u32 %v1851, 16
      %v1879 = vor.u32 %v1877, %v1875
      %v1881 = vshll.u32 %v1852, 16
      %v1883 = vrot.slane %v1881, 1
      %v1884 = vsel %vm582, %v1879, %v1883
      %v1885 = vshrl.u32 %v1852, 16
      %v1887 = vor.u32 %v1885, %v1883
      %v1889 = vshll.u32 %v1853, 16
      %v1891 = vrot.slane %v1889, 1
      %v1892 = vsel %vm582, %v1887, %v1891
      %v1893 = vshrl.u32 %v1853, 16
      %v1895 = vor.u32 %v1893, %v1891
      %v1897 = vshll.u32 %v1854, 16
      %v1899 = vrot.slane %v1897, 1
      %v1900 = vsel %vm582, %v1895, %v1899
      %v1901 = vshrl.u32 %v1854, 16
      %v1903 = vor.u32 %v1901, %v1899
      %v1905 = vshll.u32 %v1855, 16
      %v1907 = vrot.slane %v1905, 1
      %v1908 = vsel %vm582, %v1903, %v1907
      %v1909 = vshrl.u32 %v1855, 16
      %v1911 = vor.u32 %v1909, %v1907
      %v1913 = vshll.u32 %v1856, 16
      %v1915 = vrot.slane %v1913, 1
      %v1916 = vsel %vm582, %v1911, %v1915
      %v1917 = vshrl.u32 %v1856, 16
      %v1919 = vor.u32 %v1917, %v1915
      %v1921 = vshll.u32 %v1857, 16
      %v1923 = vrot.slane %v1921, 1
      %v1924 = vsel %vm582, %v1919, %v1923
      %v1925 = vshrl.u32 %v1857, 16
      %v1927 = vor.u32 %v1925, %v1923
      %v1929 = vshll.u32 %v1858, 16
      %v1931 = vrot.slane %v1929, 1
      %v1932 = vsel %vm582, %v1927, %v1931
      %v1933 = vshrl.u32 %v1858, 16
      %v1935 = vor.u32 %v1933, %v1931
      %v1937 = vshll.u32 %v1859, 16
      %v1939 = vrot.slane %v1937, 1
      %v1940 = vsel %vm582, %v1935, %v1939
      %v1941 = vshrl.u32 %v1859, 16
      %v1943 = vor.u32 %v1941, %v1939
      %v1945 = vshll.u32 %v1860, 16
      %v1947 = vrot.slane %v1945, 1
      %v1948 = vsel %vm582, %v1943, %v1947
      %v1949 = vshrl.u32 %v1860, 16
      %v1951 = vor.u32 %v1949, %v1947
      %v1953 = vshll.u32 %v1861, 16
      %v1955 = vrot.slane %v1953, 1
      %v1956 = vsel %vm582, %v1951, %v1955
      %v1957 = vshrl.u32 %v1861, 16
      %v1959 = vor.u32 %v1957, %v1955
      %v1961 = vshll.u32 %v1862, 16
      %v1963 = vrot.slane %v1961, 1
      %v1964 = vsel %vm582, %v1959, %v1963
      %v1965 = vshrl.u32 %v1862, 16
      %v1967 = vor.u32 %v1965, %v1963
      %v1969 = vshll.u32 %v1863, 16
      %v1971 = vrot.slane %v1969, 1
      %v1972 = vsel %vm582, %v1967, %v1971
      %v1973 = vshrl.u32 %v1863, 16
      %v1975 = vor.u32 %v1973, %v1971
      %v1977 = vshll.u32 %v1864, 16
      %v1979 = vrot.slane %v1977, 1
      %v1980 = vsel %vm582, %v1975, %v1979
      %v2011 = vunpack.c.l.b16 %v1776
      %v2012 = vunpack.c.l.b16 %v1777
      %v2013 = vunpack.c.l.b16 %v1778
      %v2014 = vunpack.c.l.b16 %v1779
      %v2015 = vunpack.c.l.b16 %v1780
      %v2016 = vunpack.c.l.b16 %v1781
      %v2017 = vunpack.c.l.b16 %v1782
      %v2018 = vunpack.c.l.b16 %v1783
      %v2019 = vunpack.c.l.b16 %v1784
      %v2020 = vunpack.c.l.b16 %v1785
      %v2021 = vunpack.c.l.b16 %v1786
      %v2022 = vunpack.c.l.b16 %v1787
      %v2023 = vunpack.c.l.b16 %v1788
      %v2024 = vunpack.c.l.b16 %v1789
      %v2025 = vunpack.c.l.b16 %v1790
      %v2026 = vunpack.c.l.b16 %v1791
      %v2027 = vpack.c.b16 %v2012, %v2011
      %v2028 = vpack.c.b16 %v2014, %v2013
      %v2029 = vpack.c.b16 %v2016, %v2015
      %v2030 = vpack.c.b16 %v2018, %v2017
      %v2031 = vpack.c.b16 %v2020, %v2019
      %v2032 = vpack.c.b16 %v2022, %v2021
      %v2033 = vpack.c.b16 %v2024, %v2023
      %v2034 = vpack.c.b16 %v2026, %v2025
      %2043 = vmatprep.subr.bf16.mxu0 0
      %2044 = vmatpush1.bf16.msra.mxu0 %v2027
      %2045 = vmatprep.subr.bf16.mxu0 0
      %2046 = vmatpush1.bf16.msra.mxu0 %v2028
      %2047 = vmatprep.subr.bf16.mxu0 0
      %2048 = vmatpush1.bf16.msra.mxu0 %v2029
      %2049 = vmatprep.subr.bf16.mxu0 0
      %2050 = vmatpush1.bf16.msra.mxu0 %v2030
      %2051 = vmatprep.subr.bf16.mxu0 0
      %2052 = vmatpush1.bf16.msra.mxu0 %v2031
      %2053 = vmatprep.subr.bf16.mxu0 0
      %2054 = vmatpush1.bf16.msra.mxu0 %v2032
      %2055 = vmatprep.subr.bf16.mxu0 0
      %2056 = vmatpush1.bf16.msra.mxu0 %v2033
      %2057 = vmatprep.subr.bf16.mxu0 0
      %2058 = vmatpush1.bf16.msra.mxu0 %v2034
      %2059 = vmatprep.subr.bf16.mxu0 0
      %2060 = vmatpush1.bf16.msra.mxu0 0
      %2061 = vmatprep.subr.bf16.mxu0 0
      %2062 = vmatpush1.bf16.msra.mxu0 0
      %2063 = vmatprep.subr.bf16.mxu0 0
      %2064 = vmatpush1.bf16.msra.mxu0 0
      %2065 = vmatprep.subr.bf16.mxu0 0
      %2066 = vmatpush1.bf16.msra.mxu0 0
      %2067 = vmatprep.subr.bf16.mxu0 0
      %2068 = vmatpush1.bf16.msra.mxu0 0
      %2069 = vmatprep.subr.bf16.mxu0 0
      %2070 = vmatpush1.bf16.msra.mxu0 0
      %2071 = vmatprep.subr.bf16.mxu0 0
      %2072 = vmatpush1.bf16.msra.mxu0 0
      %2073 = vmatprep.subr.bf16.mxu0 0
      %2074 = vmatpush1.bf16.msra.mxu0 0
      %2075 = vmatprep.mubr.bf16.mxu0 0
      %2076 = vmatmul.mubr.bf16.gmra.mrb[0].mxu0 %v1876
      %v2077 = vpop.f32.mrb[0].mxu0
      %v2078 = vadd.f32 0.0, %v2077
      %v2079 = vpop.f32.mrb[0].mxu0
      %v2080 = vpop.f32.mrb[0].mxu0
      %v2081 = vadd.f32 0.0, %v2080
      %v2082 = vpop.f32.mrb[0].mxu0
      %2083 = vmatprep.mubr.bf16.mxu0 0
      %2084 = vmatmul.mubr.bf16.gmra.mrb[0].mxu0 %v1884
      %v2085 = vpop.f32.mrb[0].mxu0
      %v2086 = vadd.f32 0.0, %v2085
      %v2087 = vpop.f32.mrb[0].mxu0
      %v2088 = vpop.f32.mrb[0].mxu0
      %v2089 = vadd.f32 0.0, %v2088
      %v2090 = vpop.f32.mrb[0].mxu0
      %2091 = vmatprep.mubr.bf16.mxu0 0
      %2092 = vmatmul.mubr.bf16.gmra.mrb[0].mxu0 %v1892
      %v2093 = vpop.f32.mrb[0].mxu0
      %v2094 = vadd.f32 0.0, %v2093
      %v2095 = vpop.f32.mrb[0].mxu0
      %v2096 = vpop.f32.mrb[0].mxu0
      %v2097 = vadd.f32 0.0, %v2096
      %v2098 = vpop.f32.mrb[0].mxu0
      %2099 = vmatprep.mubr.bf16.mxu0 0
      %2100 = vmatmul.mubr.bf16.gmra.mrb[0].mxu0 %v1900
      %v2101 = vpop.f32.mrb[0].mxu0
      %v2102 = vadd.f32 0.0, %v2101
      %v2103 = vpop.f32.mrb[0].mxu0
      %v2104 = vpop.f32.mrb[0].mxu0
      %v2105 = vadd.f32 0.0, %v2104
      %v2106 = vpop.f32.mrb[0].mxu0
      %2107 = vmatprep.mubr.bf16.mxu0 0
      %2108 = vmatmul.mubr.bf16.gmra.mrb[0].mxu0 %v1908
      %v2109 = vpop.f32.mrb[0].mxu0
      %v2110 = vadd.f32 0.0, %v2109
      %v2111 = vpop.f32.mrb[0].mxu0
      %v2112 = vpop.f32.mrb[0].mxu0
      %v2113 = vadd.f32 0.0, %v2112
      %v2114 = vpop.f32.mrb[0].mxu0
      %2115 = vmatprep.mubr.bf16.mxu0 0
      %2116 = vmatmul.mubr.bf16.gmra.mrb[0].mxu0 %v1916
      %v2117 = vpop.f32.mrb[0].mxu0
      %v2118 = vadd.f32 0.0, %v2117
      %v2119 = vpop.f32.mrb[0].mxu0
      %v2120 = vpop.f32.mrb[0].mxu0
      %v2121 = vadd.f32 0.0, %v2120
      %v2122 = vpop.f32.mrb[0].mxu0
      %2123 = vmatprep.mubr.bf16.mxu0 0
      %2124 = vmatmul.mubr.bf16.gmra.mrb[0].mxu0 %v1924
      %v2125 = vpop.f32.mrb[0].mxu0
      %v2126 = vadd.f32 0.0, %v2125
      %v2127 = vpop.f32.mrb[0].mxu0
      %v2128 = vpop.f32.mrb[0].mxu0
      %v2129 = vadd.f32 0.0, %v2128
      %v2130 = vpop.f32.mrb[0].mxu0
      %2131 = vmatprep.mubr.bf16.mxu0 0
      %2132 = vmatmul.mubr.bf16.gmra.mrb[0].mxu0 %v1932
      %v2133 = vpop.f32.mrb[0].mxu0
      %v2134 = vadd.f32 0.0, %v2133
      %v2135 = vpop.f32.mrb[0].mxu0
      %v2136 = vpop.f32.mrb[0].mxu0
      %v2137 = vadd.f32 0.0, %v2136
      %v2138 = vpop.f32.mrb[0].mxu0
      %2139 = vmatprep.mubr.bf16.mxu0 0
      %2140 = vmatmul.mubr.bf16.gmra.mrb[0].mxu0 %v1940
      %v2141 = vpop.f32.mrb[0].mxu0
      %v2142 = vadd.f32 0.0, %v2141
      %v2143 = vpop.f32.mrb[0].mxu0
      %v2144 = vpop.f32.mrb[0].mxu0
      %v2145 = vadd.f32 0.0, %v2144
      %v2146 = vpop.f32.mrb[0].mxu0
      %2147 = vmatprep.mubr.bf16.mxu0 0
      %2148 = vmatmul.mubr.bf16.gmra.mrb[0].mxu0 %v1948
      %v2149 = vpop.f32.mrb[0].mxu0
      %v2150 = vadd.f32 0.0, %v2149
      %v2151 = vpop.f32.mrb[0].mxu0
      %v2152 = vpop.f32.mrb[0].mxu0
      %v2153 = vadd.f32 0.0, %v2152
      %v2154 = vpop.f32.mrb[0].mxu0
      %2155 = vmatprep.mubr.bf16.mxu0 0
      %2156 = vmatmul.mubr.bf16.gmra.mrb[0].mxu0 %v1956
      %v2157 = vpop.f32.mrb[0].mxu0
      %v2158 = vadd.f32 0.0, %v2157
      %v2159 = vpop.f32.mrb[0].mxu0
      %v2160 = vpop.f32.mrb[0].mxu0
      %v2161 = vadd.f32 0.0, %v2160
      %v2162 = vpop.f32.mrb[0].mxu0
      %2163 = vmatprep.mubr.bf16.mxu0 0
      %2164 = vmatmul.mubr.bf16.gmra.mrb[0].mxu0 %v1964
      %v2165 = vpop.f32.mrb[0].mxu0
      %v2166 = vadd.f32 0.0, %v2165
      %v2167 = vpop.f32.mrb[0].mxu0
      %v2168 = vpop.f32.mrb[0].mxu0
      %v2169 = vadd.f32 0.0, %v2168
      %v2170 = vpop.f32.mrb[0].mxu0
      %2171 = vmatprep.mubr.bf16.mxu0 0
      %2172 = vmatmul.mubr.bf16.gmra.mrb[0].mxu0 %v1972
      %v2173 = vpop.f32.mrb[0].mxu0
      %v2174 = vadd.f32 0.0, %v2173
      %v2175 = vpop.f32.mrb[0].mxu0
      %v2176 = vpop.f32.mrb[0].mxu0
      %v2177 = vadd.f32 0.0, %v2176
      %v2178 = vpop.f32.mrb[0].mxu0
      %2179 = vmatprep.mubr.bf16.mxu0 0
      %2180 = vmatmul.mubr.bf16.gmra.mrb[0].mxu0 %v1980
      %v2181 = vpop.f32.mrb[0].mxu0
      %v2182 = vadd.f32 0.0, %v2181
      %v2183 = vpop.f32.mrb[0].mxu0
      %v2184 = vpop.f32.mrb[0].mxu0
      %v2185 = vadd.f32 0.0, %v2184
      %v2186 = vpop.f32.mrb[0].mxu0
      %2187 = vdwg.mxu0
      %v2188 = vadd.f32 %v1719, %v2078
      %v2189 = vadd.f32 %v1720, %v2081
      %v2190 = vadd.f32 %v1721, %v2086
      %v2191 = vadd.f32 %v1722, %v2089
      %v2192 = vadd.f32 %v1723, %v2094
      %v2193 = vadd.f32 %v1724, %v2097
      %v2194 = vadd.f32 %v1725, %v2102
      %v2195 = vadd.f32 %v1726, %v2105
      %v2196 = vadd.f32 %v1727, %v2110
      %v2197 = vadd.f32 %v1728, %v2113
      %v2198 = vadd.f32 %v1729, %v2118
      %v2199 = vadd.f32 %v1730, %v2121
      %v2200 = vadd.f32 %v1731, %v2126
      %v2201 = vadd.f32 %v1732, %v2129
      %v2202 = vadd.f32 %v1733, %v2134
      %v2203 = vadd.f32 %v1734, %v2137
      %v2204 = vadd.f32 %v1735, %v2142
      %v2205 = vadd.f32 %v1736, %v2145
      %v2206 = vadd.f32 %v1737, %v2150
      %v2207 = vadd.f32 %v1738, %v2153
      %v2208 = vadd.f32 %v1739, %v2158
      %v2209 = vadd.f32 %v1740, %v2161
      %v2210 = vadd.f32 %v1741, %v2166
      %v2211 = vadd.f32 %v1742, %v2169
      %v2212 = vadd.f32 %v1743, %v2174
      %v2213 = vadd.f32 %v1744, %v2177
      %v2214 = vadd.f32 %v1745, %v2182
      %v2215 = vadd.f32 %v1746, %v2185
      %v2216 = vld [vmem:[#allocation2 + $0xc] sm:$0xe]
      %v2217 = vld [vmem:[%s2 + $0x140] sm:$0xf]
      %v2218 = vld [vmem:[%s2 + $0x144] sm:$0xf]
      %v2219 = vld [vmem:[%s2 + $0x148] sm:$0xf]
      %v2220 = vld [vmem:[%s2 + $0x14c] sm:$0xf]
      %v2221 = vld [vmem:[%s2 + $0x150] sm:$0xf]
      %v2222 = vld [vmem:[%s2 + $0x154] sm:$0xf]
      %v2223 = vld [vmem:[%s2 + $0x158] sm:$0xf]
      %v2224 = vld [vmem:[%s2 + $0x15c] sm:$0xf]
      %v2225 = vld [vmem:[%s2 + $0x160] sm:$0xf]
      %v2226 = vld [vmem:[%s2 + $0x164] sm:$0xf]
      %v2227 = vld [vmem:[%s2 + $0x168] sm:$0xf]
      %v2228 = vld [vmem:[%s2 + $0x16c] sm:$0xf]
      %v2229 = vld [vmem:[%s2 + $0x170] sm:$0xf]
      %v2230 = vld [vmem:[%s2 + $0x174] sm:$0xf]
      %v2231 = vld [vmem:[%s2 + $0x178] sm:$0xf]
      %v2232 = vld [vmem:[%s2 + $0x17c] sm:$0xf]
      %v2234 = vunpack.c.l.b16 %v2216
      %v2235 = vpack.c.b16 %v1822, %v2234
      %v2236 = vrot.slane %v2235, 1
      %v2237 = vrot.slane %v1851, 1
      %v2238 = vsel %vm1133, %v2236, %v2237
      %v2239 = vrot.slane %v1852, 1
      %v2240 = vsel %vm1133, %v2237, %v2239
      %v2241 = vrot.slane %v1853, 1
      %v2242 = vsel %vm1133, %v2239, %v2241
      %v2243 = vrot.slane %v1854, 1
      %v2244 = vsel %vm1133, %v2241, %v2243
      %v2245 = vrot.slane %v1855, 1
      %v2246 = vsel %vm1133, %v2243, %v2245
      %v2247 = vrot.slane %v1856, 1
      %v2248 = vsel %vm1133, %v2245, %v2247
      %v2249 = vrot.slane %v1857, 1
      %v2250 = vsel %vm1133, %v2247, %v2249
      %v2251 = vrot.slane %v1858, 1
      %v2252 = vsel %vm1133, %v2249, %v2251
      %v2253 = vrot.slane %v1859, 1
      %v2254 = vsel %vm1133, %v2251, %v2253
      %v2255 = vrot.slane %v1860, 1
      %v2256 = vsel %vm1133, %v2253, %v2255
      %v2257 = vrot.slane %v1861, 1
      %v2258 = vsel %vm1133, %v2255, %v2257
      %v2259 = vrot.slane %v1862, 1
      %v2260 = vsel %vm1133, %v2257, %v2259
      %v2261 = vrot.slane %v1863, 1
      %v2262 = vsel %vm1133, %v2259, %v2261
      %v2263 = vrot.slane %v1864, 1
      %v2264 = vsel %vm1133, %v2261, %v2263
      %v2295 = vunpack.c.l.b16 %v2217
      %v2296 = vunpack.c.l.b16 %v2218
      %v2297 = vunpack.c.l.b16 %v2219
      %v2298 = vunpack.c.l.b16 %v2220
      %v2299 = vunpack.c.l.b16 %v2221
      %v2300 = vunpack.c.l.b16 %v2222
      %v2301 = vunpack.c.l.b16 %v2223
      %v2302 = vunpack.c.l.b16 %v2224
      %v2303 = vunpack.c.l.b16 %v2225
      %v2304 = vunpack.c.l.b16 %v2226
      %v2305 = vunpack.c.l.b16 %v2227
      %v2306 = vunpack.c.l.b16 %v2228
      %v2307 = vunpack.c.l.b16 %v2229
      %v2308 = vunpack.c.l.b16 %v2230
      %v2309 = vunpack.c.l.b16 %v2231
      %v2310 = vunpack.c.l.b16 %v2232
      %v2311 = vpack.c.b16 %v2296, %v2295
      %v2312 = vpack.c.b16 %v2298, %v2297
      %v2313 = vpack.c.b16 %v2300, %v2299
      %v2314 = vpack.c.b16 %v2302, %v2301
      %v2315 = vpack.c.b16 %v2304, %v2303
      %v2316 = vpack.c.b16 %v2306, %v2305
      %v2317 = vpack.c.b16 %v2308, %v2307
      %v2318 = vpack.c.b16 %v2310, %v2309
      %2327 = vmatprep.subr.bf16.mxu0 0
      %2328 = vmatpush1.bf16.msra.mxu0 %v2311
      %2329 = vmatprep.subr.bf16.mxu0 0
      %2330 = vmatpush1.bf16.msra.mxu0 %v2312
      %2331 = vmatprep.subr.bf16.mxu0 0
      %2332 = vmatpush1.bf16.msra.mxu0 %v2313
      %2333 = vmatprep.subr.bf16.mxu0 0
      %2334 = vmatpush1.bf16.msra.mxu0 %v2314
      %2335 = vmatprep.subr.bf16.mxu0 0
      %2336 = vmatpush1.bf16.msra.mxu0 %v2315
      %2337 = vmatprep.subr.bf16.mxu0 0
      %2338 = vmatpush1.bf16.msra.mxu0 %v2316
      %2339 = vmatprep.subr.bf16.mxu0 0
      %2340 = vmatpush1.bf16.msra.mxu0 %v2317
      %2341 = vmatprep.subr.bf16.mxu0 0
      %2342 = vmatpush1.bf16.msra.mxu0 %v2318
      %2343 = vmatprep.subr.bf16.mxu0 0
      %2344 = vmatpush1.bf16.msra.mxu0 0
      %2345 = vmatprep.subr.bf16.mxu0 0
      %2346 = vmatpush1.bf16.msra.mxu0 0
      %2347 = vmatprep.subr.bf16.mxu0 0
      %2348 = vmatpush1.bf16.msra.mxu0 0
      %2349 = vmatprep.subr.bf16.mxu0 0
      %2350 = vmatpush1.bf16.msra.mxu0 0
      %2351 = vmatprep.subr.bf16.mxu0 0
      %2352 = vmatpush1.bf16.msra.mxu0 0
      %2353 = vmatprep.subr.bf16.mxu0 0
      %2354 = vmatpush1.bf16.msra.mxu0 0
      %2355 = vmatprep.subr.bf16.mxu0 0
      %2356 = vmatpush1.bf16.msra.mxu0 0
      %2357 = vmatprep.subr.bf16.mxu0 0
      %2358 = vmatpush1.bf16.msra.mxu0 0
      %2359 = vmatprep.mubr.bf16.mxu0 0
      %2360 = vmatmul.mubr.bf16.gmra.mrb[0].mxu0 %v2238
      %v2361 = vpop.f32.mrb[0].mxu0
      %v2362 = vadd.f32 0.0, %v2361
      %v2363 = vpop.f32.mrb[0].mxu0
      %v2364 = vpop.f32.mrb[0].mxu0
      %v2365 = vadd.f32 0.0, %v2364
      %v2366 = vpop.f32.mrb[0].mxu0
      %2367 = vmatprep.mubr.bf16.mxu0 0
      %2368 = vmatmul.mubr.bf16.gmra.mrb[0].mxu0 %v2240
      %v2369 = vpop.f32.mrb[0].mxu0
      %v2370 = vadd.f32 0.0, %v2369
      %v2371 = vpop.f32.mrb[0].mxu0
      %v2372 = vpop.f32.mrb[0].mxu0
      %v2373 = vadd.f32 0.0, %v2372
      %v2374 = vpop.f32.mrb[0].mxu0
      %2375 = vmatprep.mubr.bf16.mxu0 0
      %2376 = vmatmul.mubr.bf16.gmra.mrb[0].mxu0 %v2242
      %v2377 = vpop.f32.mrb[0].mxu0
      %v2378 = vadd.f32 0.0, %v2377
      %v2379 = vpop.f32.mrb[0].mxu0
      %v2380 = vpop.f32.mrb[0].mxu0
      %v2381 = vadd.f32 0.0, %v2380
      %v2382 = vpop.f32.mrb[0].mxu0
      %2383 = vmatprep.mubr.bf16.mxu0 0
      %2384 = vmatmul.mubr.bf16.gmra.mrb[0].mxu0 %v2244
      %v2385 = vpop.f32.mrb[0].mxu0
      %v2386 = vadd.f32 0.0, %v2385
      %v2387 = vpop.f32.mrb[0].mxu0
      %v2388 = vpop.f32.mrb[0].mxu0
      %v2389 = vadd.f32 0.0, %v2388
      %v2390 = vpop.f32.mrb[0].mxu0
      %2391 = vmatprep.mubr.bf16.mxu0 0
      %2392 = vmatmul.mubr.bf16.gmra.mrb[0].mxu0 %v2246
      %v2393 = vpop.f32.mrb[0].mxu0
      %v2394 = vadd.f32 0.0, %v2393
      %v2395 = vpop.f32.mrb[0].mxu0
      %v2396 = vpop.f32.mrb[0].mxu0
      %v2397 = vadd.f32 0.0, %v2396
      %v2398 = vpop.f32.mrb[0].mxu0
      %2399 = vmatprep.mubr.bf16.mxu0 0
      %2400 = vmatmul.mubr.bf16.gmra.mrb[0].mxu0 %v2248
      %v2401 = vpop.f32.mrb[0].mxu0
      %v2402 = vadd.f32 0.0, %v2401
      %v2403 = vpop.f32.mrb[0].mxu0
      %v2404 = vpop.f32.mrb[0].mxu0
      %v2405 = vadd.f32 0.0, %v2404
      %v2406 = vpop.f32.mrb[0].mxu0
      %2407 = vmatprep.mubr.bf16.mxu0 0
      %2408 = vmatmul.mubr.bf16.gmra.mrb[0].mxu0 %v2250
      %v2409 = vpop.f32.mrb[0].mxu0
      %v2410 = vadd.f32 0.0, %v2409
      %v2411 = vpop.f32.mrb[0].mxu0
      %v2412 = vpop.f32.mrb[0].mxu0
      %v2413 = vadd.f32 0.0, %v2412
      %v2414 = vpop.f32.mrb[0].mxu0
      %2415 = vmatprep.mubr.bf16.mxu0 0
      %2416 = vmatmul.mubr.bf16.gmra.mrb[0].mxu0 %v2252
      %v2417 = vpop.f32.mrb[0].mxu0
      %v2418 = vadd.f32 0.0, %v2417
      %v2419 = vpop.f32.mrb[0].mxu0
      %v2420 = vpop.f32.mrb[0].mxu0
      %v2421 = vadd.f32 0.0, %v2420
      %v2422 = vpop.f32.mrb[0].mxu0
      %2423 = vmatprep.mubr.bf16.mxu0 0
      %2424 = vmatmul.mubr.bf16.gmra.mrb[0].mxu0 %v2254
      %v2425 = vpop.f32.mrb[0].mxu0
      %v2426 = vadd.f32 0.0, %v2425
      %v2427 = vpop.f32.mrb[0].mxu0
      %v2428 = vpop.f32.mrb[0].mxu0
      %v2429 = vadd.f32 0.0, %v2428
      %v2430 = vpop.f32.mrb[0].mxu0
      %2431 = vmatprep.mubr.bf16.mxu0 0
      %2432 = vmatmul.mubr.bf16.gmra.mrb[0].mxu0 %v2256
      %v2433 = vpop.f32.mrb[0].mxu0
      %v2434 = vadd.f32 0.0, %v2433
      %v2435 = vpop.f32.mrb[0].mxu0
      %v2436 = vpop.f32.mrb[0].mxu0
      %v2437 = vadd.f32 0.0, %v2436
      %v2438 = vpop.f32.mrb[0].mxu0
      %2439 = vmatprep.mubr.bf16.mxu0 0
      %2440 = vmatmul.mubr.bf16.gmra.mrb[0].mxu0 %v2258
      %v2441 = vpop.f32.mrb[0].mxu0
      %v2442 = vadd.f32 0.0, %v2441
      %v2443 = vpop.f32.mrb[0].mxu0
      %v2444 = vpop.f32.mrb[0].mxu0
      %v2445 = vadd.f32 0.0, %v2444
      %v2446 = vpop.f32.mrb[0].mxu0
      %2447 = vmatprep.mubr.bf16.mxu0 0
      %2448 = vmatmul.mubr.bf16.gmra.mrb[0].mxu0 %v2260
      %v2449 = vpop.f32.mrb[0].mxu0
      %v2450 = vadd.f32 0.0, %v2449
      %v2451 = vpop.f32.mrb[0].mxu0
      %v2452 = vpop.f32.mrb[0].mxu0
      %v2453 = vadd.f32 0.0, %v2452
      %v2454 = vpop.f32.mrb[0].mxu0
      %2455 = vmatprep.mubr.bf16.mxu0 0
      %2456 = vmatmul.mubr.bf16.gmra.mrb[0].mxu0 %v2262
      %v2457 = vpop.f32.mrb[0].mxu0
      %v2458 = vadd.f32 0.0, %v2457
      %v2459 = vpop.f32.mrb[0].mxu0
      %v2460 = vpop.f32.mrb[0].mxu0
      %v2461 = vadd.f32 0.0, %v2460
      %v2462 = vpop.f32.mrb[0].mxu0
      %2463 = vmatprep.mubr.bf16.mxu0 0
      %2464 = vmatmul.mubr.bf16.gmra.mrb[0].mxu0 %v2264
      %v2465 = vpop.f32.mrb[0].mxu0
      %v2466 = vadd.f32 0.0, %v2465
      %v2467 = vpop.f32.mrb[0].mxu0
      %v2468 = vpop.f32.mrb[0].mxu0
      %v2469 = vadd.f32 0.0, %v2468
      %v2470 = vpop.f32.mrb[0].mxu0
      %2471 = vdwg.mxu0
      %v2472 = vadd.f32 %v2188, %v2362
      %v2473 = vadd.f32 %v2189, %v2365
      %v2474 = vadd.f32 %v2190, %v2370
      %v2475 = vadd.f32 %v2191, %v2373
      %v2476 = vadd.f32 %v2192, %v2378
      %v2477 = vadd.f32 %v2193, %v2381
      %v2478 = vadd.f32 %v2194, %v2386
      %v2479 = vadd.f32 %v2195, %v2389
      %v2480 = vadd.f32 %v2196, %v2394
      %v2481 = vadd.f32 %v2197, %v2397
      %v2482 = vadd.f32 %v2198, %v2402
      %v2483 = vadd.f32 %v2199, %v2405
      %v2484 = vadd.f32 %v2200, %v2410
      %v2485 = vadd.f32 %v2201, %v2413
      %v2486 = vadd.f32 %v2202, %v2418
      %v2487 = vadd.f32 %v2203, %v2421
      %v2488 = vadd.f32 %v2204, %v2426
      %v2489 = vadd.f32 %v2205, %v2429
      %v2490 = vadd.f32 %v2206, %v2434
      %v2491 = vadd.f32 %v2207, %v2437
      %v2492 = vadd.f32 %v2208, %v2442
      %v2493 = vadd.f32 %v2209, %v2445
      %v2494 = vadd.f32 %v2210, %v2450
      %v2495 = vadd.f32 %v2211, %v2453
      %v2496 = vadd.f32 %v2212, %v2458
      %v2497 = vadd.f32 %v2213, %v2461
      %v2498 = vadd.f32 %v2214, %v2466
      %v2499 = vadd.f32 %v2215, %v2469
      %v2500 = vld [vmem:[#allocation2 + $0x18] sm:$0xf]
      %v2501 = vld [vmem:[#allocation2 + $0x1c] sm:$0xf]
      %v2502 = vld [vmem:[#allocation2 + $0x20] sm:$0xf]
      %v2503 = vld [vmem:[#allocation2 + $0x24] sm:$0xf]
      %v2504 = vld [vmem:[#allocation2 + $0x28] sm:$0xf]
      %v2505 = vld [vmem:[#allocation2 + $0x2c] sm:$0xf]
      %v2506 = vld [vmem:[#allocation2 + $0x30] sm:$0xf]
      %v2507 = vld [vmem:[#allocation2 + $0x34] sm:$0xf]
      %v2508 = vld [vmem:[#allocation2 + $0x38] sm:$0xf]
      %v2509 = vld [vmem:[#allocation2 + $0x3c] sm:$0xf]
      %v2510 = vld [vmem:[#allocation2 + $0x40] sm:$0xf]
      %v2511 = vld [vmem:[#allocation2 + $0x44] sm:$0xf]
      %v2512 = vld [vmem:[#allocation2 + $0x48] sm:$0xf]
      %v2513 = vld [vmem:[#allocation2 + $0x4c] sm:$0xf]
      %v2514 = vld [vmem:[#allocation2 + $0x50] sm:$0xf]
      %v2515 = vld [vmem:[#allocation2 + $0x54] sm:$0xf]
      %v2516 = vld [vmem:[#allocation2 + $0x58] sm:$0xf]
      %v2517 = vld [vmem:[#allocation2 + $0x5c] sm:$0xf]
      %v2518 = vld [vmem:[#allocation2 + $0x60] sm:$0xf]
      %v2519 = vld [vmem:[#allocation2 + $0x64] sm:$0xf]
      %v2520 = vld [vmem:[#allocation2 + $0x68] sm:$0xf]
      %v2521 = vld [vmem:[#allocation2 + $0x6c] sm:$0xf]
      %v2522 = vld [vmem:[#allocation2 + $0x70] sm:$0xf]
      %v2523 = vld [vmem:[#allocation2 + $0x74] sm:$0xf]
      %v2524 = vld [vmem:[#allocation2 + $0x78] sm:$0xf]
      %v2525 = vld [vmem:[#allocation2 + $0x7c] sm:$0xf]
      %v2526 = vld [vmem:[#allocation2 + $0x80] sm:$0xf]
      %v2527 = vld [vmem:[#allocation2 + $0x84] sm:$0xf]
      %v2528 = vld [vmem:[%s2 + $0x180] sm:$0xf]
      %v2529 = vld [vmem:[%s2 + $0x184] sm:$0xf]
      %v2530 = vld [vmem:[%s2 + $0x188] sm:$0xf]
      %v2531 = vld [vmem:[%s2 + $0x18c] sm:$0xf]
      %v2532 = vld [vmem:[%s2 + $0x190] sm:$0xf]
      %v2533 = vld [vmem:[%s2 + $0x194] sm:$0xf]
      %v2534 = vld [vmem:[%s2 + $0x198] sm:$0xf]
      %v2535 = vld [vmem:[%s2 + $0x19c] sm:$0xf]
      %v2536 = vld [vmem:[%s2 + $0x1a0] sm:$0xf]
      %v2537 = vld [vmem:[%s2 + $0x1a4] sm:$0xf]
      %v2538 = vld [vmem:[%s2 + $0x1a8] sm:$0xf]
      %v2539 = vld [vmem:[%s2 + $0x1ac] sm:$0xf]
      %v2540 = vld [vmem:[%s2 + $0x1b0] sm:$0xf]
      %v2541 = vld [vmem:[%s2 + $0x1b4] sm:$0xf]
      %v2542 = vld [vmem:[%s2 + $0x1b8] sm:$0xf]
      %v2543 = vld [vmem:[%s2 + $0x1bc] sm:$0xf]
      %v2572 = vunpack.c.l.b16 %v2500
      %v2573 = vunpack.c.l.b16 %v2501
      %v2574 = vunpack.c.l.b16 %v2502
      %v2575 = vunpack.c.l.b16 %v2503
      %v2576 = vunpack.c.l.b16 %v2504
      %v2577 = vunpack.c.l.b16 %v2505
      %v2578 = vunpack.c.l.b16 %v2506
      %v2579 = vunpack.c.l.b16 %v2507
      %v2580 = vunpack.c.l.b16 %v2508
      %v2581 = vunpack.c.l.b16 %v2509
      %v2582 = vunpack.c.l.b16 %v2510
      %v2583 = vunpack.c.l.b16 %v2511
      %v2584 = vunpack.c.l.b16 %v2512
      %v2585 = vunpack.c.l.b16 %v2513
      %v2586 = vunpack.c.l.b16 %v2514
      %v2587 = vunpack.c.l.b16 %v2515
      %v2588 = vunpack.c.l.b16 %v2516
      %v2589 = vunpack.c.l.b16 %v2517
      %v2590 = vunpack.c.l.b16 %v2518
      %v2591 = vunpack.c.l.b16 %v2519
      %v2592 = vunpack.c.l.b16 %v2520
      %v2593 = vunpack.c.l.b16 %v2521
      %v2594 = vunpack.c.l.b16 %v2522
      %v2595 = vunpack.c.l.b16 %v2523
      %v2596 = vunpack.c.l.b16 %v2524
      %v2597 = vunpack.c.l.b16 %v2525
      %v2598 = vunpack.c.l.b16 %v2526
      %v2599 = vunpack.c.l.b16 %v2527
      %v2600 = vpack.c.b16 %v2573, %v2572
      %v2601 = vpack.c.b16 %v2575, %v2574
      %v2602 = vpack.c.b16 %v2577, %v2576
      %v2603 = vpack.c.b16 %v2579, %v2578
      %v2604 = vpack.c.b16 %v2581, %v2580
      %v2605 = vpack.c.b16 %v2583, %v2582
      %v2606 = vpack.c.b16 %v2585, %v2584
      %v2607 = vpack.c.b16 %v2587, %v2586
      %v2608 = vpack.c.b16 %v2589, %v2588
      %v2609 = vpack.c.b16 %v2591, %v2590
      %v2610 = vpack.c.b16 %v2593, %v2592
      %v2611 = vpack.c.b16 %v2595, %v2594
      %v2612 = vpack.c.b16 %v2597, %v2596
      %v2613 = vpack.c.b16 %v2599, %v2598
      %v2644 = vunpack.c.l.b16 %v2528
      %v2645 = vunpack.c.l.b16 %v2529
      %v2646 = vunpack.c.l.b16 %v2530
      %v2647 = vunpack.c.l.b16 %v2531
      %v2648 = vunpack.c.l.b16 %v2532
      %v2649 = vunpack.c.l.b16 %v2533
      %v2650 = vunpack.c.l.b16 %v2534
      %v2651 = vunpack.c.l.b16 %v2535
      %v2652 = vunpack.c.l.b16 %v2536
      %v2653 = vunpack.c.l.b16 %v2537
      %v2654 = vunpack.c.l.b16 %v2538
      %v2655 = vunpack.c.l.b16 %v2539
      %v2656 = vunpack.c.l.b16 %v2540
      %v2657 = vunpack.c.l.b16 %v2541
      %v2658 = vunpack.c.l.b16 %v2542
      %v2659 = vunpack.c.l.b16 %v2543
      %v2660 = vpack.c.b16 %v2645, %v2644
      %v2661 = vpack.c.b16 %v2647, %v2646
      %v2662 = vpack.c.b16 %v2649, %v2648
      %v2663 = vpack.c.b16 %v2651, %v2650
      %v2664 = vpack.c.b16 %v2653, %v2652
      %v2665 = vpack.c.b16 %v2655, %v2654
      %v2666 = vpack.c.b16 %v2657, %v2656
      %v2667 = vpack.c.b16 %v2659, %v2658
      %2676 = vmatprep.subr.bf16.mxu0 0
      %2677 = vmatpush1.bf16.msra.mxu0 %v2660
      %2678 = vmatprep.subr.bf16.mxu0 0
      %2679 = vmatpush1.bf16.msra.mxu0 %v2661
      %2680 = vmatprep.subr.bf16.mxu0 0
      %2681 = vmatpush1.bf16.msra.mxu0 %v2662
      %2682 = vmatprep.subr.bf16.mxu0 0
      %2683 = vmatpush1.bf16.msra.mxu0 %v2663
      %2684 = vmatprep.subr.bf16.mxu0 0
      %2685 = vmatpush1.bf16.msra.mxu0 %v2664
      %2686 = vmatprep.subr.bf16.mxu0 0
      %2687 = vmatpush1.bf16.msra.mxu0 %v2665
      %2688 = vmatprep.subr.bf16.mxu0 0
      %2689 = vmatpush1.bf16.msra.mxu0 %v2666
      %2690 = vmatprep.subr.bf16.mxu0 0
      %2691 = vmatpush1.bf16.msra.mxu0 %v2667
      %2692 = vmatprep.subr.bf16.mxu0 0
      %2693 = vmatpush1.bf16.msra.mxu0 0
      %2694 = vmatprep.subr.bf16.mxu0 0
      %2695 = vmatpush1.bf16.msra.mxu0 0
      %2696 = vmatprep.subr.bf16.mxu0 0
      %2697 = vmatpush1.bf16.msra.mxu0 0
      %2698 = vmatprep.subr.bf16.mxu0 0
      %2699 = vmatpush1.bf16.msra.mxu0 0
      %2700 = vmatprep.subr.bf16.mxu0 0
      %2701 = vmatpush1.bf16.msra.mxu0 0
      %2702 = vmatprep.subr.bf16.mxu0 0
      %2703 = vmatpush1.bf16.msra.mxu0 0
      %2704 = vmatprep.subr.bf16.mxu0 0
      %2705 = vmatpush1.bf16.msra.mxu0 0
      %2706 = vmatprep.subr.bf16.mxu0 0
      %2707 = vmatpush1.bf16.msra.mxu0 0
      %2708 = vmatprep.mubr.bf16.mxu0 0
      %2709 = vmatmul.mubr.bf16.gmra.mrb[0].mxu0 %v2600
      %v2710 = vpop.f32.mrb[0].mxu0
      %v2711 = vadd.f32 0.0, %v2710
      %v2712 = vpop.f32.mrb[0].mxu0
      %v2713 = vpop.f32.mrb[0].mxu0
      %v2714 = vadd.f32 0.0, %v2713
      %v2715 = vpop.f32.mrb[0].mxu0
      %2716 = vmatprep.mubr.bf16.mxu0 0
      %2717 = vmatmul.mubr.bf16.gmra.mrb[0].mxu0 %v2601
      %v2718 = vpop.f32.mrb[0].mxu0
      %v2719 = vadd.f32 0.0, %v2718
      %v2720 = vpop.f32.mrb[0].mxu0
      %v2721 = vpop.f32.mrb[0].mxu0
      %v2722 = vadd.f32 0.0, %v2721
      %v2723 = vpop.f32.mrb[0].mxu0
      %2724 = vmatprep.mubr.bf16.mxu0 0
      %2725 = vmatmul.mubr.bf16.gmra.mrb[0].mxu0 %v2602
      %v2726 = vpop.f32.mrb[0].mxu0
      %v2727 = vadd.f32 0.0, %v2726
      %v2728 = vpop.f32.mrb[0].mxu0
      %v2729 = vpop.f32.mrb[0].mxu0
      %v2730 = vadd.f32 0.0, %v2729
      %v2731 = vpop.f32.mrb[0].mxu0
      %2732 = vmatprep.mubr.bf16.mxu0 0
      %2733 = vmatmul.mubr.bf16.gmra.mrb[0].mxu0 %v2603
      %v2734 = vpop.f32.mrb[0].mxu0
      %v2735 = vadd.f32 0.0, %v2734
      %v2736 = vpop.f32.mrb[0].mxu0
      %v2737 = vpop.f32.mrb[0].mxu0
      %v2738 = vadd.f32 0.0, %v2737
      %v2739 = vpop.f32.mrb[0].mxu0
      %2740 = vmatprep.mubr.bf16.mxu0 0
      %2741 = vmatmul.mubr.bf16.gmra.mrb[0].mxu0 %v2604
      %v2742 = vpop.f32.mrb[0].mxu0
      %v2743 = vadd.f32 0.0, %v2742
      %v2744 = vpop.f32.mrb[0].mxu0
      %v2745 = vpop.f32.mrb[0].mxu0
      %v2746 = vadd.f32 0.0, %v2745
      %v2747 = vpop.f32.mrb[0].mxu0
      %2748 = vmatprep.mubr.bf16.mxu0 0
      %2749 = vmatmul.mubr.bf16.gmra.mrb[0].mxu0 %v2605
      %v2750 = vpop.f32.mrb[0].mxu0
      %v2751 = vadd.f32 0.0, %v2750
      %v2752 = vpop.f32.mrb[0].mxu0
      %v2753 = vpop.f32.mrb[0].mxu0
      %v2754 = vadd.f32 0.0, %v2753
      %v2755 = vpop.f32.mrb[0].mxu0
      %2756 = vmatprep.mubr.bf16.mxu0 0
      %2757 = vmatmul.mubr.bf16.gmra.mrb[0].mxu0 %v2606
      %v2758 = vpop.f32.mrb[0].mxu0
      %v2759 = vadd.f32 0.0, %v2758
      %v2760 = vpop.f32.mrb[0].mxu0
      %v2761 = vpop.f32.mrb[0].mxu0
      %v2762 = vadd.f32 0.0, %v2761
      %v2763 = vpop.f32.mrb[0].mxu0
      %2764 = vmatprep.mubr.bf16.mxu0 0
      %2765 = vmatmul.mubr.bf16.gmra.mrb[0].mxu0 %v2607
      %v2766 = vpop.f32.mrb[0].mxu0
      %v2767 = vadd.f32 0.0, %v2766
      %v2768 = vpop.f32.mrb[0].mxu0
      %v2769 = vpop.f32.mrb[0].mxu0
      %v2770 = vadd.f32 0.0, %v2769
      %v2771 = vpop.f32.mrb[0].mxu0
      %2772 = vmatprep.mubr.bf16.mxu0 0
      %2773 = vmatmul.mubr.bf16.gmra.mrb[0].mxu0 %v2608
      %v2774 = vpop.f32.mrb[0].mxu0
      %v2775 = vadd.f32 0.0, %v2774
      %v2776 = vpop.f32.mrb[0].mxu0
      %v2777 = vpop.f32.mrb[0].mxu0
      %v2778 = vadd.f32 0.0, %v2777
      %v2779 = vpop.f32.mrb[0].mxu0
      %2780 = vmatprep.mubr.bf16.mxu0 0
      %2781 = vmatmul.mubr.bf16.gmra.mrb[0].mxu0 %v2609
      %v2782 = vpop.f32.mrb[0].mxu0
      %v2783 = vadd.f32 0.0, %v2782
      %v2784 = vpop.f32.mrb[0].mxu0
      %v2785 = vpop.f32.mrb[0].mxu0
      %v2786 = vadd.f32 0.0, %v2785
      %v2787 = vpop.f32.mrb[0].mxu0
      %2788 = vmatprep.mubr.bf16.mxu0 0
      %2789 = vmatmul.mubr.bf16.gmra.mrb[0].mxu0 %v2610
      %v2790 = vpop.f32.mrb[0].mxu0
      %v2791 = vadd.f32 0.0, %v2790
      %v2792 = vpop.f32.mrb[0].mxu0
      %v2793 = vpop.f32.mrb[0].mxu0
      %v2794 = vadd.f32 0.0, %v2793
      %v2795 = vpop.f32.mrb[0].mxu0
      %2796 = vmatprep.mubr.bf16.mxu0 0
      %2797 = vmatmul.mubr.bf16.gmra.mrb[0].mxu0 %v2611
      %v2798 = vpop.f32.mrb[0].mxu0
      %v2799 = vadd.f32 0.0, %v2798
      %v2800 = vpop.f32.mrb[0].mxu0
      %v2801 = vpop.f32.mrb[0].mxu0
      %v2802 = vadd.f32 0.0, %v2801
      %v2803 = vpop.f32.mrb[0].mxu0
      %2804 = vmatprep.mubr.bf16.mxu0 0
      %2805 = vmatmul.mubr.bf16.gmra.mrb[0].mxu0 %v2612
      %v2806 = vpop.f32.mrb[0].mxu0
      %v2807 = vadd.f32 0.0, %v2806
      %v2808 = vpop.f32.mrb[0].mxu0
      %v2809 = vpop.f32.mrb[0].mxu0
      %v2810 = vadd.f32 0.0, %v2809
      %v2811 = vpop.f32.mrb[0].mxu0
      %2812 = vmatprep.mubr.bf16.mxu0 0
      %2813 = vmatmul.mubr.bf16.gmra.mrb[0].mxu0 %v2613
      %v2814 = vpop.f32.mrb[0].mxu0
      %v2815 = vadd.f32 0.0, %v2814
      %v2816 = vpop.f32.mrb[0].mxu0
      %v2817 = vpop.f32.mrb[0].mxu0
      %v2818 = vadd.f32 0.0, %v2817
      %v2819 = vpop.f32.mrb[0].mxu0
      %2820 = vdwg.mxu0
      %v2821 = vadd.f32 %v2472, %v2711
      %v2822 = vadd.f32 %v2473, %v2714
      %v2823 = vadd.f32 %v2474, %v2719
      %v2824 = vadd.f32 %v2475, %v2722
      %v2825 = vadd.f32 %v2476, %v2727
      %v2826 = vadd.f32 %v2477, %v2730
      %v2827 = vadd.f32 %v2478, %v2735
      %v2828 = vadd.f32 %v2479, %v2738
      %v2829 = vadd.f32 %v2480, %v2743
      %v2830 = vadd.f32 %v2481, %v2746
      %v2831 = vadd.f32 %v2482, %v2751
      %v2832 = vadd.f32 %v2483, %v2754
      %v2833 = vadd.f32 %v2484, %v2759
      %v2834 = vadd.f32 %v2485, %v2762
      %v2835 = vadd.f32 %v2486, %v2767
      %v2836 = vadd.f32 %v2487, %v2770
      %v2837 = vadd.f32 %v2488, %v2775
      %v2838 = vadd.f32 %v2489, %v2778
      %v2839 = vadd.f32 %v2490, %v2783
      %v2840 = vadd.f32 %v2491, %v2786
      %v2841 = vadd.f32 %v2492, %v2791
      %v2842 = vadd.f32 %v2493, %v2794
      %v2843 = vadd.f32 %v2494, %v2799
      %v2844 = vadd.f32 %v2495, %v2802
      %v2845 = vadd.f32 %v2496, %v2807
      %v2846 = vadd.f32 %v2497, %v2810
      %v2847 = vadd.f32 %v2498, %v2815
      %v2848 = vadd.f32 %v2499, %v2818
      %v2849 = vld [vmem:[#allocation2 + $0x18] sm:$0xf]
      %v2850 = vld [vmem:[#allocation2 + $0x1c] sm:$0xf]
      %v2851 = vld [vmem:[#allocation2 + $0x20] sm:$0xf]
      %v2852 = vld [vmem:[#allocation2 + $0x24] sm:$0xf]
      %v2853 = vld [vmem:[#allocation2 + $0x28] sm:$0xf]
      %v2854 = vld [vmem:[#allocation2 + $0x2c] sm:$0xf]
      %v2855 = vld [vmem:[#allocation2 + $0x30] sm:$0xf]
      %v2856 = vld [vmem:[#allocation2 + $0x34] sm:$0xf]
      %v2857 = vld [vmem:[#allocation2 + $0x38] sm:$0xf]
      %v2858 = vld [vmem:[#allocation2 + $0x3c] sm:$0xf]
      %v2859 = vld [vmem:[#allocation2 + $0x40] sm:$0xf]
      %v2860 = vld [vmem:[#allocation2 + $0x44] sm:$0xf]
      %v2861 = vld [vmem:[#allocation2 + $0x48] sm:$0xf]
      %v2862 = vld [vmem:[#allocation2 + $0x4c] sm:$0xf]
      %v2863 = vld [vmem:[#allocation2 + $0x50] sm:$0xf]
      %v2864 = vld [vmem:[#allocation2 + $0x54] sm:$0xf]
      %v2865 = vld [vmem:[#allocation2 + $0x58] sm:$0xf]
      %v2866 = vld [vmem:[#allocation2 + $0x5c] sm:$0xf]
      %v2867 = vld [vmem:[#allocation2 + $0x60] sm:$0xf]
      %v2868 = vld [vmem:[#allocation2 + $0x64] sm:$0xf]
      %v2869 = vld [vmem:[#allocation2 + $0x68] sm:$0xf]
      %v2870 = vld [vmem:[#allocation2 + $0x6c] sm:$0xf]
      %v2871 = vld [vmem:[#allocation2 + $0x70] sm:$0xf]
      %v2872 = vld [vmem:[#allocation2 + $0x74] sm:$0xf]
      %v2873 = vld [vmem:[#allocation2 + $0x78] sm:$0xf]
      %v2874 = vld [vmem:[#allocation2 + $0x7c] sm:$0xf]
      %v2875 = vld [vmem:[#allocation2 + $0x80] sm:$0xf]
      %v2876 = vld [vmem:[#allocation2 + $0x84] sm:$0xf]
      %v2877 = vld [vmem:[#allocation2 + $0x88] sm:$0x1]
      %v2878 = vld [vmem:[%s2 + $0x1c0] sm:$0xf]
      %v2879 = vld [vmem:[%s2 + $0x1c4] sm:$0xf]
      %v2880 = vld [vmem:[%s2 + $0x1c8] sm:$0xf]
      %v2881 = vld [vmem:[%s2 + $0x1cc] sm:$0xf]
      %v2882 = vld [vmem:[%s2 + $0x1d0] sm:$0xf]
      %v2883 = vld [vmem:[%s2 + $0x1d4] sm:$0xf]
      %v2884 = vld [vmem:[%s2 + $0x1d8] sm:$0xf]
      %v2885 = vld [vmem:[%s2 + $0x1dc] sm:$0xf]
      %v2886 = vld [vmem:[%s2 + $0x1e0] sm:$0xf]
      %v2887 = vld [vmem:[%s2 + $0x1e4] sm:$0xf]
      %v2888 = vld [vmem:[%s2 + $0x1e8] sm:$0xf]
      %v2889 = vld [vmem:[%s2 + $0x1ec] sm:$0xf]
      %v2890 = vld [vmem:[%s2 + $0x1f0] sm:$0xf]
      %v2891 = vld [vmem:[%s2 + $0x1f4] sm:$0xf]
      %v2892 = vld [vmem:[%s2 + $0x1f8] sm:$0xf]
      %v2893 = vld [vmem:[%s2 + $0x1fc] sm:$0xf]
      %v2923 = vunpack.c.l.b16 %v2849
      %v2924 = vunpack.c.l.b16 %v2850
      %v2925 = vunpack.c.l.b16 %v2851
      %v2926 = vunpack.c.l.b16 %v2852
      %v2927 = vunpack.c.l.b16 %v2853
      %v2928 = vunpack.c.l.b16 %v2854
      %v2929 = vunpack.c.l.b16 %v2855
      %v2930 = vunpack.c.l.b16 %v2856
      %v2931 = vunpack.c.l.b16 %v2857
      %v2932 = vunpack.c.l.b16 %v2858
      %v2933 = vunpack.c.l.b16 %v2859
      %v2934 = vunpack.c.l.b16 %v2860
      %v2935 = vunpack.c.l.b16 %v2861
      %v2936 = vunpack.c.l.b16 %v2862
      %v2937 = vunpack.c.l.b16 %v2863
      %v2938 = vunpack.c.l.b16 %v2864
      %v2939 = vunpack.c.l.b16 %v2865
      %v2940 = vunpack.c.l.b16 %v2866
      %v2941 = vunpack.c.l.b16 %v2867
      %v2942 = vunpack.c.l.b16 %v2868
      %v2943 = vunpack.c.l.b16 %v2869
      %v2944 = vunpack.c.l.b16 %v2870
      %v2945 = vunpack.c.l.b16 %v2871
      %v2946 = vunpack.c.l.b16 %v2872
      %v2947 = vunpack.c.l.b16 %v2873
      %v2948 = vunpack.c.l.b16 %v2874
      %v2949 = vunpack.c.l.b16 %v2875
      %v2950 = vunpack.c.l.b16 %v2876
      %v2951 = vunpack.c.l.b16 %v2877
      %v2952 = vpack.c.b16 %v2924, %v2923
      %v2953 = vpack.c.b16 %v2926, %v2925
      %v2954 = vpack.c.b16 %v2928, %v2927
      %v2955 = vpack.c.b16 %v2930, %v2929
      %v2956 = vpack.c.b16 %v2932, %v2931
      %v2957 = vpack.c.b16 %v2934, %v2933
      %v2958 = vpack.c.b16 %v2936, %v2935
      %v2959 = vpack.c.b16 %v2938, %v2937
      %v2960 = vpack.c.b16 %v2940, %v2939
      %v2961 = vpack.c.b16 %v2942, %v2941
      %v2962 = vpack.c.b16 %v2944, %v2943
      %v2963 = vpack.c.b16 %v2946, %v2945
      %v2964 = vpack.c.b16 %v2948, %v2947
      %v2965 = vpack.c.b16 %v2950, %v2949
      %v2966 = vpack.c.b16 %v2951, %v2951
      %v2968 = vshrl.u32 %v2952, 16
      %v2970 = vshll.u32 %v2952, 16
      %v2972 = vrot.slane %v2970, 1
      %v2973 = vor.u32 %v2968, %v2972
      %v2975 = vshll.u32 %v2953, 16
      %v2977 = vrot.slane %v2975, 1
      %v2978 = vsel %vm582, %v2973, %v2977
      %v2979 = vshrl.u32 %v2953, 16
      %v2981 = vor.u32 %v2979, %v2977
      %v2983 = vshll.u32 %v2954, 16
      %v2985 = vrot.slane %v2983, 1
      %v2986 = vsel %vm582, %v2981, %v2985
      %v2987 = vshrl.u32 %v2954, 16
      %v2989 = vor.u32 %v2987, %v2985
      %v2991 = vshll.u32 %v2955, 16
      %v2993 = vrot.slane %v2991, 1
      %v2994 = vsel %vm582, %v2989, %v2993
      %v2995 = vshrl.u32 %v2955, 16
      %v2997 = vor.u32 %v2995, %v2993
      %v2999 = vshll.u32 %v2956, 16
      %v3001 = vrot.slane %v2999, 1
      %v3002 = vsel %vm582, %v2997, %v3001
      %v3003 = vshrl.u32 %v2956, 16
      %v3005 = vor.u32 %v3003, %v3001
      %v3007 = vshll.u32 %v2957, 16
      %v3009 = vrot.slane %v3007, 1
      %v3010 = vsel %vm582, %v3005, %v3009
      %v3011 = vshrl.u32 %v2957, 16
      %v3013 = vor.u32 %v3011, %v3009
      %v3015 = vshll.u32 %v2958, 16
      %v3017 = vrot.slane %v3015, 1
      %v3018 = vsel %vm582, %v3013, %v3017
      %v3019 = vshrl.u32 %v2958, 16
      %v3021 = vor.u32 %v3019, %v3017
      %v3023 = vshll.u32 %v2959, 16
      %v3025 = vrot.slane %v3023, 1
      %v3026 = vsel %vm582, %v3021, %v3025
      %v3027 = vshrl.u32 %v2959, 16
      %v3029 = vor.u32 %v3027, %v3025
      %v3031 = vshll.u32 %v2960, 16
      %v3033 = vrot.slane %v3031, 1
      %v3034 = vsel %vm582, %v3029, %v3033
      %v3035 = vshrl.u32 %v2960, 16
      %v3037 = vor.u32 %v3035, %v3033
      %v3039 = vshll.u32 %v2961, 16
      %v3041 = vrot.slane %v3039, 1
      %v3042 = vsel %vm582, %v3037, %v3041
      %v3043 = vshrl.u32 %v2961, 16
      %v3045 = vor.u32 %v3043, %v3041
      %v3047 = vshll.u32 %v2962, 16
      %v3049 = vrot.slane %v3047, 1
      %v3050 = vsel %vm582, %v3045, %v3049
      %v3051 = vshrl.u32 %v2962, 16
      %v3053 = vor.u32 %v3051, %v3049
      %v3055 = vshll.u32 %v2963, 16
      %v3057 = vrot.slane %v3055, 1
      %v3058 = vsel %vm582, %v3053, %v3057
      %v3059 = vshrl.u32 %v2963, 16
      %v3061 = vor.u32 %v3059, %v3057
      %v3063 = vshll.u32 %v2964, 16
      %v3065 = vrot.slane %v3063, 1
      %v3066 = vsel %vm582, %v3061, %v3065
      %v3067 = vshrl.u32 %v2964, 16
      %v3069 = vor.u32 %v3067, %v3065
      %v3071 = vshll.u32 %v2965, 16
      %v3073 = vrot.slane %v3071, 1
      %v3074 = vsel %vm582, %v3069, %v3073
      %v3075 = vshrl.u32 %v2965, 16
      %v3077 = vor.u32 %v3075, %v3073
      %v3079 = vshll.u32 %v2966, 16
      %v3081 = vrot.slane %v3079, 1
      %v3082 = vsel %vm582, %v3077, %v3081
      %v3113 = vunpack.c.l.b16 %v2878
      %v3114 = vunpack.c.l.b16 %v2879
      %v3115 = vunpack.c.l.b16 %v2880
      %v3116 = vunpack.c.l.b16 %v2881
      %v3117 = vunpack.c.l.b16 %v2882
      %v3118 = vunpack.c.l.b16 %v2883
      %v3119 = vunpack.c.l.b16 %v2884
      %v3120 = vunpack.c.l.b16 %v2885
      %v3121 = vunpack.c.l.b16 %v2886
      %v3122 = vunpack.c.l.b16 %v2887
      %v3123 = vunpack.c.l.b16 %v2888
      %v3124 = vunpack.c.l.b16 %v2889
      %v3125 = vunpack.c.l.b16 %v2890
      %v3126 = vunpack.c.l.b16 %v2891
      %v3127 = vunpack.c.l.b16 %v2892
      %v3128 = vunpack.c.l.b16 %v2893
      %v3129 = vpack.c.b16 %v3114, %v3113
      %v3130 = vpack.c.b16 %v3116, %v3115
      %v3131 = vpack.c.b16 %v3118, %v3117
      %v3132 = vpack.c.b16 %v3120, %v3119
      %v3133 = vpack.c.b16 %v3122, %v3121
      %v3134 = vpack.c.b16 %v3124, %v3123
      %v3135 = vpack.c.b16 %v3126, %v3125
      %v3136 = vpack.c.b16 %v3128, %v3127
      %3145 = vmatprep.subr.bf16.mxu0 0
      %3146 = vmatpush1.bf16.msra.mxu0 %v3129
      %3147 = vmatprep.subr.bf16.mxu0 0
      %3148 = vmatpush1.bf16.msra.mxu0 %v3130
      %3149 = vmatprep.subr.bf16.mxu0 0
      %3150 = vmatpush1.bf16.msra.mxu0 %v3131
      %3151 = vmatprep.subr.bf16.mxu0 0
      %3152 = vmatpush1.bf16.msra.mxu0 %v3132
      %3153 = vmatprep.subr.bf16.mxu0 0
      %3154 = vmatpush1.bf16.msra.mxu0 %v3133
      %3155 = vmatprep.subr.bf16.mxu0 0
      %3156 = vmatpush1.bf16.msra.mxu0 %v3134
      %3157 = vmatprep.subr.bf16.mxu0 0
      %3158 = vmatpush1.bf16.msra.mxu0 %v3135
      %3159 = vmatprep.subr.bf16.mxu0 0
      %3160 = vmatpush1.bf16.msra.mxu0 %v3136
      %3161 = vmatprep.subr.bf16.mxu0 0
      %3162 = vmatpush1.bf16.msra.mxu0 0
      %3163 = vmatprep.subr.bf16.mxu0 0
      %3164 = vmatpush1.bf16.msra.mxu0 0
      %3165 = vmatprep.subr.bf16.mxu0 0
      %3166 = vmatpush1.bf16.msra.mxu0 0
      %3167 = vmatprep.subr.bf16.mxu0 0
      %3168 = vmatpush1.bf16.msra.mxu0 0
      %3169 = vmatprep.subr.bf16.mxu0 0
      %3170 = vmatpush1.bf16.msra.mxu0 0
      %3171 = vmatprep.subr.bf16.mxu0 0
      %3172 = vmatpush1.bf16.msra.mxu0 0
      %3173 = vmatprep.subr.bf16.mxu0 0
      %3174 = vmatpush1.bf16.msra.mxu0 0
      %3175 = vmatprep.subr.bf16.mxu0 0
      %3176 = vmatpush1.bf16.msra.mxu0 0
      %3177 = vmatprep.mubr.bf16.mxu0 0
      %3178 = vmatmul.mubr.bf16.gmra.mrb[0].mxu0 %v2978
      %v3179 = vpop.f32.mrb[0].mxu0
      %v3180 = vadd.f32 0.0, %v3179
      %v3181 = vpop.f32.mrb[0].mxu0
      %v3182 = vpop.f32.mrb[0].mxu0
      %v3183 = vadd.f32 0.0, %v3182
      %v3184 = vpop.f32.mrb[0].mxu0
      %3185 = vmatprep.mubr.bf16.mxu0 0
      %3186 = vmatmul.mubr.bf16.gmra.mrb[0].mxu0 %v2986
      %v3187 = vpop.f32.mrb[0].mxu0
      %v3188 = vadd.f32 0.0, %v3187
      %v3189 = vpop.f32.mrb[0].mxu0
      %v3190 = vpop.f32.mrb[0].mxu0
      %v3191 = vadd.f32 0.0, %v3190
      %v3192 = vpop.f32.mrb[0].mxu0
      %3193 = vmatprep.mubr.bf16.mxu0 0
      %3194 = vmatmul.mubr.bf16.gmra.mrb[0].mxu0 %v2994
      %v3195 = vpop.f32.mrb[0].mxu0
      %v3196 = vadd.f32 0.0, %v3195
      %v3197 = vpop.f32.mrb[0].mxu0
      %v3198 = vpop.f32.mrb[0].mxu0
      %v3199 = vadd.f32 0.0, %v3198
      %v3200 = vpop.f32.mrb[0].mxu0
      %3201 = vmatprep.mubr.bf16.mxu0 0
      %3202 = vmatmul.mubr.bf16.gmra.mrb[0].mxu0 %v3002
      %v3203 = vpop.f32.mrb[0].mxu0
      %v3204 = vadd.f32 0.0, %v3203
      %v3205 = vpop.f32.mrb[0].mxu0
      %v3206 = vpop.f32.mrb[0].mxu0
      %v3207 = vadd.f32 0.0, %v3206
      %v3208 = vpop.f32.mrb[0].mxu0
      %3209 = vmatprep.mubr.bf16.mxu0 0
      %3210 = vmatmul.mubr.bf16.gmra.mrb[0].mxu0 %v3010
      %v3211 = vpop.f32.mrb[0].mxu0
      %v3212 = vadd.f32 0.0, %v3211
      %v3213 = vpop.f32.mrb[0].mxu0
      %v3214 = vpop.f32.mrb[0].mxu0
      %v3215 = vadd.f32 0.0, %v3214
      %v3216 = vpop.f32.mrb[0].mxu0
      %3217 = vmatprep.mubr.bf16.mxu0 0
      %3218 = vmatmul.mubr.bf16.gmra.mrb[0].mxu0 %v3018
      %v3219 = vpop.f32.mrb[0].mxu0
      %v3220 = vadd.f32 0.0, %v3219
      %v3221 = vpop.f32.mrb[0].mxu0
      %v3222 = vpop.f32.mrb[0].mxu0
      %v3223 = vadd.f32 0.0, %v3222
      %v3224 = vpop.f32.mrb[0].mxu0
      %3225 = vmatprep.mubr.bf16.mxu0 0
      %3226 = vmatmul.mubr.bf16.gmra.mrb[0].mxu0 %v3026
      %v3227 = vpop.f32.mrb[0].mxu0
      %v3228 = vadd.f32 0.0, %v3227
      %v3229 = vpop.f32.mrb[0].mxu0
      %v3230 = vpop.f32.mrb[0].mxu0
      %v3231 = vadd.f32 0.0, %v3230
      %v3232 = vpop.f32.mrb[0].mxu0
      %3233 = vmatprep.mubr.bf16.mxu0 0
      %3234 = vmatmul.mubr.bf16.gmra.mrb[0].mxu0 %v3034
      %v3235 = vpop.f32.mrb[0].mxu0
      %v3236 = vadd.f32 0.0, %v3235
      %v3237 = vpop.f32.mrb[0].mxu0
      %v3238 = vpop.f32.mrb[0].mxu0
      %v3239 = vadd.f32 0.0, %v3238
      %v3240 = vpop.f32.mrb[0].mxu0
      %3241 = vmatprep.mubr.bf16.mxu0 0
      %3242 = vmatmul.mubr.bf16.gmra.mrb[0].mxu0 %v3042
      %v3243 = vpop.f32.mrb[0].mxu0
      %v3244 = vadd.f32 0.0, %v3243
      %v3245 = vpop.f32.mrb[0].mxu0
      %v3246 = vpop.f32.mrb[0].mxu0
      %v3247 = vadd.f32 0.0, %v3246
      %v3248 = vpop.f32.mrb[0].mxu0
      %3249 = vmatprep.mubr.bf16.mxu0 0
      %3250 = vmatmul.mubr.bf16.gmra.mrb[0].mxu0 %v3050
      %v3251 = vpop.f32.mrb[0].mxu0
      %v3252 = vadd.f32 0.0, %v3251
      %v3253 = vpop.f32.mrb[0].mxu0
      %v3254 = vpop.f32.mrb[0].mxu0
      %v3255 = vadd.f32 0.0, %v3254
      %v3256 = vpop.f32.mrb[0].mxu0
      %3257 = vmatprep.mubr.bf16.mxu0 0
      %3258 = vmatmul.mubr.bf16.gmra.mrb[0].mxu0 %v3058
      %v3259 = vpop.f32.mrb[0].mxu0
      %v3260 = vadd.f32 0.0, %v3259
      %v3261 = vpop.f32.mrb[0].mxu0
      %v3262 = vpop.f32.mrb[0].mxu0
      %v3263 = vadd.f32 0.0, %v3262
      %v3264 = vpop.f32.mrb[0].mxu0
      %3265 = vmatprep.mubr.bf16.mxu0 0
      %3266 = vmatmul.mubr.bf16.gmra.mrb[0].mxu0 %v3066
      %v3267 = vpop.f32.mrb[0].mxu0
      %v3268 = vadd.f32 0.0, %v3267
      %v3269 = vpop.f32.mrb[0].mxu0
      %v3270 = vpop.f32.mrb[0].mxu0
      %v3271 = vadd.f32 0.0, %v3270
      %v3272 = vpop.f32.mrb[0].mxu0
      %3273 = vmatprep.mubr.bf16.mxu0 0
      %3274 = vmatmul.mubr.bf16.gmra.mrb[0].mxu0 %v3074
      %v3275 = vpop.f32.mrb[0].mxu0
      %v3276 = vadd.f32 0.0, %v3275
      %v3277 = vpop.f32.mrb[0].mxu0
      %v3278 = vpop.f32.mrb[0].mxu0
      %v3279 = vadd.f32 0.0, %v3278
      %v3280 = vpop.f32.mrb[0].mxu0
      %3281 = vmatprep.mubr.bf16.mxu0 0
      %3282 = vmatmul.mubr.bf16.gmra.mrb[0].mxu0 %v3082
      %v3283 = vpop.f32.mrb[0].mxu0
      %v3284 = vadd.f32 0.0, %v3283
      %v3285 = vpop.f32.mrb[0].mxu0
      %v3286 = vpop.f32.mrb[0].mxu0
      %v3287 = vadd.f32 0.0, %v3286
      %v3288 = vpop.f32.mrb[0].mxu0
      %3289 = vdwg.mxu0
      %v3290 = vadd.f32 %v2821, %v3180
      %v3291 = vadd.f32 %v2822, %v3183
      %v3292 = vadd.f32 %v2823, %v3188
      %v3293 = vadd.f32 %v2824, %v3191
      %v3294 = vadd.f32 %v2825, %v3196
      %v3295 = vadd.f32 %v2826, %v3199
      %v3296 = vadd.f32 %v2827, %v3204
      %v3297 = vadd.f32 %v2828, %v3207
      %v3298 = vadd.f32 %v2829, %v3212
      %v3299 = vadd.f32 %v2830, %v3215
      %v3300 = vadd.f32 %v2831, %v3220
      %v3301 = vadd.f32 %v2832, %v3223
      %v3302 = vadd.f32 %v2833, %v3228
      %v3303 = vadd.f32 %v2834, %v3231
      %v3304 = vadd.f32 %v2835, %v3236
      %v3305 = vadd.f32 %v2836, %v3239
      %v3306 = vadd.f32 %v2837, %v3244
      %v3307 = vadd.f32 %v2838, %v3247
      %v3308 = vadd.f32 %v2839, %v3252
      %v3309 = vadd.f32 %v2840, %v3255
      %v3310 = vadd.f32 %v2841, %v3260
      %v3311 = vadd.f32 %v2842, %v3263
      %v3312 = vadd.f32 %v2843, %v3268
      %v3313 = vadd.f32 %v2844, %v3271
      %v3314 = vadd.f32 %v2845, %v3276
      %v3315 = vadd.f32 %v2846, %v3279
      %v3316 = vadd.f32 %v2847, %v3284
      %v3317 = vadd.f32 %v2848, %v3287
      %v3318 = vld [vmem:[#allocation2 + $0x18] sm:$0xe]
      %v3319 = vld [vmem:[%s2 + $0x200] sm:$0xf]
      %v3320 = vld [vmem:[%s2 + $0x204] sm:$0xf]
      %v3321 = vld [vmem:[%s2 + $0x208] sm:$0xf]
      %v3322 = vld [vmem:[%s2 + $0x20c] sm:$0xf]
      %v3323 = vld [vmem:[%s2 + $0x210] sm:$0xf]
      %v3324 = vld [vmem:[%s2 + $0x214] sm:$0xf]
      %v3325 = vld [vmem:[%s2 + $0x218] sm:$0xf]
      %v3326 = vld [vmem:[%s2 + $0x21c] sm:$0xf]
      %v3327 = vld [vmem:[%s2 + $0x220] sm:$0xf]
      %v3328 = vld [vmem:[%s2 + $0x224] sm:$0xf]
      %v3329 = vld [vmem:[%s2 + $0x228] sm:$0xf]
      %v3330 = vld [vmem:[%s2 + $0x22c] sm:$0xf]
      %v3331 = vld [vmem:[%s2 + $0x230] sm:$0xf]
      %v3332 = vld [vmem:[%s2 + $0x234] sm:$0xf]
      %v3333 = vld [vmem:[%s2 + $0x238] sm:$0xf]
      %v3334 = vld [vmem:[%s2 + $0x23c] sm:$0xf]
      %v3336 = vunpack.c.l.b16 %v3318
      %v3337 = vpack.c.b16 %v2924, %v3336
      %v3338 = vrot.slane %v3337, 1
      %v3339 = vrot.slane %v2953, 1
      %v3340 = vsel %vm1133, %v3338, %v3339
      %v3341 = vrot.slane %v2954, 1
      %v3342 = vsel %vm1133, %v3339, %v3341
      %v3343 = vrot.slane %v2955, 1
      %v3344 = vsel %vm1133, %v3341, %v3343
      %v3345 = vrot.slane %v2956, 1
      %v3346 = vsel %vm1133, %v3343, %v3345
      %v3347 = vrot.slane %v2957, 1
      %v3348 = vsel %vm1133, %v3345, %v3347
      %v3349 = vrot.slane %v2958, 1
      %v3350 = vsel %vm1133, %v3347, %v3349
      %v3351 = vrot.slane %v2959, 1
      %v3352 = vsel %vm1133, %v3349, %v3351
      %v3353 = vrot.slane %v2960, 1
      %v3354 = vsel %vm1133, %v3351, %v3353
      %v3355 = vrot.slane %v2961, 1
      %v3356 = vsel %vm1133, %v3353, %v3355
      %v3357 = vrot.slane %v2962, 1
      %v3358 = vsel %vm1133, %v3355, %v3357
      %v3359 = vrot.slane %v2963, 1
      %v3360 = vsel %vm1133, %v3357, %v3359
      %v3361 = vrot.slane %v2964, 1
      %v3362 = vsel %vm1133, %v3359, %v3361
      %v3363 = vrot.slane %v2965, 1
      %v3364 = vsel %vm1133, %v3361, %v3363
      %v3365 = vrot.slane %v2966, 1
      %v3366 = vsel %vm1133, %v3363, %v3365
      %v3397 = vunpack.c.l.b16 %v3319
      %v3398 = vunpack.c.l.b16 %v3320
      %v3399 = vunpack.c.l.b16 %v3321
      %v3400 = vunpack.c.l.b16 %v3322
      %v3401 = vunpack.c.l.b16 %v3323
      %v3402 = vunpack.c.l.b16 %v3324
      %v3403 = vunpack.c.l.b16 %v3325
      %v3404 = vunpack.c.l.b16 %v3326
      %v3405 = vunpack.c.l.b16 %v3327
      %v3406 = vunpack.c.l.b16 %v3328
      %v3407 = vunpack.c.l.b16 %v3329
      %v3408 = vunpack.c.l.b16 %v3330
      %v3409 = vunpack.c.l.b16 %v3331
      %v3410 = vunpack.c.l.b16 %v3332
      %v3411 = vunpack.c.l.b16 %v3333
      %v3412 = vunpack.c.l.b16 %v3334
      %v3413 = vpack.c.b16 %v3398, %v3397
      %v3414 = vpack.c.b16 %v3400, %v3399
      %v3415 = vpack.c.b16 %v3402, %v3401
      %v3416 = vpack.c.b16 %v3404, %v3403
      %v3417 = vpack.c.b16 %v3406, %v3405
      %v3418 = vpack.c.b16 %v3408, %v3407
      %v3419 = vpack.c.b16 %v3410, %v3409
      %v3420 = vpack.c.b16 %v3412, %v3411
      %3429 = vmatprep.subr.bf16.mxu0 0
      %3430 = vmatpush1.bf16.msra.mxu0 %v3413
      %3431 = vmatprep.subr.bf16.mxu0 0
      %3432 = vmatpush1.bf16.msra.mxu0 %v3414
      %3433 = vmatprep.subr.bf16.mxu0 0
      %3434 = vmatpush1.bf16.msra.mxu0 %v3415
      %3435 = vmatprep.subr.bf16.mxu0 0
      %3436 = vmatpush1.bf16.msra.mxu0 %v3416
      %3437 = vmatprep.subr.bf16.mxu0 0
      %3438 = vmatpush1.bf16.msra.mxu0 %v3417
      %3439 = vmatprep.subr.bf16.mxu0 0
      %3440 = vmatpush1.bf16.msra.mxu0 %v3418
      %3441 = vmatprep.subr.bf16.mxu0 0
      %3442 = vmatpush1.bf16.msra.mxu0 %v3419
      %3443 = vmatprep.subr.bf16.mxu0 0
      %3444 = vmatpush1.bf16.msra.mxu0 %v3420
      %3445 = vmatprep.subr.bf16.mxu0 0
      %3446 = vmatpush1.bf16.msra.mxu0 0
      %3447 = vmatprep.subr.bf16.mxu0 0
      %3448 = vmatpush1.bf16.msra.mxu0 0
      %3449 = vmatprep.subr.bf16.mxu0 0
      %3450 = vmatpush1.bf16.msra.mxu0 0
      %3451 = vmatprep.subr.bf16.mxu0 0
      %3452 = vmatpush1.bf16.msra.mxu0 0
      %3453 = vmatprep.subr.bf16.mxu0 0
      %3454 = vmatpush1.bf16.msra.mxu0 0
      %3455 = vmatprep.subr.bf16.mxu0 0
      %3456 = vmatpush1.bf16.msra.mxu0 0
      %3457 = vmatprep.subr.bf16.mxu0 0
      %3458 = vmatpush1.bf16.msra.mxu0 0
      %3459 = vmatprep.subr.bf16.mxu0 0
      %3460 = vmatpush1.bf16.msra.mxu0 0
      %3461 = vmatprep.mubr.bf16.mxu0 0
      %3462 = vmatmul.mubr.bf16.gmra.mrb[0].mxu0 %v3340
      %v3463 = vpop.f32.mrb[0].mxu0
      %v3464 = vadd.f32 0.0, %v3463
      %v3465 = vpop.f32.mrb[0].mxu0
      %v3466 = vpop.f32.mrb[0].mxu0
      %v3467 = vadd.f32 0.0, %v3466
      %v3468 = vpop.f32.mrb[0].mxu0
      %3469 = vmatprep.mubr.bf16.mxu0 0
      %3470 = vmatmul.mubr.bf16.gmra.mrb[0].mxu0 %v3342
      %v3471 = vpop.f32.mrb[0].mxu0
      %v3472 = vadd.f32 0.0, %v3471
      %v3473 = vpop.f32.mrb[0].mxu0
      %v3474 = vpop.f32.mrb[0].mxu0
      %v3475 = vadd.f32 0.0, %v3474
      %v3476 = vpop.f32.mrb[0].mxu0
      %3477 = vmatprep.mubr.bf16.mxu0 0
      %3478 = vmatmul.mubr.bf16.gmra.mrb[0].mxu0 %v3344
      %v3479 = vpop.f32.mrb[0].mxu0
      %v3480 = vadd.f32 0.0, %v3479
      %v3481 = vpop.f32.mrb[0].mxu0
      %v3482 = vpop.f32.mrb[0].mxu0
      %v3483 = vadd.f32 0.0, %v3482
      %v3484 = vpop.f32.mrb[0].mxu0
      %3485 = vmatprep.mubr.bf16.mxu0 0
      %3486 = vmatmul.mubr.bf16.gmra.mrb[0].mxu0 %v3346
      %v3487 = vpop.f32.mrb[0].mxu0
      %v3488 = vadd.f32 0.0, %v3487
      %v3489 = vpop.f32.mrb[0].mxu0
      %v3490 = vpop.f32.mrb[0].mxu0
      %v3491 = vadd.f32 0.0, %v3490
      %v3492 = vpop.f32.mrb[0].mxu0
      %3493 = vmatprep.mubr.bf16.mxu0 0
      %3494 = vmatmul.mubr.bf16.gmra.mrb[0].mxu0 %v3348
      %v3495 = vpop.f32.mrb[0].mxu0
      %v3496 = vadd.f32 0.0, %v3495
      %v3497 = vpop.f32.mrb[0].mxu0
      %v3498 = vpop.f32.mrb[0].mxu0
      %v3499 = vadd.f32 0.0, %v3498
      %v3500 = vpop.f32.mrb[0].mxu0
      %3501 = vmatprep.mubr.bf16.mxu0 0
      %3502 = vmatmul.mubr.bf16.gmra.mrb[0].mxu0 %v3350
      %v3503 = vpop.f32.mrb[0].mxu0
      %v3504 = vadd.f32 0.0, %v3503
      %v3505 = vpop.f32.mrb[0].mxu0
      %v3506 = vpop.f32.mrb[0].mxu0
      %v3507 = vadd.f32 0.0, %v3506
      %v3508 = vpop.f32.mrb[0].mxu0
      %3509 = vmatprep.mubr.bf16.mxu0 0
      %3510 = vmatmul.mubr.bf16.gmra.mrb[0].mxu0 %v3352
      %v3511 = vpop.f32.mrb[0].mxu0
      %v3512 = vadd.f32 0.0, %v3511
      %v3513 = vpop.f32.mrb[0].mxu0
      %v3514 = vpop.f32.mrb[0].mxu0
      %v3515 = vadd.f32 0.0, %v3514
      %v3516 = vpop.f32.mrb[0].mxu0
      %3517 = vmatprep.mubr.bf16.mxu0 0
      %3518 = vmatmul.mubr.bf16.gmra.mrb[0].mxu0 %v3354
      %v3519 = vpop.f32.mrb[0].mxu0
      %v3520 = vadd.f32 0.0, %v3519
      %v3521 = vpop.f32.mrb[0].mxu0
      %v3522 = vpop.f32.mrb[0].mxu0
      %v3523 = vadd.f32 0.0, %v3522
      %v3524 = vpop.f32.mrb[0].mxu0
      %3525 = vmatprep.mubr.bf16.mxu0 0
      %3526 = vmatmul.mubr.bf16.gmra.mrb[0].mxu0 %v3356
      %v3527 = vpop.f32.mrb[0].mxu0
      %v3528 = vadd.f32 0.0, %v3527
      %v3529 = vpop.f32.mrb[0].mxu0
      %v3530 = vpop.f32.mrb[0].mxu0
      %v3531 = vadd.f32 0.0, %v3530
      %v3532 = vpop.f32.mrb[0].mxu0
      %3533 = vmatprep.mubr.bf16.mxu0 0
      %3534 = vmatmul.mubr.bf16.gmra.mrb[0].mxu0 %v3358
      %v3535 = vpop.f32.mrb[0].mxu0
      %v3536 = vadd.f32 0.0, %v3535
      %v3537 = vpop.f32.mrb[0].mxu0
      %v3538 = vpop.f32.mrb[0].mxu0
      %v3539 = vadd.f32 0.0, %v3538
      %v3540 = vpop.f32.mrb[0].mxu0
      %3541 = vmatprep.mubr.bf16.mxu0 0
      %3542 = vmatmul.mubr.bf16.gmra.mrb[0].mxu0 %v3360
      %v3543 = vpop.f32.mrb[0].mxu0
      %v3544 = vadd.f32 0.0, %v3543
      %v3545 = vpop.f32.mrb[0].mxu0
      %v3546 = vpop.f32.mrb[0].mxu0
      %v3547 = vadd.f32 0.0, %v3546
      %v3548 = vpop.f32.mrb[0].mxu0
      %3549 = vmatprep.mubr.bf16.mxu0 0
      %3550 = vmatmul.mubr.bf16.gmra.mrb[0].mxu0 %v3362
      %v3551 = vpop.f32.mrb[0].mxu0
      %v3552 = vadd.f32 0.0, %v3551
      %v3553 = vpop.f32.mrb[0].mxu0
      %v3554 = vpop.f32.mrb[0].mxu0
      %v3555 = vadd.f32 0.0, %v3554
      %v3556 = vpop.f32.mrb[0].mxu0
      %3557 = vmatprep.mubr.bf16.mxu0 0
      %3558 = vmatmul.mubr.bf16.gmra.mrb[0].mxu0 %v3364
      %v3559 = vpop.f32.mrb[0].mxu0
      %v3560 = vadd.f32 0.0, %v3559
      %v3561 = vpop.f32.mrb[0].mxu0
      %v3562 = vpop.f32.mrb[0].mxu0
      %v3563 = vadd.f32 0.0, %v3562
      %v3564 = vpop.f32.mrb[0].mxu0
      %3565 = vmatprep.mubr.bf16.mxu0 0
      %3566 = vmatmul.mubr.bf16.gmra.mrb[0].mxu0 %v3366
      %v3567 = vpop.f32.mrb[0].mxu0
      %v3568 = vadd.f32 0.0, %v3567
      %v3569 = vpop.f32.mrb[0].mxu0
      %v3570 = vpop.f32.mrb[0].mxu0
      %v3571 = vadd.f32 0.0, %v3570
      %v3572 = vpop.f32.mrb[0].mxu0
      %3573 = vdwg.mxu0
      %v3574 = vadd.f32 %v3290, %v3464
      %v3575 = vadd.f32 %v3291, %v3467
      %v3576 = vadd.f32 %v3292, %v3472
      %v3577 = vadd.f32 %v3293, %v3475
      %v3578 = vadd.f32 %v3294, %v3480
      %v3579 = vadd.f32 %v3295, %v3483
      %v3580 = vadd.f32 %v3296, %v3488
      %v3581 = vadd.f32 %v3297, %v3491
      %v3582 = vadd.f32 %v3298, %v3496
      %v3583 = vadd.f32 %v3299, %v3499
      %v3584 = vadd.f32 %v3300, %v3504
      %v3585 = vadd.f32 %v3301, %v3507
      %v3586 = vadd.f32 %v3302, %v3512
      %v3587 = vadd.f32 %v3303, %v3515
      %v3588 = vadd.f32 %v3304, %v3520
      %v3589 = vadd.f32 %v3305, %v3523
      %v3590 = vadd.f32 %v3306, %v3528
      %v3591 = vadd.f32 %v3307, %v3531
      %v3592 = vadd.f32 %v3308, %v3536
      %v3593 = vadd.f32 %v3309, %v3539
      %v3594 = vadd.f32 %v3310, %v3544
      %v3595 = vadd.f32 %v3311, %v3547
      %v3596 = vadd.f32 %v3312, %v3552
      %v3597 = vadd.f32 %v3313, %v3555
      %v3598 = vadd.f32 %v3314, %v3560
      %v3599 = vadd.f32 %v3315, %v3563
      %v3600 = vadd.f32 %v3316, %v3568
      %v3601 = vadd.f32 %v3317, %v3571
      %v3602 = vld [vmem:[%s3] sm:$0x1]
      %v3604 = vlaneseq
      %v3605 = vshrl.u32 %v3604, 7
      %v3606 = vsub.s32 0, %v3605
      %v3607 = vrot.slane %v3602, %v3606
      %v3609 = vadd.f32 %v3574, %v3607
      %v3610 = vadd.f32 %v3575, %v3607
      %v3611 = vadd.f32 %v3576, %v3607
      %v3612 = vadd.f32 %v3577, %v3607
      %v3613 = vadd.f32 %v3578, %v3607
      %v3614 = vadd.f32 %v3579, %v3607
      %v3615 = vadd.f32 %v3580, %v3607
      %v3616 = vadd.f32 %v3581, %v3607
      %v3617 = vadd.f32 %v3582, %v3607
      %v3618 = vadd.f32 %v3583, %v3607
      %v3619 = vadd.f32 %v3584, %v3607
      %v3620 = vadd.f32 %v3585, %v3607
      %v3621 = vadd.f32 %v3586, %v3607
      %v3622 = vadd.f32 %v3587, %v3607
      %v3623 = vadd.f32 %v3588, %v3607
      %v3624 = vadd.f32 %v3589, %v3607
      %v3625 = vadd.f32 %v3590, %v3607
      %v3626 = vadd.f32 %v3591, %v3607
      %v3627 = vadd.f32 %v3592, %v3607
      %v3628 = vadd.f32 %v3593, %v3607
      %v3629 = vadd.f32 %v3594, %v3607
      %v3630 = vadd.f32 %v3595, %v3607
      %v3631 = vadd.f32 %v3596, %v3607
      %v3632 = vadd.f32 %v3597, %v3607
      %v3633 = vadd.f32 %v3598, %v3607
      %v3634 = vadd.f32 %v3599, %v3607
      %v3635 = vadd.f32 %v3600, %v3607
      %v3636 = vadd.f32 %v3601, %v3607
      %v3637 = vmax.f32 %v3609, 0.0
      %v3638 = vmax.f32 %v3610, 0.0
      %v3639 = vmax.f32 %v3611, 0.0
      %v3640 = vmax.f32 %v3612, 0.0
      %v3641 = vmax.f32 %v3613, 0.0
      %v3642 = vmax.f32 %v3614, 0.0
      %v3643 = vmax.f32 %v3615, 0.0
      %v3644 = vmax.f32 %v3616, 0.0
      %v3645 = vmax.f32 %v3617, 0.0
      %v3646 = vmax.f32 %v3618, 0.0
      %v3647 = vmax.f32 %v3619, 0.0
      %v3648 = vmax.f32 %v3620, 0.0
      %v3649 = vmax.f32 %v3621, 0.0
      %v3650 = vmax.f32 %v3622, 0.0
      %v3651 = vmax.f32 %v3623, 0.0
      %v3652 = vmax.f32 %v3624, 0.0
      %v3653 = vmax.f32 %v3625, 0.0
      %v3654 = vmax.f32 %v3626, 0.0
      %v3655 = vmax.f32 %v3627, 0.0
      %v3656 = vmax.f32 %v3628, 0.0
      %v3657 = vmax.f32 %v3629, 0.0
      %v3658 = vmax.f32 %v3630, 0.0
      %v3659 = vmax.f32 %v3631, 0.0
      %v3660 = vmax.f32 %v3632, 0.0
      %v3661 = vmax.f32 %v3633, 0.0
      %v3662 = vmax.f32 %v3634, 0.0
      %v3663 = vmax.f32 %v3635, 0.0
      %v3664 = vmax.f32 %v3636, 0.0
      %v3665 = vld [vmem:[%s369] sm:$0xff]
      %v3666 = vld [vmem:[%s369 + $0x8] sm:$0xff]
      %v3667 = vld [vmem:[%s369 + $0x10] sm:$0xff]
      %v3668 = vld [vmem:[%s369 + $0x18] sm:$0xff]
      %v3669 = vld [vmem:[%s369 + $0x20] sm:$0xff]
      %v3670 = vld [vmem:[%s369 + $0x28] sm:$0xff]
      %v3671 = vld [vmem:[%s369 + $0x30] sm:$0xff]
      %v3672 = vld [vmem:[%s369 + $0x38] sm:$0xff]
      %v3673 = vld [vmem:[%s369 + $0x40] sm:$0xff]
      %v3674 = vld [vmem:[%s369 + $0x48] sm:$0xff]
      %v3675 = vld [vmem:[%s369 + $0x50] sm:$0xff]
      %v3676 = vld [vmem:[%s369 + $0x58] sm:$0xff]
      %v3677 = vld [vmem:[%s369 + $0x60] sm:$0xff]
      %v3678 = vld [vmem:[%s369 + $0x68] sm:$0xff]
      %v3679 = vld [vmem:[%s369 + $0x70] sm:$0xff]
      %v3680 = vld [vmem:[%s369 + $0x78] sm:$0xff]
      %v3681 = vld [vmem:[%s369 + $0x80] sm:$0xff]
      %v3682 = vld [vmem:[%s369 + $0x88] sm:$0xff]
      %v3683 = vld [vmem:[%s369 + $0x90] sm:$0xff]
      %v3684 = vld [vmem:[%s369 + $0x98] sm:$0xff]
      %v3685 = vld [vmem:[%s369 + $0xa0] sm:$0xff]
      %v3686 = vld [vmem:[%s369 + $0xa8] sm:$0xff]
      %v3687 = vld [vmem:[%s369 + $0xb0] sm:$0xff]
      %v3688 = vld [vmem:[%s369 + $0xb8] sm:$0xff]
      %v3689 = vld [vmem:[%s369 + $0xc0] sm:$0xff]
      %v3690 = vld [vmem:[%s369 + $0xc8] sm:$0xff]
      %v3691 = vld [vmem:[%s369 + $0xd0] sm:$0xff]
      %v3692 = vld [vmem:[%s369 + $0xd8] sm:$0xff]
      %3694 = vset.pattern.permute.xlu0 0
      %3695 = vperm.xlu0 %3694, %v3665
      %v3696 = vpop.permute.xlu0 %3695
      %3699 = vset.pattern.permute.xlu0 0
      %3700 = vperm.xlu0 %3699, %v3666
      %v3701 = vpop.permute.xlu0 %3700
      %3704 = vset.pattern.permute.xlu0 0
      %3705 = vperm.xlu0 %3704, %v3667
      %v3706 = vpop.permute.xlu0 %3705
      %3709 = vset.pattern.permute.xlu0 0
      %3710 = vperm.xlu0 %3709, %v3668
      %v3711 = vpop.permute.xlu0 %3710
      %3714 = vset.pattern.permute.xlu0 0
      %3715 = vperm.xlu0 %3714, %v3669
      %v3716 = vpop.permute.xlu0 %3715
      %3719 = vset.pattern.permute.xlu0 0
      %3720 = vperm.xlu0 %3719, %v3670
      %v3721 = vpop.permute.xlu0 %3720
      %3724 = vset.pattern.permute.xlu0 0
      %3725 = vperm.xlu0 %3724, %v3671
      %v3726 = vpop.permute.xlu0 %3725
      %3729 = vset.pattern.permute.xlu0 0
      %3730 = vperm.xlu0 %3729, %v3672
      %v3731 = vpop.permute.xlu0 %3730
      %3734 = vset.pattern.permute.xlu0 0
      %3735 = vperm.xlu0 %3734, %v3673
      %v3736 = vpop.permute.xlu0 %3735
      %3739 = vset.pattern.permute.xlu0 0
      %3740 = vperm.xlu0 %3739, %v3674
      %v3741 = vpop.permute.xlu0 %3740
      %3744 = vset.pattern.permute.xlu0 0
      %3745 = vperm.xlu0 %3744, %v3675
      %v3746 = vpop.permute.xlu0 %3745
      %3749 = vset.pattern.permute.xlu0 0
      %3750 = vperm.xlu0 %3749, %v3676
      %v3751 = vpop.permute.xlu0 %3750
      %3754 = vset.pattern.permute.xlu0 0
      %3755 = vperm.xlu0 %3754, %v3677
      %v3756 = vpop.permute.xlu0 %3755
      %3759 = vset.pattern.permute.xlu0 0
      %3760 = vperm.xlu0 %3759, %v3678
      %v3761 = vpop.permute.xlu0 %3760
      %3764 = vset.pattern.permute.xlu0 0
      %3765 = vperm.xlu0 %3764, %v3679
      %v3766 = vpop.permute.xlu0 %3765
      %3769 = vset.pattern.permute.xlu0 0
      %3770 = vperm.xlu0 %3769, %v3680
      %v3771 = vpop.permute.xlu0 %3770
      %3774 = vset.pattern.permute.xlu0 0
      %3775 = vperm.xlu0 %3774, %v3681
      %v3776 = vpop.permute.xlu0 %3775
      %3779 = vset.pattern.permute.xlu0 0
      %3780 = vperm.xlu0 %3779, %v3682
      %v3781 = vpop.permute.xlu0 %3780
      %3784 = vset.pattern.permute.xlu0 0
      %3785 = vperm.xlu0 %3784, %v3683
      %v3786 = vpop.permute.xlu0 %3785
      %3789 = vset.pattern.permute.xlu0 0
      %3790 = vperm.xlu0 %3789, %v3684
      %v3791 = vpop.permute.xlu0 %3790
      %3794 = vset.pattern.permute.xlu0 0
      %3795 = vperm.xlu0 %3794, %v3685
      %v3796 = vpop.permute.xlu0 %3795
      %3799 = vset.pattern.permute.xlu0 0
      %3800 = vperm.xlu0 %3799, %v3686
      %v3801 = vpop.permute.xlu0 %3800
      %3804 = vset.pattern.permute.xlu0 0
      %3805 = vperm.xlu0 %3804, %v3687
      %v3806 = vpop.permute.xlu0 %3805
      %3809 = vset.pattern.permute.xlu0 0
      %3810 = vperm.xlu0 %3809, %v3688
      %v3811 = vpop.permute.xlu0 %3810
      %3814 = vset.pattern.permute.xlu0 0
      %3815 = vperm.xlu0 %3814, %v3689
      %v3816 = vpop.permute.xlu0 %3815
      %3819 = vset.pattern.permute.xlu0 0
      %3820 = vperm.xlu0 %3819, %v3690
      %v3821 = vpop.permute.xlu0 %3820
      %3824 = vset.pattern.permute.xlu0 0
      %3825 = vperm.xlu0 %3824, %v3691
      %v3826 = vpop.permute.xlu0 %3825
      %3829 = vset.pattern.permute.xlu0 0
      %3830 = vperm.xlu0 %3829, %v3692
      %v3831 = vpop.permute.xlu0 %3830
      %v3833 = vmul.f32 %v3637, %v3696
      %v3834 = vmul.f32 %v3638, %v3701
      %v3835 = vmul.f32 %v3639, %v3706
      %v3836 = vmul.f32 %v3640, %v3711
      %v3837 = vmul.f32 %v3641, %v3716
      %v3838 = vmul.f32 %v3642, %v3721
      %v3839 = vmul.f32 %v3643, %v3726
      %v3840 = vmul.f32 %v3644, %v3731
      %v3841 = vmul.f32 %v3645, %v3736
      %v3842 = vmul.f32 %v3646, %v3741
      %v3843 = vmul.f32 %v3647, %v3746
      %v3844 = vmul.f32 %v3648, %v3751
      %v3845 = vmul.f32 %v3649, %v3756
      %v3846 = vmul.f32 %v3650, %v3761
      %v3847 = vmul.f32 %v3651, %v3766
      %v3848 = vmul.f32 %v3652, %v3771
      %v3849 = vmul.f32 %v3653, %v3776
      %v3850 = vmul.f32 %v3654, %v3781
      %v3851 = vmul.f32 %v3655, %v3786
      %v3852 = vmul.f32 %v3656, %v3791
      %v3853 = vmul.f32 %v3657, %v3796
      %v3854 = vmul.f32 %v3658, %v3801
      %v3855 = vmul.f32 %v3659, %v3806
      %v3856 = vmul.f32 %v3660, %v3811
      %v3857 = vmul.f32 %v3661, %v3816
      %v3858 = vmul.f32 %v3662, %v3821
      %v3859 = vmul.f32 %v3663, %v3826
      %v3860 = vmul.f32 %v3664, %v3831
      %3861 = vst [vmem:[%s375] sm:$0xff] %v3833
      %3862 = vst [vmem:[%s375 + $0x8] sm:$0xff] %v3834
      %3863 = vst [vmem:[%s375 + $0x10] sm:$0xff] %v3835
      %3864 = vst [vmem:[%s375 + $0x18] sm:$0xff] %v3836
      %3865 = vst [vmem:[%s375 + $0x20] sm:$0xff] %v3837
      %3866 = vst [vmem:[%s375 + $0x28] sm:$0xff] %v3838
      %3867 = vst [vmem:[%s375 + $0x30] sm:$0xff] %v3839
      %3868 = vst [vmem:[%s375 + $0x38] sm:$0xff] %v3840
      %3869 = vst [vmem:[%s375 + $0x40] sm:$0xff] %v3841
      %3870 = vst [vmem:[%s375 + $0x48] sm:$0xff] %v3842
      %3871 = vst [vmem:[%s375 + $0x50] sm:$0xff] %v3843
      %3872 = vst [vmem:[%s375 + $0x58] sm:$0xff] %v3844
      %3873 = vst [vmem:[%s375 + $0x60] sm:$0xff] %v3845
      %3874 = vst [vmem:[%s375 + $0x68] sm:$0xff] %v3846
      %3875 = vst [vmem:[%s375 + $0x70] sm:$0xff] %v3847
      %3876 = vst [vmem:[%s375 + $0x78] sm:$0xff] %v3848
      %3877 = vst [vmem:[%s375 + $0x80] sm:$0xff] %v3849
      %3878 = vst [vmem:[%s375 + $0x88] sm:$0xff] %v3850
      %3879 = vst [vmem:[%s375 + $0x90] sm:$0xff] %v3851
      %3880 = vst [vmem:[%s375 + $0x98] sm:$0xff] %v3852
      %3881 = vst [vmem:[%s375 + $0xa0] sm:$0xff] %v3853
      %3882 = vst [vmem:[%s375 + $0xa8] sm:$0xff] %v3854
      %3883 = vst [vmem:[%s375 + $0xb0] sm:$0xff] %v3855
      %3884 = vst [vmem:[%s375 + $0xb8] sm:$0xff] %v3856
      %3885 = vst [vmem:[%s375 + $0xc0] sm:$0xff] %v3857
      %3886 = vst [vmem:[%s375 + $0xc8] sm:$0xff] %v3858
      %3887 = vst [vmem:[%s375 + $0xd0] sm:$0xff] %v3859
      %3888 = vst [vmem:[%s375 + $0xd8] sm:$0xff] %v3860
      %s3889 = smul.u32 28, %s16
      %p3890 = scmp.lt.s32.totalorder %s3889, 139
      %s3891 = scalar_select %p3890, %s3889, 139
      %s3892 = smul.addr %s3891, 8
      %s3893 = scalar_lea.vmem %s5, %s3892
      // Predicated region
      $region41: #{up_forward.5} parent=39 // pred_check
        %p3894 = pneg %p184
      $region42: #{up_forward.5} parent=39 // pred_check_branch
        %3896 = sbr.rel (%p3894) target = $region44
      $region43: #{up_forward.5} parent=39 // pred_region
        %s3897 = smul.u32 28, %s16
      $region44: #{up_forward.5} parent=39 // pred_fallthru
        _
    $region40: #{up_forward.5} parent=5 // pred_fallthru
      _
    %p3898 = scmp.le.s32.totalorder 2, %s11
    // Predicated region
    $region45: #{up_forward.5} parent=5 // pred_check
      %p3899 = pneg %p3898
    $region46: #{up_forward.5} parent=5 // pred_check_branch
      %3901 = sbr.rel (%p3899) target = $region48
    $region47: #{up_forward.5} parent=5 // pred_region
      %s3902 = ssub.s32 %s11, 2
      // Predicated region
      $region49: #{up_forward.5} parent=47 // pred_check
        %p3903 = pneg %p190
      $region50: #{up_forward.5} parent=47 // pred_check_branch
        %3905 = sbr.rel (%p3903) target = $region52
      $region51: #{up_forward.5} parent=47 // pred_region
        %s3906 = smul.u32 28, %s17
        %p3907 = scmp.lt.s32.totalorder %s3906, 139
        %s3908 = scalar_select %p3907, %s3906, 139
        %s3909 = smul.addr %s3908, 8
        %s3910 = scalar_lea.vmem %s5, %s3909
      $region52: #{up_forward.5} parent=47 // pred_fallthru
        _
    $region48: #{up_forward.5} parent=5 // pred_fallthru
      _
  $region6: #{up_forward.5} parent=0 // loop_footer
    %s15 = sadd.s32 1, %s11
  $region7: #{up_forward.5} parent=0 // loop_footer_branch
    %10 = sbr.rel target = $region3
  $region8: #{up_forward.5} parent=0 // loop_exit
    _

// kernel: up_forward.4
$region0: #{up_forward.4}
  #allocation0 [shape = 'u32[]', space=smem, size = 0x4, offset = 0x4, fixed_abs, tag = 'smem constant byte address 0x4 - core index']
  #allocation1 [shape = 'u32[144,128]{1,0:T(1,128)}', space=vmem, size = 0x12000, scoped, tag = 'internal scratch']
  #allocation2 [shape = 'bf16[280,256]{1,0:T(8,128)(2,1)}', space=vmem, size = 0x23000, scoped, tag = 'scratch operand']
  %s0 = inlined_call_operand.vmem [shape: bf16[1120,128], index: 0, kind: input, shape index: {}, may-alias: {0,1}]
  %s1 = inlined_call_operand.vmem [shape: bf16[1120,128], index: 1, kind: input, shape index: {}, may-alias: {0,1}]
  %s2 = inlined_call_operand.vmem [shape: bf16[1120,128], index: 2, kind: input, shape index: {}, may-alias: {2,3}]
  %s3 = inlined_call_operand.vmem [shape: bf16[1120,128], index: 3, kind: input, shape index: {}, may-alias: {2,3}]
  %s4 = inlined_call_operand.vmem [shape: bf16[2304,128], index: 4, kind: input, shape index: {}]
  %s5 = inlined_call_operand.vmem [shape: f32[1,128], index: 5, kind: input, shape index: {}]
  %s6 = inlined_call_operand.vmem [shape: f32[1120,1], index: 6, kind: input, shape index: {}]
  %s7 = inlined_call_operand.vmem [shape: bf16[1120,128], index: 7, kind: output, shape index: {}]
  %s8 = sld [smem:[#allocation0]]
  $region61: #{up_forward.4} parent=0
    _
  %s10 = ssub.s32 1, %s8
  %s11 = scalar_select 0, %s10, %s8
  loop: start=0, step=1, limit=7
  $region2: #{up_forward.4} parent=0 // loop_pre_header
    _
  $region3: #{up_forward.4} parent=0 // loop_header
    %s13 = sphi 0, %s17
    %p14 = scmp.ge.s32.totalorder %s13, 7
    %s23 = sphi 0, %s25
    %s26 = sphi 0, %s23
    %s27 = sphi 0, %s26
    %s43 = sphi 0, %s27
    %s79 = sphi 0, %s81
    %s82 = sphi 0, %s79
    %s83 = sphi 0, %s82
    %s99 = sphi 0, %s83
    %s105 = sphi 0, %s107
    %s108 = sphi 0, %s105
    %s109 = sphi 0, %s108
    %s125 = sphi 0, %s109
    %s161 = sphi 0, %s163
    %s164 = sphi 0, %s161
    %s165 = sphi 0, %s164
    %s181 = sphi 0, %s165
    %s185 = sphi 0, %s185
    %s187 = sphi 0, %s185
    %s188 = sphi 0, %s187
    %s202 = sphi 0, %s188
    %s206 = sphi 0, %s206
    %s208 = sphi 0, %s206
    %s209 = sphi 0, %s208
    %s223 = sphi 0, %s209
    %s229 = sphi 0, %s231
    %s232 = sphi 0, %s229
    %s233 = sphi 0, %s232
    %s249 = sphi 0, %s233
    %s255 = sphi 0, %s257
    %s258 = sphi 0, %s255
    %s259 = sphi 0, %s258
    %s275 = sphi 0, %s259
  $region4: #{up_forward.4} parent=0 // loop_header_branch
    %16 = sbr.rel (%p14) target = $region8
  $region5: #{up_forward.4} parent=0 // loop_body
    %s18 = ssub.s32 %s13, 1
    %s19 = ssub.s32 %s13, 2
    %s20 = sadd.s32 %s13, 1
    %s21 = ssub.s32 %s13, %s20
    %p22 = scmp.eq.s32.totalorder %s21, 0
    %s24 = sadd.s32 %s23, 1
    %s25 = scalar_select %p22, %s23, %s24
    %p28 = pneg %p22
    %p29 = scmp.eq.s32.totalorder %s13, 4
    %p30 = por %p28, %p29
    %p31 = scmp.ne.s32.totalorder %s23, %s26
    %p32 = scmp.eq.s32.totalorder %s13, 0
    %p33 = por %p31, %p32
    %p34 = scmp.ne.s32.totalorder %s23, %s26
    %p35 = scmp.eq.s32.totalorder %s18, 4
    %p36 = por %p34, %p35
    %p37 = scmp.ne.s32.totalorder %s26, %s27
    %p38 = scmp.eq.s32.totalorder %s18, 0
    %p39 = por %p37, %p38
    %p40 = scmp.ne.s32.totalorder %s26, %s27
    %p41 = scmp.eq.s32.totalorder %s19, 4
    %p42 = por %p40, %p41
    %p44 = scmp.ne.s32.totalorder %s27, %s43
    %p45 = scmp.eq.s32.totalorder %s19, 0
    %p46 = por %p44, %p45
    %s47 = sadd.s32 %s13, 1
    %p48 = scmp.lt.s32.totalorder %s47, 0
    %s49 = ssub.s32 0, %s47
    %s50 = scalar_select %p48, %s49, %s47
    %s51 = sdiv.u32.pop %s50, 5
    %s52 = srem.u32.pop %s50, 5
    %s53 = ssub.s32 0, %s52
    %s54 = scalar_select %p48, %s53, %s52
    %p55 = scmp.ne.s32.totalorder %s54, 0
    %p56 = scmp.lt.s32.totalorder %s54, 0
    %p57 = pnand %p56, %p55
    %p58 = pneg %p57
    %s59 = sadd.s32 %s54, 5
    %s60 = scalar_select %p58, %s59, %s54
    %s61 = smul.u32 %s60, 4
    %s62 = sadd.s32 %s20, 1
    %p63 = scmp.lt.s32.totalorder %s62, 0
    %s64 = ssub.s32 0, %s62
    %s65 = scalar_select %p63, %s64, %s62
    %s66 = sdiv.u32.pop %s65, 5
    %s67 = srem.u32.pop %s65, 5
    %s68 = ssub.s32 0, %s67
    %s69 = scalar_select %p63, %s68, %s67
    %p70 = scmp.ne.s32.totalorder %s69, 0
    %p71 = scmp.lt.s32.totalorder %s69, 0
    %p72 = pnand %p71, %p70
    %p73 = pneg %p72
    %s74 = sadd.s32 %s69, 5
    %s75 = scalar_select %p73, %s74, %s69
    %s76 = smul.u32 %s75, 4
    %s77 = ssub.s32 %s61, %s76
    %p78 = scmp.eq.s32.totalorder %s77, 0
    %s80 = sadd.s32 %s79, 1
    %s81 = scalar_select %p78, %s79, %s80
    %p84 = pneg %p78
    %p85 = scmp.eq.s32.totalorder %s13, 4
    %p86 = por %p84, %p85
    %p87 = scmp.ne.s32.totalorder %s79, %s82
    %p88 = scmp.eq.s32.totalorder %s13, 0
    %p89 = por %p87, %p88
    %p90 = scmp.ne.s32.totalorder %s79, %s82
    %p91 = scmp.eq.s32.totalorder %s18, 4
    %p92 = por %p90, %p91
    %p93 = scmp.ne.s32.totalorder %s82, %s83
    %p94 = scmp.eq.s32.totalorder %s18, 0
    %p95 = por %p93, %p94
    %p96 = scmp.ne.s32.totalorder %s82, %s83
    %p97 = scmp.eq.s32.totalorder %s19, 4
    %p98 = por %p96, %p97
    %p100 = scmp.ne.s32.totalorder %s83, %s99
    %p101 = scmp.eq.s32.totalorder %s19, 0
    %p102 = por %p100, %p101
    %s103 = ssub.s32 %s13, %s20
    %p104 = scmp.eq.s32.totalorder %s103, 0
    %s106 = sadd.s32 %s105, 1
    %s107 = scalar_select %p104, %s105, %s106
    %p110 = pneg %p104
    %p111 = scmp.eq.s32.totalorder %s13, 4
    %p112 = por %p110, %p111
    %p113 = scmp.ne.s32.totalorder %s105, %s108
    %p114 = scmp.eq.s32.totalorder %s13, 0
    %p115 = por %p113, %p114
    %p116 = scmp.ne.s32.totalorder %s105, %s108
    %p117 = scmp.eq.s32.totalorder %s18, 4
    %p118 = por %p116, %p117
    %p119 = scmp.ne.s32.totalorder %s108, %s109
    %p120 = scmp.eq.s32.totalorder %s18, 0
    %p121 = por %p119, %p120
    %p122 = scmp.ne.s32.totalorder %s108, %s109
    %p123 = scmp.eq.s32.totalorder %s19, 4
    %p124 = por %p122, %p123
    %p126 = scmp.ne.s32.totalorder %s109, %s125
    %p127 = scmp.eq.s32.totalorder %s19, 0
    %p128 = por %p126, %p127
    %s129 = sadd.s32 %s13, 1
    %p130 = scmp.lt.s32.totalorder %s129, 0
    %s131 = ssub.s32 0, %s129
    %s132 = scalar_select %p130, %s131, %s129
    %s133 = sdiv.u32.pop %s132, 5
    %s134 = srem.u32.pop %s132, 5
    %s135 = ssub.s32 0, %s134
    %s136 = scalar_select %p130, %s135, %s134
    %p137 = scmp.ne.s32.totalorder %s136, 0
    %p138 = scmp.lt.s32.totalorder %s136, 0
    %p139 = pnand %p138, %p137
    %p140 = pneg %p139
    %s141 = sadd.s32 %s136, 5
    %s142 = scalar_select %p140, %s141, %s136
    %s143 = smul.u32 %s142, 4
    %s144 = sadd.s32 %s20, 1
    %p145 = scmp.lt.s32.totalorder %s144, 0
    %s146 = ssub.s32 0, %s144
    %s147 = scalar_select %p145, %s146, %s144
    %s148 = sdiv.u32.pop %s147, 5
    %s149 = srem.u32.pop %s147, 5
    %s150 = ssub.s32 0, %s149
    %s151 = scalar_select %p145, %s150, %s149
    %p152 = scmp.ne.s32.totalorder %s151, 0
    %p153 = scmp.lt.s32.totalorder %s151, 0
    %p154 = pnand %p153, %p152
    %p155 = pneg %p154
    %s156 = sadd.s32 %s151, 5
    %s157 = scalar_select %p155, %s156, %s151
    %s158 = smul.u32 %s157, 4
    %s159 = ssub.s32 %s143, %s158
    %p160 = scmp.eq.s32.totalorder %s159, 0
    %s162 = sadd.s32 %s161, 1
    %s163 = scalar_select %p160, %s161, %s162
    %p166 = pneg %p160
    %p167 = scmp.eq.s32.totalorder %s13, 4
    %p168 = por %p166, %p167
    %p169 = scmp.ne.s32.totalorder %s161, %s164
    %p170 = scmp.eq.s32.totalorder %s13, 0
    %p171 = por %p169, %p170
    %p172 = scmp.ne.s32.totalorder %s161, %s164
    %p173 = scmp.eq.s32.totalorder %s18, 4
    %p174 = por %p172, %p173
    %p175 = scmp.ne.s32.totalorder %s164, %s165
    %p176 = scmp.eq.s32.totalorder %s18, 0
    %p177 = por %p175, %p176
    %p178 = scmp.ne.s32.totalorder %s164, %s165
    %p179 = scmp.eq.s32.totalorder %s19, 4
    %p180 = por %p178, %p179
    %p182 = scmp.ne.s32.totalorder %s165, %s181
    %p183 = scmp.eq.s32.totalorder %s19, 0
    %p184 = por %p182, %p183
    %s186 = sadd.s32 %s185, 1
    %p189 = scmp.eq.s32.totalorder %s13, 4
    %p190 = scmp.ne.s32.totalorder %s185, %s187
    %p191 = scmp.eq.s32.totalorder %s13, 0
    %p192 = por %p190, %p191
    %p193 = scmp.ne.s32.totalorder %s185, %s187
    %p194 = scmp.eq.s32.totalorder %s18, 4
    %p195 = por %p193, %p194
    %p196 = scmp.ne.s32.totalorder %s187, %s188
    %p197 = scmp.eq.s32.totalorder %s18, 0
    %p198 = por %p196, %p197
    %p199 = scmp.ne.s32.totalorder %s187, %s188
    %p200 = scmp.eq.s32.totalorder %s19, 4
    %p201 = por %p199, %p200
    %p203 = scmp.ne.s32.totalorder %s188, %s202
    %p204 = scmp.eq.s32.totalorder %s19, 0
    %p205 = por %p203, %p204
    %s207 = sadd.s32 %s206, 1
    %p210 = scmp.eq.s32.totalorder %s13, 4
    %p211 = scmp.ne.s32.totalorder %s206, %s208
    %p212 = scmp.eq.s32.totalorder %s13, 0
    %p213 = por %p211, %p212
    %p214 = scmp.ne.s32.totalorder %s206, %s208
    %p215 = scmp.eq.s32.totalorder %s18, 4
    %p216 = por %p214, %p215
    %p217 = scmp.ne.s32.totalorder %s208, %s209
    %p218 = scmp.eq.s32.totalorder %s18, 0
    %p219 = por %p217, %p218
    %p220 = scmp.ne.s32.totalorder %s208, %s209
    %p221 = scmp.eq.s32.totalorder %s19, 4
    %p222 = por %p220, %p221
    %p224 = scmp.ne.s32.totalorder %s209, %s223
    %p225 = scmp.eq.s32.totalorder %s19, 0
    %p226 = por %p224, %p225
    %s227 = ssub.s32 %s13, %s20
    %p228 = scmp.eq.s32.totalorder %s227, 0
    %s230 = sadd.s32 %s229, 1
    %s231 = scalar_select %p228, %s229, %s230
    %p234 = pneg %p228
    %p235 = scmp.eq.s32.totalorder %s13, 4
    %p236 = por %p234, %p235
    %p237 = scmp.ne.s32.totalorder %s229, %s232
    %p238 = scmp.eq.s32.totalorder %s13, 0
    %p239 = por %p237, %p238
    %p240 = scmp.ne.s32.totalorder %s229, %s232
    %p241 = scmp.eq.s32.totalorder %s18, 4
    %p242 = por %p240, %p241
    %p243 = scmp.ne.s32.totalorder %s232, %s233
    %p244 = scmp.eq.s32.totalorder %s18, 0
    %p245 = por %p243, %p244
    %p246 = scmp.ne.s32.totalorder %s232, %s233
    %p247 = scmp.eq.s32.totalorder %s19, 4
    %p248 = por %p246, %p247
    %p250 = scmp.ne.s32.totalorder %s233, %s249
    %p251 = scmp.eq.s32.totalorder %s19, 0
    %p252 = por %p250, %p251
    %s253 = ssub.s32 %s13, %s20
    %p254 = scmp.eq.s32.totalorder %s253, 0
    %s256 = sadd.s32 %s255, 1
    %s257 = scalar_select %p254, %s255, %s256
    %p260 = pneg %p254
    %p261 = scmp.eq.s32.totalorder %s13, 4
    %p262 = por %p260, %p261
    %p263 = scmp.ne.s32.totalorder %s255, %s258
    %p264 = scmp.eq.s32.totalorder %s13, 0
    %p265 = por %p263, %p264
    %p266 = scmp.ne.s32.totalorder %s255, %s258
    %p267 = scmp.eq.s32.totalorder %s18, 4
    %p268 = por %p266, %p267
    %p269 = scmp.ne.s32.totalorder %s258, %s259
    %p270 = scmp.eq.s32.totalorder %s18, 0
    %p271 = por %p269, %p270
    %p272 = scmp.ne.s32.totalorder %s258, %s259
    %p273 = scmp.eq.s32.totalorder %s19, 4
    %p274 = por %p272, %p273
    %p276 = scmp.ne.s32.totalorder %s259, %s275
    %p277 = scmp.eq.s32.totalorder %s19, 0
    %p278 = por %p276, %p277
    %p279 = scmp.le.s32.totalorder 1, %s13
    %p280 = scmp.lt.s32.totalorder %s13, 6
    %p281 = pnand %p279, %p280
    %p282 = pneg %p281
    // Predicated region
    $region9: #{up_forward.4} parent=5 // pred_check
      _
    $region10: #{up_forward.4} parent=5 // pred_check_branch
      %284 = sbr.rel (%p281) target = $region12
    $region11: #{up_forward.4} parent=5 // pred_region
      %s285 = ssub.s32 %s13, 1
      // Predicated region
      $region13: #{up_forward.4} parent=11 // pred_check
        %p286 = pneg %p198
      $region14: #{up_forward.4} parent=11 // pred_check_branch
        %288 = sbr.rel (%p286) target = $region16
      $region15: #{up_forward.4} parent=11 // pred_region
        _
      $region16: #{up_forward.4} parent=11 // pred_fallthru
        _
      // Predicated region
      $region17: #{up_forward.4} parent=11 // pred_check
        %p289 = pneg %p219
      $region18: #{up_forward.4} parent=11 // pred_check_branch
        %291 = sbr.rel (%p289) target = $region20
      $region19: #{up_forward.4} parent=11 // pred_region
        _
      $region20: #{up_forward.4} parent=11 // pred_fallthru
        _
    $region12: #{up_forward.4} parent=5 // pred_fallthru
      _
    %p292 = scmp.lt.s32.totalorder %s13, 5
    // Predicated region
    $region21: #{up_forward.4} parent=5 // pred_check
      %p293 = pneg %p292
    $region22: #{up_forward.4} parent=5 // pred_check_branch
      %295 = sbr.rel (%p293) target = $region24
    $region23: #{up_forward.4} parent=5 // pred_region
      // Predicated region
      $region25: #{up_forward.4} parent=23 // pred_check
        %p296 = pneg %p33
      $region26: #{up_forward.4} parent=23 // pred_check_branch
        %298 = sbr.rel (%p296) target = $region28
      $region27: #{up_forward.4} parent=23 // pred_region
        %s299 = smul.u32 28, %s13
        %p300 = scmp.lt.s32.totalorder %s299, 139
        %s301 = scalar_select %p300, %s299, 139
        %s302 = smul.addr %s301, 4
        %s303 = scalar_lea.vmem %s0, %s302
        %s304 = smul.u32 28, %s13
      $region28: #{up_forward.4} parent=23 // pred_fallthru
        _
      // Predicated region
      $region29: #{up_forward.4} parent=23 // pred_check
        %p305 = pneg %p89
      $region30: #{up_forward.4} parent=23 // pred_check_branch
        %307 = sbr.rel (%p305) target = $region32
      $region31: #{up_forward.4} parent=23 // pred_region
        %s308 = sadd.s32 %s13, 1
        %p309 = scmp.lt.s32.totalorder %s308, 0
        %s310 = ssub.s32 0, %s308
        %s311 = scalar_select %p309, %s310, %s308
        %s312 = sdiv.u32.pop %s311, 5
        %s313 = srem.u32.pop %s311, 5
        %s314 = ssub.s32 0, %s313
        %s315 = scalar_select %p309, %s314, %s313
        %p316 = scmp.ne.s32.totalorder %s315, 0
        %p317 = scmp.lt.s32.totalorder %s315, 0
        %p318 = pnand %p317, %p316
        %p319 = pneg %p318
        %s320 = sadd.s32 %s315, 5
        %s321 = scalar_select %p319, %s320, %s315
        %s322 = smul.u32 %s321, 4
        %s323 = smul.u32 7, %s322
        %p324 = scmp.lt.s32.totalorder %s323, 139
        %s325 = scalar_select %p324, %s323, 139
        %s326 = smul.addr %s325, 4
        %s327 = scalar_lea.vmem %s1, %s326
        %s328 = sadd.s32 %s13, 1
        %p329 = scmp.lt.s32.totalorder %s328, 0
        %s330 = ssub.s32 0, %s328
        %s331 = scalar_select %p329, %s330, %s328
        %s332 = sdiv.u32.pop %s331, 5
        %s333 = srem.u32.pop %s331, 5
        %s334 = ssub.s32 0, %s333
        %s335 = scalar_select %p329, %s334, %s333
        %p336 = scmp.ne.s32.totalorder %s335, 0
        %p337 = scmp.lt.s32.totalorder %s335, 0
        %p338 = pnand %p337, %p336
        %p339 = pneg %p338
        %s340 = sadd.s32 %s335, 5
        %s341 = scalar_select %p339, %s340, %s335
        %s342 = smul.u32 %s341, 4
        %s343 = smul.u32 7, %s342
      $region32: #{up_forward.4} parent=23 // pred_fallthru
        _
      // Predicated region
      $region33: #{up_forward.4} parent=23 // pred_check
        %p344 = pneg %p115
      $region34: #{up_forward.4} parent=23 // pred_check_branch
        %346 = sbr.rel (%p344) target = $region36
      $region35: #{up_forward.4} parent=23 // pred_region
        %s347 = smul.u32 28, %s13
        %p348 = scmp.lt.s32.totalorder %s347, 139
        %s349 = scalar_select %p348, %s347, 139
        %s350 = smul.addr %s349, 4
        %s351 = scalar_lea.vmem %s2, %s350
        %s352 = smul.u32 28, %s13
      $region36: #{up_forward.4} parent=23 // pred_fallthru
        _
      // Predicated region
      $region37: #{up_forward.4} parent=23 // pred_check
        %p353 = pneg %p171
      $region38: #{up_forward.4} parent=23 // pred_check_branch
        %355 = sbr.rel (%p353) target = $region40
      $region39: #{up_forward.4} parent=23 // pred_region
        %s356 = sadd.s32 %s13, 1
        %p357 = scmp.lt.s32.totalorder %s356, 0
        %s358 = ssub.s32 0, %s356
        %s359 = scalar_select %p357, %s358, %s356
        %s360 = sdiv.u32.pop %s359, 5
        %s361 = srem.u32.pop %s359, 5
        %s362 = ssub.s32 0, %s361
        %s363 = scalar_select %p357, %s362, %s361
        %p364 = scmp.ne.s32.totalorder %s363, 0
        %p365 = scmp.lt.s32.totalorder %s363, 0
        %p366 = pnand %p365, %p364
        %p367 = pneg %p366
        %s368 = sadd.s32 %s363, 5
        %s369 = scalar_select %p367, %s368, %s363
        %s370 = smul.u32 %s369, 4
        %s371 = smul.u32 7, %s370
        %p372 = scmp.lt.s32.totalorder %s371, 139
        %s373 = scalar_select %p372, %s371, 139
        %s374 = smul.addr %s373, 4
        %s375 = scalar_lea.vmem %s3, %s374
        %s376 = sadd.s32 %s13, 1
        %p377 = scmp.lt.s32.totalorder %s376, 0
        %s378 = ssub.s32 0, %s376
        %s379 = scalar_select %p377, %s378, %s376
        %s380 = sdiv.u32.pop %s379, 5
        %s381 = srem.u32.pop %s379, 5
        %s382 = ssub.s32 0, %s381
        %s383 = scalar_select %p377, %s382, %s381
        %p384 = scmp.ne.s32.totalorder %s383, 0
        %p385 = scmp.lt.s32.totalorder %s383, 0
        %p386 = pnand %p385, %p384
        %p387 = pneg %p386
        %s388 = sadd.s32 %s383, 5
        %s389 = scalar_select %p387, %s388, %s383
        %s390 = smul.u32 %s389, 4
        %s391 = smul.u32 7, %s390
      $region40: #{up_forward.4} parent=23 // pred_fallthru
        _
      // Predicated region
      $region41: #{up_forward.4} parent=23 // pred_check
        %p392 = pneg %p239
      $region42: #{up_forward.4} parent=23 // pred_check_branch
        %394 = sbr.rel (%p392) target = $region44
      $region43: #{up_forward.4} parent=23 // pred_region
        %s395 = smul.u32 28, %s13
        %p396 = scmp.lt.s32.totalorder %s395, 139
        %s397 = scalar_select %p396, %s395, 139
        %s398 = smul.addr %s397, 8
        %s399 = scalar_lea.vmem %s6, %s398
        %s400 = smul.u32 28, %s13
      $region44: #{up_forward.4} parent=23 // pred_fallthru
        _
    $region24: #{up_forward.4} parent=5 // pred_fallthru
      _
    %p401 = scmp.le.s32.totalorder 1, %s13
    %p402 = scmp.lt.s32.totalorder %s13, 6
    %p403 = pnand %p401, %p402
    %p404 = pneg %p403
    // Predicated region
    $region45: #{up_forward.4} parent=5 // pred_check
      _
    $region46: #{up_forward.4} parent=5 // pred_check_branch
      %406 = sbr.rel (%p403) target = $region48
    $region47: #{up_forward.4} parent=5 // pred_region
      %s407 = ssub.s32 %s13, 1
      %s408 = smul.u32 28, %s18
      %p409 = scmp.lt.s32.totalorder %s408, 139
      %s410 = scalar_select %p409, %s408, 139
      %s411 = smul.addr %s410, 4
      %s412 = scalar_lea.vmem %s0, %s411
      %p413 = pneg %p39
      %p414 = pneg %p36
      %s415 = sadd.s32 %s18, 1
      %p416 = scmp.lt.s32.totalorder %s415, 0
      %s417 = ssub.s32 0, %s415
      %s418 = scalar_select %p416, %s417, %s415
      %s419 = sdiv.u32.pop %s418, 5
      %s420 = srem.u32.pop %s418, 5
      %s421 = ssub.s32 0, %s420
      %s422 = scalar_select %p416, %s421, %s420
      %p423 = scmp.ne.s32.totalorder %s422, 0
      %p424 = scmp.lt.s32.totalorder %s422, 0
      %p425 = pnand %p424, %p423
      %p426 = pneg %p425
      %s427 = sadd.s32 %s422, 5
      %s428 = scalar_select %p426, %s427, %s422
      %s429 = smul.u32 %s428, 4
      %s430 = smul.u32 7, %s429
      %p431 = scmp.lt.s32.totalorder %s430, 139
      %s432 = scalar_select %p431, %s430, 139
      %s433 = smul.addr %s432, 4
      %s434 = scalar_lea.vmem %s1, %s433
      %p435 = pneg %p95
      %p436 = pneg %p92
      %s437 = smul.u32 28, %s18
      %p438 = scmp.lt.s32.totalorder %s437, 139
      %s439 = scalar_select %p438, %s437, 139
      %s440 = smul.addr %s439, 4
      %s441 = scalar_lea.vmem %s2, %s440
      %p442 = pneg %p121
      %p443 = pneg %p118
      %s444 = sadd.s32 %s18, 1
      %p445 = scmp.lt.s32.totalorder %s444, 0
      %s446 = ssub.s32 0, %s444
      %s447 = scalar_select %p445, %s446, %s444
      %s448 = sdiv.u32.pop %s447, 5
      %s449 = srem.u32.pop %s447, 5
      %s450 = ssub.s32 0, %s449
      %s451 = scalar_select %p445, %s450, %s449
      %p452 = scmp.ne.s32.totalorder %s451, 0
      %p453 = scmp.lt.s32.totalorder %s451, 0
      %p454 = pnand %p453, %p452
      %p455 = pneg %p454
      %s456 = sadd.s32 %s451, 5
      %s457 = scalar_select %p455, %s456, %s451
      %s458 = smul.u32 %s457, 4
      %s459 = smul.u32 7, %s458
      %p460 = scmp.lt.s32.totalorder %s459, 139
      %s461 = scalar_select %p460, %s459, 139
      %s462 = smul.addr %s461, 4
      %s463 = scalar_lea.vmem %s3, %s462
      %p464 = pneg %p177
      %p465 = pneg %p174
      %p466 = pneg %p198
      %p467 = pneg %p195
      %p468 = pneg %p219
      %p469 = pneg %p216
      %s470 = smul.u32 28, %s18
      %p471 = scmp.lt.s32.totalorder %s470, 139
      %s472 = scalar_select %p471, %s470, 139
      %s473 = smul.addr %s472, 8
      %s474 = scalar_lea.vmem %s6, %s473
      %p475 = pneg %p245
      %p476 = pneg %p242
      %p477 = pneg %p271
      %p478 = pneg %p268
      %s479 = smul.u32 28, %s18
      %p480 = scmp.lt.s32.totalorder %s479, 139
      %s481 = scalar_select %p480, %s479, 139
      %s482 = smul.addr %s481, 4
      %s483 = scalar_lea.vmem %s7, %s482
      %s484 = smul.u32 28, %s18
      %p485 = scmp.lt.s32.totalorder %s484, 139
      %s486 = scalar_select %p485, %s484, 139
      %s487 = smul.addr %s486, 4
      %s488 = scalar_lea.vmem %s0, %s487
      %s489 = smul.u32 28, %s18
      %s490 = sadd.s32 %s18, 1
      %p491 = scmp.lt.s32.totalorder %s490, 0
      %s492 = ssub.s32 0, %s490
      %s493 = scalar_select %p491, %s492, %s490
      %s494 = sdiv.u32.pop %s493, 5
      %s495 = srem.u32.pop %s493, 5
      %s496 = ssub.s32 0, %s495
      %s497 = scalar_select %p491, %s496, %s495
      %p498 = scmp.ne.s32.totalorder %s497, 0
      %p499 = scmp.lt.s32.totalorder %s497, 0
      %p500 = pnand %p499, %p498
      %p501 = pneg %p500
      %s502 = sadd.s32 %s497, 5
      %s503 = scalar_select %p501, %s502, %s497
      %s504 = smul.u32 %s503, 4
      %s505 = smul.u32 7, %s504
      %p506 = scmp.lt.s32.totalorder %s505, 139
      %s507 = scalar_select %p506, %s505, 139
      %s508 = smul.addr %s507, 4
      %s509 = scalar_lea.vmem %s1, %s508
      %s510 = sadd.s32 %s18, 1
      %p511 = scmp.lt.s32.totalorder %s510, 0
      %s512 = ssub.s32 0, %s510
      %s513 = scalar_select %p511, %s512, %s510
      %s514 = sdiv.u32.pop %s513, 5
      %s515 = srem.u32.pop %s513, 5
      %s516 = ssub.s32 0, %s515
      %s517 = scalar_select %p511, %s516, %s515
      %p518 = scmp.ne.s32.totalorder %s517, 0
      %p519 = scmp.lt.s32.totalorder %s517, 0
      %p520 = pnand %p519, %p518
      %p521 = pneg %p520
      %s522 = sadd.s32 %s517, 5
      %s523 = scalar_select %p521, %s522, %s517
      %s524 = smul.u32 %s523, 4
      %s525 = smul.u32 7, %s524
      %s526 = smul.u32 28, %s18
      %p527 = scmp.lt.s32.totalorder %s526, 139
      %s528 = scalar_select %p527, %s526, 139
      %s529 = smul.addr %s528, 4
      %s530 = scalar_lea.vmem %s2, %s529
      %s531 = smul.u32 28, %s18
      %s532 = sadd.s32 %s18, 1
      %p533 = scmp.lt.s32.totalorder %s532, 0
      %s534 = ssub.s32 0, %s532
      %s535 = scalar_select %p533, %s534, %s532
      %s536 = sdiv.u32.pop %s535, 5
      %s537 = srem.u32.pop %s535, 5
      %s538 = ssub.s32 0, %s537
      %s539 = scalar_select %p533, %s538, %s537
      %p540 = scmp.ne.s32.totalorder %s539, 0
      %p541 = scmp.lt.s32.totalorder %s539, 0
      %p542 = pnand %p541, %p540
      %p543 = pneg %p542
      %s544 = sadd.s32 %s539, 5
      %s545 = scalar_select %p543, %s544, %s539
      %s546 = smul.u32 %s545, 4
      %s547 = smul.u32 7, %s546
      %p548 = scmp.lt.s32.totalorder %s547, 139
      %s549 = scalar_select %p548, %s547, 139
      %s550 = smul.addr %s549, 4
      %s551 = scalar_lea.vmem %s3, %s550
      %s552 = sadd.s32 %s18, 1
      %p553 = scmp.lt.s32.totalorder %s552, 0
      %s554 = ssub.s32 0, %s552
      %s555 = scalar_select %p553, %s554, %s552
      %s556 = sdiv.u32.pop %s555, 5
      %s557 = srem.u32.pop %s555, 5
      %s558 = ssub.s32 0, %s557
      %s559 = scalar_select %p553, %s558, %s557
      %p560 = scmp.ne.s32.totalorder %s559, 0
      %p561 = scmp.lt.s32.totalorder %s559, 0
      %p562 = pnand %p561, %p560
      %p563 = pneg %p562
      %s564 = sadd.s32 %s559, 5
      %s565 = scalar_select %p563, %s564, %s559
      %s566 = smul.u32 %s565, 4
      %s567 = smul.u32 7, %s566
      %s568 = smul.u32 28, %s18
      %p569 = scmp.lt.s32.totalorder %s568, 139
      %s570 = scalar_select %p569, %s568, 139
      %s571 = smul.addr %s570, 8
      %s572 = scalar_lea.vmem %s6, %s571
      %s573 = smul.u32 28, %s18
      %s574 = smul.u32 28, %s18
      %p575 = scmp.lt.s32.totalorder %s574, 139
      %s576 = scalar_select %p575, %s574, 139
      %s577 = smul.addr %s576, 4
      %s578 = scalar_lea.vmem %s7, %s577
      %s579 = smul.u32 28, %s18
      %v581 = vld [vmem:[%s488] sm:$0xf]
      %v582 = vld [vmem:[%s488 + $0x4] sm:$0xf]
      %v583 = vld [vmem:[%s488 + $0x8] sm:$0xf]
      %v584 = vld [vmem:[%s488 + $0xc] sm:$0xf]
      %v585 = vld [vmem:[%s488 + $0x10] sm:$0xf]
      %v586 = vld [vmem:[%s488 + $0x14] sm:$0xf]
      %v587 = vld [vmem:[%s488 + $0x18] sm:$0xf]
      %v588 = vld [vmem:[%s488 + $0x1c] sm:$0xf]
      %v589 = vld [vmem:[%s488 + $0x20] sm:$0xf]
      %v590 = vld [vmem:[%s488 + $0x24] sm:$0xf]
      %v591 = vld [vmem:[%s488 + $0x28] sm:$0xf]
      %v592 = vld [vmem:[%s488 + $0x2c] sm:$0xf]
      %v593 = vld [vmem:[%s488 + $0x30] sm:$0xf]
      %v594 = vld [vmem:[%s488 + $0x34] sm:$0xf]
      %v595 = vld [vmem:[%s488 + $0x38] sm:$0xf]
      %v596 = vld [vmem:[%s488 + $0x3c] sm:$0xf]
      %v597 = vld [vmem:[%s488 + $0x40] sm:$0xf]
      %v598 = vld [vmem:[%s488 + $0x44] sm:$0xf]
      %v599 = vld [vmem:[%s488 + $0x48] sm:$0xf]
      %v600 = vld [vmem:[%s488 + $0x4c] sm:$0xf]
      %v601 = vld [vmem:[%s488 + $0x50] sm:$0xf]
      %v602 = vld [vmem:[%s488 + $0x54] sm:$0xf]
      %v603 = vld [vmem:[%s488 + $0x58] sm:$0xf]
      %v604 = vld [vmem:[%s488 + $0x5c] sm:$0xf]
      %v605 = vld [vmem:[%s488 + $0x60] sm:$0xf]
      %v606 = vld [vmem:[%s488 + $0x64] sm:$0xf]
      %v607 = vld [vmem:[%s488 + $0x68] sm:$0xf]
      %v608 = vld [vmem:[%s488 + $0x6c] sm:$0xf]
      %609 = vst [vmem:[#allocation2] sm:$0xf] %v581
      %610 = vst [vmem:[#allocation2 + $0x8] sm:$0xf] %v582
      %611 = vst [vmem:[#allocation2 + $0x10] sm:$0xf] %v583
      %612 = vst [vmem:[#allocation2 + $0x18] sm:$0xf] %v584
      %613 = vst [vmem:[#allocation2 + $0x20] sm:$0xf] %v585
      %614 = vst [vmem:[#allocation2 + $0x28] sm:$0xf] %v586
      %615 = vst [vmem:[#allocation2 + $0x30] sm:$0xf] %v587
      %616 = vst [vmem:[#allocation2 + $0x38] sm:$0xf] %v588
      %617 = vst [vmem:[#allocation2 + $0x40] sm:$0xf] %v589
      %618 = vst [vmem:[#allocation2 + $0x48] sm:$0xf] %v590
      %619 = vst [vmem:[#allocation2 + $0x50] sm:$0xf] %v591
      %620 = vst [vmem:[#allocation2 + $0x58] sm:$0xf] %v592
      %621 = vst [vmem:[#allocation2 + $0x60] sm:$0xf] %v593
      %622 = vst [vmem:[#allocation2 + $0x68] sm:$0xf] %v594
      %623 = vst [vmem:[#allocation2 + $0x70] sm:$0xf] %v595
      %624 = vst [vmem:[#allocation2 + $0x78] sm:$0xf] %v596
      %625 = vst [vmem:[#allocation2 + $0x80] sm:$0xf] %v597
      %626 = vst [vmem:[#allocation2 + $0x88] sm:$0xf] %v598
      %627 = vst [vmem:[#allocation2 + $0x90] sm:$0xf] %v599
      %628 = vst [vmem:[#allocation2 + $0x98] sm:$0xf] %v600
      %629 = vst [vmem:[#allocation2 + $0xa0] sm:$0xf] %v601
      %630 = vst [vmem:[#allocation2 + $0xa8] sm:$0xf] %v602
      %631 = vst [vmem:[#allocation2 + $0xb0] sm:$0xf] %v603
      %632 = vst [vmem:[#allocation2 + $0xb8] sm:$0xf] %v604
      %633 = vst [vmem:[#allocation2 + $0xc0] sm:$0xf] %v605
      %634 = vst [vmem:[#allocation2 + $0xc8] sm:$0xf] %v606
      %635 = vst [vmem:[#allocation2 + $0xd0] sm:$0xf] %v607
      %636 = vst [vmem:[#allocation2 + $0xd8] sm:$0xf] %v608
      %v637 = vld [vmem:[%s509] sm:$0xf]
      %v638 = vld [vmem:[%s509 + $0x4] sm:$0xf]
      %v639 = vld [vmem:[%s509 + $0x8] sm:$0xf]
      %v640 = vld [vmem:[%s509 + $0xc] sm:$0xf]
      %v641 = vld [vmem:[%s509 + $0x10] sm:$0xf]
      %v642 = vld [vmem:[%s509 + $0x14] sm:$0xf]
      %v643 = vld [vmem:[%s509 + $0x18] sm:$0xf]
      %644 = vst [vmem:[#allocation2 + $0xe0] sm:$0xf] %v637
      %645 = vst [vmem:[#allocation2 + $0xe8] sm:$0xf] %v638
      %646 = vst [vmem:[#allocation2 + $0xf0] sm:$0xf] %v639
      %647 = vst [vmem:[#allocation2 + $0xf8] sm:$0xf] %v640
      %648 = vst [vmem:[#allocation2 + $0x100] sm:$0xf] %v641
      %649 = vst [vmem:[#allocation2 + $0x108] sm:$0xf] %v642
      %650 = vst [vmem:[#allocation2 + $0x110] sm:$0xf] %v643
      %v651 = vld [vmem:[%s530] sm:$0xf]
      %v652 = vld [vmem:[%s530 + $0x4] sm:$0xf]
      %v653 = vld [vmem:[%s530 + $0x8] sm:$0xf]
      %v654 = vld [vmem:[%s530 + $0xc] sm:$0xf]
      %v655 = vld [vmem:[%s530 + $0x10] sm:$0xf]
      %v656 = vld [vmem:[%s530 + $0x14] sm:$0xf]
      %v657 = vld [vmem:[%s530 + $0x18] sm:$0xf]
      %v658 = vld [vmem:[%s530 + $0x1c] sm:$0xf]
      %v659 = vld [vmem:[%s530 + $0x20] sm:$0xf]
      %v660 = vld [vmem:[%s530 + $0x24] sm:$0xf]
      %v661 = vld [vmem:[%s530 + $0x28] sm:$0xf]
      %v662 = vld [vmem:[%s530 + $0x2c] sm:$0xf]
      %v663 = vld [vmem:[%s530 + $0x30] sm:$0xf]
      %v664 = vld [vmem:[%s530 + $0x34] sm:$0xf]
      %v665 = vld [vmem:[%s530 + $0x38] sm:$0xf]
      %v666 = vld [vmem:[%s530 + $0x3c] sm:$0xf]
      %v667 = vld [vmem:[%s530 + $0x40] sm:$0xf]
      %v668 = vld [vmem:[%s530 + $0x44] sm:$0xf]
      %v669 = vld [vmem:[%s530 + $0x48] sm:$0xf]
      %v670 = vld [vmem:[%s530 + $0x4c] sm:$0xf]
      %v671 = vld [vmem:[%s530 + $0x50] sm:$0xf]
      %v672 = vld [vmem:[%s530 + $0x54] sm:$0xf]
      %v673 = vld [vmem:[%s530 + $0x58] sm:$0xf]
      %v674 = vld [vmem:[%s530 + $0x5c] sm:$0xf]
      %v675 = vld [vmem:[%s530 + $0x60] sm:$0xf]
      %v676 = vld [vmem:[%s530 + $0x64] sm:$0xf]
      %v677 = vld [vmem:[%s530 + $0x68] sm:$0xf]
      %v678 = vld [vmem:[%s530 + $0x6c] sm:$0xf]
      %679 = vst [vmem:[#allocation2 + $0x4] sm:$0xf] %v651
      %680 = vst [vmem:[#allocation2 + $0xc] sm:$0xf] %v652
      %681 = vst [vmem:[#allocation2 + $0x14] sm:$0xf] %v653
      %682 = vst [vmem:[#allocation2 + $0x1c] sm:$0xf] %v654
      %683 = vst [vmem:[#allocation2 + $0x24] sm:$0xf] %v655
      %684 = vst [vmem:[#allocation2 + $0x2c] sm:$0xf] %v656
      %685 = vst [vmem:[#allocation2 + $0x34] sm:$0xf] %v657
      %686 = vst [vmem:[#allocation2 + $0x3c] sm:$0xf] %v658
      %687 = vst [vmem:[#allocation2 + $0x44] sm:$0xf] %v659
      %688 = vst [vmem:[#allocation2 + $0x4c] sm:$0xf] %v660
      %689 = vst [vmem:[#allocation2 + $0x54] sm:$0xf] %v661
      %690 = vst [vmem:[#allocation2 + $0x5c] sm:$0xf] %v662
      %691 = vst [vmem:[#allocation2 + $0x64] sm:$0xf] %v663
      %692 = vst [vmem:[#allocation2 + $0x6c] sm:$0xf] %v664
      %693 = vst [vmem:[#allocation2 + $0x74] sm:$0xf] %v665
      %694 = vst [vmem:[#allocation2 + $0x7c] sm:$0xf] %v666
      %695 = vst [vmem:[#allocation2 + $0x84] sm:$0xf] %v667
      %696 = vst [vmem:[#allocation2 + $0x8c] sm:$0xf] %v668
      %697 = vst [vmem:[#allocation2 + $0x94] sm:$0xf] %v669
      %698 = vst [vmem:[#allocation2 + $0x9c] sm:$0xf] %v670
      %699 = vst [vmem:[#allocation2 + $0xa4] sm:$0xf] %v671
      %700 = vst [vmem:[#allocation2 + $0xac] sm:$0xf] %v672
      %701 = vst [vmem:[#allocation2 + $0xb4] sm:$0xf] %v673
      %702 = vst [vmem:[#allocation2 + $0xbc] sm:$0xf] %v674
      %703 = vst [vmem:[#allocation2 + $0xc4] sm:$0xf] %v675
      %704 = vst [vmem:[#allocation2 + $0xcc] sm:$0xf] %v676
      %705 = vst [vmem:[#allocation2 + $0xd4] sm:$0xf] %v677
      %706 = vst [vmem:[#allocation2 + $0xdc] sm:$0xf] %v678
      %v707 = vld [vmem:[%s551] sm:$0xf]
      %v708 = vld [vmem:[%s551 + $0x4] sm:$0xf]
      %v709 = vld [vmem:[%s551 + $0x8] sm:$0xf]
      %v710 = vld [vmem:[%s551 + $0xc] sm:$0xf]
      %v711 = vld [vmem:[%s551 + $0x10] sm:$0xf]
      %v712 = vld [vmem:[%s551 + $0x14] sm:$0xf]
      %v713 = vld [vmem:[%s551 + $0x18] sm:$0xf]
      %714 = vst [vmem:[#allocation2 + $0xe4] sm:$0xf] %v707
      %715 = vst [vmem:[#allocation2 + $0xec] sm:$0xf] %v708
      %716 = vst [vmem:[#allocation2 + $0xf4] sm:$0xf] %v709
      %717 = vst [vmem:[#allocation2 + $0xfc] sm:$0xf] %v710
      %718 = vst [vmem:[#allocation2 + $0x104] sm:$0xf] %v711
      %719 = vst [vmem:[#allocation2 + $0x10c] sm:$0xf] %v712
      %720 = vst [vmem:[#allocation2 + $0x114] sm:$0xf] %v713
      %v721 = vld [vmem:[#allocation2] sm:$0xff]
      %v722 = vld [vmem:[#allocation2 + $0x8] sm:$0xff]
      %v723 = vld [vmem:[#allocation2 + $0x10] sm:$0xff]
      %v724 = vld [vmem:[#allocation2 + $0x18] sm:$0xff]
      %v725 = vld [vmem:[#allocation2 + $0x20] sm:$0xff]
      %v726 = vld [vmem:[#allocation2 + $0x28] sm:$0xff]
      %v727 = vld [vmem:[#allocation2 + $0x30] sm:$0xff]
      %v728 = vld [vmem:[#allocation2 + $0x38] sm:$0xff]
      %v729 = vld [vmem:[#allocation2 + $0x40] sm:$0xff]
      %v730 = vld [vmem:[#allocation2 + $0x48] sm:$0xff]
      %v731 = vld [vmem:[#allocation2 + $0x50] sm:$0xff]
      %v732 = vld [vmem:[#allocation2 + $0x58] sm:$0xff]
      %v733 = vld [vmem:[#allocation2 + $0x60] sm:$0xff]
      %v734 = vld [vmem:[#allocation2 + $0x68] sm:$0xff]
      %v735 = vld [vmem:[#allocation2 + $0x70] sm:$0xff]
      %v736 = vld [vmem:[#allocation2 + $0x78] sm:$0xff]
      %v737 = vld [vmem:[#allocation2 + $0x80] sm:$0xff]
      %v738 = vld [vmem:[#allocation2 + $0x88] sm:$0xff]
      %v739 = vld [vmem:[#allocation2 + $0x90] sm:$0xff]
      %v740 = vld [vmem:[#allocation2 + $0x98] sm:$0xff]
      %v741 = vld [vmem:[#allocation2 + $0xa0] sm:$0xff]
      %v742 = vld [vmem:[#allocation2 + $0xa8] sm:$0xff]
      %v743 = vld [vmem:[#allocation2 + $0xb0] sm:$0xff]
      %v744 = vld [vmem:[#allocation2 + $0xb8] sm:$0xff]
      %v745 = vld [vmem:[#allocation2 + $0xc0] sm:$0xff]
      %v746 = vld [vmem:[#allocation2 + $0xc8] sm:$0xff]
      %v747 = vld [vmem:[#allocation2 + $0xd0] sm:$0xff]
      %v748 = vld [vmem:[#allocation2 + $0xd8] sm:$0xff]
      %v749 = vld [vmem:[%s4] sm:$0xf]
      %v750 = vld [vmem:[%s4 + $0x4] sm:$0xf]
      %v751 = vld [vmem:[%s4 + $0x8] sm:$0xf]
      %v752 = vld [vmem:[%s4 + $0xc] sm:$0xf]
      %v753 = vld [vmem:[%s4 + $0x10] sm:$0xf]
      %v754 = vld [vmem:[%s4 + $0x14] sm:$0xf]
      %v755 = vld [vmem:[%s4 + $0x18] sm:$0xf]
      %v756 = vld [vmem:[%s4 + $0x1c] sm:$0xf]
      %v757 = vld [vmem:[%s4 + $0x20] sm:$0xf]
      %v758 = vld [vmem:[%s4 + $0x24] sm:$0xf]
      %v759 = vld [vmem:[%s4 + $0x28] sm:$0xf]
      %v760 = vld [vmem:[%s4 + $0x2c] sm:$0xf]
      %v761 = vld [vmem:[%s4 + $0x30] sm:$0xf]
      %v762 = vld [vmem:[%s4 + $0x34] sm:$0xf]
      %v763 = vld [vmem:[%s4 + $0x38] sm:$0xf]
      %v764 = vld [vmem:[%s4 + $0x3c] sm:$0xf]
      %v765 = vld [vmem:[%s4 + $0x40] sm:$0xf]
      %v766 = vld [vmem:[%s4 + $0x44] sm:$0xf]
      %v767 = vld [vmem:[%s4 + $0x48] sm:$0xf]
      %v768 = vld [vmem:[%s4 + $0x4c] sm:$0xf]
      %v769 = vld [vmem:[%s4 + $0x50] sm:$0xf]
      %v770 = vld [vmem:[%s4 + $0x54] sm:$0xf]
      %v771 = vld [vmem:[%s4 + $0x58] sm:$0xf]
      %v772 = vld [vmem:[%s4 + $0x5c] sm:$0xf]
      %v773 = vld [vmem:[%s4 + $0x60] sm:$0xf]
      %v774 = vld [vmem:[%s4 + $0x64] sm:$0xf]
      %v775 = vld [vmem:[%s4 + $0x68] sm:$0xf]
      %v776 = vld [vmem:[%s4 + $0x6c] sm:$0xf]
      %v777 = vld [vmem:[%s4 + $0x70] sm:$0xf]
      %v778 = vld [vmem:[%s4 + $0x74] sm:$0xf]
      %v779 = vld [vmem:[%s4 + $0x78] sm:$0xf]
      %v780 = vld [vmem:[%s4 + $0x7c] sm:$0xf]
      %v781 = vld [vmem:[#allocation2 + $0xe0] sm:$0x11]
      %v782 = vld [vmem:[%s4 + $0x80] sm:$0xf]
      %v783 = vld [vmem:[%s4 + $0x84] sm:$0xf]
      %v784 = vld [vmem:[%s4 + $0x88] sm:$0xf]
      %v785 = vld [vmem:[%s4 + $0x8c] sm:$0xf]
      %v786 = vld [vmem:[%s4 + $0x90] sm:$0xf]
      %v787 = vld [vmem:[%s4 + $0x94] sm:$0xf]
      %v788 = vld [vmem:[%s4 + $0x98] sm:$0xf]
      %v789 = vld [vmem:[%s4 + $0x9c] sm:$0xf]
      %v790 = vld [vmem:[%s4 + $0xa0] sm:$0xf]
      %v791 = vld [vmem:[%s4 + $0xa4] sm:$0xf]
      %v792 = vld [vmem:[%s4 + $0xa8] sm:$0xf]
      %v793 = vld [vmem:[%s4 + $0xac] sm:$0xf]
      %v794 = vld [vmem:[%s4 + $0xb0] sm:$0xf]
      %v795 = vld [vmem:[%s4 + $0xb4] sm:$0xf]
      %v796 = vld [vmem:[%s4 + $0xb8] sm:$0xf]
      %v797 = vld [vmem:[%s4 + $0xbc] sm:$0xf]
      %v798 = vld [vmem:[%s4 + $0xc0] sm:$0xf]
      %v799 = vld [vmem:[%s4 + $0xc4] sm:$0xf]
      %v800 = vld [vmem:[%s4 + $0xc8] sm:$0xf]
      %v801 = vld [vmem:[%s4 + $0xcc] sm:$0xf]
      %v802 = vld [vmem:[%s4 + $0xd0] sm:$0xf]
      %v803 = vld [vmem:[%s4 + $0xd4] sm:$0xf]
      %v804 = vld [vmem:[%s4 + $0xd8] sm:$0xf]
      %v805 = vld [vmem:[%s4 + $0xdc] sm:$0xf]
      %v806 = vld [vmem:[%s4 + $0xe0] sm:$0xf]
      %v807 = vld [vmem:[%s4 + $0xe4] sm:$0xf]
      %v808 = vld [vmem:[%s4 + $0xe8] sm:$0xf]
      %v809 = vld [vmem:[%s4 + $0xec] sm:$0xf]
      %v810 = vld [vmem:[%s4 + $0xf0] sm:$0xf]
      %v811 = vld [vmem:[%s4 + $0xf4] sm:$0xf]
      %v812 = vld [vmem:[%s4 + $0xf8] sm:$0xf]
      %v813 = vld [vmem:[%s4 + $0xfc] sm:$0xf]
      %v843 = vunpack.c.l.b16 %v721
      %v844 = vunpack.c.h.b16 %v721
      %v845 = vunpack.c.l.b16 %v722
      %v846 = vunpack.c.h.b16 %v722
      %v847 = vunpack.c.l.b16 %v723
      %v848 = vunpack.c.h.b16 %v723
      %v849 = vunpack.c.l.b16 %v724
      %v850 = vunpack.c.h.b16 %v724
      %v851 = vunpack.c.l.b16 %v725
      %v852 = vunpack.c.h.b16 %v725
      %v853 = vunpack.c.l.b16 %v726
      %v854 = vunpack.c.h.b16 %v726
      %v855 = vunpack.c.l.b16 %v727
      %v856 = vunpack.c.h.b16 %v727
      %v857 = vunpack.c.l.b16 %v728
      %v858 = vunpack.c.h.b16 %v728
      %v859 = vunpack.c.l.b16 %v729
      %v860 = vunpack.c.h.b16 %v729
      %v861 = vunpack.c.l.b16 %v730
      %v862 = vunpack.c.h.b16 %v730
      %v863 = vunpack.c.l.b16 %v731
      %v864 = vunpack.c.h.b16 %v731
      %v865 = vunpack.c.l.b16 %v732
      %v866 = vunpack.c.h.b16 %v732
      %v867 = vunpack.c.l.b16 %v733
      %v868 = vunpack.c.h.b16 %v733
      %v869 = vunpack.c.l.b16 %v734
      %v870 = vunpack.c.h.b16 %v734
      %v871 = vunpack.c.l.b16 %v735
      %v872 = vunpack.c.h.b16 %v735
      %v873 = vunpack.c.l.b16 %v736
      %v874 = vunpack.c.h.b16 %v736
      %v875 = vunpack.c.l.b16 %v737
      %v876 = vunpack.c.h.b16 %v737
      %v877 = vunpack.c.l.b16 %v738
      %v878 = vunpack.c.h.b16 %v738
      %v879 = vunpack.c.l.b16 %v739
      %v880 = vunpack.c.h.b16 %v739
      %v881 = vunpack.c.l.b16 %v740
      %v882 = vunpack.c.h.b16 %v740
      %v883 = vunpack.c.l.b16 %v741
      %v884 = vunpack.c.h.b16 %v741
      %v885 = vunpack.c.l.b16 %v742
      %v886 = vunpack.c.h.b16 %v742
      %v887 = vunpack.c.l.b16 %v743
      %v888 = vunpack.c.h.b16 %v743
      %v889 = vunpack.c.l.b16 %v744
      %v890 = vunpack.c.h.b16 %v744
      %v891 = vunpack.c.l.b16 %v745
      %v892 = vunpack.c.h.b16 %v745
      %v893 = vunpack.c.l.b16 %v746
      %v894 = vunpack.c.h.b16 %v746
      %v895 = vunpack.c.l.b16 %v747
      %v896 = vunpack.c.h.b16 %v747
      %v897 = vunpack.c.l.b16 %v748
      %v898 = vunpack.c.h.b16 %v748
      %v899 = vunpack.c.l.b16 %v781
      %v900 = vunpack.c.h.b16 %v781
      %v901 = vpack.c.b16 %v845, %v843
      %v902 = vpack.c.b16 %v846, %v844
      %v903 = vpack.c.b16 %v849, %v847
      %v904 = vpack.c.b16 %v850, %v848
      %v905 = vpack.c.b16 %v853, %v851
      %v906 = vpack.c.b16 %v854, %v852
      %v907 = vpack.c.b16 %v857, %v855
      %v908 = vpack.c.b16 %v858, %v856
      %v909 = vpack.c.b16 %v861, %v859
      %v910 = vpack.c.b16 %v862, %v860
      %v911 = vpack.c.b16 %v865, %v863
      %v912 = vpack.c.b16 %v866, %v864
      %v913 = vpack.c.b16 %v869, %v867
      %v914 = vpack.c.b16 %v870, %v868
      %v915 = vpack.c.b16 %v873, %v871
      %v916 = vpack.c.b16 %v874, %v872
      %v917 = vpack.c.b16 %v877, %v875
      %v918 = vpack.c.b16 %v878, %v876
      %v919 = vpack.c.b16 %v881, %v879
      %v920 = vpack.c.b16 %v882, %v880
      %v921 = vpack.c.b16 %v885, %v883
      %v922 = vpack.c.b16 %v886, %v884
      %v923 = vpack.c.b16 %v889, %v887
      %v924 = vpack.c.b16 %v890, %v888
      %v925 = vpack.c.b16 %v893, %v891
      %v926 = vpack.c.b16 %v894, %v892
      %v927 = vpack.c.b16 %v897, %v895
      %v928 = vpack.c.b16 %v898, %v896
      %v929 = vpack.c.b16 %v899, %v899
      %v930 = vpack.c.b16 %v900, %v900
      %vm931 = vsmask.f32 7424
      %v933 = vshrl.u32 %v901, 16
      %v935 = vshll.u32 %v901, 16
      %v937 = vrot.slane %v935, 1
      %v938 = vor.u32 %v933, %v937
      %v940 = vshll.u32 %v903, 16
      %v942 = vrot.slane %v940, 1
      %v943 = vsel %vm931, %v938, %v942
      %v945 = vshrl.u32 %v902, 16
      %v947 = vshll.u32 %v902, 16
      %v949 = vrot.slane %v947, 1
      %v950 = vor.u32 %v945, %v949
      %v952 = vshll.u32 %v904, 16
      %v954 = vrot.slane %v952, 1
      %v955 = vsel %vm931, %v950, %v954
      %v956 = vshrl.u32 %v903, 16
      %v958 = vor.u32 %v956, %v942
      %v960 = vshll.u32 %v905, 16
      %v962 = vrot.slane %v960, 1
      %v963 = vsel %vm931, %v958, %v962
      %v964 = vshrl.u32 %v904, 16
      %v966 = vor.u32 %v964, %v954
      %v968 = vshll.u32 %v906, 16
      %v970 = vrot.slane %v968, 1
      %v971 = vsel %vm931, %v966, %v970
      %v972 = vshrl.u32 %v905, 16
      %v974 = vor.u32 %v972, %v962
      %v976 = vshll.u32 %v907, 16
      %v978 = vrot.slane %v976, 1
      %v979 = vsel %vm931, %v974, %v978
      %v980 = vshrl.u32 %v906, 16
      %v982 = vor.u32 %v980, %v970
      %v984 = vshll.u32 %v908, 16
      %v986 = vrot.slane %v984, 1
      %v987 = vsel %vm931, %v982, %v986
      %v988 = vshrl.u32 %v907, 16
      %v990 = vor.u32 %v988, %v978
      %v992 = vshll.u32 %v909, 16
      %v994 = vrot.slane %v992, 1
      %v995 = vsel %vm931, %v990, %v994
      %v996 = vshrl.u32 %v908, 16
      %v998 = vor.u32 %v996, %v986
      %v1000 = vshll.u32 %v910, 16
      %v1002 = vrot.slane %v1000, 1
      %v1003 = vsel %vm931, %v998, %v1002
      %v1004 = vshrl.u32 %v909, 16
      %v1006 = vor.u32 %v1004, %v994
      %v1008 = vshll.u32 %v911, 16
      %v1010 = vrot.slane %v1008, 1
      %v1011 = vsel %vm931, %v1006, %v1010
      %v1012 = vshrl.u32 %v910, 16
      %v1014 = vor.u32 %v1012, %v1002
      %v1016 = vshll.u32 %v912, 16
      %v1018 = vrot.slane %v1016, 1
      %v1019 = vsel %vm931, %v1014, %v1018
      %v1020 = vshrl.u32 %v911, 16
      %v1022 = vor.u32 %v1020, %v1010
      %v1024 = vshll.u32 %v913, 16
      %v1026 = vrot.slane %v1024, 1
      %v1027 = vsel %vm931, %v1022, %v1026
      %v1028 = vshrl.u32 %v912, 16
      %v1030 = vor.u32 %v1028, %v1018
      %v1032 = vshll.u32 %v914, 16
      %v1034 = vrot.slane %v1032, 1
      %v1035 = vsel %vm931, %v1030, %v1034
      %v1036 = vshrl.u32 %v913, 16
      %v1038 = vor.u32 %v1036, %v1026
      %v1040 = vshll.u32 %v915, 16
      %v1042 = vrot.slane %v1040, 1
      %v1043 = vsel %vm931, %v1038, %v1042
      %v1044 = vshrl.u32 %v914, 16
      %v1046 = vor.u32 %v1044, %v1034
      %v1048 = vshll.u32 %v916, 16
      %v1050 = vrot.slane %v1048, 1
      %v1051 = vsel %vm931, %v1046, %v1050
      %v1052 = vshrl.u32 %v915, 16
      %v1054 = vor.u32 %v1052, %v1042
      %v1056 = vshll.u32 %v917, 16
      %v1058 = vrot.slane %v1056, 1
      %v1059 = vsel %vm931, %v1054, %v1058
      %v1060 = vshrl.u32 %v916, 16
      %v1062 = vor.u32 %v1060, %v1050
      %v1064 = vshll.u32 %v918, 16
      %v1066 = vrot.slane %v1064, 1
      %v1067 = vsel %vm931, %v1062, %v1066
      %v1068 = vshrl.u32 %v917, 16
      %v1070 = vor.u32 %v1068, %v1058
      %v1072 = vshll.u32 %v919, 16
      %v1074 = vrot.slane %v1072, 1
      %v1075 = vsel %vm931, %v1070, %v1074
      %v1076 = vshrl.u32 %v918, 16
      %v1078 = vor.u32 %v1076, %v1066
      %v1080 = vshll.u32 %v920, 16
      %v1082 = vrot.slane %v1080, 1
      %v1083 = vsel %vm931, %v1078, %v1082
      %v1084 = vshrl.u32 %v919, 16
      %v1086 = vor.u32 %v1084, %v1074
      %v1088 = vshll.u32 %v921, 16
      %v1090 = vrot.slane %v1088, 1
      %v1091 = vsel %vm931, %v1086, %v1090
      %v1092 = vshrl.u32 %v920, 16
      %v1094 = vor.u32 %v1092, %v1082
      %v1096 = vshll.u32 %v922, 16
      %v1098 = vrot.slane %v1096, 1
      %v1099 = vsel %vm931, %v1094, %v1098
      %v1100 = vshrl.u32 %v921, 16
      %v1102 = vor.u32 %v1100, %v1090
      %v1104 = vshll.u32 %v923, 16
      %v1106 = vrot.slane %v1104, 1
      %v1107 = vsel %vm931, %v1102, %v1106
      %v1108 = vshrl.u32 %v922, 16
      %v1110 = vor.u32 %v1108, %v1098
      %v1112 = vshll.u32 %v924, 16
      %v1114 = vrot.slane %v1112, 1
      %v1115 = vsel %vm931, %v1110, %v1114
      %v1116 = vshrl.u32 %v923, 16
      %v1118 = vor.u32 %v1116, %v1106
      %v1120 = vshll.u32 %v925, 16
      %v1122 = vrot.slane %v1120, 1
      %v1123 = vsel %vm931, %v1118, %v1122
      %v1124 = vshrl.u32 %v924, 16
      %v1126 = vor.u32 %v1124, %v1114
      %v1128 = vshll.u32 %v926, 16
      %v1130 = vrot.slane %v1128, 1
      %v1131 = vsel %vm931, %v1126, %v1130
      %v1132 = vshrl.u32 %v925, 16
      %v1134 = vor.u32 %v1132, %v1122
      %v1136 = vshll.u32 %v927, 16
      %v1138 = vrot.slane %v1136, 1
      %v1139 = vsel %vm931, %v1134, %v1138
      %v1140 = vshrl.u32 %v926, 16
      %v1142 = vor.u32 %v1140, %v1130
      %v1144 = vshll.u32 %v928, 16
      %v1146 = vrot.slane %v1144, 1
      %v1147 = vsel %vm931, %v1142, %v1146
      %v1148 = vshrl.u32 %v927, 16
      %v1150 = vor.u32 %v1148, %v1138
      %v1152 = vshll.u32 %v929, 16
      %v1154 = vrot.slane %v1152, 1
      %v1155 = vsel %vm931, %v1150, %v1154
      %v1156 = vshrl.u32 %v928, 16
      %v1158 = vor.u32 %v1156, %v1146
      %v1160 = vshll.u32 %v930, 16
      %v1162 = vrot.slane %v1160, 1
      %v1163 = vsel %vm931, %v1158, %v1162
      %v1224 = vunpack.c.l.b16 %v782
      %v1225 = vunpack.c.l.b16 %v783
      %v1226 = vunpack.c.l.b16 %v784
      %v1227 = vunpack.c.l.b16 %v785
      %v1228 = vunpack.c.l.b16 %v786
      %v1229 = vunpack.c.l.b16 %v787
      %v1230 = vunpack.c.l.b16 %v788
      %v1231 = vunpack.c.l.b16 %v789
      %v1232 = vunpack.c.l.b16 %v790
      %v1233 = vunpack.c.l.b16 %v791
      %v1234 = vunpack.c.l.b16 %v792
      %v1235 = vunpack.c.l.b16 %v793
      %v1236 = vunpack.c.l.b16 %v794
      %v1237 = vunpack.c.l.b16 %v795
      %v1238 = vunpack.c.l.b16 %v796
      %v1239 = vunpack.c.l.b16 %v797
      %v1240 = vunpack.c.l.b16 %v798
      %v1241 = vunpack.c.l.b16 %v799
      %v1242 = vunpack.c.l.b16 %v800
      %v1243 = vunpack.c.l.b16 %v801
      %v1244 = vunpack.c.l.b16 %v802
      %v1245 = vunpack.c.l.b16 %v803
      %v1246 = vunpack.c.l.b16 %v804
      %v1247 = vunpack.c.l.b16 %v805
      %v1248 = vunpack.c.l.b16 %v806
      %v1249 = vunpack.c.l.b16 %v807
      %v1250 = vunpack.c.l.b16 %v808
      %v1251 = vunpack.c.l.b16 %v809
      %v1252 = vunpack.c.l.b16 %v810
      %v1253 = vunpack.c.l.b16 %v811
      %v1254 = vunpack.c.l.b16 %v812
      %v1255 = vunpack.c.l.b16 %v813
      %v1256 = vpack.c.b16 %v1225, %v1224
      %v1257 = vpack.c.b16 %v1227, %v1226
      %v1258 = vpack.c.b16 %v1229, %v1228
      %v1259 = vpack.c.b16 %v1231, %v1230
      %v1260 = vpack.c.b16 %v1233, %v1232
      %v1261 = vpack.c.b16 %v1235, %v1234
      %v1262 = vpack.c.b16 %v1237, %v1236
      %v1263 = vpack.c.b16 %v1239, %v1238
      %v1264 = vpack.c.b16 %v1241, %v1240
      %v1265 = vpack.c.b16 %v1243, %v1242
      %v1266 = vpack.c.b16 %v1245, %v1244
      %v1267 = vpack.c.b16 %v1247, %v1246
      %v1268 = vpack.c.b16 %v1249, %v1248
      %v1269 = vpack.c.b16 %v1251, %v1250
      %v1270 = vpack.c.b16 %v1253, %v1252
      %v1271 = vpack.c.b16 %v1255, %v1254
      %1288 = vmatprep.subr.bf16.mxu0 0
      %1289 = vmatpush1.bf16.msra.mxu0 %v1256
      %1290 = vmatprep.subr.bf16.mxu0 0
      %1291 = vmatpush1.bf16.msra.mxu0 %v1257
      %1292 = vmatprep.subr.bf16.mxu0 0
      %1293 = vmatpush1.bf16.msra.mxu0 %v1258
      %1294 = vmatprep.subr.bf16.mxu0 0
      %1295 = vmatpush1.bf16.msra.mxu0 %v1259
      %1296 = vmatprep.subr.bf16.mxu0 0
      %1297 = vmatpush1.bf16.msra.mxu0 %v1260
      %1298 = vmatprep.subr.bf16.mxu0 0
      %1299 = vmatpush1.bf16.msra.mxu0 %v1261
      %1300 = vmatprep.subr.bf16.mxu0 0
      %1301 = vmatpush1.bf16.msra.mxu0 %v1262
      %1302 = vmatprep.subr.bf16.mxu0 0
      %1303 = vmatpush1.bf16.msra.mxu0 %v1263
      %1304 = vmatprep.subr.bf16.mxu0 0
      %1305 = vmatpush1.bf16.msra.mxu0 %v1264
      %1306 = vmatprep.subr.bf16.mxu0 0
      %1307 = vmatpush1.bf16.msra.mxu0 %v1265
      %1308 = vmatprep.subr.bf16.mxu0 0
      %1309 = vmatpush1.bf16.msra.mxu0 %v1266
      %1310 = vmatprep.subr.bf16.mxu0 0
      %1311 = vmatpush1.bf16.msra.mxu0 %v1267
      %1312 = vmatprep.subr.bf16.mxu0 0
      %1313 = vmatpush1.bf16.msra.mxu0 %v1268
      %1314 = vmatprep.subr.bf16.mxu0 0
      %1315 = vmatpush1.bf16.msra.mxu0 %v1269
      %1316 = vmatprep.subr.bf16.mxu0 0
      %1317 = vmatpush1.bf16.msra.mxu0 %v1270
      %1318 = vmatprep.subr.bf16.mxu0 0
      %1319 = vmatpush1.bf16.msra.mxu0 %v1271
      %1320 = vmatprep.mubr.bf16.mxu0 %v955
      %1321 = vmatmul.mubr.bf16.gmra.mrb[0].mxu0 %v943
      %v1322 = vpop.f32.mrb[0].mxu0
      %v1323 = vadd.f32 0.0, %v1322
      %v1324 = vpop.f32.mrb[0].mxu0
      %v1325 = vpop.f32.mrb[0].mxu0
      %v1326 = vadd.f32 0.0, %v1325
      %v1327 = vpop.f32.mrb[0].mxu0
      %1328 = vmatprep.mubr.bf16.mxu0 %v971
      %1329 = vmatmul.mubr.bf16.gmra.mrb[0].mxu0 %v963
      %v1330 = vpop.f32.mrb[0].mxu0
      %v1331 = vadd.f32 0.0, %v1330
      %v1332 = vpop.f32.mrb[0].mxu0
      %v1333 = vpop.f32.mrb[0].mxu0
      %v1334 = vadd.f32 0.0, %v1333
      %v1335 = vpop.f32.mrb[0].mxu0
      %1336 = vmatprep.mubr.bf16.mxu0 %v987
      %1337 = vmatmul.mubr.bf16.gmra.mrb[0].mxu0 %v979
      %v1338 = vpop.f32.mrb[0].mxu0
      %v1339 = vadd.f32 0.0, %v1338
      %v1340 = vpop.f32.mrb[0].mxu0
      %v1341 = vpop.f32.mrb[0].mxu0
      %v1342 = vadd.f32 0.0, %v1341
      %v1343 = vpop.f32.mrb[0].mxu0
      %1344 = vmatprep.mubr.bf16.mxu0 %v1003
      %1345 = vmatmul.mubr.bf16.gmra.mrb[0].mxu0 %v995
      %v1346 = vpop.f32.mrb[0].mxu0
      %v1347 = vadd.f32 0.0, %v1346
      %v1348 = vpop.f32.mrb[0].mxu0
      %v1349 = vpop.f32.mrb[0].mxu0
      %v1350 = vadd.f32 0.0, %v1349
      %v1351 = vpop.f32.mrb[0].mxu0
      %1352 = vmatprep.mubr.bf16.mxu0 %v1019
      %1353 = vmatmul.mubr.bf16.gmra.mrb[0].mxu0 %v1011
      %v1354 = vpop.f32.mrb[0].mxu0
      %v1355 = vadd.f32 0.0, %v1354
      %v1356 = vpop.f32.mrb[0].mxu0
      %v1357 = vpop.f32.mrb[0].mxu0
      %v1358 = vadd.f32 0.0, %v1357
      %v1359 = vpop.f32.mrb[0].mxu0
      %1360 = vmatprep.mubr.bf16.mxu0 %v1035
      %1361 = vmatmul.mubr.bf16.gmra.mrb[0].mxu0 %v1027
      %v1362 = vpop.f32.mrb[0].mxu0
      %v1363 = vadd.f32 0.0, %v1362
      %v1364 = vpop.f32.mrb[0].mxu0
      %v1365 = vpop.f32.mrb[0].mxu0
      %v1366 = vadd.f32 0.0, %v1365
      %v1367 = vpop.f32.mrb[0].mxu0
      %1368 = vmatprep.mubr.bf16.mxu0 %v1051
      %1369 = vmatmul.mubr.bf16.gmra.mrb[0].mxu0 %v1043
      %v1370 = vpop.f32.mrb[0].mxu0
      %v1371 = vadd.f32 0.0, %v1370
      %v1372 = vpop.f32.mrb[0].mxu0
      %v1373 = vpop.f32.mrb[0].mxu0
      %v1374 = vadd.f32 0.0, %v1373
      %v1375 = vpop.f32.mrb[0].mxu0
      %1376 = vmatprep.mubr.bf16.mxu0 %v1067
      %1377 = vmatmul.mubr.bf16.gmra.mrb[0].mxu0 %v1059
      %v1378 = vpop.f32.mrb[0].mxu0
      %v1379 = vadd.f32 0.0, %v1378
      %v1380 = vpop.f32.mrb[0].mxu0
      %v1381 = vpop.f32.mrb[0].mxu0
      %v1382 = vadd.f32 0.0, %v1381
      %v1383 = vpop.f32.mrb[0].mxu0
      %1384 = vmatprep.mubr.bf16.mxu0 %v1083
      %1385 = vmatmul.mubr.bf16.gmra.mrb[0].mxu0 %v1075
      %v1386 = vpop.f32.mrb[0].mxu0
      %v1387 = vadd.f32 0.0, %v1386
      %v1388 = vpop.f32.mrb[0].mxu0
      %v1389 = vpop.f32.mrb[0].mxu0
      %v1390 = vadd.f32 0.0, %v1389
      %v1391 = vpop.f32.mrb[0].mxu0
      %1392 = vmatprep.mubr.bf16.mxu0 %v1099
      %1393 = vmatmul.mubr.bf16.gmra.mrb[0].mxu0 %v1091
      %v1394 = vpop.f32.mrb[0].mxu0
      %v1395 = vadd.f32 0.0, %v1394
      %v1396 = vpop.f32.mrb[0].mxu0
      %v1397 = vpop.f32.mrb[0].mxu0
      %v1398 = vadd.f32 0.0, %v1397
      %v1399 = vpop.f32.mrb[0].mxu0
      %1400 = vmatprep.mubr.bf16.mxu0 %v1115
      %1401 = vmatmul.mubr.bf16.gmra.mrb[0].mxu0 %v1107
      %v1402 = vpop.f32.mrb[0].mxu0
      %v1403 = vadd.f32 0.0, %v1402
      %v1404 = vpop.f32.mrb[0].mxu0
      %v1405 = vpop.f32.mrb[0].mxu0
      %v1406 = vadd.f32 0.0, %v1405
      %v1407 = vpop.f32.mrb[0].mxu0
      %1408 = vmatprep.mubr.bf16.mxu0 %v1131
      %1409 = vmatmul.mubr.bf16.gmra.mrb[0].mxu0 %v1123
      %v1410 = vpop.f32.mrb[0].mxu0
      %v1411 = vadd.f32 0.0, %v1410
      %v1412 = vpop.f32.mrb[0].mxu0
      %v1413 = vpop.f32.mrb[0].mxu0
      %v1414 = vadd.f32 0.0, %v1413
      %v1415 = vpop.f32.mrb[0].mxu0
      %1416 = vmatprep.mubr.bf16.mxu0 %v1147
      %1417 = vmatmul.mubr.bf16.gmra.mrb[0].mxu0 %v1139
      %v1418 = vpop.f32.mrb[0].mxu0
      %v1419 = vadd.f32 0.0, %v1418
      %v1420 = vpop.f32.mrb[0].mxu0
      %v1421 = vpop.f32.mrb[0].mxu0
      %v1422 = vadd.f32 0.0, %v1421
      %v1423 = vpop.f32.mrb[0].mxu0
      %1424 = vmatprep.mubr.bf16.mxu0 %v1163
      %1425 = vmatmul.mubr.bf16.gmra.mrb[0].mxu0 %v1155
      %v1426 = vpop.f32.mrb[0].mxu0
      %v1427 = vadd.f32 0.0, %v1426
      %v1428 = vpop.f32.mrb[0].mxu0
      %v1429 = vpop.f32.mrb[0].mxu0
      %v1430 = vadd.f32 0.0, %v1429
      %v1431 = vpop.f32.mrb[0].mxu0
      %1432 = vdwg.mxu0
      %v1493 = vunpack.c.l.b16 %v749
      %v1494 = vunpack.c.l.b16 %v750
      %v1495 = vunpack.c.l.b16 %v751
      %v1496 = vunpack.c.l.b16 %v752
      %v1497 = vunpack.c.l.b16 %v753
      %v1498 = vunpack.c.l.b16 %v754
      %v1499 = vunpack.c.l.b16 %v755
      %v1500 = vunpack.c.l.b16 %v756
      %v1501 = vunpack.c.l.b16 %v757
      %v1502 = vunpack.c.l.b16 %v758
      %v1503 = vunpack.c.l.b16 %v759
      %v1504 = vunpack.c.l.b16 %v760
      %v1505 = vunpack.c.l.b16 %v761
      %v1506 = vunpack.c.l.b16 %v762
      %v1507 = vunpack.c.l.b16 %v763
      %v1508 = vunpack.c.l.b16 %v764
      %v1509 = vunpack.c.l.b16 %v765
      %v1510 = vunpack.c.l.b16 %v766
      %v1511 = vunpack.c.l.b16 %v767
      %v1512 = vunpack.c.l.b16 %v768
      %v1513 = vunpack.c.l.b16 %v769
      %v1514 = vunpack.c.l.b16 %v770
      %v1515 = vunpack.c.l.b16 %v771
      %v1516 = vunpack.c.l.b16 %v772
      %v1517 = vunpack.c.l.b16 %v773
      %v1518 = vunpack.c.l.b16 %v774
      %v1519 = vunpack.c.l.b16 %v775
      %v1520 = vunpack.c.l.b16 %v776
      %v1521 = vunpack.c.l.b16 %v777
      %v1522 = vunpack.c.l.b16 %v778
      %v1523 = vunpack.c.l.b16 %v779
      %v1524 = vunpack.c.l.b16 %v780
      %v1525 = vpack.c.b16 %v1494, %v1493
      %v1526 = vpack.c.b16 %v1496, %v1495
      %v1527 = vpack.c.b16 %v1498, %v1497
      %v1528 = vpack.c.b16 %v1500, %v1499
      %v1529 = vpack.c.b16 %v1502, %v1501
      %v1530 = vpack.c.b16 %v1504, %v1503
      %v1531 = vpack.c.b16 %v1506, %v1505
      %v1532 = vpack.c.b16 %v1508, %v1507
      %v1533 = vpack.c.b16 %v1510, %v1509
      %v1534 = vpack.c.b16 %v1512, %v1511
      %v1535 = vpack.c.b16 %v1514, %v1513
      %v1536 = vpack.c.b16 %v1516, %v1515
      %v1537 = vpack.c.b16 %v1518, %v1517
      %v1538 = vpack.c.b16 %v1520, %v1519
      %v1539 = vpack.c.b16 %v1522, %v1521
      %v1540 = vpack.c.b16 %v1524, %v1523
      %1557 = vmatprep.subr.bf16.mxu0 0
      %1558 = vmatpush1.bf16.msra.mxu0 %v1525
      %1559 = vmatprep.subr.bf16.mxu0 0
      %1560 = vmatpush1.bf16.msra.mxu0 %v1526
      %1561 = vmatprep.subr.bf16.mxu0 0
      %1562 = vmatpush1.bf16.msra.mxu0 %v1527
      %1563 = vmatprep.subr.bf16.mxu0 0
      %1564 = vmatpush1.bf16.msra.mxu0 %v1528
      %1565 = vmatprep.subr.bf16.mxu0 0
      %1566 = vmatpush1.bf16.msra.mxu0 %v1529
      %1567 = vmatprep.subr.bf16.mxu0 0
      %1568 = vmatpush1.bf16.msra.mxu0 %v1530
      %1569 = vmatprep.subr.bf16.mxu0 0
      %1570 = vmatpush1.bf16.msra.mxu0 %v1531
      %1571 = vmatprep.subr.bf16.mxu0 0
      %1572 = vmatpush1.bf16.msra.mxu0 %v1532
      %1573 = vmatprep.subr.bf16.mxu0 0
      %1574 = vmatpush1.bf16.msra.mxu0 %v1533
      %1575 = vmatprep.subr.bf16.mxu0 0
      %1576 = vmatpush1.bf16.msra.mxu0 %v1534
      %1577 = vmatprep.subr.bf16.mxu0 0
      %1578 = vmatpush1.bf16.msra.mxu0 %v1535
      %1579 = vmatprep.subr.bf16.mxu0 0
      %1580 = vmatpush1.bf16.msra.mxu0 %v1536
      %1581 = vmatprep.subr.bf16.mxu0 0
      %1582 = vmatpush1.bf16.msra.mxu0 %v1537
      %1583 = vmatprep.subr.bf16.mxu0 0
      %1584 = vmatpush1.bf16.msra.mxu0 %v1538
      %1585 = vmatprep.subr.bf16.mxu0 0
      %1586 = vmatpush1.bf16.msra.mxu0 %v1539
      %1587 = vmatprep.subr.bf16.mxu0 0
      %1588 = vmatpush1.bf16.msra.mxu0 %v1540
      %1589 = vmatprep.mubr.bf16.mxu0 %v902
      %1590 = vmatmul.mubr.bf16.gmra.mrb[0].mxu0 %v901
      %v1591 = vpop.f32.mrb[0].mxu0
      %v1592 = vadd.f32 %v1323, %v1591
      %v1593 = vpop.f32.mrb[0].mxu0
      %v1594 = vpop.f32.mrb[0].mxu0
      %v1595 = vadd.f32 %v1326, %v1594
      %v1596 = vpop.f32.mrb[0].mxu0
      %1597 = vmatprep.mubr.bf16.mxu0 %v904
      %1598 = vmatmul.mubr.bf16.gmra.mrb[0].mxu0 %v903
      %v1599 = vpop.f32.mrb[0].mxu0
      %v1600 = vadd.f32 %v1331, %v1599
      %v1601 = vpop.f32.mrb[0].mxu0
      %v1602 = vpop.f32.mrb[0].mxu0
      %v1603 = vadd.f32 %v1334, %v1602
      %v1604 = vpop.f32.mrb[0].mxu0
      %1605 = vmatprep.mubr.bf16.mxu0 %v906
      %1606 = vmatmul.mubr.bf16.gmra.mrb[0].mxu0 %v905
      %v1607 = vpop.f32.mrb[0].mxu0
      %v1608 = vadd.f32 %v1339, %v1607
      %v1609 = vpop.f32.mrb[0].mxu0
      %v1610 = vpop.f32.mrb[0].mxu0
      %v1611 = vadd.f32 %v1342, %v1610
      %v1612 = vpop.f32.mrb[0].mxu0
      %1613 = vmatprep.mubr.bf16.mxu0 %v908
      %1614 = vmatmul.mubr.bf16.gmra.mrb[0].mxu0 %v907
      %v1615 = vpop.f32.mrb[0].mxu0
      %v1616 = vadd.f32 %v1347, %v1615
      %v1617 = vpop.f32.mrb[0].mxu0
      %v1618 = vpop.f32.mrb[0].mxu0
      %v1619 = vadd.f32 %v1350, %v1618
      %v1620 = vpop.f32.mrb[0].mxu0
      %1621 = vmatprep.mubr.bf16.mxu0 %v910
      %1622 = vmatmul.mubr.bf16.gmra.mrb[0].mxu0 %v909
      %v1623 = vpop.f32.mrb[0].mxu0
      %v1624 = vadd.f32 %v1355, %v1623
      %v1625 = vpop.f32.mrb[0].mxu0
      %v1626 = vpop.f32.mrb[0].mxu0
      %v1627 = vadd.f32 %v1358, %v1626
      %v1628 = vpop.f32.mrb[0].mxu0
      %1629 = vmatprep.mubr.bf16.mxu0 %v912
      %1630 = vmatmul.mubr.bf16.gmra.mrb[0].mxu0 %v911
      %v1631 = vpop.f32.mrb[0].mxu0
      %v1632 = vadd.f32 %v1363, %v1631
      %v1633 = vpop.f32.mrb[0].mxu0
      %v1634 = vpop.f32.mrb[0].mxu0
      %v1635 = vadd.f32 %v1366, %v1634
      %v1636 = vpop.f32.mrb[0].mxu0
      %1637 = vmatprep.mubr.bf16.mxu0 %v914
      %1638 = vmatmul.mubr.bf16.gmra.mrb[0].mxu0 %v913
      %v1639 = vpop.f32.mrb[0].mxu0
      %v1640 = vadd.f32 %v1371, %v1639
      %v1641 = vpop.f32.mrb[0].mxu0
      %v1642 = vpop.f32.mrb[0].mxu0
      %v1643 = vadd.f32 %v1374, %v1642
      %v1644 = vpop.f32.mrb[0].mxu0
      %1645 = vmatprep.mubr.bf16.mxu0 %v916
      %1646 = vmatmul.mubr.bf16.gmra.mrb[0].mxu0 %v915
      %v1647 = vpop.f32.mrb[0].mxu0
      %v1648 = vadd.f32 %v1379, %v1647
      %v1649 = vpop.f32.mrb[0].mxu0
      %v1650 = vpop.f32.mrb[0].mxu0
      %v1651 = vadd.f32 %v1382, %v1650
      %v1652 = vpop.f32.mrb[0].mxu0
      %1653 = vmatprep.mubr.bf16.mxu0 %v918
      %1654 = vmatmul.mubr.bf16.gmra.mrb[0].mxu0 %v917
      %v1655 = vpop.f32.mrb[0].mxu0
      %v1656 = vadd.f32 %v1387, %v1655
      %v1657 = vpop.f32.mrb[0].mxu0
      %v1658 = vpop.f32.mrb[0].mxu0
      %v1659 = vadd.f32 %v1390, %v1658
      %v1660 = vpop.f32.mrb[0].mxu0
      %1661 = vmatprep.mubr.bf16.mxu0 %v920
      %1662 = vmatmul.mubr.bf16.gmra.mrb[0].mxu0 %v919
      %v1663 = vpop.f32.mrb[0].mxu0
      %v1664 = vadd.f32 %v1395, %v1663
      %v1665 = vpop.f32.mrb[0].mxu0
      %v1666 = vpop.f32.mrb[0].mxu0
      %v1667 = vadd.f32 %v1398, %v1666
      %v1668 = vpop.f32.mrb[0].mxu0
      %1669 = vmatprep.mubr.bf16.mxu0 %v922
      %1670 = vmatmul.mubr.bf16.gmra.mrb[0].mxu0 %v921
      %v1671 = vpop.f32.mrb[0].mxu0
      %v1672 = vadd.f32 %v1403, %v1671
      %v1673 = vpop.f32.mrb[0].mxu0
      %v1674 = vpop.f32.mrb[0].mxu0
      %v1675 = vadd.f32 %v1406, %v1674
      %v1676 = vpop.f32.mrb[0].mxu0
      %1677 = vmatprep.mubr.bf16.mxu0 %v924
      %1678 = vmatmul.mubr.bf16.gmra.mrb[0].mxu0 %v923
      %v1679 = vpop.f32.mrb[0].mxu0
      %v1680 = vadd.f32 %v1411, %v1679
      %v1681 = vpop.f32.mrb[0].mxu0
      %v1682 = vpop.f32.mrb[0].mxu0
      %v1683 = vadd.f32 %v1414, %v1682
      %v1684 = vpop.f32.mrb[0].mxu0
      %1685 = vmatprep.mubr.bf16.mxu0 %v926
      %1686 = vmatmul.mubr.bf16.gmra.mrb[0].mxu0 %v925
      %v1687 = vpop.f32.mrb[0].mxu0
      %v1688 = vadd.f32 %v1419, %v1687
      %v1689 = vpop.f32.mrb[0].mxu0
      %v1690 = vpop.f32.mrb[0].mxu0
      %v1691 = vadd.f32 %v1422, %v1690
      %v1692 = vpop.f32.mrb[0].mxu0
      %1693 = vmatprep.mubr.bf16.mxu0 %v928
      %1694 = vmatmul.mubr.bf16.gmra.mrb[0].mxu0 %v927
      %v1695 = vpop.f32.mrb[0].mxu0
      %v1696 = vadd.f32 %v1427, %v1695
      %v1697 = vpop.f32.mrb[0].mxu0
      %v1698 = vpop.f32.mrb[0].mxu0
      %v1699 = vadd.f32 %v1430, %v1698
      %v1700 = vpop.f32.mrb[0].mxu0
      %1701 = vdwg.mxu0
      %v1702 = vld [vmem:[#allocation2] sm:$0xee]
      %v1703 = vld [vmem:[%s4 + $0x100] sm:$0xf]
      %v1704 = vld [vmem:[%s4 + $0x104] sm:$0xf]
      %v1705 = vld [vmem:[%s4 + $0x108] sm:$0xf]
      %v1706 = vld [vmem:[%s4 + $0x10c] sm:$0xf]
      %v1707 = vld [vmem:[%s4 + $0x110] sm:$0xf]
      %v1708 = vld [vmem:[%s4 + $0x114] sm:$0xf]
      %v1709 = vld [vmem:[%s4 + $0x118] sm:$0xf]
      %v1710 = vld [vmem:[%s4 + $0x11c] sm:$0xf]
      %v1711 = vld [vmem:[%s4 + $0x120] sm:$0xf]
      %v1712 = vld [vmem:[%s4 + $0x124] sm:$0xf]
      %v1713 = vld [vmem:[%s4 + $0x128] sm:$0xf]
      %v1714 = vld [vmem:[%s4 + $0x12c] sm:$0xf]
      %v1715 = vld [vmem:[%s4 + $0x130] sm:$0xf]
      %v1716 = vld [vmem:[%s4 + $0x134] sm:$0xf]
      %v1717 = vld [vmem:[%s4 + $0x138] sm:$0xf]
      %v1718 = vld [vmem:[%s4 + $0x13c] sm:$0xf]
      %v1719 = vld [vmem:[%s4 + $0x140] sm:$0xf]
      %v1720 = vld [vmem:[%s4 + $0x144] sm:$0xf]
      %v1721 = vld [vmem:[%s4 + $0x148] sm:$0xf]
      %v1722 = vld [vmem:[%s4 + $0x14c] sm:$0xf]
      %v1723 = vld [vmem:[%s4 + $0x150] sm:$0xf]
      %v1724 = vld [vmem:[%s4 + $0x154] sm:$0xf]
      %v1725 = vld [vmem:[%s4 + $0x158] sm:$0xf]
      %v1726 = vld [vmem:[%s4 + $0x15c] sm:$0xf]
      %v1727 = vld [vmem:[%s4 + $0x160] sm:$0xf]
      %v1728 = vld [vmem:[%s4 + $0x164] sm:$0xf]
      %v1729 = vld [vmem:[%s4 + $0x168] sm:$0xf]
      %v1730 = vld [vmem:[%s4 + $0x16c] sm:$0xf]
      %v1731 = vld [vmem:[%s4 + $0x170] sm:$0xf]
      %v1732 = vld [vmem:[%s4 + $0x174] sm:$0xf]
      %v1733 = vld [vmem:[%s4 + $0x178] sm:$0xf]
      %v1734 = vld [vmem:[%s4 + $0x17c] sm:$0xf]
      %v1736 = vunpack.c.l.b16 %v1702
      %v1737 = vunpack.c.h.b16 %v1702
      %v1738 = vpack.c.b16 %v845, %v1736
      %v1739 = vpack.c.b16 %v846, %v1737
      %vm1740 = vcmask 1046528
      %v1741 = vrot.slane %v1738, 1
      %v1742 = vrot.slane %v903, 1
      %v1743 = vsel %vm1740, %v1741, %v1742
      %v1744 = vrot.slane %v1739, 1
      %v1745 = vrot.slane %v904, 1
      %v1746 = vsel %vm1740, %v1744, %v1745
      %v1747 = vrot.slane %v905, 1
      %v1748 = vsel %vm1740, %v1742, %v1747
      %v1749 = vrot.slane %v906, 1
      %v1750 = vsel %vm1740, %v1745, %v1749
      %v1751 = vrot.slane %v907, 1
      %v1752 = vsel %vm1740, %v1747, %v1751
      %v1753 = vrot.slane %v908, 1
      %v1754 = vsel %vm1740, %v1749, %v1753
      %v1755 = vrot.slane %v909, 1
      %v1756 = vsel %vm1740, %v1751, %v1755
      %v1757 = vrot.slane %v910, 1
      %v1758 = vsel %vm1740, %v1753, %v1757
      %v1759 = vrot.slane %v911, 1
      %v1760 = vsel %vm1740, %v1755, %v1759
      %v1761 = vrot.slane %v912, 1
      %v1762 = vsel %vm1740, %v1757, %v1761
      %v1763 = vrot.slane %v913, 1
      %v1764 = vsel %vm1740, %v1759, %v1763
      %v1765 = vrot.slane %v914, 1
      %v1766 = vsel %vm1740, %v1761, %v1765
      %v1767 = vrot.slane %v915, 1
      %v1768 = vsel %vm1740, %v1763, %v1767
      %v1769 = vrot.slane %v916, 1
      %v1770 = vsel %vm1740, %v1765, %v1769
      %v1771 = vrot.slane %v917, 1
      %v1772 = vsel %vm1740, %v1767, %v1771
      %v1773 = vrot.slane %v918, 1
      %v1774 = vsel %vm1740, %v1769, %v1773
      %v1775 = vrot.slane %v919, 1
      %v1776 = vsel %vm1740, %v1771, %v1775
      %v1777 = vrot.slane %v920, 1
      %v1778 = vsel %vm1740, %v1773, %v1777
      %v1779 = vrot.slane %v921, 1
      %v1780 = vsel %vm1740, %v1775, %v1779
      %v1781 = vrot.slane %v922, 1
      %v1782 = vsel %vm1740, %v1777, %v1781
      %v1783 = vrot.slane %v923, 1
      %v1784 = vsel %vm1740, %v1779, %v1783
      %v1785 = vrot.slane %v924, 1
      %v1786 = vsel %vm1740, %v1781, %v1785
      %v1787 = vrot.slane %v925, 1
      %v1788 = vsel %vm1740, %v1783, %v1787
      %v1789 = vrot.slane %v926, 1
      %v1790 = vsel %vm1740, %v1785, %v1789
      %v1791 = vrot.slane %v927, 1
      %v1792 = vsel %vm1740, %v1787, %v1791
      %v1793 = vrot.slane %v928, 1
      %v1794 = vsel %vm1740, %v1789, %v1793
      %v1795 = vrot.slane %v929, 1
      %v1796 = vsel %vm1740, %v1791, %v1795
      %v1797 = vrot.slane %v930, 1
      %v1798 = vsel %vm1740, %v1793, %v1797
      %v1859 = vunpack.c.l.b16 %v1703
      %v1860 = vunpack.c.l.b16 %v1704
      %v1861 = vunpack.c.l.b16 %v1705
      %v1862 = vunpack.c.l.b16 %v1706
      %v1863 = vunpack.c.l.b16 %v1707
      %v1864 = vunpack.c.l.b16 %v1708
      %v1865 = vunpack.c.l.b16 %v1709
      %v1866 = vunpack.c.l.b16 %v1710
      %v1867 = vunpack.c.l.b16 %v1711
      %v1868 = vunpack.c.l.b16 %v1712
      %v1869 = vunpack.c.l.b16 %v1713
      %v1870 = vunpack.c.l.b16 %v1714
      %v1871 = vunpack.c.l.b16 %v1715
      %v1872 = vunpack.c.l.b16 %v1716
      %v1873 = vunpack.c.l.b16 %v1717
      %v1874 = vunpack.c.l.b16 %v1718
      %v1875 = vunpack.c.l.b16 %v1719
      %v1876 = vunpack.c.l.b16 %v1720
      %v1877 = vunpack.c.l.b16 %v1721
      %v1878 = vunpack.c.l.b16 %v1722
      %v1879 = vunpack.c.l.b16 %v1723
      %v1880 = vunpack.c.l.b16 %v1724
      %v1881 = vunpack.c.l.b16 %v1725
      %v1882 = vunpack.c.l.b16 %v1726
      %v1883 = vunpack.c.l.b16 %v1727
      %v1884 = vunpack.c.l.b16 %v1728
      %v1885 = vunpack.c.l.b16 %v1729
      %v1886 = vunpack.c.l.b16 %v1730
      %v1887 = vunpack.c.l.b16 %v1731
      %v1888 = vunpack.c.l.b16 %v1732
      %v1889 = vunpack.c.l.b16 %v1733
      %v1890 = vunpack.c.l.b16 %v1734
      %v1891 = vpack.c.b16 %v1860, %v1859
      %v1892 = vpack.c.b16 %v1862, %v1861
      %v1893 = vpack.c.b16 %v1864, %v1863
      %v1894 = vpack.c.b16 %v1866, %v1865
      %v1895 = vpack.c.b16 %v1868, %v1867
      %v1896 = vpack.c.b16 %v1870, %v1869
      %v1897 = vpack.c.b16 %v1872, %v1871
      %v1898 = vpack.c.b16 %v1874, %v1873
      %v1899 = vpack.c.b16 %v1876, %v1875
      %v1900 = vpack.c.b16 %v1878, %v1877
      %v1901 = vpack.c.b16 %v1880, %v1879
      %v1902 = vpack.c.b16 %v1882, %v1881
      %v1903 = vpack.c.b16 %v1884, %v1883
      %v1904 = vpack.c.b16 %v1886, %v1885
      %v1905 = vpack.c.b16 %v1888, %v1887
      %v1906 = vpack.c.b16 %v1890, %v1889
      %1923 = vmatprep.subr.bf16.mxu0 0
      %1924 = vmatpush1.bf16.msra.mxu0 %v1891
      %1925 = vmatprep.subr.bf16.mxu0 0
      %1926 = vmatpush1.bf16.msra.mxu0 %v1892
      %1927 = vmatprep.subr.bf16.mxu0 0
      %1928 = vmatpush1.bf16.msra.mxu0 %v1893
      %1929 = vmatprep.subr.bf16.mxu0 0
      %1930 = vmatpush1.bf16.msra.mxu0 %v1894
      %1931 = vmatprep.subr.bf16.mxu0 0
      %1932 = vmatpush1.bf16.msra.mxu0 %v1895
      %1933 = vmatprep.subr.bf16.mxu0 0
      %1934 = vmatpush1.bf16.msra.mxu0 %v1896
      %1935 = vmatprep.subr.bf16.mxu0 0
      %1936 = vmatpush1.bf16.msra.mxu0 %v1897
      %1937 = vmatprep.subr.bf16.mxu0 0
      %1938 = vmatpush1.bf16.msra.mxu0 %v1898
      %1939 = vmatprep.subr.bf16.mxu0 0
      %1940 = vmatpush1.bf16.msra.mxu0 %v1899
      %1941 = vmatprep.subr.bf16.mxu0 0
      %1942 = vmatpush1.bf16.msra.mxu0 %v1900
      %1943 = vmatprep.subr.bf16.mxu0 0
      %1944 = vmatpush1.bf16.msra.mxu0 %v1901
      %1945 = vmatprep.subr.bf16.mxu0 0
      %1946 = vmatpush1.bf16.msra.mxu0 %v1902
      %1947 = vmatprep.subr.bf16.mxu0 0
      %1948 = vmatpush1.bf16.msra.mxu0 %v1903
      %1949 = vmatprep.subr.bf16.mxu0 0
      %1950 = vmatpush1.bf16.msra.mxu0 %v1904
      %1951 = vmatprep.subr.bf16.mxu0 0
      %1952 = vmatpush1.bf16.msra.mxu0 %v1905
      %1953 = vmatprep.subr.bf16.mxu0 0
      %1954 = vmatpush1.bf16.msra.mxu0 %v1906
      %1955 = vmatprep.mubr.bf16.mxu0 %v1746
      %1956 = vmatmul.mubr.bf16.gmra.mrb[0].mxu0 %v1743
      %v1957 = vpop.f32.mrb[0].mxu0
      %v1958 = vadd.f32 0.0, %v1957
      %v1959 = vpop.f32.mrb[0].mxu0
      %v1960 = vpop.f32.mrb[0].mxu0
      %v1961 = vadd.f32 0.0, %v1960
      %v1962 = vpop.f32.mrb[0].mxu0
      %1963 = vmatprep.mubr.bf16.mxu0 %v1750
      %1964 = vmatmul.mubr.bf16.gmra.mrb[0].mxu0 %v1748
      %v1965 = vpop.f32.mrb[0].mxu0
      %v1966 = vadd.f32 0.0, %v1965
      %v1967 = vpop.f32.mrb[0].mxu0
      %v1968 = vpop.f32.mrb[0].mxu0
      %v1969 = vadd.f32 0.0, %v1968
      %v1970 = vpop.f32.mrb[0].mxu0
      %1971 = vmatprep.mubr.bf16.mxu0 %v1754
      %1972 = vmatmul.mubr.bf16.gmra.mrb[0].mxu0 %v1752
      %v1973 = vpop.f32.mrb[0].mxu0
      %v1974 = vadd.f32 0.0, %v1973
      %v1975 = vpop.f32.mrb[0].mxu0
      %v1976 = vpop.f32.mrb[0].mxu0
      %v1977 = vadd.f32 0.0, %v1976
      %v1978 = vpop.f32.mrb[0].mxu0
      %1979 = vmatprep.mubr.bf16.mxu0 %v1758
      %1980 = vmatmul.mubr.bf16.gmra.mrb[0].mxu0 %v1756
      %v1981 = vpop.f32.mrb[0].mxu0
      %v1982 = vadd.f32 0.0, %v1981
      %v1983 = vpop.f32.mrb[0].mxu0
      %v1984 = vpop.f32.mrb[0].mxu0
      %v1985 = vadd.f32 0.0, %v1984
      %v1986 = vpop.f32.mrb[0].mxu0
      %1987 = vmatprep.mubr.bf16.mxu0 %v1762
      %1988 = vmatmul.mubr.bf16.gmra.mrb[0].mxu0 %v1760
      %v1989 = vpop.f32.mrb[0].mxu0
      %v1990 = vadd.f32 0.0, %v1989
      %v1991 = vpop.f32.mrb[0].mxu0
      %v1992 = vpop.f32.mrb[0].mxu0
      %v1993 = vadd.f32 0.0, %v1992
      %v1994 = vpop.f32.mrb[0].mxu0
      %1995 = vmatprep.mubr.bf16.mxu0 %v1766
      %1996 = vmatmul.mubr.bf16.gmra.mrb[0].mxu0 %v1764
      %v1997 = vpop.f32.mrb[0].mxu0
      %v1998 = vadd.f32 0.0, %v1997
      %v1999 = vpop.f32.mrb[0].mxu0
      %v2000 = vpop.f32.mrb[0].mxu0
      %v2001 = vadd.f32 0.0, %v2000
      %v2002 = vpop.f32.mrb[0].mxu0
      %2003 = vmatprep.mubr.bf16.mxu0 %v1770
      %2004 = vmatmul.mubr.bf16.gmra.mrb[0].mxu0 %v1768
      %v2005 = vpop.f32.mrb[0].mxu0
      %v2006 = vadd.f32 0.0, %v2005
      %v2007 = vpop.f32.mrb[0].mxu0
      %v2008 = vpop.f32.mrb[0].mxu0
      %v2009 = vadd.f32 0.0, %v2008
      %v2010 = vpop.f32.mrb[0].mxu0
      %2011 = vmatprep.mubr.bf16.mxu0 %v1774
      %2012 = vmatmul.mubr.bf16.gmra.mrb[0].mxu0 %v1772
      %v2013 = vpop.f32.mrb[0].mxu0
      %v2014 = vadd.f32 0.0, %v2013
      %v2015 = vpop.f32.mrb[0].mxu0
      %v2016 = vpop.f32.mrb[0].mxu0
      %v2017 = vadd.f32 0.0, %v2016
      %v2018 = vpop.f32.mrb[0].mxu0
      %2019 = vmatprep.mubr.bf16.mxu0 %v1778
      %2020 = vmatmul.mubr.bf16.gmra.mrb[0].mxu0 %v1776
      %v2021 = vpop.f32.mrb[0].mxu0
      %v2022 = vadd.f32 0.0, %v2021
      %v2023 = vpop.f32.mrb[0].mxu0
      %v2024 = vpop.f32.mrb[0].mxu0
      %v2025 = vadd.f32 0.0, %v2024
      %v2026 = vpop.f32.mrb[0].mxu0
      %2027 = vmatprep.mubr.bf16.mxu0 %v1782
      %2028 = vmatmul.mubr.bf16.gmra.mrb[0].mxu0 %v1780
      %v2029 = vpop.f32.mrb[0].mxu0
      %v2030 = vadd.f32 0.0, %v2029
      %v2031 = vpop.f32.mrb[0].mxu0
      %v2032 = vpop.f32.mrb[0].mxu0
      %v2033 = vadd.f32 0.0, %v2032
      %v2034 = vpop.f32.mrb[0].mxu0
      %2035 = vmatprep.mubr.bf16.mxu0 %v1786
      %2036 = vmatmul.mubr.bf16.gmra.mrb[0].mxu0 %v1784
      %v2037 = vpop.f32.mrb[0].mxu0
      %v2038 = vadd.f32 0.0, %v2037
      %v2039 = vpop.f32.mrb[0].mxu0
      %v2040 = vpop.f32.mrb[0].mxu0
      %v2041 = vadd.f32 0.0, %v2040
      %v2042 = vpop.f32.mrb[0].mxu0
      %2043 = vmatprep.mubr.bf16.mxu0 %v1790
      %2044 = vmatmul.mubr.bf16.gmra.mrb[0].mxu0 %v1788
      %v2045 = vpop.f32.mrb[0].mxu0
      %v2046 = vadd.f32 0.0, %v2045
      %v2047 = vpop.f32.mrb[0].mxu0
      %v2048 = vpop.f32.mrb[0].mxu0
      %v2049 = vadd.f32 0.0, %v2048
      %v2050 = vpop.f32.mrb[0].mxu0
      %2051 = vmatprep.mubr.bf16.mxu0 %v1794
      %2052 = vmatmul.mubr.bf16.gmra.mrb[0].mxu0 %v1792
      %v2053 = vpop.f32.mrb[0].mxu0
      %v2054 = vadd.f32 0.0, %v2053
      %v2055 = vpop.f32.mrb[0].mxu0
      %v2056 = vpop.f32.mrb[0].mxu0
      %v2057 = vadd.f32 0.0, %v2056
      %v2058 = vpop.f32.mrb[0].mxu0
      %2059 = vmatprep.mubr.bf16.mxu0 %v1798
      %2060 = vmatmul.mubr.bf16.gmra.mrb[0].mxu0 %v1796
      %v2061 = vpop.f32.mrb[0].mxu0
      %v2062 = vadd.f32 0.0, %v2061
      %v2063 = vpop.f32.mrb[0].mxu0
      %v2064 = vpop.f32.mrb[0].mxu0
      %v2065 = vadd.f32 0.0, %v2064
      %v2066 = vpop.f32.mrb[0].mxu0
      %2067 = vdwg.mxu0
      %v2068 = vadd.f32 %v1592, %v1958
      %v2069 = vadd.f32 %v1595, %v1961
      %v2070 = vadd.f32 %v1600, %v1966
      %v2071 = vadd.f32 %v1603, %v1969
      %v2072 = vadd.f32 %v1608, %v1974
      %v2073 = vadd.f32 %v1611, %v1977
      %v2074 = vadd.f32 %v1616, %v1982
      %v2075 = vadd.f32 %v1619, %v1985
      %v2076 = vadd.f32 %v1624, %v1990
      %v2077 = vadd.f32 %v1627, %v1993
      %v2078 = vadd.f32 %v1632, %v1998
      %v2079 = vadd.f32 %v1635, %v2001
      %v2080 = vadd.f32 %v1640, %v2006
      %v2081 = vadd.f32 %v1643, %v2009
      %v2082 = vadd.f32 %v1648, %v2014
      %v2083 = vadd.f32 %v1651, %v2017
      %v2084 = vadd.f32 %v1656, %v2022
      %v2085 = vadd.f32 %v1659, %v2025
      %v2086 = vadd.f32 %v1664, %v2030
      %v2087 = vadd.f32 %v1667, %v2033
      %v2088 = vadd.f32 %v1672, %v2038
      %v2089 = vadd.f32 %v1675, %v2041
      %v2090 = vadd.f32 %v1680, %v2046
      %v2091 = vadd.f32 %v1683, %v2049
      %v2092 = vadd.f32 %v1688, %v2054
      %v2093 = vadd.f32 %v1691, %v2057
      %v2094 = vadd.f32 %v1696, %v2062
      %v2095 = vadd.f32 %v1699, %v2065
      %v2096 = vld [vmem:[#allocation2 + $0x18] sm:$0xff]
      %v2097 = vld [vmem:[#allocation2 + $0x20] sm:$0xff]
      %v2098 = vld [vmem:[#allocation2 + $0x28] sm:$0xff]
      %v2099 = vld [vmem:[#allocation2 + $0x30] sm:$0xff]
      %v2100 = vld [vmem:[#allocation2 + $0x38] sm:$0xff]
      %v2101 = vld [vmem:[#allocation2 + $0x40] sm:$0xff]
      %v2102 = vld [vmem:[#allocation2 + $0x48] sm:$0xff]
      %v2103 = vld [vmem:[#allocation2 + $0x50] sm:$0xff]
      %v2104 = vld [vmem:[#allocation2 + $0x58] sm:$0xff]
      %v2105 = vld [vmem:[#allocation2 + $0x60] sm:$0xff]
      %v2106 = vld [vmem:[#allocation2 + $0x68] sm:$0xff]
      %v2107 = vld [vmem:[#allocation2 + $0x70] sm:$0xff]
      %v2108 = vld [vmem:[#allocation2 + $0x78] sm:$0xff]
      %v2109 = vld [vmem:[#allocation2 + $0x80] sm:$0xff]
      %v2110 = vld [vmem:[#allocation2 + $0x88] sm:$0xff]
      %v2111 = vld [vmem:[#allocation2 + $0x90] sm:$0xff]
      %v2112 = vld [vmem:[#allocation2 + $0x98] sm:$0xff]
      %v2113 = vld [vmem:[#allocation2 + $0xa0] sm:$0xff]
      %v2114 = vld [vmem:[#allocation2 + $0xa8] sm:$0xff]
      %v2115 = vld [vmem:[#allocation2 + $0xb0] sm:$0xff]
      %v2116 = vld [vmem:[#allocation2 + $0xb8] sm:$0xff]
      %v2117 = vld [vmem:[#allocation2 + $0xc0] sm:$0xff]
      %v2118 = vld [vmem:[#allocation2 + $0xc8] sm:$0xff]
      %v2119 = vld [vmem:[#allocation2 + $0xd0] sm:$0xff]
      %v2120 = vld [vmem:[#allocation2 + $0xd8] sm:$0xff]
      %v2121 = vld [vmem:[#allocation2 + $0xe0] sm:$0xff]
      %v2122 = vld [vmem:[#allocation2 + $0xe8] sm:$0xff]
      %v2123 = vld [vmem:[#allocation2 + $0xf0] sm:$0xff]
      %v2124 = vld [vmem:[%s4 + $0x180] sm:$0xf]
      %v2125 = vld [vmem:[%s4 + $0x184] sm:$0xf]
      %v2126 = vld [vmem:[%s4 + $0x188] sm:$0xf]
      %v2127 = vld [vmem:[%s4 + $0x18c] sm:$0xf]
      %v2128 = vld [vmem:[%s4 + $0x190] sm:$0xf]
      %v2129 = vld [vmem:[%s4 + $0x194] sm:$0xf]
      %v2130 = vld [vmem:[%s4 + $0x198] sm:$0xf]
      %v2131 = vld [vmem:[%s4 + $0x19c] sm:$0xf]
      %v2132 = vld [vmem:[%s4 + $0x1a0] sm:$0xf]
      %v2133 = vld [vmem:[%s4 + $0x1a4] sm:$0xf]
      %v2134 = vld [vmem:[%s4 + $0x1a8] sm:$0xf]
      %v2135 = vld [vmem:[%s4 + $0x1ac] sm:$0xf]
      %v2136 = vld [vmem:[%s4 + $0x1b0] sm:$0xf]
      %v2137 = vld [vmem:[%s4 + $0x1b4] sm:$0xf]
      %v2138 = vld [vmem:[%s4 + $0x1b8] sm:$0xf]
      %v2139 = vld [vmem:[%s4 + $0x1bc] sm:$0xf]
      %v2140 = vld [vmem:[%s4 + $0x1c0] sm:$0xf]
      %v2141 = vld [vmem:[%s4 + $0x1c4] sm:$0xf]
      %v2142 = vld [vmem:[%s4 + $0x1c8] sm:$0xf]
      %v2143 = vld [vmem:[%s4 + $0x1cc] sm:$0xf]
      %v2144 = vld [vmem:[%s4 + $0x1d0] sm:$0xf]
      %v2145 = vld [vmem:[%s4 + $0x1d4] sm:$0xf]
      %v2146 = vld [vmem:[%s4 + $0x1d8] sm:$0xf]
      %v2147 = vld [vmem:[%s4 + $0x1dc] sm:$0xf]
      %v2148 = vld [vmem:[%s4 + $0x1e0] sm:$0xf]
      %v2149 = vld [vmem:[%s4 + $0x1e4] sm:$0xf]
      %v2150 = vld [vmem:[%s4 + $0x1e8] sm:$0xf]
      %v2151 = vld [vmem:[%s4 + $0x1ec] sm:$0xf]
      %v2152 = vld [vmem:[%s4 + $0x1f0] sm:$0xf]
      %v2153 = vld [vmem:[%s4 + $0x1f4] sm:$0xf]
      %v2154 = vld [vmem:[%s4 + $0x1f8] sm:$0xf]
      %v2155 = vld [vmem:[%s4 + $0x1fc] sm:$0xf]
      %v2184 = vunpack.c.l.b16 %v2096
      %v2185 = vunpack.c.h.b16 %v2096
      %v2186 = vunpack.c.l.b16 %v2097
      %v2187 = vunpack.c.h.b16 %v2097
      %v2188 = vunpack.c.l.b16 %v2098
      %v2189 = vunpack.c.h.b16 %v2098
      %v2190 = vunpack.c.l.b16 %v2099
      %v2191 = vunpack.c.h.b16 %v2099
      %v2192 = vunpack.c.l.b16 %v2100
      %v2193 = vunpack.c.h.b16 %v2100
      %v2194 = vunpack.c.l.b16 %v2101
      %v2195 = vunpack.c.h.b16 %v2101
      %v2196 = vunpack.c.l.b16 %v2102
      %v2197 = vunpack.c.h.b16 %v2102
      %v2198 = vunpack.c.l.b16 %v2103
      %v2199 = vunpack.c.h.b16 %v2103
      %v2200 = vunpack.c.l.b16 %v2104
      %v2201 = vunpack.c.h.b16 %v2104
      %v2202 = vunpack.c.l.b16 %v2105
      %v2203 = vunpack.c.h.b16 %v2105
      %v2204 = vunpack.c.l.b16 %v2106
      %v2205 = vunpack.c.h.b16 %v2106
      %v2206 = vunpack.c.l.b16 %v2107
      %v2207 = vunpack.c.h.b16 %v2107
      %v2208 = vunpack.c.l.b16 %v2108
      %v2209 = vunpack.c.h.b16 %v2108
      %v2210 = vunpack.c.l.b16 %v2109
      %v2211 = vunpack.c.h.b16 %v2109
      %v2212 = vunpack.c.l.b16 %v2110
      %v2213 = vunpack.c.h.b16 %v2110
      %v2214 = vunpack.c.l.b16 %v2111
      %v2215 = vunpack.c.h.b16 %v2111
      %v2216 = vunpack.c.l.b16 %v2112
      %v2217 = vunpack.c.h.b16 %v2112
      %v2218 = vunpack.c.l.b16 %v2113
      %v2219 = vunpack.c.h.b16 %v2113
      %v2220 = vunpack.c.l.b16 %v2114
      %v2221 = vunpack.c.h.b16 %v2114
      %v2222 = vunpack.c.l.b16 %v2115
      %v2223 = vunpack.c.h.b16 %v2115
      %v2224 = vunpack.c.l.b16 %v2116
      %v2225 = vunpack.c.h.b16 %v2116
      %v2226 = vunpack.c.l.b16 %v2117
      %v2227 = vunpack.c.h.b16 %v2117
      %v2228 = vunpack.c.l.b16 %v2118
      %v2229 = vunpack.c.h.b16 %v2118
      %v2230 = vunpack.c.l.b16 %v2119
      %v2231 = vunpack.c.h.b16 %v2119
      %v2232 = vunpack.c.l.b16 %v2120
      %v2233 = vunpack.c.h.b16 %v2120
      %v2234 = vunpack.c.l.b16 %v2121
      %v2235 = vunpack.c.h.b16 %v2121
      %v2236 = vunpack.c.l.b16 %v2122
      %v2237 = vunpack.c.h.b16 %v2122
      %v2238 = vunpack.c.l.b16 %v2123
      %v2239 = vunpack.c.h.b16 %v2123
      %v2240 = vpack.c.b16 %v2186, %v2184
      %v2241 = vpack.c.b16 %v2187, %v2185
      %v2242 = vpack.c.b16 %v2190, %v2188
      %v2243 = vpack.c.b16 %v2191, %v2189
      %v2244 = vpack.c.b16 %v2194, %v2192
      %v2245 = vpack.c.b16 %v2195, %v2193
      %v2246 = vpack.c.b16 %v2198, %v2196
      %v2247 = vpack.c.b16 %v2199, %v2197
      %v2248 = vpack.c.b16 %v2202, %v2200
      %v2249 = vpack.c.b16 %v2203, %v2201
      %v2250 = vpack.c.b16 %v2206, %v2204
      %v2251 = vpack.c.b16 %v2207, %v2205
      %v2252 = vpack.c.b16 %v2210, %v2208
      %v2253 = vpack.c.b16 %v2211, %v2209
      %v2254 = vpack.c.b16 %v2214, %v2212
      %v2255 = vpack.c.b16 %v2215, %v2213
      %v2256 = vpack.c.b16 %v2218, %v2216
      %v2257 = vpack.c.b16 %v2219, %v2217
      %v2258 = vpack.c.b16 %v2222, %v2220
      %v2259 = vpack.c.b16 %v2223, %v2221
      %v2260 = vpack.c.b16 %v2226, %v2224
      %v2261 = vpack.c.b16 %v2227, %v2225
      %v2262 = vpack.c.b16 %v2230, %v2228
      %v2263 = vpack.c.b16 %v2231, %v2229
      %v2264 = vpack.c.b16 %v2234, %v2232
      %v2265 = vpack.c.b16 %v2235, %v2233
      %v2266 = vpack.c.b16 %v2238, %v2236
      %v2267 = vpack.c.b16 %v2239, %v2237
      %v2328 = vunpack.c.l.b16 %v2124
      %v2329 = vunpack.c.l.b16 %v2125
      %v2330 = vunpack.c.l.b16 %v2126
      %v2331 = vunpack.c.l.b16 %v2127
      %v2332 = vunpack.c.l.b16 %v2128
      %v2333 = vunpack.c.l.b16 %v2129
      %v2334 = vunpack.c.l.b16 %v2130
      %v2335 = vunpack.c.l.b16 %v2131
      %v2336 = vunpack.c.l.b16 %v2132
      %v2337 = vunpack.c.l.b16 %v2133
      %v2338 = vunpack.c.l.b16 %v2134
      %v2339 = vunpack.c.l.b16 %v2135
      %v2340 = vunpack.c.l.b16 %v2136
      %v2341 = vunpack.c.l.b16 %v2137
      %v2342 = vunpack.c.l.b16 %v2138
      %v2343 = vunpack.c.l.b16 %v2139
      %v2344 = vunpack.c.l.b16 %v2140
      %v2345 = vunpack.c.l.b16 %v2141
      %v2346 = vunpack.c.l.b16 %v2142
      %v2347 = vunpack.c.l.b16 %v2143
      %v2348 = vunpack.c.l.b16 %v2144
      %v2349 = vunpack.c.l.b16 %v2145
      %v2350 = vunpack.c.l.b16 %v2146
      %v2351 = vunpack.c.l.b16 %v2147
      %v2352 = vunpack.c.l.b16 %v2148
      %v2353 = vunpack.c.l.b16 %v2149
      %v2354 = vunpack.c.l.b16 %v2150
      %v2355 = vunpack.c.l.b16 %v2151
      %v2356 = vunpack.c.l.b16 %v2152
      %v2357 = vunpack.c.l.b16 %v2153
      %v2358 = vunpack.c.l.b16 %v2154
      %v2359 = vunpack.c.l.b16 %v2155
      %v2360 = vpack.c.b16 %v2329, %v2328
      %v2361 = vpack.c.b16 %v2331, %v2330
      %v2362 = vpack.c.b16 %v2333, %v2332
      %v2363 = vpack.c.b16 %v2335, %v2334
      %v2364 = vpack.c.b16 %v2337, %v2336
      %v2365 = vpack.c.b16 %v2339, %v2338
      %v2366 = vpack.c.b16 %v2341, %v2340
      %v2367 = vpack.c.b16 %v2343, %v2342
      %v2368 = vpack.c.b16 %v2345, %v2344
      %v2369 = vpack.c.b16 %v2347, %v2346
      %v2370 = vpack.c.b16 %v2349, %v2348
      %v2371 = vpack.c.b16 %v2351, %v2350
      %v2372 = vpack.c.b16 %v2353, %v2352
      %v2373 = vpack.c.b16 %v2355, %v2354
      %v2374 = vpack.c.b16 %v2357, %v2356
      %v2375 = vpack.c.b16 %v2359, %v2358
      %2392 = vmatprep.subr.bf16.mxu0 0
      %2393 = vmatpush1.bf16.msra.mxu0 %v2360
      %2394 = vmatprep.subr.bf16.mxu0 0
      %2395 = vmatpush1.bf16.msra.mxu0 %v2361
      %2396 = vmatprep.subr.bf16.mxu0 0
      %2397 = vmatpush1.bf16.msra.mxu0 %v2362
      %2398 = vmatprep.subr.bf16.mxu0 0
      %2399 = vmatpush1.bf16.msra.mxu0 %v2363
      %2400 = vmatprep.subr.bf16.mxu0 0
      %2401 = vmatpush1.bf16.msra.mxu0 %v2364
      %2402 = vmatprep.subr.bf16.mxu0 0
      %2403 = vmatpush1.bf16.msra.mxu0 %v2365
      %2404 = vmatprep.subr.bf16.mxu0 0
      %2405 = vmatpush1.bf16.msra.mxu0 %v2366
      %2406 = vmatprep.subr.bf16.mxu0 0
      %2407 = vmatpush1.bf16.msra.mxu0 %v2367
      %2408 = vmatprep.subr.bf16.mxu0 0
      %2409 = vmatpush1.bf16.msra.mxu0 %v2368
      %2410 = vmatprep.subr.bf16.mxu0 0
      %2411 = vmatpush1.bf16.msra.mxu0 %v2369
      %2412 = vmatprep.subr.bf16.mxu0 0
      %2413 = vmatpush1.bf16.msra.mxu0 %v2370
      %2414 = vmatprep.subr.bf16.mxu0 0
      %2415 = vmatpush1.bf16.msra.mxu0 %v2371
      %2416 = vmatprep.subr.bf16.mxu0 0
      %2417 = vmatpush1.bf16.msra.mxu0 %v2372
      %2418 = vmatprep.subr.bf16.mxu0 0
      %2419 = vmatpush1.bf16.msra.mxu0 %v2373
      %2420 = vmatprep.subr.bf16.mxu0 0
      %2421 = vmatpush1.bf16.msra.mxu0 %v2374
      %2422 = vmatprep.subr.bf16.mxu0 0
      %2423 = vmatpush1.bf16.msra.mxu0 %v2375
      %2424 = vmatprep.mubr.bf16.mxu0 %v2241
      %2425 = vmatmul.mubr.bf16.gmra.mrb[0].mxu0 %v2240
      %v2426 = vpop.f32.mrb[0].mxu0
      %v2427 = vadd.f32 0.0, %v2426
      %v2428 = vpop.f32.mrb[0].mxu0
      %v2429 = vpop.f32.mrb[0].mxu0
      %v2430 = vadd.f32 0.0, %v2429
      %v2431 = vpop.f32.mrb[0].mxu0
      %2432 = vmatprep.mubr.bf16.mxu0 %v2243
      %2433 = vmatmul.mubr.bf16.gmra.mrb[0].mxu0 %v2242
      %v2434 = vpop.f32.mrb[0].mxu0
      %v2435 = vadd.f32 0.0, %v2434
      %v2436 = vpop.f32.mrb[0].mxu0
      %v2437 = vpop.f32.mrb[0].mxu0
      %v2438 = vadd.f32 0.0, %v2437
      %v2439 = vpop.f32.mrb[0].mxu0
      %2440 = vmatprep.mubr.bf16.mxu0 %v2245
      %2441 = vmatmul.mubr.bf16.gmra.mrb[0].mxu0 %v2244
      %v2442 = vpop.f32.mrb[0].mxu0
      %v2443 = vadd.f32 0.0, %v2442
      %v2444 = vpop.f32.mrb[0].mxu0
      %v2445 = vpop.f32.mrb[0].mxu0
      %v2446 = vadd.f32 0.0, %v2445
      %v2447 = vpop.f32.mrb[0].mxu0
      %2448 = vmatprep.mubr.bf16.mxu0 %v2247
      %2449 = vmatmul.mubr.bf16.gmra.mrb[0].mxu0 %v2246
      %v2450 = vpop.f32.mrb[0].mxu0
      %v2451 = vadd.f32 0.0, %v2450
      %v2452 = vpop.f32.mrb[0].mxu0
      %v2453 = vpop.f32.mrb[0].mxu0
      %v2454 = vadd.f32 0.0, %v2453
      %v2455 = vpop.f32.mrb[0].mxu0
      %2456 = vmatprep.mubr.bf16.mxu0 %v2249
      %2457 = vmatmul.mubr.bf16.gmra.mrb[0].mxu0 %v2248
      %v2458 = vpop.f32.mrb[0].mxu0
      %v2459 = vadd.f32 0.0, %v2458
      %v2460 = vpop.f32.mrb[0].mxu0
      %v2461 = vpop.f32.mrb[0].mxu0
      %v2462 = vadd.f32 0.0, %v2461
      %v2463 = vpop.f32.mrb[0].mxu0
      %2464 = vmatprep.mubr.bf16.mxu0 %v2251
      %2465 = vmatmul.mubr.bf16.gmra.mrb[0].mxu0 %v2250
      %v2466 = vpop.f32.mrb[0].mxu0
      %v2467 = vadd.f32 0.0, %v2466
      %v2468 = vpop.f32.mrb[0].mxu0
      %v2469 = vpop.f32.mrb[0].mxu0
      %v2470 = vadd.f32 0.0, %v2469
      %v2471 = vpop.f32.mrb[0].mxu0
      %2472 = vmatprep.mubr.bf16.mxu0 %v2253
      %2473 = vmatmul.mubr.bf16.gmra.mrb[0].mxu0 %v2252
      %v2474 = vpop.f32.mrb[0].mxu0
      %v2475 = vadd.f32 0.0, %v2474
      %v2476 = vpop.f32.mrb[0].mxu0
      %v2477 = vpop.f32.mrb[0].mxu0
      %v2478 = vadd.f32 0.0, %v2477
      %v2479 = vpop.f32.mrb[0].mxu0
      %2480 = vmatprep.mubr.bf16.mxu0 %v2255
      %2481 = vmatmul.mubr.bf16.gmra.mrb[0].mxu0 %v2254
      %v2482 = vpop.f32.mrb[0].mxu0
      %v2483 = vadd.f32 0.0, %v2482
      %v2484 = vpop.f32.mrb[0].mxu0
      %v2485 = vpop.f32.mrb[0].mxu0
      %v2486 = vadd.f32 0.0, %v2485
      %v2487 = vpop.f32.mrb[0].mxu0
      %2488 = vmatprep.mubr.bf16.mxu0 %v2257
      %2489 = vmatmul.mubr.bf16.gmra.mrb[0].mxu0 %v2256
      %v2490 = vpop.f32.mrb[0].mxu0
      %v2491 = vadd.f32 0.0, %v2490
      %v2492 = vpop.f32.mrb[0].mxu0
      %v2493 = vpop.f32.mrb[0].mxu0
      %v2494 = vadd.f32 0.0, %v2493
      %v2495 = vpop.f32.mrb[0].mxu0
      %2496 = vmatprep.mubr.bf16.mxu0 %v2259
      %2497 = vmatmul.mubr.bf16.gmra.mrb[0].mxu0 %v2258
      %v2498 = vpop.f32.mrb[0].mxu0
      %v2499 = vadd.f32 0.0, %v2498
      %v2500 = vpop.f32.mrb[0].mxu0
      %v2501 = vpop.f32.mrb[0].mxu0
      %v2502 = vadd.f32 0.0, %v2501
      %v2503 = vpop.f32.mrb[0].mxu0
      %2504 = vmatprep.mubr.bf16.mxu0 %v2261
      %2505 = vmatmul.mubr.bf16.gmra.mrb[0].mxu0 %v2260
      %v2506 = vpop.f32.mrb[0].mxu0
      %v2507 = vadd.f32 0.0, %v2506
      %v2508 = vpop.f32.mrb[0].mxu0
      %v2509 = vpop.f32.mrb[0].mxu0
      %v2510 = vadd.f32 0.0, %v2509
      %v2511 = vpop.f32.mrb[0].mxu0
      %2512 = vmatprep.mubr.bf16.mxu0 %v2263
      %2513 = vmatmul.mubr.bf16.gmra.mrb[0].mxu0 %v2262
      %v2514 = vpop.f32.mrb[0].mxu0
      %v2515 = vadd.f32 0.0, %v2514
      %v2516 = vpop.f32.mrb[0].mxu0
      %v2517 = vpop.f32.mrb[0].mxu0
      %v2518 = vadd.f32 0.0, %v2517
      %v2519 = vpop.f32.mrb[0].mxu0
      %2520 = vmatprep.mubr.bf16.mxu0 %v2265
      %2521 = vmatmul.mubr.bf16.gmra.mrb[0].mxu0 %v2264
      %v2522 = vpop.f32.mrb[0].mxu0
      %v2523 = vadd.f32 0.0, %v2522
      %v2524 = vpop.f32.mrb[0].mxu0
      %v2525 = vpop.f32.mrb[0].mxu0
      %v2526 = vadd.f32 0.0, %v2525
      %v2527 = vpop.f32.mrb[0].mxu0
      %2528 = vmatprep.mubr.bf16.mxu0 %v2267
      %2529 = vmatmul.mubr.bf16.gmra.mrb[0].mxu0 %v2266
      %v2530 = vpop.f32.mrb[0].mxu0
      %v2531 = vadd.f32 0.0, %v2530
      %v2532 = vpop.f32.mrb[0].mxu0
      %v2533 = vpop.f32.mrb[0].mxu0
      %v2534 = vadd.f32 0.0, %v2533
      %v2535 = vpop.f32.mrb[0].mxu0
      %2536 = vdwg.mxu0
      %v2537 = vadd.f32 %v2068, %v2427
      %v2538 = vadd.f32 %v2069, %v2430
      %v2539 = vadd.f32 %v2070, %v2435
      %v2540 = vadd.f32 %v2071, %v2438
      %v2541 = vadd.f32 %v2072, %v2443
      %v2542 = vadd.f32 %v2073, %v2446
      %v2543 = vadd.f32 %v2074, %v2451
      %v2544 = vadd.f32 %v2075, %v2454
      %v2545 = vadd.f32 %v2076, %v2459
      %v2546 = vadd.f32 %v2077, %v2462
      %v2547 = vadd.f32 %v2078, %v2467
      %v2548 = vadd.f32 %v2079, %v2470
      %v2549 = vadd.f32 %v2080, %v2475
      %v2550 = vadd.f32 %v2081, %v2478
      %v2551 = vadd.f32 %v2082, %v2483
      %v2552 = vadd.f32 %v2083, %v2486
      %v2553 = vadd.f32 %v2084, %v2491
      %v2554 = vadd.f32 %v2085, %v2494
      %v2555 = vadd.f32 %v2086, %v2499
      %v2556 = vadd.f32 %v2087, %v2502
      %v2557 = vadd.f32 %v2088, %v2507
      %v2558 = vadd.f32 %v2089, %v2510
      %v2559 = vadd.f32 %v2090, %v2515
      %v2560 = vadd.f32 %v2091, %v2518
      %v2561 = vadd.f32 %v2092, %v2523
      %v2562 = vadd.f32 %v2093, %v2526
      %v2563 = vadd.f32 %v2094, %v2531
      %v2564 = vadd.f32 %v2095, %v2534
      %v2565 = vld [vmem:[#allocation2 + $0x18] sm:$0xff]
      %v2566 = vld [vmem:[#allocation2 + $0x20] sm:$0xff]
      %v2567 = vld [vmem:[#allocation2 + $0x28] sm:$0xff]
      %v2568 = vld [vmem:[#allocation2 + $0x30] sm:$0xff]
      %v2569 = vld [vmem:[#allocation2 + $0x38] sm:$0xff]
      %v2570 = vld [vmem:[#allocation2 + $0x40] sm:$0xff]
      %v2571 = vld [vmem:[#allocation2 + $0x48] sm:$0xff]
      %v2572 = vld [vmem:[#allocation2 + $0x50] sm:$0xff]
      %v2573 = vld [vmem:[#allocation2 + $0x58] sm:$0xff]
      %v2574 = vld [vmem:[#allocation2 + $0x60] sm:$0xff]
      %v2575 = vld [vmem:[#allocation2 + $0x68] sm:$0xff]
      %v2576 = vld [vmem:[#allocation2 + $0x70] sm:$0xff]
      %v2577 = vld [vmem:[#allocation2 + $0x78] sm:$0xff]
      %v2578 = vld [vmem:[#allocation2 + $0x80] sm:$0xff]
      %v2579 = vld [vmem:[#allocation2 + $0x88] sm:$0xff]
      %v2580 = vld [vmem:[#allocation2 + $0x90] sm:$0xff]
      %v2581 = vld [vmem:[#allocation2 + $0x98] sm:$0xff]
      %v2582 = vld [vmem:[#allocation2 + $0xa0] sm:$0xff]
      %v2583 = vld [vmem:[#allocation2 + $0xa8] sm:$0xff]
      %v2584 = vld [vmem:[#allocation2 + $0xb0] sm:$0xff]
      %v2585 = vld [vmem:[#allocation2 + $0xb8] sm:$0xff]
      %v2586 = vld [vmem:[#allocation2 + $0xc0] sm:$0xff]
      %v2587 = vld [vmem:[#allocation2 + $0xc8] sm:$0xff]
      %v2588 = vld [vmem:[#allocation2 + $0xd0] sm:$0xff]
      %v2589 = vld [vmem:[#allocation2 + $0xd8] sm:$0xff]
      %v2590 = vld [vmem:[#allocation2 + $0xe0] sm:$0xff]
      %v2591 = vld [vmem:[#allocation2 + $0xe8] sm:$0xff]
      %v2592 = vld [vmem:[#allocation2 + $0xf0] sm:$0xff]
      %v2593 = vld [vmem:[#allocation2 + $0xf8] sm:$0x11]
      %v2594 = vld [vmem:[%s4 + $0x200] sm:$0xf]
      %v2595 = vld [vmem:[%s4 + $0x204] sm:$0xf]
      %v2596 = vld [vmem:[%s4 + $0x208] sm:$0xf]
      %v2597 = vld [vmem:[%s4 + $0x20c] sm:$0xf]
      %v2598 = vld [vmem:[%s4 + $0x210] sm:$0xf]
      %v2599 = vld [vmem:[%s4 + $0x214] sm:$0xf]
      %v2600 = vld [vmem:[%s4 + $0x218] sm:$0xf]
      %v2601 = vld [vmem:[%s4 + $0x21c] sm:$0xf]
      %v2602 = vld [vmem:[%s4 + $0x220] sm:$0xf]
      %v2603 = vld [vmem:[%s4 + $0x224] sm:$0xf]
      %v2604 = vld [vmem:[%s4 + $0x228] sm:$0xf]
      %v2605 = vld [vmem:[%s4 + $0x22c] sm:$0xf]
      %v2606 = vld [vmem:[%s4 + $0x230] sm:$0xf]
      %v2607 = vld [vmem:[%s4 + $0x234] sm:$0xf]
      %v2608 = vld [vmem:[%s4 + $0x238] sm:$0xf]
      %v2609 = vld [vmem:[%s4 + $0x23c] sm:$0xf]
      %v2610 = vld [vmem:[%s4 + $0x240] sm:$0xf]
      %v2611 = vld [vmem:[%s4 + $0x244] sm:$0xf]
      %v2612 = vld [vmem:[%s4 + $0x248] sm:$0xf]
      %v2613 = vld [vmem:[%s4 + $0x24c] sm:$0xf]
      %v2614 = vld [vmem:[%s4 + $0x250] sm:$0xf]
      %v2615 = vld [vmem:[%s4 + $0x254] sm:$0xf]
      %v2616 = vld [vmem:[%s4 + $0x258] sm:$0xf]
      %v2617 = vld [vmem:[%s4 + $0x25c] sm:$0xf]
      %v2618 = vld [vmem:[%s4 + $0x260] sm:$0xf]
      %v2619 = vld [vmem:[%s4 + $0x264] sm:$0xf]
      %v2620 = vld [vmem:[%s4 + $0x268] sm:$0xf]
      %v2621 = vld [vmem:[%s4 + $0x26c] sm:$0xf]
      %v2622 = vld [vmem:[%s4 + $0x270] sm:$0xf]
      %v2623 = vld [vmem:[%s4 + $0x274] sm:$0xf]
      %v2624 = vld [vmem:[%s4 + $0x278] sm:$0xf]
      %v2625 = vld [vmem:[%s4 + $0x27c] sm:$0xf]
      %v2655 = vunpack.c.l.b16 %v2565
      %v2656 = vunpack.c.h.b16 %v2565
      %v2657 = vunpack.c.l.b16 %v2566
      %v2658 = vunpack.c.h.b16 %v2566
      %v2659 = vunpack.c.l.b16 %v2567
      %v2660 = vunpack.c.h.b16 %v2567
      %v2661 = vunpack.c.l.b16 %v2568
      %v2662 = vunpack.c.h.b16 %v2568
      %v2663 = vunpack.c.l.b16 %v2569
      %v2664 = vunpack.c.h.b16 %v2569
      %v2665 = vunpack.c.l.b16 %v2570
      %v2666 = vunpack.c.h.b16 %v2570
      %v2667 = vunpack.c.l.b16 %v2571
      %v2668 = vunpack.c.h.b16 %v2571
      %v2669 = vunpack.c.l.b16 %v2572
      %v2670 = vunpack.c.h.b16 %v2572
      %v2671 = vunpack.c.l.b16 %v2573
      %v2672 = vunpack.c.h.b16 %v2573
      %v2673 = vunpack.c.l.b16 %v2574
      %v2674 = vunpack.c.h.b16 %v2574
      %v2675 = vunpack.c.l.b16 %v2575
      %v2676 = vunpack.c.h.b16 %v2575
      %v2677 = vunpack.c.l.b16 %v2576
      %v2678 = vunpack.c.h.b16 %v2576
      %v2679 = vunpack.c.l.b16 %v2577
      %v2680 = vunpack.c.h.b16 %v2577
      %v2681 = vunpack.c.l.b16 %v2578
      %v2682 = vunpack.c.h.b16 %v2578
      %v2683 = vunpack.c.l.b16 %v2579
      %v2684 = vunpack.c.h.b16 %v2579
      %v2685 = vunpack.c.l.b16 %v2580
      %v2686 = vunpack.c.h.b16 %v2580
      %v2687 = vunpack.c.l.b16 %v2581
      %v2688 = vunpack.c.h.b16 %v2581
      %v2689 = vunpack.c.l.b16 %v2582
      %v2690 = vunpack.c.h.b16 %v2582
      %v2691 = vunpack.c.l.b16 %v2583
      %v2692 = vunpack.c.h.b16 %v2583
      %v2693 = vunpack.c.l.b16 %v2584
      %v2694 = vunpack.c.h.b16 %v2584
      %v2695 = vunpack.c.l.b16 %v2585
      %v2696 = vunpack.c.h.b16 %v2585
      %v2697 = vunpack.c.l.b16 %v2586
      %v2698 = vunpack.c.h.b16 %v2586
      %v2699 = vunpack.c.l.b16 %v2587
      %v2700 = vunpack.c.h.b16 %v2587
      %v2701 = vunpack.c.l.b16 %v2588
      %v2702 = vunpack.c.h.b16 %v2588
      %v2703 = vunpack.c.l.b16 %v2589
      %v2704 = vunpack.c.h.b16 %v2589
      %v2705 = vunpack.c.l.b16 %v2590
      %v2706 = vunpack.c.h.b16 %v2590
      %v2707 = vunpack.c.l.b16 %v2591
      %v2708 = vunpack.c.h.b16 %v2591
      %v2709 = vunpack.c.l.b16 %v2592
      %v2710 = vunpack.c.h.b16 %v2592
      %v2711 = vunpack.c.l.b16 %v2593
      %v2712 = vunpack.c.h.b16 %v2593
      %v2713 = vpack.c.b16 %v2657, %v2655
      %v2714 = vpack.c.b16 %v2658, %v2656
      %v2715 = vpack.c.b16 %v2661, %v2659
      %v2716 = vpack.c.b16 %v2662, %v2660
      %v2717 = vpack.c.b16 %v2665, %v2663
      %v2718 = vpack.c.b16 %v2666, %v2664
      %v2719 = vpack.c.b16 %v2669, %v2667
      %v2720 = vpack.c.b16 %v2670, %v2668
      %v2721 = vpack.c.b16 %v2673, %v2671
      %v2722 = vpack.c.b16 %v2674, %v2672
      %v2723 = vpack.c.b16 %v2677, %v2675
      %v2724 = vpack.c.b16 %v2678, %v2676
      %v2725 = vpack.c.b16 %v2681, %v2679
      %v2726 = vpack.c.b16 %v2682, %v2680
      %v2727 = vpack.c.b16 %v2685, %v2683
      %v2728 = vpack.c.b16 %v2686, %v2684
      %v2729 = vpack.c.b16 %v2689, %v2687
      %v2730 = vpack.c.b16 %v2690, %v2688
      %v2731 = vpack.c.b16 %v2693, %v2691
      %v2732 = vpack.c.b16 %v2694, %v2692
      %v2733 = vpack.c.b16 %v2697, %v2695
      %v2734 = vpack.c.b16 %v2698, %v2696
      %v2735 = vpack.c.b16 %v2701, %v2699
      %v2736 = vpack.c.b16 %v2702, %v2700
      %v2737 = vpack.c.b16 %v2705, %v2703
      %v2738 = vpack.c.b16 %v2706, %v2704
      %v2739 = vpack.c.b16 %v2709, %v2707
      %v2740 = vpack.c.b16 %v2710, %v2708
      %v2741 = vpack.c.b16 %v2711, %v2711
      %v2742 = vpack.c.b16 %v2712, %v2712
      %v2744 = vshrl.u32 %v2713, 16
      %v2746 = vshll.u32 %v2713, 16
      %v2748 = vrot.slane %v2746, 1
      %v2749 = vor.u32 %v2744, %v2748
      %v2751 = vshll.u32 %v2715, 16
      %v2753 = vrot.slane %v2751, 1
      %v2754 = vsel %vm931, %v2749, %v2753
      %v2756 = vshrl.u32 %v2714, 16
      %v2758 = vshll.u32 %v2714, 16
      %v2760 = vrot.slane %v2758, 1
      %v2761 = vor.u32 %v2756, %v2760
      %v2763 = vshll.u32 %v2716, 16
      %v2765 = vrot.slane %v2763, 1
      %v2766 = vsel %vm931, %v2761, %v2765
      %v2767 = vshrl.u32 %v2715, 16
      %v2769 = vor.u32 %v2767, %v2753
      %v2771 = vshll.u32 %v2717, 16
      %v2773 = vrot.slane %v2771, 1
      %v2774 = vsel %vm931, %v2769, %v2773
      %v2775 = vshrl.u32 %v2716, 16
      %v2777 = vor.u32 %v2775, %v2765
      %v2779 = vshll.u32 %v2718, 16
      %v2781 = vrot.slane %v2779, 1
      %v2782 = vsel %vm931, %v2777, %v2781
      %v2783 = vshrl.u32 %v2717, 16
      %v2785 = vor.u32 %v2783, %v2773
      %v2787 = vshll.u32 %v2719, 16
      %v2789 = vrot.slane %v2787, 1
      %v2790 = vsel %vm931, %v2785, %v2789
      %v2791 = vshrl.u32 %v2718, 16
      %v2793 = vor.u32 %v2791, %v2781
      %v2795 = vshll.u32 %v2720, 16
      %v2797 = vrot.slane %v2795, 1
      %v2798 = vsel %vm931, %v2793, %v2797
      %v2799 = vshrl.u32 %v2719, 16
      %v2801 = vor.u32 %v2799, %v2789
      %v2803 = vshll.u32 %v2721, 16
      %v2805 = vrot.slane %v2803, 1
      %v2806 = vsel %vm931, %v2801, %v2805
      %v2807 = vshrl.u32 %v2720, 16
      %v2809 = vor.u32 %v2807, %v2797
      %v2811 = vshll.u32 %v2722, 16
      %v2813 = vrot.slane %v2811, 1
      %v2814 = vsel %vm931, %v2809, %v2813
      %v2815 = vshrl.u32 %v2721, 16
      %v2817 = vor.u32 %v2815, %v2805
      %v2819 = vshll.u32 %v2723, 16
      %v2821 = vrot.slane %v2819, 1
      %v2822 = vsel %vm931, %v2817, %v2821
      %v2823 = vshrl.u32 %v2722, 16
      %v2825 = vor.u32 %v2823, %v2813
      %v2827 = vshll.u32 %v2724, 16
      %v2829 = vrot.slane %v2827, 1
      %v2830 = vsel %vm931, %v2825, %v2829
      %v2831 = vshrl.u32 %v2723, 16
      %v2833 = vor.u32 %v2831, %v2821
      %v2835 = vshll.u32 %v2725, 16
      %v2837 = vrot.slane %v2835, 1
      %v2838 = vsel %vm931, %v2833, %v2837
      %v2839 = vshrl.u32 %v2724, 16
      %v2841 = vor.u32 %v2839, %v2829
      %v2843 = vshll.u32 %v2726, 16
      %v2845 = vrot.slane %v2843, 1
      %v2846 = vsel %vm931, %v2841, %v2845
      %v2847 = vshrl.u32 %v2725, 16
      %v2849 = vor.u32 %v2847, %v2837
      %v2851 = vshll.u32 %v2727, 16
      %v2853 = vrot.slane %v2851, 1
      %v2854 = vsel %vm931, %v2849, %v2853
      %v2855 = vshrl.u32 %v2726, 16
      %v2857 = vor.u32 %v2855, %v2845
      %v2859 = vshll.u32 %v2728, 16
      %v2861 = vrot.slane %v2859, 1
      %v2862 = vsel %vm931, %v2857, %v2861
      %v2863 = vshrl.u32 %v2727, 16
      %v2865 = vor.u32 %v2863, %v2853
      %v2867 = vshll.u32 %v2729, 16
      %v2869 = vrot.slane %v2867, 1
      %v2870 = vsel %vm931, %v2865, %v2869
      %v2871 = vshrl.u32 %v2728, 16
      %v2873 = vor.u32 %v2871, %v2861
      %v2875 = vshll.u32 %v2730, 16
      %v2877 = vrot.slane %v2875, 1
      %v2878 = vsel %vm931, %v2873, %v2877
      %v2879 = vshrl.u32 %v2729, 16
      %v2881 = vor.u32 %v2879, %v2869
      %v2883 = vshll.u32 %v2731, 16
      %v2885 = vrot.slane %v2883, 1
      %v2886 = vsel %vm931, %v2881, %v2885
      %v2887 = vshrl.u32 %v2730, 16
      %v2889 = vor.u32 %v2887, %v2877
      %v2891 = vshll.u32 %v2732, 16
      %v2893 = vrot.slane %v2891, 1
      %v2894 = vsel %vm931, %v2889, %v2893
      %v2895 = vshrl.u32 %v2731, 16
      %v2897 = vor.u32 %v2895, %v2885
      %v2899 = vshll.u32 %v2733, 16
      %v2901 = vrot.slane %v2899, 1
      %v2902 = vsel %vm931, %v2897, %v2901
      %v2903 = vshrl.u32 %v2732, 16
      %v2905 = vor.u32 %v2903, %v2893
      %v2907 = vshll.u32 %v2734, 16
      %v2909 = vrot.slane %v2907, 1
      %v2910 = vsel %vm931, %v2905, %v2909
      %v2911 = vshrl.u32 %v2733, 16
      %v2913 = vor.u32 %v2911, %v2901
      %v2915 = vshll.u32 %v2735, 16
      %v2917 = vrot.slane %v2915, 1
      %v2918 = vsel %vm931, %v2913, %v2917
      %v2919 = vshrl.u32 %v2734, 16
      %v2921 = vor.u32 %v2919, %v2909
      %v2923 = vshll.u32 %v2736, 16
      %v2925 = vrot.slane %v2923, 1
      %v2926 = vsel %vm931, %v2921, %v2925
      %v2927 = vshrl.u32 %v2735, 16
      %v2929 = vor.u32 %v2927, %v2917
      %v2931 = vshll.u32 %v2737, 16
      %v2933 = vrot.slane %v2931, 1
      %v2934 = vsel %vm931, %v2929, %v2933
      %v2935 = vshrl.u32 %v2736, 16
      %v2937 = vor.u32 %v2935, %v2925
      %v2939 = vshll.u32 %v2738, 16
      %v2941 = vrot.slane %v2939, 1
      %v2942 = vsel %vm931, %v2937, %v2941
      %v2943 = vshrl.u32 %v2737, 16
      %v2945 = vor.u32 %v2943, %v2933
      %v2947 = vshll.u32 %v2739, 16
      %v2949 = vrot.slane %v2947, 1
      %v2950 = vsel %vm931, %v2945, %v2949
      %v2951 = vshrl.u32 %v2738, 16
      %v2953 = vor.u32 %v2951, %v2941
      %v2955 = vshll.u32 %v2740, 16
      %v2957 = vrot.slane %v2955, 1
      %v2958 = vsel %vm931, %v2953, %v2957
      %v2959 = vshrl.u32 %v2739, 16
      %v2961 = vor.u32 %v2959, %v2949
      %v2963 = vshll.u32 %v2741, 16
      %v2965 = vrot.slane %v2963, 1
      %v2966 = vsel %vm931, %v2961, %v2965
      %v2967 = vshrl.u32 %v2740, 16
      %v2969 = vor.u32 %v2967, %v2957
      %v2971 = vshll.u32 %v2742, 16
      %v2973 = vrot.slane %v2971, 1
      %v2974 = vsel %vm931, %v2969, %v2973
      %v3035 = vunpack.c.l.b16 %v2594
      %v3036 = vunpack.c.l.b16 %v2595
      %v3037 = vunpack.c.l.b16 %v2596
      %v3038 = vunpack.c.l.b16 %v2597
      %v3039 = vunpack.c.l.b16 %v2598
      %v3040 = vunpack.c.l.b16 %v2599
      %v3041 = vunpack.c.l.b16 %v2600
      %v3042 = vunpack.c.l.b16 %v2601
      %v3043 = vunpack.c.l.b16 %v2602
      %v3044 = vunpack.c.l.b16 %v2603
      %v3045 = vunpack.c.l.b16 %v2604
      %v3046 = vunpack.c.l.b16 %v2605
      %v3047 = vunpack.c.l.b16 %v2606
      %v3048 = vunpack.c.l.b16 %v2607
      %v3049 = vunpack.c.l.b16 %v2608
      %v3050 = vunpack.c.l.b16 %v2609
      %v3051 = vunpack.c.l.b16 %v2610
      %v3052 = vunpack.c.l.b16 %v2611
      %v3053 = vunpack.c.l.b16 %v2612
      %v3054 = vunpack.c.l.b16 %v2613
      %v3055 = vunpack.c.l.b16 %v2614
      %v3056 = vunpack.c.l.b16 %v2615
      %v3057 = vunpack.c.l.b16 %v2616
      %v3058 = vunpack.c.l.b16 %v2617
      %v3059 = vunpack.c.l.b16 %v2618
      %v3060 = vunpack.c.l.b16 %v2619
      %v3061 = vunpack.c.l.b16 %v2620
      %v3062 = vunpack.c.l.b16 %v2621
      %v3063 = vunpack.c.l.b16 %v2622
      %v3064 = vunpack.c.l.b16 %v2623
      %v3065 = vunpack.c.l.b16 %v2624
      %v3066 = vunpack.c.l.b16 %v2625
      %v3067 = vpack.c.b16 %v3036, %v3035
      %v3068 = vpack.c.b16 %v3038, %v3037
      %v3069 = vpack.c.b16 %v3040, %v3039
      %v3070 = vpack.c.b16 %v3042, %v3041
      %v3071 = vpack.c.b16 %v3044, %v3043
      %v3072 = vpack.c.b16 %v3046, %v3045
      %v3073 = vpack.c.b16 %v3048, %v3047
      %v3074 = vpack.c.b16 %v3050, %v3049
      %v3075 = vpack.c.b16 %v3052, %v3051
      %v3076 = vpack.c.b16 %v3054, %v3053
      %v3077 = vpack.c.b16 %v3056, %v3055
      %v3078 = vpack.c.b16 %v3058, %v3057
      %v3079 = vpack.c.b16 %v3060, %v3059
      %v3080 = vpack.c.b16 %v3062, %v3061
      %v3081 = vpack.c.b16 %v3064, %v3063
      %v3082 = vpack.c.b16 %v3066, %v3065
      %3099 = vmatprep.subr.bf16.mxu0 0
      %3100 = vmatpush1.bf16.msra.mxu0 %v3067
      %3101 = vmatprep.subr.bf16.mxu0 0
      %3102 = vmatpush1.bf16.msra.mxu0 %v3068
      %3103 = vmatprep.subr.bf16.mxu0 0
      %3104 = vmatpush1.bf16.msra.mxu0 %v3069
      %3105 = vmatprep.subr.bf16.mxu0 0
      %3106 = vmatpush1.bf16.msra.mxu0 %v3070
      %3107 = vmatprep.subr.bf16.mxu0 0
      %3108 = vmatpush1.bf16.msra.mxu0 %v3071
      %3109 = vmatprep.subr.bf16.mxu0 0
      %3110 = vmatpush1.bf16.msra.mxu0 %v3072
      %3111 = vmatprep.subr.bf16.mxu0 0
      %3112 = vmatpush1.bf16.msra.mxu0 %v3073
      %3113 = vmatprep.subr.bf16.mxu0 0
      %3114 = vmatpush1.bf16.msra.mxu0 %v3074
      %3115 = vmatprep.subr.bf16.mxu0 0
      %3116 = vmatpush1.bf16.msra.mxu0 %v3075
      %3117 = vmatprep.subr.bf16.mxu0 0
      %3118 = vmatpush1.bf16.msra.mxu0 %v3076
      %3119 = vmatprep.subr.bf16.mxu0 0
      %3120 = vmatpush1.bf16.msra.mxu0 %v3077
      %3121 = vmatprep.subr.bf16.mxu0 0
      %3122 = vmatpush1.bf16.msra.mxu0 %v3078
      %3123 = vmatprep.subr.bf16.mxu0 0
      %3124 = vmatpush1.bf16.msra.mxu0 %v3079
      %3125 = vmatprep.subr.bf16.mxu0 0
      %3126 = vmatpush1.bf16.msra.mxu0 %v3080
      %3127 = vmatprep.subr.bf16.mxu0 0
      %3128 = vmatpush1.bf16.msra.mxu0 %v3081
      %3129 = vmatprep.subr.bf16.mxu0 0
      %3130 = vmatpush1.bf16.msra.mxu0 %v3082
      %3131 = vmatprep.mubr.bf16.mxu0 %v2766
      %3132 = vmatmul.mubr.bf16.gmra.mrb[0].mxu0 %v2754
      %v3133 = vpop.f32.mrb[0].mxu0
      %v3134 = vadd.f32 0.0, %v3133
      %v3135 = vpop.f32.mrb[0].mxu0
      %v3136 = vpop.f32.mrb[0].mxu0
      %v3137 = vadd.f32 0.0, %v3136
      %v3138 = vpop.f32.mrb[0].mxu0
      %3139 = vmatprep.mubr.bf16.mxu0 %v2782
      %3140 = vmatmul.mubr.bf16.gmra.mrb[0].mxu0 %v2774
      %v3141 = vpop.f32.mrb[0].mxu0
      %v3142 = vadd.f32 0.0, %v3141
      %v3143 = vpop.f32.mrb[0].mxu0
      %v3144 = vpop.f32.mrb[0].mxu0
      %v3145 = vadd.f32 0.0, %v3144
      %v3146 = vpop.f32.mrb[0].mxu0
      %3147 = vmatprep.mubr.bf16.mxu0 %v2798
      %3148 = vmatmul.mubr.bf16.gmra.mrb[0].mxu0 %v2790
      %v3149 = vpop.f32.mrb[0].mxu0
      %v3150 = vadd.f32 0.0, %v3149
      %v3151 = vpop.f32.mrb[0].mxu0
      %v3152 = vpop.f32.mrb[0].mxu0
      %v3153 = vadd.f32 0.0, %v3152
      %v3154 = vpop.f32.mrb[0].mxu0
      %3155 = vmatprep.mubr.bf16.mxu0 %v2814
      %3156 = vmatmul.mubr.bf16.gmra.mrb[0].mxu0 %v2806
      %v3157 = vpop.f32.mrb[0].mxu0
      %v3158 = vadd.f32 0.0, %v3157
      %v3159 = vpop.f32.mrb[0].mxu0
      %v3160 = vpop.f32.mrb[0].mxu0
      %v3161 = vadd.f32 0.0, %v3160
      %v3162 = vpop.f32.mrb[0].mxu0
      %3163 = vmatprep.mubr.bf16.mxu0 %v2830
      %3164 = vmatmul.mubr.bf16.gmra.mrb[0].mxu0 %v2822
      %v3165 = vpop.f32.mrb[0].mxu0
      %v3166 = vadd.f32 0.0, %v3165
      %v3167 = vpop.f32.mrb[0].mxu0
      %v3168 = vpop.f32.mrb[0].mxu0
      %v3169 = vadd.f32 0.0, %v3168
      %v3170 = vpop.f32.mrb[0].mxu0
      %3171 = vmatprep.mubr.bf16.mxu0 %v2846
      %3172 = vmatmul.mubr.bf16.gmra.mrb[0].mxu0 %v2838
      %v3173 = vpop.f32.mrb[0].mxu0
      %v3174 = vadd.f32 0.0, %v3173
      %v3175 = vpop.f32.mrb[0].mxu0
      %v3176 = vpop.f32.mrb[0].mxu0
      %v3177 = vadd.f32 0.0, %v3176
      %v3178 = vpop.f32.mrb[0].mxu0
      %3179 = vmatprep.mubr.bf16.mxu0 %v2862
      %3180 = vmatmul.mubr.bf16.gmra.mrb[0].mxu0 %v2854
      %v3181 = vpop.f32.mrb[0].mxu0
      %v3182 = vadd.f32 0.0, %v3181
      %v3183 = vpop.f32.mrb[0].mxu0
      %v3184 = vpop.f32.mrb[0].mxu0
      %v3185 = vadd.f32 0.0, %v3184
      %v3186 = vpop.f32.mrb[0].mxu0
      %3187 = vmatprep.mubr.bf16.mxu0 %v2878
      %3188 = vmatmul.mubr.bf16.gmra.mrb[0].mxu0 %v2870
      %v3189 = vpop.f32.mrb[0].mxu0
      %v3190 = vadd.f32 0.0, %v3189
      %v3191 = vpop.f32.mrb[0].mxu0
      %v3192 = vpop.f32.mrb[0].mxu0
      %v3193 = vadd.f32 0.0, %v3192
      %v3194 = vpop.f32.mrb[0].mxu0
      %3195 = vmatprep.mubr.bf16.mxu0 %v2894
      %3196 = vmatmul.mubr.bf16.gmra.mrb[0].mxu0 %v2886
      %v3197 = vpop.f32.mrb[0].mxu0
      %v3198 = vadd.f32 0.0, %v3197
      %v3199 = vpop.f32.mrb[0].mxu0
      %v3200 = vpop.f32.mrb[0].mxu0
      %v3201 = vadd.f32 0.0, %v3200
      %v3202 = vpop.f32.mrb[0].mxu0
      %3203 = vmatprep.mubr.bf16.mxu0 %v2910
      %3204 = vmatmul.mubr.bf16.gmra.mrb[0].mxu0 %v2902
      %v3205 = vpop.f32.mrb[0].mxu0
      %v3206 = vadd.f32 0.0, %v3205
      %v3207 = vpop.f32.mrb[0].mxu0
      %v3208 = vpop.f32.mrb[0].mxu0
      %v3209 = vadd.f32 0.0, %v3208
      %v3210 = vpop.f32.mrb[0].mxu0
      %3211 = vmatprep.mubr.bf16.mxu0 %v2926
      %3212 = vmatmul.mubr.bf16.gmra.mrb[0].mxu0 %v2918
      %v3213 = vpop.f32.mrb[0].mxu0
      %v3214 = vadd.f32 0.0, %v3213
      %v3215 = vpop.f32.mrb[0].mxu0
      %v3216 = vpop.f32.mrb[0].mxu0
      %v3217 = vadd.f32 0.0, %v3216
      %v3218 = vpop.f32.mrb[0].mxu0
      %3219 = vmatprep.mubr.bf16.mxu0 %v2942
      %3220 = vmatmul.mubr.bf16.gmra.mrb[0].mxu0 %v2934
      %v3221 = vpop.f32.mrb[0].mxu0
      %v3222 = vadd.f32 0.0, %v3221
      %v3223 = vpop.f32.mrb[0].mxu0
      %v3224 = vpop.f32.mrb[0].mxu0
      %v3225 = vadd.f32 0.0, %v3224
      %v3226 = vpop.f32.mrb[0].mxu0
      %3227 = vmatprep.mubr.bf16.mxu0 %v2958
      %3228 = vmatmul.mubr.bf16.gmra.mrb[0].mxu0 %v2950
      %v3229 = vpop.f32.mrb[0].mxu0
      %v3230 = vadd.f32 0.0, %v3229
      %v3231 = vpop.f32.mrb[0].mxu0
      %v3232 = vpop.f32.mrb[0].mxu0
      %v3233 = vadd.f32 0.0, %v3232
      %v3234 = vpop.f32.mrb[0].mxu0
      %3235 = vmatprep.mubr.bf16.mxu0 %v2974
      %3236 = vmatmul.mubr.bf16.gmra.mrb[0].mxu0 %v2966
      %v3237 = vpop.f32.mrb[0].mxu0
      %v3238 = vadd.f32 0.0, %v3237
      %v3239 = vpop.f32.mrb[0].mxu0
      %v3240 = vpop.f32.mrb[0].mxu0
      %v3241 = vadd.f32 0.0, %v3240
      %v3242 = vpop.f32.mrb[0].mxu0
      %3243 = vdwg.mxu0
      %v3244 = vadd.f32 %v2537, %v3134
      %v3245 = vadd.f32 %v2538, %v3137
      %v3246 = vadd.f32 %v2539, %v3142
      %v3247 = vadd.f32 %v2540, %v3145
      %v3248 = vadd.f32 %v2541, %v3150
      %v3249 = vadd.f32 %v2542, %v3153
      %v3250 = vadd.f32 %v2543, %v3158
      %v3251 = vadd.f32 %v2544, %v3161
      %v3252 = vadd.f32 %v2545, %v3166
      %v3253 = vadd.f32 %v2546, %v3169
      %v3254 = vadd.f32 %v2547, %v3174
      %v3255 = vadd.f32 %v2548, %v3177
      %v3256 = vadd.f32 %v2549, %v3182
      %v3257 = vadd.f32 %v2550, %v3185
      %v3258 = vadd.f32 %v2551, %v3190
      %v3259 = vadd.f32 %v2552, %v3193
      %v3260 = vadd.f32 %v2553, %v3198
      %v3261 = vadd.f32 %v2554, %v3201
      %v3262 = vadd.f32 %v2555, %v3206
      %v3263 = vadd.f32 %v2556, %v3209
      %v3264 = vadd.f32 %v2557, %v3214
      %v3265 = vadd.f32 %v2558, %v3217
      %v3266 = vadd.f32 %v2559, %v3222
      %v3267 = vadd.f32 %v2560, %v3225
      %v3268 = vadd.f32 %v2561, %v3230
      %v3269 = vadd.f32 %v2562, %v3233
      %v3270 = vadd.f32 %v2563, %v3238
      %v3271 = vadd.f32 %v2564, %v3241
      %v3272 = vld [vmem:[#allocation2 + $0x18] sm:$0xee]
      %v3273 = vld [vmem:[%s4 + $0x280] sm:$0xf]
      %v3274 = vld [vmem:[%s4 + $0x284] sm:$0xf]
      %v3275 = vld [vmem:[%s4 + $0x288] sm:$0xf]
      %v3276 = vld [vmem:[%s4 + $0x28c] sm:$0xf]
      %v3277 = vld [vmem:[%s4 + $0x290] sm:$0xf]
      %v3278 = vld [vmem:[%s4 + $0x294] sm:$0xf]
      %v3279 = vld [vmem:[%s4 + $0x298] sm:$0xf]
      %v3280 = vld [vmem:[%s4 + $0x29c] sm:$0xf]
      %v3281 = vld [vmem:[%s4 + $0x2a0] sm:$0xf]
      %v3282 = vld [vmem:[%s4 + $0x2a4] sm:$0xf]
      %v3283 = vld [vmem:[%s4 + $0x2a8] sm:$0xf]
      %v3284 = vld [vmem:[%s4 + $0x2ac] sm:$0xf]
      %v3285 = vld [vmem:[%s4 + $0x2b0] sm:$0xf]
      %v3286 = vld [vmem:[%s4 + $0x2b4] sm:$0xf]
      %v3287 = vld [vmem:[%s4 + $0x2b8] sm:$0xf]
      %v3288 = vld [vmem:[%s4 + $0x2bc] sm:$0xf]
      %v3289 = vld [vmem:[%s4 + $0x2c0] sm:$0xf]
      %v3290 = vld [vmem:[%s4 + $0x2c4] sm:$0xf]
      %v3291 = vld [vmem:[%s4 + $0x2c8] sm:$0xf]
      %v3292 = vld [vmem:[%s4 + $0x2cc] sm:$0xf]
      %v3293 = vld [vmem:[%s4 + $0x2d0] sm:$0xf]
      %v3294 = vld [vmem:[%s4 + $0x2d4] sm:$0xf]
      %v3295 = vld [vmem:[%s4 + $0x2d8] sm:$0xf]
      %v3296 = vld [vmem:[%s4 + $0x2dc] sm:$0xf]
      %v3297 = vld [vmem:[%s4 + $0x2e0] sm:$0xf]
      %v3298 = vld [vmem:[%s4 + $0x2e4] sm:$0xf]
      %v3299 = vld [vmem:[%s4 + $0x2e8] sm:$0xf]
      %v3300 = vld [vmem:[%s4 + $0x2ec] sm:$0xf]
      %v3301 = vld [vmem:[%s4 + $0x2f0] sm:$0xf]
      %v3302 = vld [vmem:[%s4 + $0x2f4] sm:$0xf]
      %v3303 = vld [vmem:[%s4 + $0x2f8] sm:$0xf]
      %v3304 = vld [vmem:[%s4 + $0x2fc] sm:$0xf]
      %v3306 = vunpack.c.l.b16 %v3272
      %v3307 = vunpack.c.h.b16 %v3272
      %v3308 = vpack.c.b16 %v2657, %v3306
      %v3309 = vpack.c.b16 %v2658, %v3307
      %v3310 = vrot.slane %v3308, 1
      %v3311 = vrot.slane %v2715, 1
      %v3312 = vsel %vm1740, %v3310, %v3311
      %v3313 = vrot.slane %v3309, 1
      %v3314 = vrot.slane %v2716, 1
      %v3315 = vsel %vm1740, %v3313, %v3314
      %v3316 = vrot.slane %v2717, 1
      %v3317 = vsel %vm1740, %v3311, %v3316
      %v3318 = vrot.slane %v2718, 1
      %v3319 = vsel %vm1740, %v3314, %v3318
      %v3320 = vrot.slane %v2719, 1
      %v3321 = vsel %vm1740, %v3316, %v3320
      %v3322 = vrot.slane %v2720, 1
      %v3323 = vsel %vm1740, %v3318, %v3322
      %v3324 = vrot.slane %v2721, 1
      %v3325 = vsel %vm1740, %v3320, %v3324
      %v3326 = vrot.slane %v2722, 1
      %v3327 = vsel %vm1740, %v3322, %v3326
      %v3328 = vrot.slane %v2723, 1
      %v3329 = vsel %vm1740, %v3324, %v3328
      %v3330 = vrot.slane %v2724, 1
      %v3331 = vsel %vm1740, %v3326, %v3330
      %v3332 = vrot.slane %v2725, 1
      %v3333 = vsel %vm1740, %v3328, %v3332
      %v3334 = vrot.slane %v2726, 1
      %v3335 = vsel %vm1740, %v3330, %v3334
      %v3336 = vrot.slane %v2727, 1
      %v3337 = vsel %vm1740, %v3332, %v3336
      %v3338 = vrot.slane %v2728, 1
      %v3339 = vsel %vm1740, %v3334, %v3338
      %v3340 = vrot.slane %v2729, 1
      %v3341 = vsel %vm1740, %v3336, %v3340
      %v3342 = vrot.slane %v2730, 1
      %v3343 = vsel %vm1740, %v3338, %v3342
      %v3344 = vrot.slane %v2731, 1
      %v3345 = vsel %vm1740, %v3340, %v3344
      %v3346 = vrot.slane %v2732, 1
      %v3347 = vsel %vm1740, %v3342, %v3346
      %v3348 = vrot.slane %v2733, 1
      %v3349 = vsel %vm1740, %v3344, %v3348
      %v3350 = vrot.slane %v2734, 1
      %v3351 = vsel %vm1740, %v3346, %v3350
      %v3352 = vrot.slane %v2735, 1
      %v3353 = vsel %vm1740, %v3348, %v3352
      %v3354 = vrot.slane %v2736, 1
      %v3355 = vsel %vm1740, %v3350, %v3354
      %v3356 = vrot.slane %v2737, 1
      %v3357 = vsel %vm1740, %v3352, %v3356
      %v3358 = vrot.slane %v2738, 1
      %v3359 = vsel %vm1740, %v3354, %v3358
      %v3360 = vrot.slane %v2739, 1
      %v3361 = vsel %vm1740, %v3356, %v3360
      %v3362 = vrot.slane %v2740, 1
      %v3363 = vsel %vm1740, %v3358, %v3362
      %v3364 = vrot.slane %v2741, 1
      %v3365 = vsel %vm1740, %v3360, %v3364
      %v3366 = vrot.slane %v2742, 1
      %v3367 = vsel %vm1740, %v3362, %v3366
      %v3428 = vunpack.c.l.b16 %v3273
      %v3429 = vunpack.c.l.b16 %v3274
      %v3430 = vunpack.c.l.b16 %v3275
      %v3431 = vunpack.c.l.b16 %v3276
      %v3432 = vunpack.c.l.b16 %v3277
      %v3433 = vunpack.c.l.b16 %v3278
      %v3434 = vunpack.c.l.b16 %v3279
      %v3435 = vunpack.c.l.b16 %v3280
      %v3436 = vunpack.c.l.b16 %v3281
      %v3437 = vunpack.c.l.b16 %v3282
      %v3438 = vunpack.c.l.b16 %v3283
      %v3439 = vunpack.c.l.b16 %v3284
      %v3440 = vunpack.c.l.b16 %v3285
      %v3441 = vunpack.c.l.b16 %v3286
      %v3442 = vunpack.c.l.b16 %v3287
      %v3443 = vunpack.c.l.b16 %v3288
      %v3444 = vunpack.c.l.b16 %v3289
      %v3445 = vunpack.c.l.b16 %v3290
      %v3446 = vunpack.c.l.b16 %v3291
      %v3447 = vunpack.c.l.b16 %v3292
      %v3448 = vunpack.c.l.b16 %v3293
      %v3449 = vunpack.c.l.b16 %v3294
      %v3450 = vunpack.c.l.b16 %v3295
      %v3451 = vunpack.c.l.b16 %v3296
      %v3452 = vunpack.c.l.b16 %v3297
      %v3453 = vunpack.c.l.b16 %v3298
      %v3454 = vunpack.c.l.b16 %v3299
      %v3455 = vunpack.c.l.b16 %v3300
      %v3456 = vunpack.c.l.b16 %v3301
      %v3457 = vunpack.c.l.b16 %v3302
      %v3458 = vunpack.c.l.b16 %v3303
      %v3459 = vunpack.c.l.b16 %v3304
      %v3460 = vpack.c.b16 %v3429, %v3428
      %v3461 = vpack.c.b16 %v3431, %v3430
      %v3462 = vpack.c.b16 %v3433, %v3432
      %v3463 = vpack.c.b16 %v3435, %v3434
      %v3464 = vpack.c.b16 %v3437, %v3436
      %v3465 = vpack.c.b16 %v3439, %v3438
      %v3466 = vpack.c.b16 %v3441, %v3440
      %v3467 = vpack.c.b16 %v3443, %v3442
      %v3468 = vpack.c.b16 %v3445, %v3444
      %v3469 = vpack.c.b16 %v3447, %v3446
      %v3470 = vpack.c.b16 %v3449, %v3448
      %v3471 = vpack.c.b16 %v3451, %v3450
      %v3472 = vpack.c.b16 %v3453, %v3452
      %v3473 = vpack.c.b16 %v3455, %v3454
      %v3474 = vpack.c.b16 %v3457, %v3456
      %v3475 = vpack.c.b16 %v3459, %v3458
      %3492 = vmatprep.subr.bf16.mxu0 0
      %3493 = vmatpush1.bf16.msra.mxu0 %v3460
      %3494 = vmatprep.subr.bf16.mxu0 0
      %3495 = vmatpush1.bf16.msra.mxu0 %v3461
      %3496 = vmatprep.subr.bf16.mxu0 0
      %3497 = vmatpush1.bf16.msra.mxu0 %v3462
      %3498 = vmatprep.subr.bf16.mxu0 0
      %3499 = vmatpush1.bf16.msra.mxu0 %v3463
      %3500 = vmatprep.subr.bf16.mxu0 0
      %3501 = vmatpush1.bf16.msra.mxu0 %v3464
      %3502 = vmatprep.subr.bf16.mxu0 0
      %3503 = vmatpush1.bf16.msra.mxu0 %v3465
      %3504 = vmatprep.subr.bf16.mxu0 0
      %3505 = vmatpush1.bf16.msra.mxu0 %v3466
      %3506 = vmatprep.subr.bf16.mxu0 0
      %3507 = vmatpush1.bf16.msra.mxu0 %v3467
      %3508 = vmatprep.subr.bf16.mxu0 0
      %3509 = vmatpush1.bf16.msra.mxu0 %v3468
      %3510 = vmatprep.subr.bf16.mxu0 0
      %3511 = vmatpush1.bf16.msra.mxu0 %v3469
      %3512 = vmatprep.subr.bf16.mxu0 0
      %3513 = vmatpush1.bf16.msra.mxu0 %v3470
      %3514 = vmatprep.subr.bf16.mxu0 0
      %3515 = vmatpush1.bf16.msra.mxu0 %v3471
      %3516 = vmatprep.subr.bf16.mxu0 0
      %3517 = vmatpush1.bf16.msra.mxu0 %v3472
      %3518 = vmatprep.subr.bf16.mxu0 0
      %3519 = vmatpush1.bf16.msra.mxu0 %v3473
      %3520 = vmatprep.subr.bf16.mxu0 0
      %3521 = vmatpush1.bf16.msra.mxu0 %v3474
      %3522 = vmatprep.subr.bf16.mxu0 0
      %3523 = vmatpush1.bf16.msra.mxu0 %v3475
      %3524 = vmatprep.mubr.bf16.mxu0 %v3315
      %3525 = vmatmul.mubr.bf16.gmra.mrb[0].mxu0 %v3312
      %v3526 = vpop.f32.mrb[0].mxu0
      %v3527 = vadd.f32 0.0, %v3526
      %v3528 = vpop.f32.mrb[0].mxu0
      %v3529 = vpop.f32.mrb[0].mxu0
      %v3530 = vadd.f32 0.0, %v3529
      %v3531 = vpop.f32.mrb[0].mxu0
      %3532 = vmatprep.mubr.bf16.mxu0 %v3319
      %3533 = vmatmul.mubr.bf16.gmra.mrb[0].mxu0 %v3317
      %v3534 = vpop.f32.mrb[0].mxu0
      %v3535 = vadd.f32 0.0, %v3534
      %v3536 = vpop.f32.mrb[0].mxu0
      %v3537 = vpop.f32.mrb[0].mxu0
      %v3538 = vadd.f32 0.0, %v3537
      %v3539 = vpop.f32.mrb[0].mxu0
      %3540 = vmatprep.mubr.bf16.mxu0 %v3323
      %3541 = vmatmul.mubr.bf16.gmra.mrb[0].mxu0 %v3321
      %v3542 = vpop.f32.mrb[0].mxu0
      %v3543 = vadd.f32 0.0, %v3542
      %v3544 = vpop.f32.mrb[0].mxu0
      %v3545 = vpop.f32.mrb[0].mxu0
      %v3546 = vadd.f32 0.0, %v3545
      %v3547 = vpop.f32.mrb[0].mxu0
      %3548 = vmatprep.mubr.bf16.mxu0 %v3327
      %3549 = vmatmul.mubr.bf16.gmra.mrb[0].mxu0 %v3325
      %v3550 = vpop.f32.mrb[0].mxu0
      %v3551 = vadd.f32 0.0, %v3550
      %v3552 = vpop.f32.mrb[0].mxu0
      %v3553 = vpop.f32.mrb[0].mxu0
      %v3554 = vadd.f32 0.0, %v3553
      %v3555 = vpop.f32.mrb[0].mxu0
      %3556 = vmatprep.mubr.bf16.mxu0 %v3331
      %3557 = vmatmul.mubr.bf16.gmra.mrb[0].mxu0 %v3329
      %v3558 = vpop.f32.mrb[0].mxu0
      %v3559 = vadd.f32 0.0, %v3558
      %v3560 = vpop.f32.mrb[0].mxu0
      %v3561 = vpop.f32.mrb[0].mxu0
      %v3562 = vadd.f32 0.0, %v3561
      %v3563 = vpop.f32.mrb[0].mxu0
      %3564 = vmatprep.mubr.bf16.mxu0 %v3335
      %3565 = vmatmul.mubr.bf16.gmra.mrb[0].mxu0 %v3333
      %v3566 = vpop.f32.mrb[0].mxu0
      %v3567 = vadd.f32 0.0, %v3566
      %v3568 = vpop.f32.mrb[0].mxu0
      %v3569 = vpop.f32.mrb[0].mxu0
      %v3570 = vadd.f32 0.0, %v3569
      %v3571 = vpop.f32.mrb[0].mxu0
      %3572 = vmatprep.mubr.bf16.mxu0 %v3339
      %3573 = vmatmul.mubr.bf16.gmra.mrb[0].mxu0 %v3337
      %v3574 = vpop.f32.mrb[0].mxu0
      %v3575 = vadd.f32 0.0, %v3574
      %v3576 = vpop.f32.mrb[0].mxu0
      %v3577 = vpop.f32.mrb[0].mxu0
      %v3578 = vadd.f32 0.0, %v3577
      %v3579 = vpop.f32.mrb[0].mxu0
      %3580 = vmatprep.mubr.bf16.mxu0 %v3343
      %3581 = vmatmul.mubr.bf16.gmra.mrb[0].mxu0 %v3341
      %v3582 = vpop.f32.mrb[0].mxu0
      %v3583 = vadd.f32 0.0, %v3582
      %v3584 = vpop.f32.mrb[0].mxu0
      %v3585 = vpop.f32.mrb[0].mxu0
      %v3586 = vadd.f32 0.0, %v3585
      %v3587 = vpop.f32.mrb[0].mxu0
      %3588 = vmatprep.mubr.bf16.mxu0 %v3347
      %3589 = vmatmul.mubr.bf16.gmra.mrb[0].mxu0 %v3345
      %v3590 = vpop.f32.mrb[0].mxu0
      %v3591 = vadd.f32 0.0, %v3590
      %v3592 = vpop.f32.mrb[0].mxu0
      %v3593 = vpop.f32.mrb[0].mxu0
      %v3594 = vadd.f32 0.0, %v3593
      %v3595 = vpop.f32.mrb[0].mxu0
      %3596 = vmatprep.mubr.bf16.mxu0 %v3351
      %3597 = vmatmul.mubr.bf16.gmra.mrb[0].mxu0 %v3349
      %v3598 = vpop.f32.mrb[0].mxu0
      %v3599 = vadd.f32 0.0, %v3598
      %v3600 = vpop.f32.mrb[0].mxu0
      %v3601 = vpop.f32.mrb[0].mxu0
      %v3602 = vadd.f32 0.0, %v3601
      %v3603 = vpop.f32.mrb[0].mxu0
      %3604 = vmatprep.mubr.bf16.mxu0 %v3355
      %3605 = vmatmul.mubr.bf16.gmra.mrb[0].mxu0 %v3353
      %v3606 = vpop.f32.mrb[0].mxu0
      %v3607 = vadd.f32 0.0, %v3606
      %v3608 = vpop.f32.mrb[0].mxu0
      %v3609 = vpop.f32.mrb[0].mxu0
      %v3610 = vadd.f32 0.0, %v3609
      %v3611 = vpop.f32.mrb[0].mxu0
      %3612 = vmatprep.mubr.bf16.mxu0 %v3359
      %3613 = vmatmul.mubr.bf16.gmra.mrb[0].mxu0 %v3357
      %v3614 = vpop.f32.mrb[0].mxu0
      %v3615 = vadd.f32 0.0, %v3614
      %v3616 = vpop.f32.mrb[0].mxu0
      %v3617 = vpop.f32.mrb[0].mxu0
      %v3618 = vadd.f32 0.0, %v3617
      %v3619 = vpop.f32.mrb[0].mxu0
      %3620 = vmatprep.mubr.bf16.mxu0 %v3363
      %3621 = vmatmul.mubr.bf16.gmra.mrb[0].mxu0 %v3361
      %v3622 = vpop.f32.mrb[0].mxu0
      %v3623 = vadd.f32 0.0, %v3622
      %v3624 = vpop.f32.mrb[0].mxu0
      %v3625 = vpop.f32.mrb[0].mxu0
      %v3626 = vadd.f32 0.0, %v3625
      %v3627 = vpop.f32.mrb[0].mxu0
      %3628 = vmatprep.mubr.bf16.mxu0 %v3367
      %3629 = vmatmul.mubr.bf16.gmra.mrb[0].mxu0 %v3365
      %v3630 = vpop.f32.mrb[0].mxu0
      %v3631 = vadd.f32 0.0, %v3630
      %v3632 = vpop.f32.mrb[0].mxu0
      %v3633 = vpop.f32.mrb[0].mxu0
      %v3634 = vadd.f32 0.0, %v3633
      %v3635 = vpop.f32.mrb[0].mxu0
      %3636 = vdwg.mxu0
      %v3637 = vadd.f32 %v3244, %v3527
      %v3638 = vadd.f32 %v3245, %v3530
      %v3639 = vadd.f32 %v3246, %v3535
      %v3640 = vadd.f32 %v3247, %v3538
      %v3641 = vadd.f32 %v3248, %v3543
      %v3642 = vadd.f32 %v3249, %v3546
      %v3643 = vadd.f32 %v3250, %v3551
      %v3644 = vadd.f32 %v3251, %v3554
      %v3645 = vadd.f32 %v3252, %v3559
      %v3646 = vadd.f32 %v3253, %v3562
      %v3647 = vadd.f32 %v3254, %v3567
      %v3648 = vadd.f32 %v3255, %v3570
      %v3649 = vadd.f32 %v3256, %v3575
      %v3650 = vadd.f32 %v3257, %v3578
      %v3651 = vadd.f32 %v3258, %v3583
      %v3652 = vadd.f32 %v3259, %v3586
      %v3653 = vadd.f32 %v3260, %v3591
      %v3654 = vadd.f32 %v3261, %v3594
      %v3655 = vadd.f32 %v3262, %v3599
      %v3656 = vadd.f32 %v3263, %v3602
      %v3657 = vadd.f32 %v3264, %v3607
      %v3658 = vadd.f32 %v3265, %v3610
      %v3659 = vadd.f32 %v3266, %v3615
      %v3660 = vadd.f32 %v3267, %v3618
      %v3661 = vadd.f32 %v3268, %v3623
      %v3662 = vadd.f32 %v3269, %v3626
      %v3663 = vadd.f32 %v3270, %v3631
      %v3664 = vadd.f32 %v3271, %v3634
      %v3665 = vld [vmem:[#allocation2 + $0x30] sm:$0xff]
      %v3666 = vld [vmem:[#allocation2 + $0x38] sm:$0xff]
      %v3667 = vld [vmem:[#allocation2 + $0x40] sm:$0xff]
      %v3668 = vld [vmem:[#allocation2 + $0x48] sm:$0xff]
      %v3669 = vld [vmem:[#allocation2 + $0x50] sm:$0xff]
      %v3670 = vld [vmem:[#allocation2 + $0x58] sm:$0xff]
      %v3671 = vld [vmem:[#allocation2 + $0x60] sm:$0xff]
      %v3672 = vld [vmem:[#allocation2 + $0x68] sm:$0xff]
      %v3673 = vld [vmem:[#allocation2 + $0x70] sm:$0xff]
      %v3674 = vld [vmem:[#allocation2 + $0x78] sm:$0xff]
      %v3675 = vld [vmem:[#allocation2 + $0x80] sm:$0xff]
      %v3676 = vld [vmem:[#allocation2 + $0x88] sm:$0xff]
      %v3677 = vld [vmem:[#allocation2 + $0x90] sm:$0xff]
      %v3678 = vld [vmem:[#allocation2 + $0x98] sm:$0xff]
      %v3679 = vld [vmem:[#allocation2 + $0xa0] sm:$0xff]
      %v3680 = vld [vmem:[#allocation2 + $0xa8] sm:$0xff]
      %v3681 = vld [vmem:[#allocation2 + $0xb0] sm:$0xff]
      %v3682 = vld [vmem:[#allocation2 + $0xb8] sm:$0xff]
      %v3683 = vld [vmem:[#allocation2 + $0xc0] sm:$0xff]
      %v3684 = vld [vmem:[#allocation2 + $0xc8] sm:$0xff]
      %v3685 = vld [vmem:[#allocation2 + $0xd0] sm:$0xff]
      %v3686 = vld [vmem:[#allocation2 + $0xd8] sm:$0xff]
      %v3687 = vld [vmem:[#allocation2 + $0xe0] sm:$0xff]
      %v3688 = vld [vmem:[#allocation2 + $0xe8] sm:$0xff]
      %v3689 = vld [vmem:[#allocation2 + $0xf0] sm:$0xff]
      %v3690 = vld [vmem:[#allocation2 + $0xf8] sm:$0xff]
      %v3691 = vld [vmem:[#allocation2 + $0x100] sm:$0xff]
      %v3692 = vld [vmem:[#allocation2 + $0x108] sm:$0xff]
      %v3693 = vld [vmem:[%s4 + $0x300] sm:$0xf]
      %v3694 = vld [vmem:[%s4 + $0x304] sm:$0xf]
      %v3695 = vld [vmem:[%s4 + $0x308] sm:$0xf]
      %v3696 = vld [vmem:[%s4 + $0x30c] sm:$0xf]
      %v3697 = vld [vmem:[%s4 + $0x310] sm:$0xf]
      %v3698 = vld [vmem:[%s4 + $0x314] sm:$0xf]
      %v3699 = vld [vmem:[%s4 + $0x318] sm:$0xf]
      %v3700 = vld [vmem:[%s4 + $0x31c] sm:$0xf]
      %v3701 = vld [vmem:[%s4 + $0x320] sm:$0xf]
      %v3702 = vld [vmem:[%s4 + $0x324] sm:$0xf]
      %v3703 = vld [vmem:[%s4 + $0x328] sm:$0xf]
      %v3704 = vld [vmem:[%s4 + $0x32c] sm:$0xf]
      %v3705 = vld [vmem:[%s4 + $0x330] sm:$0xf]
      %v3706 = vld [vmem:[%s4 + $0x334] sm:$0xf]
      %v3707 = vld [vmem:[%s4 + $0x338] sm:$0xf]
      %v3708 = vld [vmem:[%s4 + $0x33c] sm:$0xf]
      %v3709 = vld [vmem:[%s4 + $0x340] sm:$0xf]
      %v3710 = vld [vmem:[%s4 + $0x344] sm:$0xf]
      %v3711 = vld [vmem:[%s4 + $0x348] sm:$0xf]
      %v3712 = vld [vmem:[%s4 + $0x34c] sm:$0xf]
      %v3713 = vld [vmem:[%s4 + $0x350] sm:$0xf]
      %v3714 = vld [vmem:[%s4 + $0x354] sm:$0xf]
      %v3715 = vld [vmem:[%s4 + $0x358] sm:$0xf]
      %v3716 = vld [vmem:[%s4 + $0x35c] sm:$0xf]
      %v3717 = vld [vmem:[%s4 + $0x360] sm:$0xf]
      %v3718 = vld [vmem:[%s4 + $0x364] sm:$0xf]
      %v3719 = vld [vmem:[%s4 + $0x368] sm:$0xf]
      %v3720 = vld [vmem:[%s4 + $0x36c] sm:$0xf]
      %v3721 = vld [vmem:[%s4 + $0x370] sm:$0xf]
      %v3722 = vld [vmem:[%s4 + $0x374] sm:$0xf]
      %v3723 = vld [vmem:[%s4 + $0x378] sm:$0xf]
      %v3724 = vld [vmem:[%s4 + $0x37c] sm:$0xf]
      %v3753 = vunpack.c.l.b16 %v3665
      %v3754 = vunpack.c.h.b16 %v3665
      %v3755 = vunpack.c.l.b16 %v3666
      %v3756 = vunpack.c.h.b16 %v3666
      %v3757 = vunpack.c.l.b16 %v3667
      %v3758 = vunpack.c.h.b16 %v3667
      %v3759 = vunpack.c.l.b16 %v3668
      %v3760 = vunpack.c.h.b16 %v3668
      %v3761 = vunpack.c.l.b16 %v3669
      %v3762 = vunpack.c.h.b16 %v3669
      %v3763 = vunpack.c.l.b16 %v3670
      %v3764 = vunpack.c.h.b16 %v3670
      %v3765 = vunpack.c.l.b16 %v3671
      %v3766 = vunpack.c.h.b16 %v3671
      %v3767 = vunpack.c.l.b16 %v3672
      %v3768 = vunpack.c.h.b16 %v3672
      %v3769 = vunpack.c.l.b16 %v3673
      %v3770 = vunpack.c.h.b16 %v3673
      %v3771 = vunpack.c.l.b16 %v3674
      %v3772 = vunpack.c.h.b16 %v3674
      %v3773 = vunpack.c.l.b16 %v3675
      %v3774 = vunpack.c.h.b16 %v3675
      %v3775 = vunpack.c.l.b16 %v3676
      %v3776 = vunpack.c.h.b16 %v3676
      %v3777 = vunpack.c.l.b16 %v3677
      %v3778 = vunpack.c.h.b16 %v3677
      %v3779 = vunpack.c.l.b16 %v3678
      %v3780 = vunpack.c.h.b16 %v3678
      %v3781 = vunpack.c.l.b16 %v3679
      %v3782 = vunpack.c.h.b16 %v3679
      %v3783 = vunpack.c.l.b16 %v3680
      %v3784 = vunpack.c.h.b16 %v3680
      %v3785 = vunpack.c.l.b16 %v3681
      %v3786 = vunpack.c.h.b16 %v3681
      %v3787 = vunpack.c.l.b16 %v3682
      %v3788 = vunpack.c.h.b16 %v3682
      %v3789 = vunpack.c.l.b16 %v3683
      %v3790 = vunpack.c.h.b16 %v3683
      %v3791 = vunpack.c.l.b16 %v3684
      %v3792 = vunpack.c.h.b16 %v3684
      %v3793 = vunpack.c.l.b16 %v3685
      %v3794 = vunpack.c.h.b16 %v3685
      %v3795 = vunpack.c.l.b16 %v3686
      %v3796 = vunpack.c.h.b16 %v3686
      %v3797 = vunpack.c.l.b16 %v3687
      %v3798 = vunpack.c.h.b16 %v3687
      %v3799 = vunpack.c.l.b16 %v3688
      %v3800 = vunpack.c.h.b16 %v3688
      %v3801 = vunpack.c.l.b16 %v3689
      %v3802 = vunpack.c.h.b16 %v3689
      %v3803 = vunpack.c.l.b16 %v3690
      %v3804 = vunpack.c.h.b16 %v3690
      %v3805 = vunpack.c.l.b16 %v3691
      %v3806 = vunpack.c.h.b16 %v3691
      %v3807 = vunpack.c.l.b16 %v3692
      %v3808 = vunpack.c.h.b16 %v3692
      %v3809 = vpack.c.b16 %v3755, %v3753
      %v3810 = vpack.c.b16 %v3756, %v3754
      %v3811 = vpack.c.b16 %v3759, %v3757
      %v3812 = vpack.c.b16 %v3760, %v3758
      %v3813 = vpack.c.b16 %v3763, %v3761
      %v3814 = vpack.c.b16 %v3764, %v3762
      %v3815 = vpack.c.b16 %v3767, %v3765
      %v3816 = vpack.c.b16 %v3768, %v3766
      %v3817 = vpack.c.b16 %v3771, %v3769
      %v3818 = vpack.c.b16 %v3772, %v3770
      %v3819 = vpack.c.b16 %v3775, %v3773
      %v3820 = vpack.c.b16 %v3776, %v3774
      %v3821 = vpack.c.b16 %v3779, %v3777
      %v3822 = vpack.c.b16 %v3780, %v3778
      %v3823 = vpack.c.b16 %v3783, %v3781
      %v3824 = vpack.c.b16 %v3784, %v3782
      %v3825 = vpack.c.b16 %v3787, %v3785
      %v3826 = vpack.c.b16 %v3788, %v3786
      %v3827 = vpack.c.b16 %v3791, %v3789
      %v3828 = vpack.c.b16 %v3792, %v3790
      %v3829 = vpack.c.b16 %v3795, %v3793
      %v3830 = vpack.c.b16 %v3796, %v3794
      %v3831 = vpack.c.b16 %v3799, %v3797
      %v3832 = vpack.c.b16 %v3800, %v3798
      %v3833 = vpack.c.b16 %v3803, %v3801
      %v3834 = vpack.c.b16 %v3804, %v3802
      %v3835 = vpack.c.b16 %v3807, %v3805
      %v3836 = vpack.c.b16 %v3808, %v3806
      %v3897 = vunpack.c.l.b16 %v3693
      %v3898 = vunpack.c.l.b16 %v3694
      %v3899 = vunpack.c.l.b16 %v3695
      %v3900 = vunpack.c.l.b16 %v3696
      %v3901 = vunpack.c.l.b16 %v3697
      %v3902 = vunpack.c.l.b16 %v3698
      %v3903 = vunpack.c.l.b16 %v3699
      %v3904 = vunpack.c.l.b16 %v3700
      %v3905 = vunpack.c.l.b16 %v3701
      %v3906 = vunpack.c.l.b16 %v3702
      %v3907 = vunpack.c.l.b16 %v3703
      %v3908 = vunpack.c.l.b16 %v3704
      %v3909 = vunpack.c.l.b16 %v3705
      %v3910 = vunpack.c.l.b16 %v3706
      %v3911 = vunpack.c.l.b16 %v3707
      %v3912 = vunpack.c.l.b16 %v3708
      %v3913 = vunpack.c.l.b16 %v3709
      %v3914 = vunpack.c.l.b16 %v3710
      %v3915 = vunpack.c.l.b16 %v3711
      %v3916 = vunpack.c.l.b16 %v3712
      %v3917 = vunpack.c.l.b16 %v3713
      %v3918 = vunpack.c.l.b16 %v3714
      %v3919 = vunpack.c.l.b16 %v3715
      %v3920 = vunpack.c.l.b16 %v3716
      %v3921 = vunpack.c.l.b16 %v3717
      %v3922 = vunpack.c.l.b16 %v3718
      %v3923 = vunpack.c.l.b16 %v3719
      %v3924 = vunpack.c.l.b16 %v3720
      %v3925 = vunpack.c.l.b16 %v3721
      %v3926 = vunpack.c.l.b16 %v3722
      %v3927 = vunpack.c.l.b16 %v3723
      %v3928 = vunpack.c.l.b16 %v3724
      %v3929 = vpack.c.b16 %v3898, %v3897
      %v3930 = vpack.c.b16 %v3900, %v3899
      %v3931 = vpack.c.b16 %v3902, %v3901
      %v3932 = vpack.c.b16 %v3904, %v3903
      %v3933 = vpack.c.b16 %v3906, %v3905
      %v3934 = vpack.c.b16 %v3908, %v3907
      %v3935 = vpack.c.b16 %v3910, %v3909
      %v3936 = vpack.c.b16 %v3912, %v3911
      %v3937 = vpack.c.b16 %v3914, %v3913
      %v3938 = vpack.c.b16 %v3916, %v3915
      %v3939 = vpack.c.b16 %v3918, %v3917
      %v3940 = vpack.c.b16 %v3920, %v3919
      %v3941 = vpack.c.b16 %v3922, %v3921
      %v3942 = vpack.c.b16 %v3924, %v3923
      %v3943 = vpack.c.b16 %v3926, %v3925
      %v3944 = vpack.c.b16 %v3928, %v3927
      %3961 = vmatprep.subr.bf16.mxu0 0
      %3962 = vmatpush1.bf16.msra.mxu0 %v3929
      %3963 = vmatprep.subr.bf16.mxu0 0
      %3964 = vmatpush1.bf16.msra.mxu0 %v3930
      %3965 = vmatprep.subr.bf16.mxu0 0
      %3966 = vmatpush1.bf16.msra.mxu0 %v3931
      %3967 = vmatprep.subr.bf16.mxu0 0
      %3968 = vmatpush1.bf16.msra.mxu0 %v3932
      %3969 = vmatprep.subr.bf16.mxu0 0
      %3970 = vmatpush1.bf16.msra.mxu0 %v3933
      %3971 = vmatprep.subr.bf16.mxu0 0
      %3972 = vmatpush1.bf16.msra.mxu0 %v3934
      %3973 = vmatprep.subr.bf16.mxu0 0
      %3974 = vmatpush1.bf16.msra.mxu0 %v3935
      %3975 = vmatprep.subr.bf16.mxu0 0
      %3976 = vmatpush1.bf16.msra.mxu0 %v3936
      %3977 = vmatprep.subr.bf16.mxu0 0
      %3978 = vmatpush1.bf16.msra.mxu0 %v3937
      %3979 = vmatprep.subr.bf16.mxu0 0
      %3980 = vmatpush1.bf16.msra.mxu0 %v3938
      %3981 = vmatprep.subr.bf16.mxu0 0
      %3982 = vmatpush1.bf16.msra.mxu0 %v3939
      %3983 = vmatprep.subr.bf16.mxu0 0
      %3984 = vmatpush1.bf16.msra.mxu0 %v3940
      %3985 = vmatprep.subr.bf16.mxu0 0
      %3986 = vmatpush1.bf16.msra.mxu0 %v3941
      %3987 = vmatprep.subr.bf16.mxu0 0
      %3988 = vmatpush1.bf16.msra.mxu0 %v3942
      %3989 = vmatprep.subr.bf16.mxu0 0
      %3990 = vmatpush1.bf16.msra.mxu0 %v3943
      %3991 = vmatprep.subr.bf16.mxu0 0
      %3992 = vmatpush1.bf16.msra.mxu0 %v3944
      %3993 = vmatprep.mubr.bf16.mxu0 %v3810
      %3994 = vmatmul.mubr.bf16.gmra.mrb[0].mxu0 %v3809
      %v3995 = vpop.f32.mrb[0].mxu0
      %v3996 = vadd.f32 0.0, %v3995
      %v3997 = vpop.f32.mrb[0].mxu0
      %v3998 = vpop.f32.mrb[0].mxu0
      %v3999 = vadd.f32 0.0, %v3998
      %v4000 = vpop.f32.mrb[0].mxu0
      %4001 = vmatprep.mubr.bf16.mxu0 %v3812
      %4002 = vmatmul.mubr.bf16.gmra.mrb[0].mxu0 %v3811
      %v4003 = vpop.f32.mrb[0].mxu0
      %v4004 = vadd.f32 0.0, %v4003
      %v4005 = vpop.f32.mrb[0].mxu0
      %v4006 = vpop.f32.mrb[0].mxu0
      %v4007 = vadd.f32 0.0, %v4006
      %v4008 = vpop.f32.mrb[0].mxu0
      %4009 = vmatprep.mubr.bf16.mxu0 %v3814
      %4010 = vmatmul.mubr.bf16.gmra.mrb[0].mxu0 %v3813
      %v4011 = vpop.f32.mrb[0].mxu0
      %v4012 = vadd.f32 0.0, %v4011
      %v4013 = vpop.f32.mrb[0].mxu0
      %v4014 = vpop.f32.mrb[0].mxu0
      %v4015 = vadd.f32 0.0, %v4014
      %v4016 = vpop.f32.mrb[0].mxu0
      %4017 = vmatprep.mubr.bf16.mxu0 %v3816
      %4018 = vmatmul.mubr.bf16.gmra.mrb[0].mxu0 %v3815
      %v4019 = vpop.f32.mrb[0].mxu0
      %v4020 = vadd.f32 0.0, %v4019
      %v4021 = vpop.f32.mrb[0].mxu0
      %v4022 = vpop.f32.mrb[0].mxu0
      %v4023 = vadd.f32 0.0, %v4022
      %v4024 = vpop.f32.mrb[0].mxu0
      %4025 = vmatprep.mubr.bf16.mxu0 %v3818
      %4026 = vmatmul.mubr.bf16.gmra.mrb[0].mxu0 %v3817
      %v4027 = vpop.f32.mrb[0].mxu0
      %v4028 = vadd.f32 0.0, %v4027
      %v4029 = vpop.f32.mrb[0].mxu0
      %v4030 = vpop.f32.mrb[0].mxu0
      %v4031 = vadd.f32 0.0, %v4030
      %v4032 = vpop.f32.mrb[0].mxu0
      %4033 = vmatprep.mubr.bf16.mxu0 %v3820
      %4034 = vmatmul.mubr.bf16.gmra.mrb[0].mxu0 %v3819
      %v4035 = vpop.f32.mrb[0].mxu0
      %v4036 = vadd.f32 0.0, %v4035
      %v4037 = vpop.f32.mrb[0].mxu0
      %v4038 = vpop.f32.mrb[0].mxu0
      %v4039 = vadd.f32 0.0, %v4038
      %v4040 = vpop.f32.mrb[0].mxu0
      %4041 = vmatprep.mubr.bf16.mxu0 %v3822
      %4042 = vmatmul.mubr.bf16.gmra.mrb[0].mxu0 %v3821
      %v4043 = vpop.f32.mrb[0].mxu0
      %v4044 = vadd.f32 0.0, %v4043
      %v4045 = vpop.f32.mrb[0].mxu0
      %v4046 = vpop.f32.mrb[0].mxu0
      %v4047 = vadd.f32 0.0, %v4046
      %v4048 = vpop.f32.mrb[0].mxu0
      %4049 = vmatprep.mubr.bf16.mxu0 %v3824
      %4050 = vmatmul.mubr.bf16.gmra.mrb[0].mxu0 %v3823
      %v4051 = vpop.f32.mrb[0].mxu0
      %v4052 = vadd.f32 0.0, %v4051
      %v4053 = vpop.f32.mrb[0].mxu0
      %v4054 = vpop.f32.mrb[0].mxu0
      %v4055 = vadd.f32 0.0, %v4054
      %v4056 = vpop.f32.mrb[0].mxu0
      %4057 = vmatprep.mubr.bf16.mxu0 %v3826
      %4058 = vmatmul.mubr.bf16.gmra.mrb[0].mxu0 %v3825
      %v4059 = vpop.f32.mrb[0].mxu0
      %v4060 = vadd.f32 0.0, %v4059
      %v4061 = vpop.f32.mrb[0].mxu0
      %v4062 = vpop.f32.mrb[0].mxu0
      %v4063 = vadd.f32 0.0, %v4062
      %v4064 = vpop.f32.mrb[0].mxu0
      %4065 = vmatprep.mubr.bf16.mxu0 %v3828
      %4066 = vmatmul.mubr.bf16.gmra.mrb[0].mxu0 %v3827
      %v4067 = vpop.f32.mrb[0].mxu0
      %v4068 = vadd.f32 0.0, %v4067
      %v4069 = vpop.f32.mrb[0].mxu0
      %v4070 = vpop.f32.mrb[0].mxu0
      %v4071 = vadd.f32 0.0, %v4070
      %v4072 = vpop.f32.mrb[0].mxu0
      %4073 = vmatprep.mubr.bf16.mxu0 %v3830
      %4074 = vmatmul.mubr.bf16.gmra.mrb[0].mxu0 %v3829
      %v4075 = vpop.f32.mrb[0].mxu0
      %v4076 = vadd.f32 0.0, %v4075
      %v4077 = vpop.f32.mrb[0].mxu0
      %v4078 = vpop.f32.mrb[0].mxu0
      %v4079 = vadd.f32 0.0, %v4078
      %v4080 = vpop.f32.mrb[0].mxu0
      %4081 = vmatprep.mubr.bf16.mxu0 %v3832
      %4082 = vmatmul.mubr.bf16.gmra.mrb[0].mxu0 %v3831
      %v4083 = vpop.f32.mrb[0].mxu0
      %v4084 = vadd.f32 0.0, %v4083
      %v4085 = vpop.f32.mrb[0].mxu0
      %v4086 = vpop.f32.mrb[0].mxu0
      %v4087 = vadd.f32 0.0, %v4086
      %v4088 = vpop.f32.mrb[0].mxu0
      %4089 = vmatprep.mubr.bf16.mxu0 %v3834
      %4090 = vmatmul.mubr.bf16.gmra.mrb[0].mxu0 %v3833
      %v4091 = vpop.f32.mrb[0].mxu0
      %v4092 = vadd.f32 0.0, %v4091
      %v4093 = vpop.f32.mrb[0].mxu0
      %v4094 = vpop.f32.mrb[0].mxu0
      %v4095 = vadd.f32 0.0, %v4094
      %v4096 = vpop.f32.mrb[0].mxu0
      %4097 = vmatprep.mubr.bf16.mxu0 %v3836
      %4098 = vmatmul.mubr.bf16.gmra.mrb[0].mxu0 %v3835
      %v4099 = vpop.f32.mrb[0].mxu0
      %v4100 = vadd.f32 0.0, %v4099
      %v4101 = vpop.f32.mrb[0].mxu0
      %v4102 = vpop.f32.mrb[0].mxu0
      %v4103 = vadd.f32 0.0, %v4102
      %v4104 = vpop.f32.mrb[0].mxu0
      %4105 = vdwg.mxu0
      %v4106 = vadd.f32 %v3637, %v3996
      %v4107 = vadd.f32 %v3638, %v3999
      %v4108 = vadd.f32 %v3639, %v4004
      %v4109 = vadd.f32 %v3640, %v4007
      %v4110 = vadd.f32 %v3641, %v4012
      %v4111 = vadd.f32 %v3642, %v4015
      %v4112 = vadd.f32 %v3643, %v4020
      %v4113 = vadd.f32 %v3644, %v4023
      %v4114 = vadd.f32 %v3645, %v4028
      %v4115 = vadd.f32 %v3646, %v4031
      %v4116 = vadd.f32 %v3647, %v4036
      %v4117 = vadd.f32 %v3648, %v4039
      %v4118 = vadd.f32 %v3649, %v4044
      %v4119 = vadd.f32 %v3650, %v4047
      %v4120 = vadd.f32 %v3651, %v4052
      %v4121 = vadd.f32 %v3652, %v4055
      %v4122 = vadd.f32 %v3653, %v4060
      %v4123 = vadd.f32 %v3654, %v4063
      %v4124 = vadd.f32 %v3655, %v4068
      %v4125 = vadd.f32 %v3656, %v4071
      %v4126 = vadd.f32 %v3657, %v4076
      %v4127 = vadd.f32 %v3658, %v4079
      %v4128 = vadd.f32 %v3659, %v4084
      %v4129 = vadd.f32 %v3660, %v4087
      %v4130 = vadd.f32 %v3661, %v4092
      %v4131 = vadd.f32 %v3662, %v4095
      %v4132 = vadd.f32 %v3663, %v4100
      %v4133 = vadd.f32 %v3664, %v4103
      %v4134 = vld [vmem:[#allocation2 + $0x30] sm:$0xff]
      %v4135 = vld [vmem:[#allocation2 + $0x38] sm:$0xff]
      %v4136 = vld [vmem:[#allocation2 + $0x40] sm:$0xff]
      %v4137 = vld [vmem:[#allocation2 + $0x48] sm:$0xff]
      %v4138 = vld [vmem:[#allocation2 + $0x50] sm:$0xff]
      %v4139 = vld [vmem:[#allocation2 + $0x58] sm:$0xff]
      %v4140 = vld [vmem:[#allocation2 + $0x60] sm:$0xff]
      %v4141 = vld [vmem:[#allocation2 + $0x68] sm:$0xff]
      %v4142 = vld [vmem:[#allocation2 + $0x70] sm:$0xff]
      %v4143 = vld [vmem:[#allocation2 + $0x78] sm:$0xff]
      %v4144 = vld [vmem:[#allocation2 + $0x80] sm:$0xff]
      %v4145 = vld [vmem:[#allocation2 + $0x88] sm:$0xff]
      %v4146 = vld [vmem:[#allocation2 + $0x90] sm:$0xff]
      %v4147 = vld [vmem:[#allocation2 + $0x98] sm:$0xff]
      %v4148 = vld [vmem:[#allocation2 + $0xa0] sm:$0xff]
      %v4149 = vld [vmem:[#allocation2 + $0xa8] sm:$0xff]
      %v4150 = vld [vmem:[#allocation2 + $0xb0] sm:$0xff]
      %v4151 = vld [vmem:[#allocation2 + $0xb8] sm:$0xff]
      %v4152 = vld [vmem:[#allocation2 + $0xc0] sm:$0xff]
      %v4153 = vld [vmem:[#allocation2 + $0xc8] sm:$0xff]
      %v4154 = vld [vmem:[#allocation2 + $0xd0] sm:$0xff]
      %v4155 = vld [vmem:[#allocation2 + $0xd8] sm:$0xff]
      %v4156 = vld [vmem:[#allocation2 + $0xe0] sm:$0xff]
      %v4157 = vld [vmem:[#allocation2 + $0xe8] sm:$0xff]
      %v4158 = vld [vmem:[#allocation2 + $0xf0] sm:$0xff]
      %v4159 = vld [vmem:[#allocation2 + $0xf8] sm:$0xff]
      %v4160 = vld [vmem:[#allocation2 + $0x100] sm:$0xff]
      %v4161 = vld [vmem:[#allocation2 + $0x108] sm:$0xff]
      %v4162 = vld [vmem:[#allocation2 + $0x110] sm:$0x11]
      %v4163 = vld [vmem:[%s4 + $0x380] sm:$0xf]
      %v4164 = vld [vmem:[%s4 + $0x384] sm:$0xf]
      %v4165 = vld [vmem:[%s4 + $0x388] sm:$0xf]
      %v4166 = vld [vmem:[%s4 + $0x38c] sm:$0xf]
      %v4167 = vld [vmem:[%s4 + $0x390] sm:$0xf]
      %v4168 = vld [vmem:[%s4 + $0x394] sm:$0xf]
      %v4169 = vld [vmem:[%s4 + $0x398] sm:$0xf]
      %v4170 = vld [vmem:[%s4 + $0x39c] sm:$0xf]
      %v4171 = vld [vmem:[%s4 + $0x3a0] sm:$0xf]
      %v4172 = vld [vmem:[%s4 + $0x3a4] sm:$0xf]
      %v4173 = vld [vmem:[%s4 + $0x3a8] sm:$0xf]
      %v4174 = vld [vmem:[%s4 + $0x3ac] sm:$0xf]
      %v4175 = vld [vmem:[%s4 + $0x3b0] sm:$0xf]
      %v4176 = vld [vmem:[%s4 + $0x3b4] sm:$0xf]
      %v4177 = vld [vmem:[%s4 + $0x3b8] sm:$0xf]
      %v4178 = vld [vmem:[%s4 + $0x3bc] sm:$0xf]
      %v4179 = vld [vmem:[%s4 + $0x3c0] sm:$0xf]
      %v4180 = vld [vmem:[%s4 + $0x3c4] sm:$0xf]
      %v4181 = vld [vmem:[%s4 + $0x3c8] sm:$0xf]
      %v4182 = vld [vmem:[%s4 + $0x3cc] sm:$0xf]
      %v4183 = vld [vmem:[%s4 + $0x3d0] sm:$0xf]
      %v4184 = vld [vmem:[%s4 + $0x3d4] sm:$0xf]
      %v4185 = vld [vmem:[%s4 + $0x3d8] sm:$0xf]
      %v4186 = vld [vmem:[%s4 + $0x3dc] sm:$0xf]
      %v4187 = vld [vmem:[%s4 + $0x3e0] sm:$0xf]
      %v4188 = vld [vmem:[%s4 + $0x3e4] sm:$0xf]
      %v4189 = vld [vmem:[%s4 + $0x3e8] sm:$0xf]
      %v4190 = vld [vmem:[%s4 + $0x3ec] sm:$0xf]
      %v4191 = vld [vmem:[%s4 + $0x3f0] sm:$0xf]
      %v4192 = vld [vmem:[%s4 + $0x3f4] sm:$0xf]
      %v4193 = vld [vmem:[%s4 + $0x3f8] sm:$0xf]
      %v4194 = vld [vmem:[%s4 + $0x3fc] sm:$0xf]
      %v4224 = vunpack.c.l.b16 %v4134
      %v4225 = vunpack.c.h.b16 %v4134
      %v4226 = vunpack.c.l.b16 %v4135
      %v4227 = vunpack.c.h.b16 %v4135
      %v4228 = vunpack.c.l.b16 %v4136
      %v4229 = vunpack.c.h.b16 %v4136
      %v4230 = vunpack.c.l.b16 %v4137
      %v4231 = vunpack.c.h.b16 %v4137
      %v4232 = vunpack.c.l.b16 %v4138
      %v4233 = vunpack.c.h.b16 %v4138
      %v4234 = vunpack.c.l.b16 %v4139
      %v4235 = vunpack.c.h.b16 %v4139
      %v4236 = vunpack.c.l.b16 %v4140
      %v4237 = vunpack.c.h.b16 %v4140
      %v4238 = vunpack.c.l.b16 %v4141
      %v4239 = vunpack.c.h.b16 %v4141
      %v4240 = vunpack.c.l.b16 %v4142
      %v4241 = vunpack.c.h.b16 %v4142
      %v4242 = vunpack.c.l.b16 %v4143
      %v4243 = vunpack.c.h.b16 %v4143
      %v4244 = vunpack.c.l.b16 %v4144
      %v4245 = vunpack.c.h.b16 %v4144
      %v4246 = vunpack.c.l.b16 %v4145
      %v4247 = vunpack.c.h.b16 %v4145
      %v4248 = vunpack.c.l.b16 %v4146
      %v4249 = vunpack.c.h.b16 %v4146
      %v4250 = vunpack.c.l.b16 %v4147
      %v4251 = vunpack.c.h.b16 %v4147
      %v4252 = vunpack.c.l.b16 %v4148
      %v4253 = vunpack.c.h.b16 %v4148
      %v4254 = vunpack.c.l.b16 %v4149
      %v4255 = vunpack.c.h.b16 %v4149
      %v4256 = vunpack.c.l.b16 %v4150
      %v4257 = vunpack.c.h.b16 %v4150
      %v4258 = vunpack.c.l.b16 %v4151
      %v4259 = vunpack.c.h.b16 %v4151
      %v4260 = vunpack.c.l.b16 %v4152
      %v4261 = vunpack.c.h.b16 %v4152
      %v4262 = vunpack.c.l.b16 %v4153
      %v4263 = vunpack.c.h.b16 %v4153
      %v4264 = vunpack.c.l.b16 %v4154
      %v4265 = vunpack.c.h.b16 %v4154
      %v4266 = vunpack.c.l.b16 %v4155
      %v4267 = vunpack.c.h.b16 %v4155
      %v4268 = vunpack.c.l.b16 %v4156
      %v4269 = vunpack.c.h.b16 %v4156
      %v4270 = vunpack.c.l.b16 %v4157
      %v4271 = vunpack.c.h.b16 %v4157
      %v4272 = vunpack.c.l.b16 %v4158
      %v4273 = vunpack.c.h.b16 %v4158
      %v4274 = vunpack.c.l.b16 %v4159
      %v4275 = vunpack.c.h.b16 %v4159
      %v4276 = vunpack.c.l.b16 %v4160
      %v4277 = vunpack.c.h.b16 %v4160
      %v4278 = vunpack.c.l.b16 %v4161
      %v4279 = vunpack.c.h.b16 %v4161
      %v4280 = vunpack.c.l.b16 %v4162
      %v4281 = vunpack.c.h.b16 %v4162
      %v4282 = vpack.c.b16 %v4226, %v4224
      %v4283 = vpack.c.b16 %v4227, %v4225
      %v4284 = vpack.c.b16 %v4230, %v4228
      %v4285 = vpack.c.b16 %v4231, %v4229
      %v4286 = vpack.c.b16 %v4234, %v4232
      %v4287 = vpack.c.b16 %v4235, %v4233
      %v4288 = vpack.c.b16 %v4238, %v4236
      %v4289 = vpack.c.b16 %v4239, %v4237
      %v4290 = vpack.c.b16 %v4242, %v4240
      %v4291 = vpack.c.b16 %v4243, %v4241
      %v4292 = vpack.c.b16 %v4246, %v4244
      %v4293 = vpack.c.b16 %v4247, %v4245
      %v4294 = vpack.c.b16 %v4250, %v4248
      %v4295 = vpack.c.b16 %v4251, %v4249
      %v4296 = vpack.c.b16 %v4254, %v4252
      %v4297 = vpack.c.b16 %v4255, %v4253
      %v4298 = vpack.c.b16 %v4258, %v4256
      %v4299 = vpack.c.b16 %v4259, %v4257
      %v4300 = vpack.c.b16 %v4262, %v4260
      %v4301 = vpack.c.b16 %v4263, %v4261
      %v4302 = vpack.c.b16 %v4266, %v4264
      %v4303 = vpack.c.b16 %v4267, %v4265
      %v4304 = vpack.c.b16 %v4270, %v4268
      %v4305 = vpack.c.b16 %v4271, %v4269
      %v4306 = vpack.c.b16 %v4274, %v4272
      %v4307 = vpack.c.b16 %v4275, %v4273
      %v4308 = vpack.c.b16 %v4278, %v4276
      %v4309 = vpack.c.b16 %v4279, %v4277
      %v4310 = vpack.c.b16 %v4280, %v4280
      %v4311 = vpack.c.b16 %v4281, %v4281
      %v4313 = vshrl.u32 %v4282, 16
      %v4315 = vshll.u32 %v4282, 16
      %v4317 = vrot.slane %v4315, 1
      %v4318 = vor.u32 %v4313, %v4317
      %v4320 = vshll.u32 %v4284, 16
      %v4322 = vrot.slane %v4320, 1
      %v4323 = vsel %vm931, %v4318, %v4322
      %v4325 = vshrl.u32 %v4283, 16
      %v4327 = vshll.u32 %v4283, 16
      %v4329 = vrot.slane %v4327, 1
      %v4330 = vor.u32 %v4325, %v4329
      %v4332 = vshll.u32 %v4285, 16
      %v4334 = vrot.slane %v4332, 1
      %v4335 = vsel %vm931, %v4330, %v4334
      %v4336 = vshrl.u32 %v4284, 16
      %v4338 = vor.u32 %v4336, %v4322
      %v4340 = vshll.u32 %v4286, 16
      %v4342 = vrot.slane %v4340, 1
      %v4343 = vsel %vm931, %v4338, %v4342
      %v4344 = vshrl.u32 %v4285, 16
      %v4346 = vor.u32 %v4344, %v4334
      %v4348 = vshll.u32 %v4287, 16
      %v4350 = vrot.slane %v4348, 1
      %v4351 = vsel %vm931, %v4346, %v4350
      %v4352 = vshrl.u32 %v4286, 16
      %v4354 = vor.u32 %v4352, %v4342
      %v4356 = vshll.u32 %v4288, 16
      %v4358 = vrot.slane %v4356, 1
      %v4359 = vsel %vm931, %v4354, %v4358
      %v4360 = vshrl.u32 %v4287, 16
      %v4362 = vor.u32 %v4360, %v4350
      %v4364 = vshll.u32 %v4289, 16
      %v4366 = vrot.slane %v4364, 1
      %v4367 = vsel %vm931, %v4362, %v4366
      %v4368 = vshrl.u32 %v4288, 16
      %v4370 = vor.u32 %v4368, %v4358
      %v4372 = vshll.u32 %v4290, 16
      %v4374 = vrot.slane %v4372, 1
      %v4375 = vsel %vm931, %v4370, %v4374
      %v4376 = vshrl.u32 %v4289, 16
      %v4378 = vor.u32 %v4376, %v4366
      %v4380 = vshll.u32 %v4291, 16
      %v4382 = vrot.slane %v4380, 1
      %v4383 = vsel %vm931, %v4378, %v4382
      %v4384 = vshrl.u32 %v4290, 16
      %v4386 = vor.u32 %v4384, %v4374
      %v4388 = vshll.u32 %v4292, 16
      %v4390 = vrot.slane %v4388, 1
      %v4391 = vsel %vm931, %v4386, %v4390
      %v4392 = vshrl.u32 %v4291, 16
      %v4394 = vor.u32 %v4392, %v4382
      %v4396 = vshll.u32 %v4293, 16
      %v4398 = vrot.slane %v4396, 1
      %v4399 = vsel %vm931, %v4394, %v4398
      %v4400 = vshrl.u32 %v4292, 16
      %v4402 = vor.u32 %v4400, %v4390
      %v4404 = vshll.u32 %v4294, 16
      %v4406 = vrot.slane %v4404, 1
      %v4407 = vsel %vm931, %v4402, %v4406
      %v4408 = vshrl.u32 %v4293, 16
      %v4410 = vor.u32 %v4408, %v4398
      %v4412 = vshll.u32 %v4295, 16
      %v4414 = vrot.slane %v4412, 1
      %v4415 = vsel %vm931, %v4410, %v4414
      %v4416 = vshrl.u32 %v4294, 16
      %v4418 = vor.u32 %v4416, %v4406
      %v4420 = vshll.u32 %v4296, 16
      %v4422 = vrot.slane %v4420, 1
      %v4423 = vsel %vm931, %v4418, %v4422
      %v4424 = vshrl.u32 %v4295, 16
      %v4426 = vor.u32 %v4424, %v4414
      %v4428 = vshll.u32 %v4297, 16
      %v4430 = vrot.slane %v4428, 1
      %v4431 = vsel %vm931, %v4426, %v4430
      %v4432 = vshrl.u32 %v4296, 16
      %v4434 = vor.u32 %v4432, %v4422
      %v4436 = vshll.u32 %v4298, 16
      %v4438 = vrot.slane %v4436, 1
      %v4439 = vsel %vm931, %v4434, %v4438
      %v4440 = vshrl.u32 %v4297, 16
      %v4442 = vor.u32 %v4440, %v4430
      %v4444 = vshll.u32 %v4299, 16
      %v4446 = vrot.slane %v4444, 1
      %v4447 = vsel %vm931, %v4442, %v4446
      %v4448 = vshrl.u32 %v4298, 16
      %v4450 = vor.u32 %v4448, %v4438
      %v4452 = vshll.u32 %v4300, 16
      %v4454 = vrot.slane %v4452, 1
      %v4455 = vsel %vm931, %v4450, %v4454
      %v4456 = vshrl.u32 %v4299, 16
      %v4458 = vor.u32 %v4456, %v4446
      %v4460 = vshll.u32 %v4301, 16
      %v4462 = vrot.slane %v4460, 1
      %v4463 = vsel %vm931, %v4458, %v4462
      %v4464 = vshrl.u32 %v4300, 16
      %v4466 = vor.u32 %v4464, %v4454
      %v4468 = vshll.u32 %v4302, 16
      %v4470 = vrot.slane %v4468, 1
      %v4471 = vsel %vm931, %v4466, %v4470
      %v4472 = vshrl.u32 %v4301, 16
      %v4474 = vor.u32 %v4472, %v4462
      %v4476 = vshll.u32 %v4303, 16
      %v4478 = vrot.slane %v4476, 1
      %v4479 = vsel %vm931, %v4474, %v4478
      %v4480 = vshrl.u32 %v4302, 16
      %v4482 = vor.u32 %v4480, %v4470
      %v4484 = vshll.u32 %v4304, 16
      %v4486 = vrot.slane %v4484, 1
      %v4487 = vsel %vm931, %v4482, %v4486
      %v4488 = vshrl.u32 %v4303, 16
      %v4490 = vor.u32 %v4488, %v4478
      %v4492 = vshll.u32 %v4305, 16
      %v4494 = vrot.slane %v4492, 1
      %v4495 = vsel %vm931, %v4490, %v4494
      %v4496 = vshrl.u32 %v4304, 16
      %v4498 = vor.u32 %v4496, %v4486
      %v4500 = vshll.u32 %v4306, 16
      %v4502 = vrot.slane %v4500, 1
      %v4503 = vsel %vm931, %v4498, %v4502
      %v4504 = vshrl.u32 %v4305, 16
      %v4506 = vor.u32 %v4504, %v4494
      %v4508 = vshll.u32 %v4307, 16
      %v4510 = vrot.slane %v4508, 1
      %v4511 = vsel %vm931, %v4506, %v4510
      %v4512 = vshrl.u32 %v4306, 16
      %v4514 = vor.u32 %v4512, %v4502
      %v4516 = vshll.u32 %v4308, 16
      %v4518 = vrot.slane %v4516, 1
      %v4519 = vsel %vm931, %v4514, %v4518
      %v4520 = vshrl.u32 %v4307, 16
      %v4522 = vor.u32 %v4520, %v4510
      %v4524 = vshll.u32 %v4309, 16
      %v4526 = vrot.slane %v4524, 1
      %v4527 = vsel %vm931, %v4522, %v4526
      %v4528 = vshrl.u32 %v4308, 16
      %v4530 = vor.u32 %v4528, %v4518
      %v4532 = vshll.u32 %v4310, 16
      %v4534 = vrot.slane %v4532, 1
      %v4535 = vsel %vm931, %v4530, %v4534
      %v4536 = vshrl.u32 %v4309, 16
      %v4538 = vor.u32 %v4536, %v4526
      %v4540 = vshll.u32 %v4311, 16
      %v4542 = vrot.slane %v4540, 1
      %v4543 = vsel %vm931, %v4538, %v4542
      %v4604 = vunpack.c.l.b16 %v4163
      %v4605 = vunpack.c.l.b16 %v4164
      %v4606 = vunpack.c.l.b16 %v4165
      %v4607 = vunpack.c.l.b16 %v4166
      %v4608 = vunpack.c.l.b16 %v4167
      %v4609 = vunpack.c.l.b16 %v4168
      %v4610 = vunpack.c.l.b16 %v4169
      %v4611 = vunpack.c.l.b16 %v4170
      %v4612 = vunpack.c.l.b16 %v4171
      %v4613 = vunpack.c.l.b16 %v4172
      %v4614 = vunpack.c.l.b16 %v4173
      %v4615 = vunpack.c.l.b16 %v4174
      %v4616 = vunpack.c.l.b16 %v4175
      %v4617 = vunpack.c.l.b16 %v4176
      %v4618 = vunpack.c.l.b16 %v4177
      %v4619 = vunpack.c.l.b16 %v4178
      %v4620 = vunpack.c.l.b16 %v4179
      %v4621 = vunpack.c.l.b16 %v4180
      %v4622 = vunpack.c.l.b16 %v4181
      %v4623 = vunpack.c.l.b16 %v4182
      %v4624 = vunpack.c.l.b16 %v4183
      %v4625 = vunpack.c.l.b16 %v4184
      %v4626 = vunpack.c.l.b16 %v4185
      %v4627 = vunpack.c.l.b16 %v4186
      %v4628 = vunpack.c.l.b16 %v4187
      %v4629 = vunpack.c.l.b16 %v4188
      %v4630 = vunpack.c.l.b16 %v4189
      %v4631 = vunpack.c.l.b16 %v4190
      %v4632 = vunpack.c.l.b16 %v4191
      %v4633 = vunpack.c.l.b16 %v4192
      %v4634 = vunpack.c.l.b16 %v4193
      %v4635 = vunpack.c.l.b16 %v4194
      %v4636 = vpack.c.b16 %v4605, %v4604
      %v4637 = vpack.c.b16 %v4607, %v4606
      %v4638 = vpack.c.b16 %v4609, %v4608
      %v4639 = vpack.c.b16 %v4611, %v4610
      %v4640 = vpack.c.b16 %v4613, %v4612
      %v4641 = vpack.c.b16 %v4615, %v4614
      %v4642 = vpack.c.b16 %v4617, %v4616
      %v4643 = vpack.c.b16 %v4619, %v4618
      %v4644 = vpack.c.b16 %v4621, %v4620
      %v4645 = vpack.c.b16 %v4623, %v4622
      %v4646 = vpack.c.b16 %v4625, %v4624
      %v4647 = vpack.c.b16 %v4627, %v4626
      %v4648 = vpack.c.b16 %v4629, %v4628
      %v4649 = vpack.c.b16 %v4631, %v4630
      %v4650 = vpack.c.b16 %v4633, %v4632
      %v4651 = vpack.c.b16 %v4635, %v4634
      %4668 = vmatprep.subr.bf16.mxu0 0
      %4669 = vmatpush1.bf16.msra.mxu0 %v4636
      %4670 = vmatprep.subr.bf16.mxu0 0
      %4671 = vmatpush1.bf16.msra.mxu0 %v4637
      %4672 = vmatprep.subr.bf16.mxu0 0
      %4673 = vmatpush1.bf16.msra.mxu0 %v4638
      %4674 = vmatprep.subr.bf16.mxu0 0
      %4675 = vmatpush1.bf16.msra.mxu0 %v4639
      %4676 = vmatprep.subr.bf16.mxu0 0
      %4677 = vmatpush1.bf16.msra.mxu0 %v4640
      %4678 = vmatprep.subr.bf16.mxu0 0
      %4679 = vmatpush1.bf16.msra.mxu0 %v4641
      %4680 = vmatprep.subr.bf16.mxu0 0
      %4681 = vmatpush1.bf16.msra.mxu0 %v4642
      %4682 = vmatprep.subr.bf16.mxu0 0
      %4683 = vmatpush1.bf16.msra.mxu0 %v4643
      %4684 = vmatprep.subr.bf16.mxu0 0
      %4685 = vmatpush1.bf16.msra.mxu0 %v4644
      %4686 = vmatprep.subr.bf16.mxu0 0
      %4687 = vmatpush1.bf16.msra.mxu0 %v4645
      %4688 = vmatprep.subr.bf16.mxu0 0
      %4689 = vmatpush1.bf16.msra.mxu0 %v4646
      %4690 = vmatprep.subr.bf16.mxu0 0
      %4691 = vmatpush1.bf16.msra.mxu0 %v4647
      %4692 = vmatprep.subr.bf16.mxu0 0
      %4693 = vmatpush1.bf16.msra.mxu0 %v4648
      %4694 = vmatprep.subr.bf16.mxu0 0
      %4695 = vmatpush1.bf16.msra.mxu0 %v4649
      %4696 = vmatprep.subr.bf16.mxu0 0
      %4697 = vmatpush1.bf16.msra.mxu0 %v4650
      %4698 = vmatprep.subr.bf16.mxu0 0
      %4699 = vmatpush1.bf16.msra.mxu0 %v4651
      %4700 = vmatprep.mubr.bf16.mxu0 %v4335
      %4701 = vmatmul.mubr.bf16.gmra.mrb[0].mxu0 %v4323
      %v4702 = vpop.f32.mrb[0].mxu0
      %v4703 = vadd.f32 0.0, %v4702
      %v4704 = vpop.f32.mrb[0].mxu0
      %v4705 = vpop.f32.mrb[0].mxu0
      %v4706 = vadd.f32 0.0, %v4705
      %v4707 = vpop.f32.mrb[0].mxu0
      %4708 = vmatprep.mubr.bf16.mxu0 %v4351
      %4709 = vmatmul.mubr.bf16.gmra.mrb[0].mxu0 %v4343
      %v4710 = vpop.f32.mrb[0].mxu0
      %v4711 = vadd.f32 0.0, %v4710
      %v4712 = vpop.f32.mrb[0].mxu0
      %v4713 = vpop.f32.mrb[0].mxu0
      %v4714 = vadd.f32 0.0, %v4713
      %v4715 = vpop.f32.mrb[0].mxu0
      %4716 = vmatprep.mubr.bf16.mxu0 %v4367
      %4717 = vmatmul.mubr.bf16.gmra.mrb[0].mxu0 %v4359
      %v4718 = vpop.f32.mrb[0].mxu0
      %v4719 = vadd.f32 0.0, %v4718
      %v4720 = vpop.f32.mrb[0].mxu0
      %v4721 = vpop.f32.mrb[0].mxu0
      %v4722 = vadd.f32 0.0, %v4721
      %v4723 = vpop.f32.mrb[0].mxu0
      %4724 = vmatprep.mubr.bf16.mxu0 %v4383
      %4725 = vmatmul.mubr.bf16.gmra.mrb[0].mxu0 %v4375
      %v4726 = vpop.f32.mrb[0].mxu0
      %v4727 = vadd.f32 0.0, %v4726
      %v4728 = vpop.f32.mrb[0].mxu0
      %v4729 = vpop.f32.mrb[0].mxu0
      %v4730 = vadd.f32 0.0, %v4729
      %v4731 = vpop.f32.mrb[0].mxu0
      %4732 = vmatprep.mubr.bf16.mxu0 %v4399
      %4733 = vmatmul.mubr.bf16.gmra.mrb[0].mxu0 %v4391
      %v4734 = vpop.f32.mrb[0].mxu0
      %v4735 = vadd.f32 0.0, %v4734
      %v4736 = vpop.f32.mrb[0].mxu0
      %v4737 = vpop.f32.mrb[0].mxu0
      %v4738 = vadd.f32 0.0, %v4737
      %v4739 = vpop.f32.mrb[0].mxu0
      %4740 = vmatprep.mubr.bf16.mxu0 %v4415
      %4741 = vmatmul.mubr.bf16.gmra.mrb[0].mxu0 %v4407
      %v4742 = vpop.f32.mrb[0].mxu0
      %v4743 = vadd.f32 0.0, %v4742
      %v4744 = vpop.f32.mrb[0].mxu0
      %v4745 = vpop.f32.mrb[0].mxu0
      %v4746 = vadd.f32 0.0, %v4745
      %v4747 = vpop.f32.mrb[0].mxu0
      %4748 = vmatprep.mubr.bf16.mxu0 %v4431
      %4749 = vmatmul.mubr.bf16.gmra.mrb[0].mxu0 %v4423
      %v4750 = vpop.f32.mrb[0].mxu0
      %v4751 = vadd.f32 0.0, %v4750
      %v4752 = vpop.f32.mrb[0].mxu0
      %v4753 = vpop.f32.mrb[0].mxu0
      %v4754 = vadd.f32 0.0, %v4753
      %v4755 = vpop.f32.mrb[0].mxu0
      %4756 = vmatprep.mubr.bf16.mxu0 %v4447
      %4757 = vmatmul.mubr.bf16.gmra.mrb[0].mxu0 %v4439
      %v4758 = vpop.f32.mrb[0].mxu0
      %v4759 = vadd.f32 0.0, %v4758
      %v4760 = vpop.f32.mrb[0].mxu0
      %v4761 = vpop.f32.mrb[0].mxu0
      %v4762 = vadd.f32 0.0, %v4761
      %v4763 = vpop.f32.mrb[0].mxu0
      %4764 = vmatprep.mubr.bf16.mxu0 %v4463
      %4765 = vmatmul.mubr.bf16.gmra.mrb[0].mxu0 %v4455
      %v4766 = vpop.f32.mrb[0].mxu0
      %v4767 = vadd.f32 0.0, %v4766
      %v4768 = vpop.f32.mrb[0].mxu0
      %v4769 = vpop.f32.mrb[0].mxu0
      %v4770 = vadd.f32 0.0, %v4769
      %v4771 = vpop.f32.mrb[0].mxu0
      %4772 = vmatprep.mubr.bf16.mxu0 %v4479
      %4773 = vmatmul.mubr.bf16.gmra.mrb[0].mxu0 %v4471
      %v4774 = vpop.f32.mrb[0].mxu0
      %v4775 = vadd.f32 0.0, %v4774
      %v4776 = vpop.f32.mrb[0].mxu0
      %v4777 = vpop.f32.mrb[0].mxu0
      %v4778 = vadd.f32 0.0, %v4777
      %v4779 = vpop.f32.mrb[0].mxu0
      %4780 = vmatprep.mubr.bf16.mxu0 %v4495
      %4781 = vmatmul.mubr.bf16.gmra.mrb[0].mxu0 %v4487
      %v4782 = vpop.f32.mrb[0].mxu0
      %v4783 = vadd.f32 0.0, %v4782
      %v4784 = vpop.f32.mrb[0].mxu0
      %v4785 = vpop.f32.mrb[0].mxu0
      %v4786 = vadd.f32 0.0, %v4785
      %v4787 = vpop.f32.mrb[0].mxu0
      %4788 = vmatprep.mubr.bf16.mxu0 %v4511
      %4789 = vmatmul.mubr.bf16.gmra.mrb[0].mxu0 %v4503
      %v4790 = vpop.f32.mrb[0].mxu0
      %v4791 = vadd.f32 0.0, %v4790
      %v4792 = vpop.f32.mrb[0].mxu0
      %v4793 = vpop.f32.mrb[0].mxu0
      %v4794 = vadd.f32 0.0, %v4793
      %v4795 = vpop.f32.mrb[0].mxu0
      %4796 = vmatprep.mubr.bf16.mxu0 %v4527
      %4797 = vmatmul.mubr.bf16.gmra.mrb[0].mxu0 %v4519
      %v4798 = vpop.f32.mrb[0].mxu0
      %v4799 = vadd.f32 0.0, %v4798
      %v4800 = vpop.f32.mrb[0].mxu0
      %v4801 = vpop.f32.mrb[0].mxu0
      %v4802 = vadd.f32 0.0, %v4801
      %v4803 = vpop.f32.mrb[0].mxu0
      %4804 = vmatprep.mubr.bf16.mxu0 %v4543
      %4805 = vmatmul.mubr.bf16.gmra.mrb[0].mxu0 %v4535
      %v4806 = vpop.f32.mrb[0].mxu0
      %v4807 = vadd.f32 0.0, %v4806
      %v4808 = vpop.f32.mrb[0].mxu0
      %v4809 = vpop.f32.mrb[0].mxu0
      %v4810 = vadd.f32 0.0, %v4809
      %v4811 = vpop.f32.mrb[0].mxu0
      %4812 = vdwg.mxu0
      %v4813 = vadd.f32 %v4106, %v4703
      %v4814 = vadd.f32 %v4107, %v4706
      %v4815 = vadd.f32 %v4108, %v4711
      %v4816 = vadd.f32 %v4109, %v4714
      %v4817 = vadd.f32 %v4110, %v4719
      %v4818 = vadd.f32 %v4111, %v4722
      %v4819 = vadd.f32 %v4112, %v4727
      %v4820 = vadd.f32 %v4113, %v4730
      %v4821 = vadd.f32 %v4114, %v4735
      %v4822 = vadd.f32 %v4115, %v4738
      %v4823 = vadd.f32 %v4116, %v4743
      %v4824 = vadd.f32 %v4117, %v4746
      %v4825 = vadd.f32 %v4118, %v4751
      %v4826 = vadd.f32 %v4119, %v4754
      %v4827 = vadd.f32 %v4120, %v4759
      %v4828 = vadd.f32 %v4121, %v4762
      %v4829 = vadd.f32 %v4122, %v4767
      %v4830 = vadd.f32 %v4123, %v4770
      %v4831 = vadd.f32 %v4124, %v4775
      %v4832 = vadd.f32 %v4125, %v4778
      %v4833 = vadd.f32 %v4126, %v4783
      %v4834 = vadd.f32 %v4127, %v4786
      %v4835 = vadd.f32 %v4128, %v4791
      %v4836 = vadd.f32 %v4129, %v4794
      %v4837 = vadd.f32 %v4130, %v4799
      %v4838 = vadd.f32 %v4131, %v4802
      %v4839 = vadd.f32 %v4132, %v4807
      %v4840 = vadd.f32 %v4133, %v4810
      %v4841 = vld [vmem:[#allocation2 + $0x30] sm:$0xee]
      %v4842 = vld [vmem:[%s4 + $0x400] sm:$0xf]
      %v4843 = vld [vmem:[%s4 + $0x404] sm:$0xf]
      %v4844 = vld [vmem:[%s4 + $0x408] sm:$0xf]
      %v4845 = vld [vmem:[%s4 + $0x40c] sm:$0xf]
      %v4846 = vld [vmem:[%s4 + $0x410] sm:$0xf]
      %v4847 = vld [vmem:[%s4 + $0x414] sm:$0xf]
      %v4848 = vld [vmem:[%s4 + $0x418] sm:$0xf]
      %v4849 = vld [vmem:[%s4 + $0x41c] sm:$0xf]
      %v4850 = vld [vmem:[%s4 + $0x420] sm:$0xf]
      %v4851 = vld [vmem:[%s4 + $0x424] sm:$0xf]
      %v4852 = vld [vmem:[%s4 + $0x428] sm:$0xf]
      %v4853 = vld [vmem:[%s4 + $0x42c] sm:$0xf]
      %v4854 = vld [vmem:[%s4 + $0x430] sm:$0xf]
      %v4855 = vld [vmem:[%s4 + $0x434] sm:$0xf]
      %v4856 = vld [vmem:[%s4 + $0x438] sm:$0xf]
      %v4857 = vld [vmem:[%s4 + $0x43c] sm:$0xf]
      %v4858 = vld [vmem:[%s4 + $0x440] sm:$0xf]
      %v4859 = vld [vmem:[%s4 + $0x444] sm:$0xf]
      %v4860 = vld [vmem:[%s4 + $0x448] sm:$0xf]
      %v4861 = vld [vmem:[%s4 + $0x44c] sm:$0xf]
      %v4862 = vld [vmem:[%s4 + $0x450] sm:$0xf]
      %v4863 = vld [vmem:[%s4 + $0x454] sm:$0xf]
      %v4864 = vld [vmem:[%s4 + $0x458] sm:$0xf]
      %v4865 = vld [vmem:[%s4 + $0x45c] sm:$0xf]
      %v4866 = vld [vmem:[%s4 + $0x460] sm:$0xf]
      %v4867 = vld [vmem:[%s4 + $0x464] sm:$0xf]
      %v4868 = vld [vmem:[%s4 + $0x468] sm:$0xf]
      %v4869 = vld [vmem:[%s4 + $0x46c] sm:$0xf]
      %v4870 = vld [vmem:[%s4 + $0x470] sm:$0xf]
      %v4871 = vld [vmem:[%s4 + $0x474] sm:$0xf]
      %v4872 = vld [vmem:[%s4 + $0x478] sm:$0xf]
      %v4873 = vld [vmem:[%s4 + $0x47c] sm:$0xf]
      %v4875 = vunpack.c.l.b16 %v4841
      %v4876 = vunpack.c.h.b16 %v4841
      %v4877 = vpack.c.b16 %v4226, %v4875
      %v4878 = vpack.c.b16 %v4227, %v4876
      %v4879 = vrot.slane %v4877, 1
      %v4880 = vrot.slane %v4284, 1
      %v4881 = vsel %vm1740, %v4879, %v4880
      %v4882 = vrot.slane %v4878, 1
      %v4883 = vrot.slane %v4285, 1
      %v4884 = vsel %vm1740, %v4882, %v4883
      %v4885 = vrot.slane %v4286, 1
      %v4886 = vsel %vm1740, %v4880, %v4885
      %v4887 = vrot.slane %v4287, 1
      %v4888 = vsel %vm1740, %v4883, %v4887
      %v4889 = vrot.slane %v4288, 1
      %v4890 = vsel %vm1740, %v4885, %v4889
      %v4891 = vrot.slane %v4289, 1
      %v4892 = vsel %vm1740, %v4887, %v4891
      %v4893 = vrot.slane %v4290, 1
      %v4894 = vsel %vm1740, %v4889, %v4893
      %v4895 = vrot.slane %v4291, 1
      %v4896 = vsel %vm1740, %v4891, %v4895
      %v4897 = vrot.slane %v4292, 1
      %v4898 = vsel %vm1740, %v4893, %v4897
      %v4899 = vrot.slane %v4293, 1
      %v4900 = vsel %vm1740, %v4895, %v4899
      %v4901 = vrot.slane %v4294, 1
      %v4902 = vsel %vm1740, %v4897, %v4901
      %v4903 = vrot.slane %v4295, 1
      %v4904 = vsel %vm1740, %v4899, %v4903
      %v4905 = vrot.slane %v4296, 1
      %v4906 = vsel %vm1740, %v4901, %v4905
      %v4907 = vrot.slane %v4297, 1
      %v4908 = vsel %vm1740, %v4903, %v4907
      %v4909 = vrot.slane %v4298, 1
      %v4910 = vsel %vm1740, %v4905, %v4909
      %v4911 = vrot.slane %v4299, 1
      %v4912 = vsel %vm1740, %v4907, %v4911
      %v4913 = vrot.slane %v4300, 1
      %v4914 = vsel %vm1740, %v4909, %v4913
      %v4915 = vrot.slane %v4301, 1
      %v4916 = vsel %vm1740, %v4911, %v4915
      %v4917 = vrot.slane %v4302, 1
      %v4918 = vsel %vm1740, %v4913, %v4917
      %v4919 = vrot.slane %v4303, 1
      %v4920 = vsel %vm1740, %v4915, %v4919
      %v4921 = vrot.slane %v4304, 1
      %v4922 = vsel %vm1740, %v4917, %v4921
      %v4923 = vrot.slane %v4305, 1
      %v4924 = vsel %vm1740, %v4919, %v4923
      %v4925 = vrot.slane %v4306, 1
      %v4926 = vsel %vm1740, %v4921, %v4925
      %v4927 = vrot.slane %v4307, 1
      %v4928 = vsel %vm1740, %v4923, %v4927
      %v4929 = vrot.slane %v4308, 1
      %v4930 = vsel %vm1740, %v4925, %v4929
      %v4931 = vrot.slane %v4309, 1
      %v4932 = vsel %vm1740, %v4927, %v4931
      %v4933 = vrot.slane %v4310, 1
      %v4934 = vsel %vm1740, %v4929, %v4933
      %v4935 = vrot.slane %v4311, 1
      %v4936 = vsel %vm1740, %v4931, %v4935
      %v4997 = vunpack.c.l.b16 %v4842
      %v4998 = vunpack.c.l.b16 %v4843
      %v4999 = vunpack.c.l.b16 %v4844
      %v5000 = vunpack.c.l.b16 %v4845
      %v5001 = vunpack.c.l.b16 %v4846
      %v5002 = vunpack.c.l.b16 %v4847
      %v5003 = vunpack.c.l.b16 %v4848
      %v5004 = vunpack.c.l.b16 %v4849
      %v5005 = vunpack.c.l.b16 %v4850
      %v5006 = vunpack.c.l.b16 %v4851
      %v5007 = vunpack.c.l.b16 %v4852
      %v5008 = vunpack.c.l.b16 %v4853
      %v5009 = vunpack.c.l.b16 %v4854
      %v5010 = vunpack.c.l.b16 %v4855
      %v5011 = vunpack.c.l.b16 %v4856
      %v5012 = vunpack.c.l.b16 %v4857
      %v5013 = vunpack.c.l.b16 %v4858
      %v5014 = vunpack.c.l.b16 %v4859
      %v5015 = vunpack.c.l.b16 %v4860
      %v5016 = vunpack.c.l.b16 %v4861
      %v5017 = vunpack.c.l.b16 %v4862
      %v5018 = vunpack.c.l.b16 %v4863
      %v5019 = vunpack.c.l.b16 %v4864
      %v5020 = vunpack.c.l.b16 %v4865
      %v5021 = vunpack.c.l.b16 %v4866
      %v5022 = vunpack.c.l.b16 %v4867
      %v5023 = vunpack.c.l.b16 %v4868
      %v5024 = vunpack.c.l.b16 %v4869
      %v5025 = vunpack.c.l.b16 %v4870
      %v5026 = vunpack.c.l.b16 %v4871
      %v5027 = vunpack.c.l.b16 %v4872
      %v5028 = vunpack.c.l.b16 %v4873
      %v5029 = vpack.c.b16 %v4998, %v4997
      %v5030 = vpack.c.b16 %v5000, %v4999
      %v5031 = vpack.c.b16 %v5002, %v5001
      %v5032 = vpack.c.b16 %v5004, %v5003
      %v5033 = vpack.c.b16 %v5006, %v5005
      %v5034 = vpack.c.b16 %v5008, %v5007
      %v5035 = vpack.c.b16 %v5010, %v5009
      %v5036 = vpack.c.b16 %v5012, %v5011
      %v5037 = vpack.c.b16 %v5014, %v5013
      %v5038 = vpack.c.b16 %v5016, %v5015
      %v5039 = vpack.c.b16 %v5018, %v5017
      %v5040 = vpack.c.b16 %v5020, %v5019
      %v5041 = vpack.c.b16 %v5022, %v5021
      %v5042 = vpack.c.b16 %v5024, %v5023
      %v5043 = vpack.c.b16 %v5026, %v5025
      %v5044 = vpack.c.b16 %v5028, %v5027
      %5061 = vmatprep.subr.bf16.mxu0 0
      %5062 = vmatpush1.bf16.msra.mxu0 %v5029
      %5063 = vmatprep.subr.bf16.mxu0 0
      %5064 = vmatpush1.bf16.msra.mxu0 %v5030
      %5065 = vmatprep.subr.bf16.mxu0 0
      %5066 = vmatpush1.bf16.msra.mxu0 %v5031
      %5067 = vmatprep.subr.bf16.mxu0 0
      %5068 = vmatpush1.bf16.msra.mxu0 %v5032
      %5069 = vmatprep.subr.bf16.mxu0 0
      %5070 = vmatpush1.bf16.msra.mxu0 %v5033
      %5071 = vmatprep.subr.bf16.mxu0 0
      %5072 = vmatpush1.bf16.msra.mxu0 %v5034
      %5073 = vmatprep.subr.bf16.mxu0 0
      %5074 = vmatpush1.bf16.msra.mxu0 %v5035
      %5075 = vmatprep.subr.bf16.mxu0 0
      %5076 = vmatpush1.bf16.msra.mxu0 %v5036
      %5077 = vmatprep.subr.bf16.mxu0 0
      %5078 = vmatpush1.bf16.msra.mxu0 %v5037
      %5079 = vmatprep.subr.bf16.mxu0 0
      %5080 = vmatpush1.bf16.msra.mxu0 %v5038
      %5081 = vmatprep.subr.bf16.mxu0 0
      %5082 = vmatpush1.bf16.msra.mxu0 %v5039
      %5083 = vmatprep.subr.bf16.mxu0 0
      %5084 = vmatpush1.bf16.msra.mxu0 %v5040
      %5085 = vmatprep.subr.bf16.mxu0 0
      %5086 = vmatpush1.bf16.msra.mxu0 %v5041
      %5087 = vmatprep.subr.bf16.mxu0 0
      %5088 = vmatpush1.bf16.msra.mxu0 %v5042
      %5089 = vmatprep.subr.bf16.mxu0 0
      %5090 = vmatpush1.bf16.msra.mxu0 %v5043
      %5091 = vmatprep.subr.bf16.mxu0 0
      %5092 = vmatpush1.bf16.msra.mxu0 %v5044
      %5093 = vmatprep.mubr.bf16.mxu0 %v4884
      %5094 = vmatmul.mubr.bf16.gmra.mrb[0].mxu0 %v4881
      %v5095 = vpop.f32.mrb[0].mxu0
      %v5096 = vadd.f32 0.0, %v5095
      %v5097 = vpop.f32.mrb[0].mxu0
      %v5098 = vpop.f32.mrb[0].mxu0
      %v5099 = vadd.f32 0.0, %v5098
      %v5100 = vpop.f32.mrb[0].mxu0
      %5101 = vmatprep.mubr.bf16.mxu0 %v4888
      %5102 = vmatmul.mubr.bf16.gmra.mrb[0].mxu0 %v4886
      %v5103 = vpop.f32.mrb[0].mxu0
      %v5104 = vadd.f32 0.0, %v5103
      %v5105 = vpop.f32.mrb[0].mxu0
      %v5106 = vpop.f32.mrb[0].mxu0
      %v5107 = vadd.f32 0.0, %v5106
      %v5108 = vpop.f32.mrb[0].mxu0
      %5109 = vmatprep.mubr.bf16.mxu0 %v4892
      %5110 = vmatmul.mubr.bf16.gmra.mrb[0].mxu0 %v4890
      %v5111 = vpop.f32.mrb[0].mxu0
      %v5112 = vadd.f32 0.0, %v5111
      %v5113 = vpop.f32.mrb[0].mxu0
      %v5114 = vpop.f32.mrb[0].mxu0
      %v5115 = vadd.f32 0.0, %v5114
      %v5116 = vpop.f32.mrb[0].mxu0
      %5117 = vmatprep.mubr.bf16.mxu0 %v4896
      %5118 = vmatmul.mubr.bf16.gmra.mrb[0].mxu0 %v4894
      %v5119 = vpop.f32.mrb[0].mxu0
      %v5120 = vadd.f32 0.0, %v5119
      %v5121 = vpop.f32.mrb[0].mxu0
      %v5122 = vpop.f32.mrb[0].mxu0
      %v5123 = vadd.f32 0.0, %v5122
      %v5124 = vpop.f32.mrb[0].mxu0
      %5125 = vmatprep.mubr.bf16.mxu0 %v4900
      %5126 = vmatmul.mubr.bf16.gmra.mrb[0].mxu0 %v4898
      %v5127 = vpop.f32.mrb[0].mxu0
      %v5128 = vadd.f32 0.0, %v5127
      %v5129 = vpop.f32.mrb[0].mxu0
      %v5130 = vpop.f32.mrb[0].mxu0
      %v5131 = vadd.f32 0.0, %v5130
      %v5132 = vpop.f32.mrb[0].mxu0
      %5133 = vmatprep.mubr.bf16.mxu0 %v4904
      %5134 = vmatmul.mubr.bf16.gmra.mrb[0].mxu0 %v4902
      %v5135 = vpop.f32.mrb[0].mxu0
      %v5136 = vadd.f32 0.0, %v5135
      %v5137 = vpop.f32.mrb[0].mxu0
      %v5138 = vpop.f32.mrb[0].mxu0
      %v5139 = vadd.f32 0.0, %v5138
      %v5140 = vpop.f32.mrb[0].mxu0
      %5141 = vmatprep.mubr.bf16.mxu0 %v4908
      %5142 = vmatmul.mubr.bf16.gmra.mrb[0].mxu0 %v4906
      %v5143 = vpop.f32.mrb[0].mxu0
      %v5144 = vadd.f32 0.0, %v5143
      %v5145 = vpop.f32.mrb[0].mxu0
      %v5146 = vpop.f32.mrb[0].mxu0
      %v5147 = vadd.f32 0.0, %v5146
      %v5148 = vpop.f32.mrb[0].mxu0
      %5149 = vmatprep.mubr.bf16.mxu0 %v4912
      %5150 = vmatmul.mubr.bf16.gmra.mrb[0].mxu0 %v4910
      %v5151 = vpop.f32.mrb[0].mxu0
      %v5152 = vadd.f32 0.0, %v5151
      %v5153 = vpop.f32.mrb[0].mxu0
      %v5154 = vpop.f32.mrb[0].mxu0
      %v5155 = vadd.f32 0.0, %v5154
      %v5156 = vpop.f32.mrb[0].mxu0
      %5157 = vmatprep.mubr.bf16.mxu0 %v4916
      %5158 = vmatmul.mubr.bf16.gmra.mrb[0].mxu0 %v4914
      %v5159 = vpop.f32.mrb[0].mxu0
      %v5160 = vadd.f32 0.0, %v5159
      %v5161 = vpop.f32.mrb[0].mxu0
      %v5162 = vpop.f32.mrb[0].mxu0
      %v5163 = vadd.f32 0.0, %v5162
      %v5164 = vpop.f32.mrb[0].mxu0
      %5165 = vmatprep.mubr.bf16.mxu0 %v4920
      %5166 = vmatmul.mubr.bf16.gmra.mrb[0].mxu0 %v4918
      %v5167 = vpop.f32.mrb[0].mxu0
      %v5168 = vadd.f32 0.0, %v5167
      %v5169 = vpop.f32.mrb[0].mxu0
      %v5170 = vpop.f32.mrb[0].mxu0
      %v5171 = vadd.f32 0.0, %v5170
      %v5172 = vpop.f32.mrb[0].mxu0
      %5173 = vmatprep.mubr.bf16.mxu0 %v4924
      %5174 = vmatmul.mubr.bf16.gmra.mrb[0].mxu0 %v4922
      %v5175 = vpop.f32.mrb[0].mxu0
      %v5176 = vadd.f32 0.0, %v5175
      %v5177 = vpop.f32.mrb[0].mxu0
      %v5178 = vpop.f32.mrb[0].mxu0
      %v5179 = vadd.f32 0.0, %v5178
      %v5180 = vpop.f32.mrb[0].mxu0
      %5181 = vmatprep.mubr.bf16.mxu0 %v4928
      %5182 = vmatmul.mubr.bf16.gmra.mrb[0].mxu0 %v4926
      %v5183 = vpop.f32.mrb[0].mxu0
      %v5184 = vadd.f32 0.0, %v5183
      %v5185 = vpop.f32.mrb[0].mxu0
      %v5186 = vpop.f32.mrb[0].mxu0
      %v5187 = vadd.f32 0.0, %v5186
      %v5188 = vpop.f32.mrb[0].mxu0
      %5189 = vmatprep.mubr.bf16.mxu0 %v4932
      %5190 = vmatmul.mubr.bf16.gmra.mrb[0].mxu0 %v4930
      %v5191 = vpop.f32.mrb[0].mxu0
      %v5192 = vadd.f32 0.0, %v5191
      %v5193 = vpop.f32.mrb[0].mxu0
      %v5194 = vpop.f32.mrb[0].mxu0
      %v5195 = vadd.f32 0.0, %v5194
      %v5196 = vpop.f32.mrb[0].mxu0
      %5197 = vmatprep.mubr.bf16.mxu0 %v4936
      %5198 = vmatmul.mubr.bf16.gmra.mrb[0].mxu0 %v4934
      %v5199 = vpop.f32.mrb[0].mxu0
      %v5200 = vadd.f32 0.0, %v5199
      %v5201 = vpop.f32.mrb[0].mxu0
      %v5202 = vpop.f32.mrb[0].mxu0
      %v5203 = vadd.f32 0.0, %v5202
      %v5204 = vpop.f32.mrb[0].mxu0
      %5205 = vdwg.mxu0
      %v5206 = vadd.f32 %v4813, %v5096
      %v5207 = vadd.f32 %v4814, %v5099
      %v5208 = vadd.f32 %v4815, %v5104
      %v5209 = vadd.f32 %v4816, %v5107
      %v5210 = vadd.f32 %v4817, %v5112
      %v5211 = vadd.f32 %v4818, %v5115
      %v5212 = vadd.f32 %v4819, %v5120
      %v5213 = vadd.f32 %v4820, %v5123
      %v5214 = vadd.f32 %v4821, %v5128
      %v5215 = vadd.f32 %v4822, %v5131
      %v5216 = vadd.f32 %v4823, %v5136
      %v5217 = vadd.f32 %v4824, %v5139
      %v5218 = vadd.f32 %v4825, %v5144
      %v5219 = vadd.f32 %v4826, %v5147
      %v5220 = vadd.f32 %v4827, %v5152
      %v5221 = vadd.f32 %v4828, %v5155
      %v5222 = vadd.f32 %v4829, %v5160
      %v5223 = vadd.f32 %v4830, %v5163
      %v5224 = vadd.f32 %v4831, %v5168
      %v5225 = vadd.f32 %v4832, %v5171
      %v5226 = vadd.f32 %v4833, %v5176
      %v5227 = vadd.f32 %v4834, %v5179
      %v5228 = vadd.f32 %v4835, %v5184
      %v5229 = vadd.f32 %v4836, %v5187
      %v5230 = vadd.f32 %v4837, %v5192
      %v5231 = vadd.f32 %v4838, %v5195
      %v5232 = vadd.f32 %v4839, %v5200
      %v5233 = vadd.f32 %v4840, %v5203
      %v5234 = vld [vmem:[%s5] sm:$0x1]
      %v5236 = vlaneseq
      %v5237 = vshrl.u32 %v5236, 7
      %v5238 = vsub.s32 0, %v5237
      %v5239 = vrot.slane %v5234, %v5238
      %v5241 = vadd.f32 %v5206, %v5239
      %v5242 = vadd.f32 %v5207, %v5239
      %v5243 = vadd.f32 %v5208, %v5239
      %v5244 = vadd.f32 %v5209, %v5239
      %v5245 = vadd.f32 %v5210, %v5239
      %v5246 = vadd.f32 %v5211, %v5239
      %v5247 = vadd.f32 %v5212, %v5239
      %v5248 = vadd.f32 %v5213, %v5239
      %v5249 = vadd.f32 %v5214, %v5239
      %v5250 = vadd.f32 %v5215, %v5239
      %v5251 = vadd.f32 %v5216, %v5239
      %v5252 = vadd.f32 %v5217, %v5239
      %v5253 = vadd.f32 %v5218, %v5239
      %v5254 = vadd.f32 %v5219, %v5239
      %v5255 = vadd.f32 %v5220, %v5239
      %v5256 = vadd.f32 %v5221, %v5239
      %v5257 = vadd.f32 %v5222, %v5239
      %v5258 = vadd.f32 %v5223, %v5239
      %v5259 = vadd.f32 %v5224, %v5239
      %v5260 = vadd.f32 %v5225, %v5239
      %v5261 = vadd.f32 %v5226, %v5239
      %v5262 = vadd.f32 %v5227, %v5239
      %v5263 = vadd.f32 %v5228, %v5239
      %v5264 = vadd.f32 %v5229, %v5239
      %v5265 = vadd.f32 %v5230, %v5239
      %v5266 = vadd.f32 %v5231, %v5239
      %v5267 = vadd.f32 %v5232, %v5239
      %v5268 = vadd.f32 %v5233, %v5239
      %v5269 = vmax.f32 %v5241, 0.0
      %v5270 = vmax.f32 %v5242, 0.0
      %v5271 = vmax.f32 %v5243, 0.0
      %v5272 = vmax.f32 %v5244, 0.0
      %v5273 = vmax.f32 %v5245, 0.0
      %v5274 = vmax.f32 %v5246, 0.0
      %v5275 = vmax.f32 %v5247, 0.0
      %v5276 = vmax.f32 %v5248, 0.0
      %v5277 = vmax.f32 %v5249, 0.0
      %v5278 = vmax.f32 %v5250, 0.0
      %v5279 = vmax.f32 %v5251, 0.0
      %v5280 = vmax.f32 %v5252, 0.0
      %v5281 = vmax.f32 %v5253, 0.0
      %v5282 = vmax.f32 %v5254, 0.0
      %v5283 = vmax.f32 %v5255, 0.0
      %v5284 = vmax.f32 %v5256, 0.0
      %v5285 = vmax.f32 %v5257, 0.0
      %v5286 = vmax.f32 %v5258, 0.0
      %v5287 = vmax.f32 %v5259, 0.0
      %v5288 = vmax.f32 %v5260, 0.0
      %v5289 = vmax.f32 %v5261, 0.0
      %v5290 = vmax.f32 %v5262, 0.0
      %v5291 = vmax.f32 %v5263, 0.0
      %v5292 = vmax.f32 %v5264, 0.0
      %v5293 = vmax.f32 %v5265, 0.0
      %v5294 = vmax.f32 %v5266, 0.0
      %v5295 = vmax.f32 %v5267, 0.0
      %v5296 = vmax.f32 %v5268, 0.0
      %v5297 = vld [vmem:[%s572] sm:$0xff]
      %v5298 = vld [vmem:[%s572 + $0x8] sm:$0xff]
      %v5299 = vld [vmem:[%s572 + $0x10] sm:$0xff]
      %v5300 = vld [vmem:[%s572 + $0x18] sm:$0xff]
      %v5301 = vld [vmem:[%s572 + $0x20] sm:$0xff]
      %v5302 = vld [vmem:[%s572 + $0x28] sm:$0xff]
      %v5303 = vld [vmem:[%s572 + $0x30] sm:$0xff]
      %v5304 = vld [vmem:[%s572 + $0x38] sm:$0xff]
      %v5305 = vld [vmem:[%s572 + $0x40] sm:$0xff]
      %v5306 = vld [vmem:[%s572 + $0x48] sm:$0xff]
      %v5307 = vld [vmem:[%s572 + $0x50] sm:$0xff]
      %v5308 = vld [vmem:[%s572 + $0x58] sm:$0xff]
      %v5309 = vld [vmem:[%s572 + $0x60] sm:$0xff]
      %v5310 = vld [vmem:[%s572 + $0x68] sm:$0xff]
      %v5311 = vld [vmem:[%s572 + $0x70] sm:$0xff]
      %v5312 = vld [vmem:[%s572 + $0x78] sm:$0xff]
      %v5313 = vld [vmem:[%s572 + $0x80] sm:$0xff]
      %v5314 = vld [vmem:[%s572 + $0x88] sm:$0xff]
      %v5315 = vld [vmem:[%s572 + $0x90] sm:$0xff]
      %v5316 = vld [vmem:[%s572 + $0x98] sm:$0xff]
      %v5317 = vld [vmem:[%s572 + $0xa0] sm:$0xff]
      %v5318 = vld [vmem:[%s572 + $0xa8] sm:$0xff]
      %v5319 = vld [vmem:[%s572 + $0xb0] sm:$0xff]
      %v5320 = vld [vmem:[%s572 + $0xb8] sm:$0xff]
      %v5321 = vld [vmem:[%s572 + $0xc0] sm:$0xff]
      %v5322 = vld [vmem:[%s572 + $0xc8] sm:$0xff]
      %v5323 = vld [vmem:[%s572 + $0xd0] sm:$0xff]
      %v5324 = vld [vmem:[%s572 + $0xd8] sm:$0xff]
      %5326 = vset.pattern.permute.xlu0 0
      %5327 = vperm.xlu0 %5326, %v5297
      %v5328 = vpop.permute.xlu0 %5327
      %5331 = vset.pattern.permute.xlu0 0
      %5332 = vperm.xlu0 %5331, %v5298
      %v5333 = vpop.permute.xlu0 %5332
      %5336 = vset.pattern.permute.xlu0 0
      %5337 = vperm.xlu0 %5336, %v5299
      %v5338 = vpop.permute.xlu0 %5337
      %5341 = vset.pattern.permute.xlu0 0
      %5342 = vperm.xlu0 %5341, %v5300
      %v5343 = vpop.permute.xlu0 %5342
      %5346 = vset.pattern.permute.xlu0 0
      %5347 = vperm.xlu0 %5346, %v5301
      %v5348 = vpop.permute.xlu0 %5347
      %5351 = vset.pattern.permute.xlu0 0
      %5352 = vperm.xlu0 %5351, %v5302
      %v5353 = vpop.permute.xlu0 %5352
      %5356 = vset.pattern.permute.xlu0 0
      %5357 = vperm.xlu0 %5356, %v5303
      %v5358 = vpop.permute.xlu0 %5357
      %5361 = vset.pattern.permute.xlu0 0
      %5362 = vperm.xlu0 %5361, %v5304
      %v5363 = vpop.permute.xlu0 %5362
      %5366 = vset.pattern.permute.xlu0 0
      %5367 = vperm.xlu0 %5366, %v5305
      %v5368 = vpop.permute.xlu0 %5367
      %5371 = vset.pattern.permute.xlu0 0
      %5372 = vperm.xlu0 %5371, %v5306
      %v5373 = vpop.permute.xlu0 %5372
      %5376 = vset.pattern.permute.xlu0 0
      %5377 = vperm.xlu0 %5376, %v5307
      %v5378 = vpop.permute.xlu0 %5377
      %5381 = vset.pattern.permute.xlu0 0
      %5382 = vperm.xlu0 %5381, %v5308
      %v5383 = vpop.permute.xlu0 %5382
      %5386 = vset.pattern.permute.xlu0 0
      %5387 = vperm.xlu0 %5386, %v5309
      %v5388 = vpop.permute.xlu0 %5387
      %5391 = vset.pattern.permute.xlu0 0
      %5392 = vperm.xlu0 %5391, %v5310
      %v5393 = vpop.permute.xlu0 %5392
      %5396 = vset.pattern.permute.xlu0 0
      %5397 = vperm.xlu0 %5396, %v5311
      %v5398 = vpop.permute.xlu0 %5397
      %5401 = vset.pattern.permute.xlu0 0
      %5402 = vperm.xlu0 %5401, %v5312
      %v5403 = vpop.permute.xlu0 %5402
      %5406 = vset.pattern.permute.xlu0 0
      %5407 = vperm.xlu0 %5406, %v5313
      %v5408 = vpop.permute.xlu0 %5407
      %5411 = vset.pattern.permute.xlu0 0
      %5412 = vperm.xlu0 %5411, %v5314
      %v5413 = vpop.permute.xlu0 %5412
      %5416 = vset.pattern.permute.xlu0 0
      %5417 = vperm.xlu0 %5416, %v5315
      %v5418 = vpop.permute.xlu0 %5417
      %5421 = vset.pattern.permute.xlu0 0
      %5422 = vperm.xlu0 %5421, %v5316
      %v5423 = vpop.permute.xlu0 %5422
      %5426 = vset.pattern.permute.xlu0 0
      %5427 = vperm.xlu0 %5426, %v5317
      %v5428 = vpop.permute.xlu0 %5427
      %5431 = vset.pattern.permute.xlu0 0
      %5432 = vperm.xlu0 %5431, %v5318
      %v5433 = vpop.permute.xlu0 %5432
      %5436 = vset.pattern.permute.xlu0 0
      %5437 = vperm.xlu0 %5436, %v5319
      %v5438 = vpop.permute.xlu0 %5437
      %5441 = vset.pattern.permute.xlu0 0
      %5442 = vperm.xlu0 %5441, %v5320
      %v5443 = vpop.permute.xlu0 %5442
      %5446 = vset.pattern.permute.xlu0 0
      %5447 = vperm.xlu0 %5446, %v5321
      %v5448 = vpop.permute.xlu0 %5447
      %5451 = vset.pattern.permute.xlu0 0
      %5452 = vperm.xlu0 %5451, %v5322
      %v5453 = vpop.permute.xlu0 %5452
      %5456 = vset.pattern.permute.xlu0 0
      %5457 = vperm.xlu0 %5456, %v5323
      %v5458 = vpop.permute.xlu0 %5457
      %5461 = vset.pattern.permute.xlu0 0
      %5462 = vperm.xlu0 %5461, %v5324
      %v5463 = vpop.permute.xlu0 %5462
      %v5465 = vmul.f32 %v5269, %v5328
      %v5466 = vmul.f32 %v5270, %v5333
      %v5467 = vmul.f32 %v5271, %v5338
      %v5468 = vmul.f32 %v5272, %v5343
      %v5469 = vmul.f32 %v5273, %v5348
      %v5470 = vmul.f32 %v5274, %v5353
      %v5471 = vmul.f32 %v5275, %v5358
      %v5472 = vmul.f32 %v5276, %v5363
      %v5473 = vmul.f32 %v5277, %v5368
      %v5474 = vmul.f32 %v5278, %v5373
      %v5475 = vmul.f32 %v5279, %v5378
      %v5476 = vmul.f32 %v5280, %v5383
      %v5477 = vmul.f32 %v5281, %v5388
      %v5478 = vmul.f32 %v5282, %v5393
      %v5479 = vmul.f32 %v5283, %v5398
      %v5480 = vmul.f32 %v5284, %v5403
      %v5481 = vmul.f32 %v5285, %v5408
      %v5482 = vmul.f32 %v5286, %v5413
      %v5483 = vmul.f32 %v5287, %v5418
      %v5484 = vmul.f32 %v5288, %v5423
      %v5485 = vmul.f32 %v5289, %v5428
      %v5486 = vmul.f32 %v5290, %v5433
      %v5487 = vmul.f32 %v5291, %v5438
      %v5488 = vmul.f32 %v5292, %v5443
      %v5489 = vmul.f32 %v5293, %v5448
      %v5490 = vmul.f32 %v5294, %v5453
      %v5491 = vmul.f32 %v5295, %v5458
      %v5492 = vmul.f32 %v5296, %v5463
      %v5493 = vpack.c.bf16 %v5466, %v5465
      %v5494 = vpack.c.bf16 %v5468, %v5467
      %v5495 = vpack.c.bf16 %v5470, %v5469
      %v5496 = vpack.c.bf16 %v5472, %v5471
      %v5497 = vpack.c.bf16 %v5474, %v5473
      %v5498 = vpack.c.bf16 %v5476, %v5475
      %v5499 = vpack.c.bf16 %v5478, %v5477
      %v5500 = vpack.c.bf16 %v5480, %v5479
      %v5501 = vpack.c.bf16 %v5482, %v5481
      %v5502 = vpack.c.bf16 %v5484, %v5483
      %v5503 = vpack.c.bf16 %v5486, %v5485
      %v5504 = vpack.c.bf16 %v5488, %v5487
      %v5505 = vpack.c.bf16 %v5490, %v5489
      %v5506 = vpack.c.bf16 %v5492, %v5491
      %v5521 = vunpack.c.l.b16 %v5493
      %v5522 = vunpack.c.h.b16 %v5493
      %v5523 = vunpack.c.l.b16 %v5494
      %v5524 = vunpack.c.h.b16 %v5494
      %v5525 = vunpack.c.l.b16 %v5495
      %v5526 = vunpack.c.h.b16 %v5495
      %v5527 = vunpack.c.l.b16 %v5496
      %v5528 = vunpack.c.h.b16 %v5496
      %v5529 = vunpack.c.l.b16 %v5497
      %v5530 = vunpack.c.h.b16 %v5497
      %v5531 = vunpack.c.l.b16 %v5498
      %v5532 = vunpack.c.h.b16 %v5498
      %v5533 = vunpack.c.l.b16 %v5499
      %v5534 = vunpack.c.h.b16 %v5499
      %v5535 = vunpack.c.l.b16 %v5500
      %v5536 = vunpack.c.h.b16 %v5500
      %v5537 = vunpack.c.l.b16 %v5501
      %v5538 = vunpack.c.h.b16 %v5501
      %v5539 = vunpack.c.l.b16 %v5502
      %v5540 = vunpack.c.h.b16 %v5502
      %v5541 = vunpack.c.l.b16 %v5503
      %v5542 = vunpack.c.h.b16 %v5503
      %v5543 = vunpack.c.l.b16 %v5504
      %v5544 = vunpack.c.h.b16 %v5504
      %v5545 = vunpack.c.l.b16 %v5505
      %v5546 = vunpack.c.h.b16 %v5505
      %v5547 = vunpack.c.l.b16 %v5506
      %v5548 = vunpack.c.h.b16 %v5506
      %v5549 = vpack.c.b16 %v5521, %v5521
      %v5550 = vpack.c.b16 %v5522, %v5522
      %v5551 = vpack.c.b16 %v5523, %v5523
      %v5552 = vpack.c.b16 %v5524, %v5524
      %v5553 = vpack.c.b16 %v5525, %v5525
      %v5554 = vpack.c.b16 %v5526, %v5526
      %v5555 = vpack.c.b16 %v5527, %v5527
      %v5556 = vpack.c.b16 %v5528, %v5528
      %v5557 = vpack.c.b16 %v5529, %v5529
      %v5558 = vpack.c.b16 %v5530, %v5530
      %v5559 = vpack.c.b16 %v5531, %v5531
      %v5560 = vpack.c.b16 %v5532, %v5532
      %v5561 = vpack.c.b16 %v5533, %v5533
      %v5562 = vpack.c.b16 %v5534, %v5534
      %v5563 = vpack.c.b16 %v5535, %v5535
      %v5564 = vpack.c.b16 %v5536, %v5536
      %v5565 = vpack.c.b16 %v5537, %v5537
      %v5566 = vpack.c.b16 %v5538, %v5538
      %v5567 = vpack.c.b16 %v5539, %v5539
      %v5568 = vpack.c.b16 %v5540, %v5540
      %v5569 = vpack.c.b16 %v5541, %v5541
      %v5570 = vpack.c.b16 %v5542, %v5542
      %v5571 = vpack.c.b16 %v5543, %v5543
      %v5572 = vpack.c.b16 %v5544, %v5544
      %v5573 = vpack.c.b16 %v5545, %v5545
      %v5574 = vpack.c.b16 %v5546, %v5546
      %v5575 = vpack.c.b16 %v5547, %v5547
      %v5576 = vpack.c.b16 %v5548, %v5548
      %5605 = vst [vmem:[%s578] sm:$0xf] %v5549
      %5606 = vst [vmem:[%s578 + $0x4] sm:$0xf] %v5550
      %5607 = vst [vmem:[%s578 + $0x8] sm:$0xf] %v5551
      %5608 = vst [vmem:[%s578 + $0xc] sm:$0xf] %v5552
      %5609 = vst [vmem:[%s578 + $0x10] sm:$0xf] %v5553
      %5610 = vst [vmem:[%s578 + $0x14] sm:$0xf] %v5554
      %5611 = vst [vmem:[%s578 + $0x18] sm:$0xf] %v5555
      %5612 = vst [vmem:[%s578 + $0x1c] sm:$0xf] %v5556
      %5613 = vst [vmem:[%s578 + $0x20] sm:$0xf] %v5557
      %5614 = vst [vmem:[%s578 + $0x24] sm:$0xf] %v5558
      %5615 = vst [vmem:[%s578 + $0x28] sm:$0xf] %v5559
      %5616 = vst [vmem:[%s578 + $0x2c] sm:$0xf] %v5560
      %5617 = vst [vmem:[%s578 + $0x30] sm:$0xf] %v5561
      %5618 = vst [vmem:[%s578 + $0x34] sm:$0xf] %v5562
      %5619 = vst [vmem:[%s578 + $0x38] sm:$0xf] %v5563
      %5620 = vst [vmem:[%s578 + $0x3c] sm:$0xf] %v5564
      %5621 = vst [vmem:[%s578 + $0x40] sm:$0xf] %v5565
      %5622 = vst [vmem:[%s578 + $0x44] sm:$0xf] %v5566
      %5623 = vst [vmem:[%s578 + $0x48] sm:$0xf] %v5567
      %5624 = vst [vmem:[%s578 + $0x4c] sm:$0xf] %v5568
      %5625 = vst [vmem:[%s578 + $0x50] sm:$0xf] %v5569
      %5626 = vst [vmem:[%s578 + $0x54] sm:$0xf] %v5570
      %5627 = vst [vmem:[%s578 + $0x58] sm:$0xf] %v5571
      %5628 = vst [vmem:[%s578 + $0x5c] sm:$0xf] %v5572
      %5629 = vst [vmem:[%s578 + $0x60] sm:$0xf] %v5573
      %5630 = vst [vmem:[%s578 + $0x64] sm:$0xf] %v5574
      %5631 = vst [vmem:[%s578 + $0x68] sm:$0xf] %v5575
      %5632 = vst [vmem:[%s578 + $0x6c] sm:$0xf] %v5576
      %s5633 = smul.u32 28, %s18
      %p5634 = scmp.lt.s32.totalorder %s5633, 139
      %s5635 = scalar_select %p5634, %s5633, 139
      %s5636 = smul.addr %s5635, 4
      %s5637 = scalar_lea.vmem %s7, %s5636
      // Predicated region
      $region49: #{up_forward.4} parent=47 // pred_check
        %p5638 = pneg %p268
      $region50: #{up_forward.4} parent=47 // pred_check_branch
        %5640 = sbr.rel (%p5638) target = $region52
      $region51: #{up_forward.4} parent=47 // pred_region
        %s5641 = smul.u32 28, %s18
      $region52: #{up_forward.4} parent=47 // pred_fallthru
        _
    $region48: #{up_forward.4} parent=5 // pred_fallthru
      _
    %p5642 = scmp.le.s32.totalorder 2, %s13
    // Predicated region
    $region53: #{up_forward.4} parent=5 // pred_check
      %p5643 = pneg %p5642
    $region54: #{up_forward.4} parent=5 // pred_check_branch
      %5645 = sbr.rel (%p5643) target = $region56
    $region55: #{up_forward.4} parent=5 // pred_region
      %s5646 = ssub.s32 %s13, 2
      // Predicated region
      $region57: #{up_forward.4} parent=55 // pred_check
        %p5647 = pneg %p274
      $region58: #{up_forward.4} parent=55 // pred_check_branch
        %5649 = sbr.rel (%p5647) target = $region60
      $region59: #{up_forward.4} parent=55 // pred_region
        %s5650 = smul.u32 28, %s19
        %p5651 = scmp.lt.s32.totalorder %s5650, 139
        %s5652 = scalar_select %p5651, %s5650, 139
        %s5653 = smul.addr %s5652, 4
        %s5654 = scalar_lea.vmem %s7, %s5653
      $region60: #{up_forward.4} parent=55 // pred_fallthru
        _
    $region56: #{up_forward.4} parent=5 // pred_fallthru
      _
  $region6: #{up_forward.4} parent=0 // loop_footer
    %s17 = sadd.s32 1, %s13
  $region7: #{up_forward.4} parent=0 // loop_footer_branch
    %12 = sbr.rel target = $region3
  $region8: #{up_forward.4} parent=0 // loop_exit
    _

</llo_original>
